<compile_context>
chip_gen: v7x
topology: tpu7x:2x2x1
jax: 0.10.0
libtpu: 0.0.40
codegen_flags: <defaults>
</compile_context>

<pallas_src>
import functools
import math

import numpy as np
import jax
import jax.numpy as jnp
from jax import lax
from jax.experimental import pallas as pl
from jax.experimental.pallas import tpu as pltpu

RES = (16, 16)          # self.res  (num_dims == 2)
MAX_VAL = 10.0          # max_val
COST_SCALE = 1.0        # cost_scale (the C Parameter is unused in forward)
OBJ_WIDTH = 3           # obj_width (box-blur kernel width)
N_SOLVER_ITERS = 5      # LaplacianSolver.forward calls the CUDA solver 5 times
HIDDEN = 128            # tcnn network: 128 neurons
N_LAYERS = 4            # 4 hidden layers


# --------------------------------------------------------------------------
# Host-side compile-time constants (banded stencil / blur matrices, reciprocal
# neighbour counts, un-flatten matrices).  Tiny, passed as 3 kernel inputs.
# --------------------------------------------------------------------------
@functools.lru_cache(maxsize=None)
def _solver_constants(H, W, width):
    assert H == W, "consolidated solver constants assume a square grid"
    N = H * W
    ii = np.arange(H)
    jj = np.arange(W)
    nn = np.arange(N)

    # 8-neighbour sum == P3 @ V @ Q3 - V  (tri-diagonal-of-ones band matrices).
    P3 = (np.abs(ii[:, None] - ii[None, :]) <= 1).astype(np.float32)      # (H, H)
    Q3 = (np.abs(jj[:, None] - jj[None, :]) <= 1).astype(np.float32)      # (W, W)

    # Reciprocal of per-cell valid-neighbour count (iteration-invariant constant).
    rcnt = P3.sum(axis=1)
    ccnt = Q3.sum(axis=0)
    inv_cnt = (1.0 / (rcnt[:, None] * ccnt[None, :] - 1.0)).astype(np.float32)

    # Separable width x width box blur: extra = Pw @ ob @ Qw (Pw pre-scaled by 1/w^2).
    if width > 0:
        lo = -((width - 1) // 2)
        hi = lo + width - 1
        dr = ii[None, :] - ii[:, None]
        Pw = ((dr >= lo) & (dr <= hi)).astype(np.float32) / float(width * width)
        dc = jj[:, None] - jj[None, :]
        Qw = ((dc >= lo) & (dc <= hi)).astype(np.float32)
    else:
        Pw = np.zeros((H, H), np.float32)
        Qw = np.zeros((W, W), np.float32)

    stencil = np.stack([P3, Q3, Pw, Qw, inv_cnt], axis=0)                 # (5, H, W)

    # Un-flatten a lane-dense (1, N) cost row into a (H, W) grid on the MXU:
    #   C = (R * c_row) @ E     with R[i, n] = [n // W == i], E[n, j] = [n % W == j].
    R = (nn[None, :] // W == ii[:, None]).astype(np.float32)              # (H, N)
    E = (nn[:, None] % W == jj[None, :]).astype(np.float32)               # (N, W)

    return jnp.asarray(stencil), jnp.asarray(R), jnp.asarray(E)


# --------------------------------------------------------------------------
# Fused kernel: encoding + MLP -> cost field C, solver sweeps, bilinear sample.
# One grid step == one problem instance.
# --------------------------------------------------------------------------
def _make_kernel(H, W, N, max_val, width, n_iters, n_layers):
    def kernel(xa_ref, btc_ref, wenc_ref, whid_ref, wout_ref, st_ref, r_ref, e_ref,
               out_ref, c_ref):
        f32 = jnp.float32

        # ---------------- Stage 1: fused GaussianEncoding + MLP (feature-major) --------
        xa = xa_ref[0]                                  # (8, N): rows [x, y, 1, 0,...,0]
        # Encoding matrix already folds 0.5+0.5*x remap, 2*pi, and the cos/sin phase.
        vp = jnp.dot(wenc_ref[...], xa, preferred_element_type=f32)       # (128, N)
        h = jnp.cos(vp).astype(jnp.bfloat16)            # cos half / sin half via phase
        # 4 hidden ReLU layers, bf16 operands on the MXU, f32 accumulation, bf16 carry.
        for l in range(n_layers):
            acc = jnp.dot(whid_ref[l], h, preferred_element_type=f32)     # (128, N)
            h = jnp.maximum(acc, 0.0).astype(jnp.bfloat16)
        # Output layer (n_out = 1): padded (8, 128) row matmul, take row 0 -> lane-dense.
        cT = jnp.dot(wout_ref[...], h, preferred_element_type=f32)[0:1, :]   # (1, N)

        # Un-flatten the lane-dense cost row to the (H, W) grid the solver needs.
        C = jnp.dot(r_ref[...] * cT, e_ref[...], preferred_element_type=f32)  # (H, W)
        c_ref[0] = C

        # ---------------- Stage 2: Laplacian solver ----------------
        btc = btc_ref[0]                                # (2, H, W)
        bt = btc[0]
        bc = btc[1]
        st = st_ref[...]                                # (5, H, W)
        P3, Q3, Pw, Qw, inv_cnt = st[0], st[1], st[2], st[3], st[4]

        C_pos = jnp.maximum(C, 0.0)
        if width > 0:
            ob = bc * (bt == 1.0).astype(f32) * (bc > 0.0).astype(f32)
            # width x width box blur as two banded matmuls (Pw pre-scaled by 1/w^2).
            extra = jnp.dot(Pw, jnp.dot(ob, Qw, preferred_element_type=f32),
                            preferred_element_type=f32)
            C_pos = C_pos + extra * (bt == 0.0).astype(f32)

        fixed = bt > 0.0
        # First-call semantics: V = max_val everywhere; V[bt > 0] = bc[bt > 0].
        V = jnp.where(fixed, bc, jnp.full((H, W), max_val, f32))
        # TODO(synk): laplacian_solver.forward is an opaque CUDA extension; approximated
        # as n_iters Jacobi sweeps (8-neighbour mean + source C, Dirichlet where bt > 0).
        for _ in range(n_iters):
            nsum = jnp.dot(P3, jnp.dot(V, Q3, preferred_element_type=f32),
                           preferred_element_type=f32) - V
            V = jnp.where(fixed, bc, nsum * inv_cnt + C_pos)

        # ------- Stage 3: bilinear grid_sample (align_corners=True, border pad) -------
        # All per-point scalars stay lane-dense (1, N); bilinear weights are fused into
        # transposed one-hot selectors, so sampling is one matmul + one sublane reduce.
        gx = xa[0:1, :]                                 # (1, N)
        gy = xa[1:2, :]
        ix = jnp.clip((gx + 1.0) * (0.5 * (W - 1)), 0.0, float(W - 1))
        iy = jnp.clip((gy + 1.0) * (0.5 * (H - 1)), 0.0, float(H - 1))
        x0f = jnp.floor(ix)
        y0f = jnp.floor(iy)
        wx = ix - x0f
        wy = iy - y0f
        x0 = x0f.astype(jnp.int32)
        y0 = y0f.astype(jnp.int32)
        x1 = jnp.minimum(x0 + 1, W - 1)
        y1 = jnp.minimum(y0 + 1, H - 1)

        col_ids = lax.broadcasted_iota(jnp.int32, (W, N), 0)   # grid column index
        row_ids = lax.broadcasted_iota(jnp.int32, (H, N), 0)   # grid row index
        XwT = (jnp.where(col_ids == x0, 1.0 - wx, 0.0)
               + jnp.where(col_ids == x1, wx, 0.0))            # (W, N)
        YwT = (jnp.where(row_ids == y0, 1.0 - wy, 0.0)
               + jnp.where(row_ids == y1, wy, 0.0))            # (H, N)

        samp = jnp.sum(YwT * jnp.dot(V, XwT, preferred_element_type=f32),
                       axis=0, keepdims=True)                  # (1, N), lane-dense
        out_ref[0] = samp

    return kernel


# --------------------------------------------------------------------------
# Host-side parameter folding (encoding remap / 2*pi / phase, padded output row).
# --------------------------------------------------------------------------
def prepare_params(b, whid, wout):
    """b: (hidden/2, 2) f32, whid: (n_layers, hidden, hidden), wout: (hidden,) f32."""
    n_layers, hidden, _ = whid.shape
    half = hidden // 2
    pi = math.pi
    b0 = jnp.concatenate([b[:, 0], b[:, 0]])                       # (hidden,)
    b1 = jnp.concatenate([b[:, 1], b[:, 1]])
    phase = jnp.concatenate([jnp.zeros((half,), jnp.float32),
                             jnp.full((half,), -0.5 * pi, jnp.float32)])
    bias = pi * (b0 + b1) + phase   # folds px = 0.5 + 0.5*gx remap and sin = cos(.-pi/2)
    wenc = jnp.zeros((hidden, 8), jnp.float32)
    wenc = wenc.at[:, 0].set(pi * b0)
    wenc = wenc.at[:, 1].set(pi * b1)
    wenc = wenc.at[:, 2].set(bias)                                 # columns 3..7 stay 0
    wout8 = jnp.zeros((8, hidden), jnp.float32).at[0].set(wout).astype(jnp.bfloat16)
    return wenc, whid.astype(jnp.bfloat16), wout8


def init_params(key, *, sigma=0.2, hidden=HIDDEN, n_layers=N_LAYERS):
    ks = jax.random.split(key, 3)
    b = sigma * jax.random.normal(ks[0], (hidden // 2, 2), jnp.float32)  # GaussianEncoding B
    scale = 1.0 / math.sqrt(float(hidden))
    whid = scale * jax.random.normal(ks[1], (n_layers, hidden, hidden), jnp.float32)
    wout = scale * jax.random.normal(ks[2], (hidden,), jnp.float32)
    return prepare_params(b, whid, wout)


# --------------------------------------------------------------------------
# Wrapper.  Accepts a single instance (x.size == 2*H*W) or a batch of independent
# instances (each processed with the module's first-call semantics).
# --------------------------------------------------------------------------
def laplace_cost_net_forward(x, boundary_types, boundary_conditions, params, *,
                             res=RES, max_val=MAX_VAL, width=OBJ_WIDTH,
                             n_iters=N_SOLVER_ITERS):
    H, W = res
    N = H * W
    wenc, whid, wout8 = params
    n_layers = whid.shape[0]

    x = jnp.asarray(x, jnp.float32)
    assert x.size % (2 * N) == 0
    single = (x.size == 2 * N)
    xq = x.reshape(-1, N, 2)
    B = xq.shape[0]

    bt = jnp.asarray(boundary_types, jnp.float32)
    bc = jnp.asarray(boundary_conditions, jnp.float32)
    if bt.ndim == 2:
        bt = jnp.broadcast_to(bt, (B, H, W))
    if bc.ndim == 2:
        bc = jnp.broadcast_to(bc, (B, H, W))
    bt = bt.reshape(B, H, W)
    bc = bc.reshape(B, H, W)

    # Lane-dense augmented query coordinates: rows = [x, y, 1, 0, 0, 0, 0, 0].
    xa = jnp.zeros((B, 8, N), jnp.float32)
    xa = xa.at[:, 0, :].set(xq[:, :, 0])
    xa = xa.at[:, 1, :].set(xq[:, :, 1])
    xa = xa.at[:, 2, :].set(1.0)
    btc = jnp.stack([bt, bc], axis=1)                              # (B, 2, H, W)

    stencil, R, E = _solver_constants(H, W, int(width))

    kernel = _make_kernel(H, W, N, float(max_val), int(width), int(n_iters), n_layers)

    def inst(shape):           # per-instance: indexed by the batch grid axis
        nd = len(shape)
        return pl.BlockSpec((1,) + shape, lambda i, _nd=nd: (i,) + (0,) * _nd)

    def const(shape):          # constant block index -> stays resident, no re-DMA
        nd = len(shape)
        return pl.BlockSpec(shape, lambda i, _nd=nd: (0,) * _nd)

    out_flat, C = pl.pallas_call(
        kernel,
        out_shape=(jax.ShapeDtypeStruct((B, 1, N), jnp.float32),
                   jax.ShapeDtypeStruct((B, H, W), jnp.float32)),
        grid=(B,),
        in_specs=[inst((8, N)), inst((2, H, W)),
                  const(wenc.shape), const(whid.shape), const(wout8.shape),
                  const(stencil.shape), const(R.shape), const(E.shape)],
        out_specs=(inst((1, N)), inst((H, W))),
        compiler_params=pltpu.CompilerParams(dimension_semantics=("parallel",)),
    )(xa, btc, wenc, whid, wout8, stencil, R, E)

    out = out_flat.reshape(B, H, W)        # lane-dense store; reshape is wrapper-side
    if single:
        return out[0], C[0], None          # J is None (calc_gradient=False)
    return out, C, None


if __name__ == "__main__":
    H, W = RES
    B = 4                                   # batch of independent problem instances
    key = jax.random.PRNGKey(0)
    kx, kp = jax.random.split(key)
    params = init_params(kp)

    # Query points in [-1, 1]^2, one per grid cell (x.numel() // 2 == prod(res) per inst).
    x = jax.random.uniform(kx, (B, H, W, 2), jnp.float32, minval=-1.0, maxval=1.0)

    boundary_types = jnp.zeros((B, H, W), jnp.float32)
    boundary_types = boundary_types.at[:, 4:7, 4:7].set(1.0)    # object cells
    boundary_types = boundary_types.at[:, 12, 12].set(2.0)      # fixed (goal) cell
    boundary_conditions = jnp.zeros((B, H, W), jnp.float32)
    boundary_conditions = boundary_conditions.at[:, 4:7, 4:7].set(MAX_VAL)

    fwd = jax.jit(laplace_cost_net_forward)
    out, C, J = fwd(x, boundary_types, boundary_conditions, params)
    out, C = jax.block_until_ready((out, C))
    assert out.shape == (B, H, W) and C.shape == (B, H, W) and J is None
    assert bool(jnp.all(jnp.isfinite(out))) and bool(jnp.all(jnp.isfinite(C)))
    print("KERNEL_OK")
</pallas_src>

<mosaic_0001>
module attributes {stable_mosaic.version = 11 : i64} {
  func.func @kernel(%arg0: i32, %arg1: memref<1x8x256xf32, #tpu.memory_space<vmem>>, %arg2: memref<1x2x16x16xf32, #tpu.memory_space<vmem>>, %arg3: memref<128x8xf32, #tpu.memory_space<vmem>>, %arg4: memref<4x128x128xbf16, #tpu.memory_space<vmem>>, %arg5: memref<8x128xbf16, #tpu.memory_space<vmem>>, %arg6: memref<5x16x16xf32, #tpu.memory_space<vmem>>, %arg7: memref<16x256xf32, #tpu.memory_space<vmem>>, %arg8: memref<256x16xf32, #tpu.memory_space<vmem>>, %arg9: memref<1x1x256xf32, #tpu.memory_space<vmem>>, %arg10: memref<1x16x16xf32, #tpu.memory_space<vmem>>) attributes {dimension_semantics = [#tpu.dimension_semantics<parallel>], iteration_bounds = array<i64: 4>, scalar_prefetch = 0 : i64, scratch_operands = 0 : i64, tpu.core_type = #tpu.core_type<tc>, window_params = [{transform_indices = @transform_0, window_bounds = array<i64: 1, 8, 256>}, {transform_indices = @transform_1, window_bounds = array<i64: 1, 2, 16, 16>}, {pipeline_mode = #tpu.pipeline_mode<synchronous>, transform_indices = @transform_2, window_bounds = array<i64: 128, 8>}, {pipeline_mode = #tpu.pipeline_mode<synchronous>, transform_indices = @transform_3, window_bounds = array<i64: 4, 128, 128>}, {pipeline_mode = #tpu.pipeline_mode<synchronous>, transform_indices = @transform_4, window_bounds = array<i64: 8, 128>}, {pipeline_mode = #tpu.pipeline_mode<synchronous>, transform_indices = @transform_5, window_bounds = array<i64: 5, 16, 16>}, {pipeline_mode = #tpu.pipeline_mode<synchronous>, transform_indices = @transform_6, window_bounds = array<i64: 16, 256>}, {pipeline_mode = #tpu.pipeline_mode<synchronous>, transform_indices = @transform_7, window_bounds = array<i64: 256, 16>}, {transform_indices = @transform_8, window_bounds = array<i64: 1, 1, 256>}, {transform_indices = @transform_9, window_bounds = array<i64: 1, 16, 16>}]} {
    %c0 = arith.constant 0 : index
    %c0_0 = arith.constant 0 : index
    %c0_1 = arith.constant 0 : index
    %0 = vector.load %arg1[%c0, %c0_0, %c0_1] : memref<1x8x256xf32, #tpu.memory_space<vmem>>, vector<1x8x256xf32>
    %1 = vector.shape_cast %0 : vector<1x8x256xf32> to vector<8x256xf32>
    %c0_2 = arith.constant 0 : index
    %c0_3 = arith.constant 0 : index
    %2 = vector.load %arg3[%c0_2, %c0_3] : memref<128x8xf32, #tpu.memory_space<vmem>>, vector<128x8xf32>
    %cst = arith.constant dense<0.000000e+00> : vector<128x256xf32>
    %3 = tpu.matmul %2, %1, %cst {dimension_numbers = #tpu.dot_dimension_numbers<[1], [0], [0], [1], [0, 0, 1, 1], [], []>} : vector<128x8xf32>, vector<8x256xf32>, vector<128x256xf32> -> vector<128x256xf32>
    %4 = math.cos %3 : vector<128x256xf32>
    %5 = arith.truncf %4 : vector<128x256xf32> to vector<128x256xbf16>
    %c0_4 = arith.constant 0 : index
    %c0_5 = arith.constant 0 : index
    %c0_6 = arith.constant 0 : index
    %6 = vector.load %arg4[%c0_4, %c0_5, %c0_6] : memref<4x128x128xbf16, #tpu.memory_space<vmem>>, vector<1x128x128xbf16>
    %7 = vector.shape_cast %6 : vector<1x128x128xbf16> to vector<128x128xbf16>
    %cst_7 = arith.constant dense<0.000000e+00> : vector<128x256xf32>
    %8 = tpu.matmul %7, %5, %cst_7 {dimension_numbers = #tpu.dot_dimension_numbers<[1], [0], [0], [1], [0, 0, 1, 1], [], []>} : vector<128x128xbf16>, vector<128x256xbf16>, vector<128x256xf32> -> vector<128x256xf32>
    %cst_8 = arith.constant 0.000000e+00 : f32
    %9 = vector.broadcast %cst_8 : f32 to vector<128x256xf32>
    %10 = arith.maximumf %8, %9 : vector<128x256xf32>
    %11 = arith.truncf %10 : vector<128x256xf32> to vector<128x256xbf16>
    %c1 = arith.constant 1 : index
    %c0_9 = arith.constant 0 : index
    %c0_10 = arith.constant 0 : index
    %12 = vector.load %arg4[%c1, %c0_9, %c0_10] : memref<4x128x128xbf16, #tpu.memory_space<vmem>>, vector<1x128x128xbf16>
    %13 = vector.shape_cast %12 : vector<1x128x128xbf16> to vector<128x128xbf16>
    %cst_11 = arith.constant dense<0.000000e+00> : vector<128x256xf32>
    %14 = tpu.matmul %13, %11, %cst_11 {dimension_numbers = #tpu.dot_dimension_numbers<[1], [0], [0], [1], [0, 0, 1, 1], [], []>} : vector<128x128xbf16>, vector<128x256xbf16>, vector<128x256xf32> -> vector<128x256xf32>
    %cst_12 = arith.constant 0.000000e+00 : f32
    %15 = vector.broadcast %cst_12 : f32 to vector<128x256xf32>
    %16 = arith.maximumf %14, %15 : vector<128x256xf32>
    %17 = arith.truncf %16 : vector<128x256xf32> to vector<128x256xbf16>
    %c2 = arith.constant 2 : index
    %c0_13 = arith.constant 0 : index
    %c0_14 = arith.constant 0 : index
    %18 = vector.load %arg4[%c2, %c0_13, %c0_14] : memref<4x128x128xbf16, #tpu.memory_space<vmem>>, vector<1x128x128xbf16>
    %19 = vector.shape_cast %18 : vector<1x128x128xbf16> to vector<128x128xbf16>
    %cst_15 = arith.constant dense<0.000000e+00> : vector<128x256xf32>
    %20 = tpu.matmul %19, %17, %cst_15 {dimension_numbers = #tpu.dot_dimension_numbers<[1], [0], [0], [1], [0, 0, 1, 1], [], []>} : vector<128x128xbf16>, vector<128x256xbf16>, vector<128x256xf32> -> vector<128x256xf32>
    %cst_16 = arith.constant 0.000000e+00 : f32
    %21 = vector.broadcast %cst_16 : f32 to vector<128x256xf32>
    %22 = arith.maximumf %20, %21 : vector<128x256xf32>
    %23 = arith.truncf %22 : vector<128x256xf32> to vector<128x256xbf16>
    %c3 = arith.constant 3 : index
    %c0_17 = arith.constant 0 : index
    %c0_18 = arith.constant 0 : index
    %24 = vector.load %arg4[%c3, %c0_17, %c0_18] : memref<4x128x128xbf16, #tpu.memory_space<vmem>>, vector<1x128x128xbf16>
    %25 = vector.shape_cast %24 : vector<1x128x128xbf16> to vector<128x128xbf16>
    %cst_19 = arith.constant dense<0.000000e+00> : vector<128x256xf32>
    %26 = tpu.matmul %25, %23, %cst_19 {dimension_numbers = #tpu.dot_dimension_numbers<[1], [0], [0], [1], [0, 0, 1, 1], [], []>} : vector<128x128xbf16>, vector<128x256xbf16>, vector<128x256xf32> -> vector<128x256xf32>
    %cst_20 = arith.constant 0.000000e+00 : f32
    %27 = vector.broadcast %cst_20 : f32 to vector<128x256xf32>
    %28 = arith.maximumf %26, %27 : vector<128x256xf32>
    %29 = arith.truncf %28 : vector<128x256xf32> to vector<128x256xbf16>
    %c0_21 = arith.constant 0 : index
    %c0_22 = arith.constant 0 : index
    %30 = vector.load %arg5[%c0_21, %c0_22] : memref<8x128xbf16, #tpu.memory_space<vmem>>, vector<8x128xbf16>
    %cst_23 = arith.constant dense<0.000000e+00> : vector<8x256xf32>
    %31 = tpu.matmul %30, %29, %cst_23 {dimension_numbers = #tpu.dot_dimension_numbers<[1], [0], [0], [1], [0, 0, 1, 1], [], []>} : vector<8x128xbf16>, vector<128x256xbf16>, vector<8x256xf32> -> vector<8x256xf32>
    %32 = vector.extract_strided_slice %31 {offsets = [0, 0], sizes = [1, 256], strides = [1, 1]} : vector<8x256xf32> to vector<1x256xf32>
    %c0_24 = arith.constant 0 : index
    %c0_25 = arith.constant 0 : index
    %33 = vector.load %arg7[%c0_24, %c0_25] : memref<16x256xf32, #tpu.memory_space<vmem>>, vector<16x256xf32>
    %34 = vector.broadcast %32 : vector<1x256xf32> to vector<16x256xf32>
    %35 = arith.mulf %33, %34 : vector<16x256xf32>
    %c0_26 = arith.constant 0 : index
    %c0_27 = arith.constant 0 : index
    %36 = vector.load %arg8[%c0_26, %c0_27] : memref<256x16xf32, #tpu.memory_space<vmem>>, vector<256x16xf32>
    %cst_28 = arith.constant dense<0.000000e+00> : vector<16x16xf32>
    %37 = tpu.matmul %35, %36, %cst_28 {dimension_numbers = #tpu.dot_dimension_numbers<[1], [0], [0], [1], [0, 0, 1, 1], [], []>} : vector<16x256xf32>, vector<256x16xf32>, vector<16x16xf32> -> vector<16x16xf32>
    %c0_29 = arith.constant 0 : index
    %c0_30 = arith.constant 0 : index
    %c0_31 = arith.constant 0 : index
    %38 = vector.load %arg10[%c0_29, %c0_30, %c0_31] : memref<1x16x16xf32, #tpu.memory_space<vmem>>, vector<1x16x16xf32>
    %39 = vector.shape_cast %38 : vector<1x16x16xf32> to vector<16x16xf32>
    %40 = vector.shape_cast %37 : vector<16x16xf32> to vector<1x16x16xf32>
    tpu.vector_store %arg10[%c0_29, %c0_30, %c0_31], %40 {strides = array<i32>} : memref<1x16x16xf32, #tpu.memory_space<vmem>>, vector<1x16x16xf32>,
    %c0_32 = arith.constant 0 : index
    %c0_33 = arith.constant 0 : index
    %c0_34 = arith.constant 0 : index
    %c0_35 = arith.constant 0 : index
    %41 = vector.load %arg2[%c0_32, %c0_33, %c0_34, %c0_35] : memref<1x2x16x16xf32, #tpu.memory_space<vmem>>, vector<1x2x16x16xf32>
    %42 = vector.shape_cast %41 : vector<1x2x16x16xf32> to vector<2x16x16xf32>
    %43 = vector.extract_strided_slice %42 {offsets = [0, 0, 0], sizes = [1, 16, 16], strides = [1, 1, 1]} : vector<2x16x16xf32> to vector<1x16x16xf32>
    %44 = vector.shape_cast %43 : vector<1x16x16xf32> to vector<16x16xf32>
    %45 = vector.extract_strided_slice %42 {offsets = [1, 0, 0], sizes = [1, 16, 16], strides = [1, 1, 1]} : vector<2x16x16xf32> to vector<1x16x16xf32>
    %46 = vector.shape_cast %45 : vector<1x16x16xf32> to vector<16x16xf32>
    %c0_36 = arith.constant 0 : index
    %c0_37 = arith.constant 0 : index
    %c0_38 = arith.constant 0 : index
    %47 = vector.load %arg6[%c0_36, %c0_37, %c0_38] : memref<5x16x16xf32, #tpu.memory_space<vmem>>, vector<5x16x16xf32>
    %48 = vector.extract_strided_slice %47 {offsets = [0, 0, 0], sizes = [1, 16, 16], strides = [1, 1, 1]} : vector<5x16x16xf32> to vector<1x16x16xf32>
    %49 = vector.shape_cast %48 : vector<1x16x16xf32> to vector<16x16xf32>
    %50 = vector.extract_strided_slice %47 {offsets = [1, 0, 0], sizes = [1, 16, 16], strides = [1, 1, 1]} : vector<5x16x16xf32> to vector<1x16x16xf32>
    %51 = vector.shape_cast %50 : vector<1x16x16xf32> to vector<16x16xf32>
    %52 = vector.extract_strided_slice %47 {offsets = [2, 0, 0], sizes = [1, 16, 16], strides = [1, 1, 1]} : vector<5x16x16xf32> to vector<1x16x16xf32>
    %53 = vector.shape_cast %52 : vector<1x16x16xf32> to vector<16x16xf32>
    %54 = vector.extract_strided_slice %47 {offsets = [3, 0, 0], sizes = [1, 16, 16], strides = [1, 1, 1]} : vector<5x16x16xf32> to vector<1x16x16xf32>
    %55 = vector.shape_cast %54 : vector<1x16x16xf32> to vector<16x16xf32>
    %56 = vector.extract_strided_slice %47 {offsets = [4, 0, 0], sizes = [1, 16, 16], strides = [1, 1, 1]} : vector<5x16x16xf32> to vector<1x16x16xf32>
    %57 = vector.shape_cast %56 : vector<1x16x16xf32> to vector<16x16xf32>
    %cst_39 = arith.constant 0.000000e+00 : f32
    %58 = vector.broadcast %cst_39 : f32 to vector<16x16xf32>
    %59 = arith.maximumf %37, %58 : vector<16x16xf32>
    %cst_40 = arith.constant 1.000000e+00 : f32
    %60 = vector.broadcast %cst_40 : f32 to vector<16x16xf32>
    %61 = arith.cmpf oeq, %44, %60 : vector<16x16xf32>
    %62 = arith.extui %61 : vector<16x16xi1> to vector<16x16xi32>
    %63 = arith.sitofp %62 : vector<16x16xi32> to vector<16x16xf32>
    %64 = arith.mulf %46, %63 : vector<16x16xf32>
    %cst_41 = arith.constant 0.000000e+00 : f32
    %65 = vector.broadcast %cst_41 : f32 to vector<16x16xf32>
    %66 = arith.cmpf ogt, %46, %65 : vector<16x16xf32>
    %67 = arith.extui %66 : vector<16x16xi1> to vector<16x16xi32>
    %68 = arith.sitofp %67 : vector<16x16xi32> to vector<16x16xf32>
    %69 = arith.mulf %64, %68 : vector<16x16xf32>
    %cst_42 = arith.constant dense<0.000000e+00> : vector<16x16xf32>
    %70 = tpu.matmul %69, %55, %cst_42 {dimension_numbers = #tpu.dot_dimension_numbers<[1], [0], [0], [1], [0, 0, 1, 1], [], []>} : vector<16x16xf32>, vector<16x16xf32>, vector<16x16xf32> -> vector<16x16xf32>
    %cst_43 = arith.constant dense<0.000000e+00> : vector<16x16xf32>
    %71 = tpu.matmul %53, %70, %cst_43 {dimension_numbers = #tpu.dot_dimension_numbers<[1], [0], [0], [1], [0, 0, 1, 1], [], []>} : vector<16x16xf32>, vector<16x16xf32>, vector<16x16xf32> -> vector<16x16xf32>
    %cst_44 = arith.constant 0.000000e+00 : f32
    %72 = vector.broadcast %cst_44 : f32 to vector<16x16xf32>
    %73 = arith.cmpf oeq, %44, %72 : vector<16x16xf32>
    %74 = arith.extui %73 : vector<16x16xi1> to vector<16x16xi32>
    %75 = arith.sitofp %74 : vector<16x16xi32> to vector<16x16xf32>
    %76 = arith.mulf %71, %75 : vector<16x16xf32>
    %77 = arith.addf %59, %76 : vector<16x16xf32>
    %cst_45 = arith.constant 0.000000e+00 : f32
    %78 = vector.broadcast %cst_45 : f32 to vector<16x16xf32>
    %79 = arith.cmpf ogt, %44, %78 : vector<16x16xf32>
    %cst_46 = arith.constant 1.000000e+01 : f32
    %80 = vector.broadcast %cst_46 : f32 to vector<16x16xf32>
    %81 = arith.select %79, %46, %80 : vector<16x16xi1>, vector<16x16xf32>
    %cst_47 = arith.constant dense<0.000000e+00> : vector<16x16xf32>
    %82 = tpu.matmul %81, %51, %cst_47 {dimension_numbers = #tpu.dot_dimension_numbers<[1], [0], [0], [1], [0, 0, 1, 1], [], []>} : vector<16x16xf32>, vector<16x16xf32>, vector<16x16xf32> -> vector<16x16xf32>
    %cst_48 = arith.constant dense<0.000000e+00> : vector<16x16xf32>
    %83 = tpu.matmul %49, %82, %cst_48 {dimension_numbers = #tpu.dot_dimension_numbers<[1], [0], [0], [1], [0, 0, 1, 1], [], []>} : vector<16x16xf32>, vector<16x16xf32>, vector<16x16xf32> -> vector<16x16xf32>
    %84 = arith.subf %83, %81 : vector<16x16xf32>
    %85 = arith.mulf %84, %57 : vector<16x16xf32>
    %86 = arith.addf %85, %77 : vector<16x16xf32>
    %87 = arith.select %79, %46, %86 : vector<16x16xi1>, vector<16x16xf32>
    %cst_49 = arith.constant dense<0.000000e+00> : vector<16x16xf32>
    %88 = tpu.matmul %87, %51, %cst_49 {dimension_numbers = #tpu.dot_dimension_numbers<[1], [0], [0], [1], [0, 0, 1, 1], [], []>} : vector<16x16xf32>, vector<16x16xf32>, vector<16x16xf32> -> vector<16x16xf32>
    %cst_50 = arith.constant dense<0.000000e+00> : vector<16x16xf32>
    %89 = tpu.matmul %49, %88, %cst_50 {dimension_numbers = #tpu.dot_dimension_numbers<[1], [0], [0], [1], [0, 0, 1, 1], [], []>} : vector<16x16xf32>, vector<16x16xf32>, vector<16x16xf32> -> vector<16x16xf32>
    %90 = arith.subf %89, %87 : vector<16x16xf32>
    %91 = arith.mulf %90, %57 : vector<16x16xf32>
    %92 = arith.addf %91, %77 : vector<16x16xf32>
    %93 = arith.select %79, %46, %92 : vector<16x16xi1>, vector<16x16xf32>
    %cst_51 = arith.constant dense<0.000000e+00> : vector<16x16xf32>
    %94 = tpu.matmul %93, %51, %cst_51 {dimension_numbers = #tpu.dot_dimension_numbers<[1], [0], [0], [1], [0, 0, 1, 1], [], []>} : vector<16x16xf32>, vector<16x16xf32>, vector<16x16xf32> -> vector<16x16xf32>
    %cst_52 = arith.constant dense<0.000000e+00> : vector<16x16xf32>
    %95 = tpu.matmul %49, %94, %cst_52 {dimension_numbers = #tpu.dot_dimension_numbers<[1], [0], [0], [1], [0, 0, 1, 1], [], []>} : vector<16x16xf32>, vector<16x16xf32>, vector<16x16xf32> -> vector<16x16xf32>
    %96 = arith.subf %95, %93 : vector<16x16xf32>
    %97 = arith.mulf %96, %57 : vector<16x16xf32>
    %98 = arith.addf %97, %77 : vector<16x16xf32>
    %99 = arith.select %79, %46, %98 : vector<16x16xi1>, vector<16x16xf32>
    %cst_53 = arith.constant dense<0.000000e+00> : vector<16x16xf32>
    %100 = tpu.matmul %99, %51, %cst_53 {dimension_numbers = #tpu.dot_dimension_numbers<[1], [0], [0], [1], [0, 0, 1, 1], [], []>} : vector<16x16xf32>, vector<16x16xf32>, vector<16x16xf32> -> vector<16x16xf32>
    %cst_54 = arith.constant dense<0.000000e+00> : vector<16x16xf32>
    %101 = tpu.matmul %49, %100, %cst_54 {dimension_numbers = #tpu.dot_dimension_numbers<[1], [0], [0], [1], [0, 0, 1, 1], [], []>} : vector<16x16xf32>, vector<16x16xf32>, vector<16x16xf32> -> vector<16x16xf32>
    %102 = arith.subf %101, %99 : vector<16x16xf32>
    %103 = arith.mulf %102, %57 : vector<16x16xf32>
    %104 = arith.addf %103, %77 : vector<16x16xf32>
    %105 = arith.select %79, %46, %104 : vector<16x16xi1>, vector<16x16xf32>
    %cst_55 = arith.constant dense<0.000000e+00> : vector<16x16xf32>
    %106 = tpu.matmul %105, %51, %cst_55 {dimension_numbers = #tpu.dot_dimension_numbers<[1], [0], [0], [1], [0, 0, 1, 1], [], []>} : vector<16x16xf32>, vector<16x16xf32>, vector<16x16xf32> -> vector<16x16xf32>
    %cst_56 = arith.constant dense<0.000000e+00> : vector<16x16xf32>
    %107 = tpu.matmul %49, %106, %cst_56 {dimension_numbers = #tpu.dot_dimension_numbers<[1], [0], [0], [1], [0, 0, 1, 1], [], []>} : vector<16x16xf32>, vector<16x16xf32>, vector<16x16xf32> -> vector<16x16xf32>
    %108 = arith.subf %107, %105 : vector<16x16xf32>
    %109 = arith.mulf %108, %57 : vector<16x16xf32>
    %110 = arith.addf %109, %77 : vector<16x16xf32>
    %111 = arith.select %79, %46, %110 : vector<16x16xi1>, vector<16x16xf32>
    %112 = vector.extract_strided_slice %1 {offsets = [0, 0], sizes = [1, 256], strides = [1, 1]} : vector<8x256xf32> to vector<1x256xf32>
    %113 = vector.extract_strided_slice %1 {offsets = [1, 0], sizes = [1, 256], strides = [1, 1]} : vector<8x256xf32> to vector<1x256xf32>
    %cst_57 = arith.constant 1.000000e+00 : f32
    %114 = vector.broadcast %cst_57 : f32 to vector<1x256xf32>
    %115 = arith.addf %112, %114 : vector<1x256xf32>
    %cst_58 = arith.constant 7.500000e+00 : f32
    %116 = vector.broadcast %cst_58 : f32 to vector<1x256xf32>
    %117 = arith.mulf %115, %116 : vector<1x256xf32>
    %cst_59 = arith.constant 0.000000e+00 : f32
    %cst_60 = arith.constant 1.500000e+01 : f32
    %118 = vector.broadcast %cst_59 : f32 to vector<1x256xf32>
    %119 = arith.maximumf %118, %117 : vector<1x256xf32>
    %120 = vector.broadcast %cst_60 : f32 to vector<1x256xf32>
    %121 = arith.minimumf %120, %119 : vector<1x256xf32>
    %cst_61 = arith.constant 1.000000e+00 : f32
    %122 = vector.broadcast %cst_61 : f32 to vector<1x256xf32>
    %123 = arith.addf %113, %122 : vector<1x256xf32>
    %cst_62 = arith.constant 7.500000e+00 : f32
    %124 = vector.broadcast %cst_62 : f32 to vector<1x256xf32>
    %125 = arith.mulf %123, %124 : vector<1x256xf32>
    %cst_63 = arith.constant 0.000000e+00 : f32
    %cst_64 = arith.constant 1.500000e+01 : f32
    %126 = vector.broadcast %cst_63 : f32 to vector<1x256xf32>
    %127 = arith.maximumf %126, %125 : vector<1x256xf32>
    %128 = vector.broadcast %cst_64 : f32 to vector<1x256xf32>
    %129 = arith.minimumf %128, %127 : vector<1x256xf32>
    %130 = math.floor %121 : vector<1x256xf32>
    %131 = math.floor %129 : vector<1x256xf32>
    %132 = arith.subf %121, %130 : vector<1x256xf32>
    %133 = arith.subf %129, %131 : vector<1x256xf32>
    %134 = arith.fptosi %130 : vector<1x256xf32> to vector<1x256xi32>
    %135 = arith.fptosi %131 : vector<1x256xf32> to vector<1x256xi32>
    %c1_i32 = arith.constant 1 : i32
    %136 = vector.broadcast %c1_i32 : i32 to vector<1x256xi32>
    %137 = arith.addi %134, %136 : vector<1x256xi32>
    %c15_i32 = arith.constant 15 : i32
    %138 = vector.broadcast %c15_i32 : i32 to vector<1x256xi32>
    %139 = arith.minsi %137, %138 : vector<1x256xi32>
    %c1_i32_65 = arith.constant 1 : i32
    %140 = vector.broadcast %c1_i32_65 : i32 to vector<1x256xi32>
    %141 = arith.addi %135, %140 : vector<1x256xi32>
    %c15_i32_66 = arith.constant 15 : i32
    %142 = vector.broadcast %c15_i32_66 : i32 to vector<1x256xi32>
    %143 = arith.minsi %141, %142 : vector<1x256xi32>
    %144 = tpu.iota {dimensions = array<i32: 0>} : vector<16x256xi32>
    %145 = tpu.iota {dimensions = array<i32: 0>} : vector<16x256xi32>
    %146 = vector.broadcast %134 : vector<1x256xi32> to vector<16x256xi32>
    %147 = arith.cmpi eq, %144, %146 : vector<16x256xi32>
    %cst_67 = arith.constant 1.000000e+00 : f32
    %148 = vector.broadcast %cst_67 : f32 to vector<1x256xf32>
    %149 = arith.subf %148, %132 : vector<1x256xf32>
    %cst_68 = arith.constant 0.000000e+00 : f32
    %150 = vector.shape_cast %149 : vector<1x256xf32> to vector<1x256xf32>
    %151 = vector.broadcast %150 : vector<1x256xf32> to vector<16x256xf32>
    %152 = vector.broadcast %cst_68 : f32 to vector<16x256xf32>
    %153 = arith.select %147, %151, %152 : vector<16x256xi1>, vector<16x256xf32>
    %154 = vector.broadcast %139 : vector<1x256xi32> to vector<16x256xi32>
    %155 = arith.cmpi eq, %144, %154 : vector<16x256xi32>
    %cst_69 = arith.constant 0.000000e+00 : f32
    %156 = vector.shape_cast %132 : vector<1x256xf32> to vector<1x256xf32>
    %157 = vector.broadcast %156 : vector<1x256xf32> to vector<16x256xf32>
    %158 = vector.broadcast %cst_69 : f32 to vector<16x256xf32>
    %159 = arith.select %155, %157, %158 : vector<16x256xi1>, vector<16x256xf32>
    %160 = arith.addf %153, %159 : vector<16x256xf32>
    %161 = vector.broadcast %135 : vector<1x256xi32> to vector<16x256xi32>
    %162 = arith.cmpi eq, %145, %161 : vector<16x256xi32>
    %cst_70 = arith.constant 1.000000e+00 : f32
    %163 = vector.broadcast %cst_70 : f32 to vector<1x256xf32>
    %164 = arith.subf %163, %133 : vector<1x256xf32>
    %cst_71 = arith.constant 0.000000e+00 : f32
    %165 = vector.shape_cast %164 : vector<1x256xf32> to vector<1x256xf32>
    %166 = vector.broadcast %165 : vector<1x256xf32> to vector<16x256xf32>
    %167 = vector.broadcast %cst_71 : f32 to vector<16x256xf32>
    %168 = arith.select %162, %166, %167 : vector<16x256xi1>, vector<16x256xf32>
    %169 = vector.broadcast %143 : vector<1x256xi32> to vector<16x256xi32>
    %170 = arith.cmpi eq, %145, %169 : vector<16x256xi32>
    %cst_72 = arith.constant 0.000000e+00 : f32
    %171 = vector.shape_cast %133 : vector<1x256xf32> to vector<1x256xf32>
    %172 = vector.broadcast %171 : vector<1x256xf32> to vector<16x256xf32>
    %173 = vector.broadcast %cst_72 : f32 to vector<16x256xf32>
    %174 = arith.select %170, %172, %173 : vector<16x256xi1>, vector<16x256xf32>
    %175 = arith.addf %168, %174 : vector<16x256xf32>
    %cst_73 = arith.constant dense<0.000000e+00> : vector<16x256xf32>
    %176 = tpu.matmul %111, %160, %cst_73 {dimension_numbers = #tpu.dot_dimension_numbers<[1], [0], [0], [1], [0, 0, 1, 1], [], []>} : vector<16x16xf32>, vector<16x256xf32>, vector<16x256xf32> -> vector<16x256xf32>
    %177 = arith.mulf %175, %176 : vector<16x256xf32>
    %cst_74 = arith.constant dense<0.000000e+00> : vector<256xf32>
    %178 = vector.multi_reduction <add>, %177, %cst_74 [0] : vector<16x256xf32> to vector<256xf32>
    %179 = vector.shape_cast %178 : vector<256xf32> to vector<1x256xf32>
    %c0_75 = arith.constant 0 : index
    %c0_76 = arith.constant 0 : index
    %c0_77 = arith.constant 0 : index
    %180 = vector.load %arg9[%c0_75, %c0_76, %c0_77] : memref<1x1x256xf32, #tpu.memory_space<vmem>>, vector<1x1x256xf32>
    %181 = vector.shape_cast %180 : vector<1x1x256xf32> to vector<1x256xf32>
    %182 = vector.shape_cast %179 : vector<1x256xf32> to vector<1x1x256xf32>
    tpu.vector_store %arg9[%c0_75, %c0_76, %c0_77], %182 {strides = array<i32>} : memref<1x1x256xf32, #tpu.memory_space<vmem>>, vector<1x1x256xf32>,
    return
  }
  func.func @transform_0(%arg0: i32) -> (i32, i32, i32) {
    %c0_i32 = arith.constant 0 : i32
    %c0_i32_0 = arith.constant 0 : i32
    %c0_i32_1 = arith.constant 0 : i32
    return %arg0, %c0_i32, %c0_i32_0 : i32, i32, i32
  }
  func.func @transform_1(%arg0: i32) -> (i32, i32, i32, i32) {
    %c0_i32 = arith.constant 0 : i32
    %c0_i32_0 = arith.constant 0 : i32
    %c0_i32_1 = arith.constant 0 : i32
    %c0_i32_2 = arith.constant 0 : i32
    return %arg0, %c0_i32, %c0_i32_0, %c0_i32_1 : i32, i32, i32, i32
  }
  func.func @transform_2(%arg0: i32) -> (i32, i32) {
    %c0_i32 = arith.constant 0 : i32
    %c0_i32_0 = arith.constant 0 : i32
    %c0_i32_1 = arith.constant 0 : i32
    return %c0_i32, %c0_i32_0 : i32, i32
  }
  func.func @transform_3(%arg0: i32) -> (i32, i32, i32) {
    %c0_i32 = arith.constant 0 : i32
    %c0_i32_0 = arith.constant 0 : i32
    %c0_i32_1 = arith.constant 0 : i32
    %c0_i32_2 = arith.constant 0 : i32
    return %c0_i32, %c0_i32_0, %c0_i32_1 : i32, i32, i32
  }
  func.func @transform_4(%arg0: i32) -> (i32, i32) {
    %c0_i32 = arith.constant 0 : i32
    %c0_i32_0 = arith.constant 0 : i32
    %c0_i32_1 = arith.constant 0 : i32
    return %c0_i32, %c0_i32_0 : i32, i32
  }
  func.func @transform_5(%arg0: i32) -> (i32, i32, i32) {
    %c0_i32 = arith.constant 0 : i32
    %c0_i32_0 = arith.constant 0 : i32
    %c0_i32_1 = arith.constant 0 : i32
    %c0_i32_2 = arith.constant 0 : i32
    return %c0_i32, %c0_i32_0, %c0_i32_1 : i32, i32, i32
  }
  func.func @transform_6(%arg0: i32) -> (i32, i32) {
    %c0_i32 = arith.constant 0 : i32
    %c0_i32_0 = arith.constant 0 : i32
    %c0_i32_1 = arith.constant 0 : i32
    return %c0_i32, %c0_i32_0 : i32, i32
  }
  func.func @transform_7(%arg0: i32) -> (i32, i32) {
    %c0_i32 = arith.constant 0 : i32
    %c0_i32_0 = arith.constant 0 : i32
    %c0_i32_1 = arith.constant 0 : i32
    return %c0_i32, %c0_i32_0 : i32, i32
  }
  func.func @transform_8(%arg0: i32) -> (i32, i32, i32) {
    %c0_i32 = arith.constant 0 : i32
    %c0_i32_0 = arith.constant 0 : i32
    %c0_i32_1 = arith.constant 0 : i32
    return %arg0, %c0_i32, %c0_i32_0 : i32, i32, i32
  }
  func.func @transform_9(%arg0: i32) -> (i32, i32, i32) {
    %c0_i32 = arith.constant 0 : i32
    %c0_i32_0 = arith.constant 0 : i32
    %c0_i32_1 = arith.constant 0 : i32
    return %arg0, %c0_i32, %c0_i32_0 : i32, i32, i32
  }
}

</mosaic_0001>

<llo_original>
// kernel: laplace_cost_net_forward.1
$region0: #{laplace_cost_net_forward.1}
  #allocation0 [shape = 'u32[]', space=smem, size = 0x4, offset = 0x4, fixed_abs, tag = 'smem constant byte address 0x4 - core index']
  #allocation1 [shape = 'u32[144,128]{1,0:T(1,128)}', space=vmem, size = 0x12000, scoped, tag = 'internal scratch']
  %s0 = inlined_call_operand.vmem [shape: f32[4,8,256], index: 0, kind: input, shape index: {}]
  %s1 = inlined_call_operand.vmem [shape: f32[4,2,16,16], index: 1, kind: input, shape index: {}]
  %s2 = inlined_call_operand.vmem [shape: f32[128,8], index: 2, kind: input, shape index: {}]
  %s3 = inlined_call_operand.vmem [shape: bf16[4,128,128], index: 3, kind: input, shape index: {}]
  %s4 = inlined_call_operand.vmem [shape: bf16[8,128], index: 4, kind: input, shape index: {}]
  %s5 = inlined_call_operand.vmem [shape: f32[5,16,16], index: 5, kind: input, shape index: {}]
  %s6 = inlined_call_operand.vmem [shape: f32[16,256], index: 6, kind: input, shape index: {}]
  %s7 = inlined_call_operand.vmem [shape: f32[256,16], index: 7, kind: input, shape index: {}]
  %s8 = inlined_call_operand.vmem [shape: f32[4,1,256], index: 8, kind: output, shape index: {0}]
  %s9 = inlined_call_operand.hbm [shape: f32[4,16,16], index: 9, kind: output, shape index: {1}]
  %10 = xla_tuple %s8, %s9
  %s11 = sld [smem:[#allocation0]]
  $region73: #{laplace_cost_net_forward.1} parent=0
    _
  %s13 = ssub.s32 1, %s11
  %s14 = scalar_select 0, %s13, %s11
  $region1: #{laplace_cost_net_forward.1} parent=0
    #allocation2 [shape = 'u8[16384]{0}', space=vmem, size = 0x4000, scoped, tag = 'output window, operand 1']
    #allocation3 [shape = 's32[2]{0}', space=sflag, size = 0x8, scoped, tag = 'scoped memory for laplace_cost_net_forward.1']
    %15 = vsyncpa [#allocation3], 0
    %s16 = scalar_lea.sflag [#allocation3], 1
    %17 = vsyncpa %s16, 0
    loop: start=0, step=1, limit=6
    $region2: #{laplace_cost_net_forward.1} parent=1 // loop_pre_header
      _
    $region3: #{laplace_cost_net_forward.1} parent=1 // loop_header
      %s19 = sphi 0, %s23
      %p20 = scmp.ge.s32.totalorder %s19, 6
      %s29 = sphi 0, %s31
      %s32 = sphi 0, %s29
      %s33 = sphi 0, %s32
      %s49 = sphi 0, %s33
      %s55 = sphi 0, %s57
      %s58 = sphi 0, %s55
      %s59 = sphi 0, %s58
      %s75 = sphi 0, %s59
      %s79 = sphi 0, %s79
      %s81 = sphi 0, %s79
      %s82 = sphi 0, %s81
      %s96 = sphi 0, %s82
      %s100 = sphi 0, %s100
      %s102 = sphi 0, %s100
      %s103 = sphi 0, %s102
      %s117 = sphi 0, %s103
      %s121 = sphi 0, %s121
      %s123 = sphi 0, %s121
      %s124 = sphi 0, %s123
      %s138 = sphi 0, %s124
      %s142 = sphi 0, %s142
      %s144 = sphi 0, %s142
      %s145 = sphi 0, %s144
      %s159 = sphi 0, %s145
      %s163 = sphi 0, %s163
      %s165 = sphi 0, %s163
      %s166 = sphi 0, %s165
      %s180 = sphi 0, %s166
      %s184 = sphi 0, %s184
      %s186 = sphi 0, %s184
      %s187 = sphi 0, %s186
      %s201 = sphi 0, %s187
      %s207 = sphi 0, %s209
      %s210 = sphi 0, %s207
      %s211 = sphi 0, %s210
      %s227 = sphi 0, %s211
      %s233 = sphi 0, %s235
      %s236 = sphi 0, %s233
      %s237 = sphi 0, %s236
      %s253 = sphi 0, %s237
    $region4: #{laplace_cost_net_forward.1} parent=1 // loop_header_branch
      %22 = sbr.rel (%p20) target = $region8
    $region5: #{laplace_cost_net_forward.1} parent=1 // loop_body
      %s24 = ssub.s32 %s19, 1
      %s25 = ssub.s32 %s19, 2
      %s26 = sadd.s32 %s19, 1
      %s27 = ssub.s32 %s19, %s26
      %p28 = scmp.eq.s32.totalorder %s27, 0
      %s30 = sadd.s32 %s29, 1
      %s31 = scalar_select %p28, %s29, %s30
      %p34 = pneg %p28
      %p35 = scmp.eq.s32.totalorder %s19, 3
      %p36 = por %p34, %p35
      %p37 = scmp.ne.s32.totalorder %s29, %s32
      %p38 = scmp.eq.s32.totalorder %s19, 0
      %p39 = por %p37, %p38
      %p40 = scmp.ne.s32.totalorder %s29, %s32
      %p41 = scmp.eq.s32.totalorder %s24, 3
      %p42 = por %p40, %p41
      %p43 = scmp.ne.s32.totalorder %s32, %s33
      %p44 = scmp.eq.s32.totalorder %s24, 0
      %p45 = por %p43, %p44
      %p46 = scmp.ne.s32.totalorder %s32, %s33
      %p47 = scmp.eq.s32.totalorder %s25, 3
      %p48 = por %p46, %p47
      %p50 = scmp.ne.s32.totalorder %s33, %s49
      %p51 = scmp.eq.s32.totalorder %s25, 0
      %p52 = por %p50, %p51
      %s53 = ssub.s32 %s19, %s26
      %p54 = scmp.eq.s32.totalorder %s53, 0
      %s56 = sadd.s32 %s55, 1
      %s57 = scalar_select %p54, %s55, %s56
      %p60 = pneg %p54
      %p61 = scmp.eq.s32.totalorder %s19, 3
      %p62 = por %p60, %p61
      %p63 = scmp.ne.s32.totalorder %s55, %s58
      %p64 = scmp.eq.s32.totalorder %s19, 0
      %p65 = por %p63, %p64
      %p66 = scmp.ne.s32.totalorder %s55, %s58
      %p67 = scmp.eq.s32.totalorder %s24, 3
      %p68 = por %p66, %p67
      %p69 = scmp.ne.s32.totalorder %s58, %s59
      %p70 = scmp.eq.s32.totalorder %s24, 0
      %p71 = por %p69, %p70
      %p72 = scmp.ne.s32.totalorder %s58, %s59
      %p73 = scmp.eq.s32.totalorder %s25, 3
      %p74 = por %p72, %p73
      %p76 = scmp.ne.s32.totalorder %s59, %s75
      %p77 = scmp.eq.s32.totalorder %s25, 0
      %p78 = por %p76, %p77
      %s80 = sadd.s32 %s79, 1
      %p83 = scmp.eq.s32.totalorder %s19, 3
      %p84 = scmp.ne.s32.totalorder %s79, %s81
      %p85 = scmp.eq.s32.totalorder %s19, 0
      %p86 = por %p84, %p85
      %p87 = scmp.ne.s32.totalorder %s79, %s81
      %p88 = scmp.eq.s32.totalorder %s24, 3
      %p89 = por %p87, %p88
      %p90 = scmp.ne.s32.totalorder %s81, %s82
      %p91 = scmp.eq.s32.totalorder %s24, 0
      %p92 = por %p90, %p91
      %p93 = scmp.ne.s32.totalorder %s81, %s82
      %p94 = scmp.eq.s32.totalorder %s25, 3
      %p95 = por %p93, %p94
      %p97 = scmp.ne.s32.totalorder %s82, %s96
      %p98 = scmp.eq.s32.totalorder %s25, 0
      %p99 = por %p97, %p98
      %s101 = sadd.s32 %s100, 1
      %p104 = scmp.eq.s32.totalorder %s19, 3
      %p105 = scmp.ne.s32.totalorder %s100, %s102
      %p106 = scmp.eq.s32.totalorder %s19, 0
      %p107 = por %p105, %p106
      %p108 = scmp.ne.s32.totalorder %s100, %s102
      %p109 = scmp.eq.s32.totalorder %s24, 3
      %p110 = por %p108, %p109
      %p111 = scmp.ne.s32.totalorder %s102, %s103
      %p112 = scmp.eq.s32.totalorder %s24, 0
      %p113 = por %p111, %p112
      %p114 = scmp.ne.s32.totalorder %s102, %s103
      %p115 = scmp.eq.s32.totalorder %s25, 3
      %p116 = por %p114, %p115
      %p118 = scmp.ne.s32.totalorder %s103, %s117
      %p119 = scmp.eq.s32.totalorder %s25, 0
      %p120 = por %p118, %p119
      %s122 = sadd.s32 %s121, 1
      %p125 = scmp.eq.s32.totalorder %s19, 3
      %p126 = scmp.ne.s32.totalorder %s121, %s123
      %p127 = scmp.eq.s32.totalorder %s19, 0
      %p128 = por %p126, %p127
      %p129 = scmp.ne.s32.totalorder %s121, %s123
      %p130 = scmp.eq.s32.totalorder %s24, 3
      %p131 = por %p129, %p130
      %p132 = scmp.ne.s32.totalorder %s123, %s124
      %p133 = scmp.eq.s32.totalorder %s24, 0
      %p134 = por %p132, %p133
      %p135 = scmp.ne.s32.totalorder %s123, %s124
      %p136 = scmp.eq.s32.totalorder %s25, 3
      %p137 = por %p135, %p136
      %p139 = scmp.ne.s32.totalorder %s124, %s138
      %p140 = scmp.eq.s32.totalorder %s25, 0
      %p141 = por %p139, %p140
      %s143 = sadd.s32 %s142, 1
      %p146 = scmp.eq.s32.totalorder %s19, 3
      %p147 = scmp.ne.s32.totalorder %s142, %s144
      %p148 = scmp.eq.s32.totalorder %s19, 0
      %p149 = por %p147, %p148
      %p150 = scmp.ne.s32.totalorder %s142, %s144
      %p151 = scmp.eq.s32.totalorder %s24, 3
      %p152 = por %p150, %p151
      %p153 = scmp.ne.s32.totalorder %s144, %s145
      %p154 = scmp.eq.s32.totalorder %s24, 0
      %p155 = por %p153, %p154
      %p156 = scmp.ne.s32.totalorder %s144, %s145
      %p157 = scmp.eq.s32.totalorder %s25, 3
      %p158 = por %p156, %p157
      %p160 = scmp.ne.s32.totalorder %s145, %s159
      %p161 = scmp.eq.s32.totalorder %s25, 0
      %p162 = por %p160, %p161
      %s164 = sadd.s32 %s163, 1
      %p167 = scmp.eq.s32.totalorder %s19, 3
      %p168 = scmp.ne.s32.totalorder %s163, %s165
      %p169 = scmp.eq.s32.totalorder %s19, 0
      %p170 = por %p168, %p169
      %p171 = scmp.ne.s32.totalorder %s163, %s165
      %p172 = scmp.eq.s32.totalorder %s24, 3
      %p173 = por %p171, %p172
      %p174 = scmp.ne.s32.totalorder %s165, %s166
      %p175 = scmp.eq.s32.totalorder %s24, 0
      %p176 = por %p174, %p175
      %p177 = scmp.ne.s32.totalorder %s165, %s166
      %p178 = scmp.eq.s32.totalorder %s25, 3
      %p179 = por %p177, %p178
      %p181 = scmp.ne.s32.totalorder %s166, %s180
      %p182 = scmp.eq.s32.totalorder %s25, 0
      %p183 = por %p181, %p182
      %s185 = sadd.s32 %s184, 1
      %p188 = scmp.eq.s32.totalorder %s19, 3
      %p189 = scmp.ne.s32.totalorder %s184, %s186
      %p190 = scmp.eq.s32.totalorder %s19, 0
      %p191 = por %p189, %p190
      %p192 = scmp.ne.s32.totalorder %s184, %s186
      %p193 = scmp.eq.s32.totalorder %s24, 3
      %p194 = por %p192, %p193
      %p195 = scmp.ne.s32.totalorder %s186, %s187
      %p196 = scmp.eq.s32.totalorder %s24, 0
      %p197 = por %p195, %p196
      %p198 = scmp.ne.s32.totalorder %s186, %s187
      %p199 = scmp.eq.s32.totalorder %s25, 3
      %p200 = por %p198, %p199
      %p202 = scmp.ne.s32.totalorder %s187, %s201
      %p203 = scmp.eq.s32.totalorder %s25, 0
      %p204 = por %p202, %p203
      %s205 = ssub.s32 %s19, %s26
      %p206 = scmp.eq.s32.totalorder %s205, 0
      %s208 = sadd.s32 %s207, 1
      %s209 = scalar_select %p206, %s207, %s208
      %p212 = pneg %p206
      %p213 = scmp.eq.s32.totalorder %s19, 3
      %p214 = por %p212, %p213
      %p215 = scmp.ne.s32.totalorder %s207, %s210
      %p216 = scmp.eq.s32.totalorder %s19, 0
      %p217 = por %p215, %p216
      %p218 = scmp.ne.s32.totalorder %s207, %s210
      %p219 = scmp.eq.s32.totalorder %s24, 3
      %p220 = por %p218, %p219
      %p221 = scmp.ne.s32.totalorder %s210, %s211
      %p222 = scmp.eq.s32.totalorder %s24, 0
      %p223 = por %p221, %p222
      %p224 = scmp.ne.s32.totalorder %s210, %s211
      %p225 = scmp.eq.s32.totalorder %s25, 3
      %p226 = por %p224, %p225
      %p228 = scmp.ne.s32.totalorder %s211, %s227
      %p229 = scmp.eq.s32.totalorder %s25, 0
      %p230 = por %p228, %p229
      %s231 = ssub.s32 %s19, %s26
      %p232 = scmp.eq.s32.totalorder %s231, 0
      %s234 = sadd.s32 %s233, 1
      %s235 = scalar_select %p232, %s233, %s234
      %p238 = pneg %p232
      %p239 = scmp.eq.s32.totalorder %s19, 3
      %p240 = por %p238, %p239
      %p241 = scmp.ne.s32.totalorder %s233, %s236
      %p242 = scmp.eq.s32.totalorder %s19, 0
      %p243 = por %p241, %p242
      %p244 = scmp.ne.s32.totalorder %s233, %s236
      %p245 = scmp.eq.s32.totalorder %s24, 3
      %p246 = por %p244, %p245
      %p247 = scmp.ne.s32.totalorder %s236, %s237
      %p248 = scmp.eq.s32.totalorder %s24, 0
      %p249 = por %p247, %p248
      %p250 = scmp.ne.s32.totalorder %s236, %s237
      %p251 = scmp.eq.s32.totalorder %s25, 3
      %p252 = por %p250, %p251
      %p254 = scmp.ne.s32.totalorder %s237, %s253
      %p255 = scmp.eq.s32.totalorder %s25, 0
      %p256 = por %p254, %p255
      %p257 = scmp.le.s32.totalorder 1, %s19
      %p258 = scmp.lt.s32.totalorder %s19, 5
      %p259 = pnand %p257, %p258
      %p260 = pneg %p259
      // Predicated region
      $region9: #{laplace_cost_net_forward.1} parent=5 // pred_check
        _
      $region10: #{laplace_cost_net_forward.1} parent=5 // pred_check_branch
        %262 = sbr.rel (%p259) target = $region12
      $region11: #{laplace_cost_net_forward.1} parent=5 // pred_region
        %s263 = ssub.s32 %s19, 1
        // Predicated region
        $region13: #{laplace_cost_net_forward.1} parent=11 // pred_check
          %p264 = pneg %p92
        $region14: #{laplace_cost_net_forward.1} parent=11 // pred_check_branch
          %266 = sbr.rel (%p264) target = $region16
        $region15: #{laplace_cost_net_forward.1} parent=11 // pred_region
          _
        $region16: #{laplace_cost_net_forward.1} parent=11 // pred_fallthru
          _
        // Predicated region
        $region17: #{laplace_cost_net_forward.1} parent=11 // pred_check
          %p267 = pneg %p113
        $region18: #{laplace_cost_net_forward.1} parent=11 // pred_check_branch
          %269 = sbr.rel (%p267) target = $region20
        $region19: #{laplace_cost_net_forward.1} parent=11 // pred_region
          _
        $region20: #{laplace_cost_net_forward.1} parent=11 // pred_fallthru
          _
        // Predicated region
        $region21: #{laplace_cost_net_forward.1} parent=11 // pred_check
          %p270 = pneg %p134
        $region22: #{laplace_cost_net_forward.1} parent=11 // pred_check_branch
          %272 = sbr.rel (%p270) target = $region24
        $region23: #{laplace_cost_net_forward.1} parent=11 // pred_region
          _
        $region24: #{laplace_cost_net_forward.1} parent=11 // pred_fallthru
          _
        // Predicated region
        $region25: #{laplace_cost_net_forward.1} parent=11 // pred_check
          %p273 = pneg %p155
        $region26: #{laplace_cost_net_forward.1} parent=11 // pred_check_branch
          %275 = sbr.rel (%p273) target = $region28
        $region27: #{laplace_cost_net_forward.1} parent=11 // pred_region
          _
        $region28: #{laplace_cost_net_forward.1} parent=11 // pred_fallthru
          _
        // Predicated region
        $region29: #{laplace_cost_net_forward.1} parent=11 // pred_check
          %p276 = pneg %p176
        $region30: #{laplace_cost_net_forward.1} parent=11 // pred_check_branch
          %278 = sbr.rel (%p276) target = $region32
        $region31: #{laplace_cost_net_forward.1} parent=11 // pred_region
          _
        $region32: #{laplace_cost_net_forward.1} parent=11 // pred_fallthru
          _
        // Predicated region
        $region33: #{laplace_cost_net_forward.1} parent=11 // pred_check
          %p279 = pneg %p197
        $region34: #{laplace_cost_net_forward.1} parent=11 // pred_check_branch
          %281 = sbr.rel (%p279) target = $region36
        $region35: #{laplace_cost_net_forward.1} parent=11 // pred_region
          _
        $region36: #{laplace_cost_net_forward.1} parent=11 // pred_fallthru
          _
      $region12: #{laplace_cost_net_forward.1} parent=5 // pred_fallthru
        _
      %p282 = scmp.lt.s32.totalorder %s19, 4
      // Predicated region
      $region37: #{laplace_cost_net_forward.1} parent=5 // pred_check
        %p283 = pneg %p282
      $region38: #{laplace_cost_net_forward.1} parent=5 // pred_check_branch
        %285 = sbr.rel (%p283) target = $region40
      $region39: #{laplace_cost_net_forward.1} parent=5 // pred_region
        // Predicated region
        $region41: #{laplace_cost_net_forward.1} parent=39 // pred_check
          %p286 = pneg %p39
        $region42: #{laplace_cost_net_forward.1} parent=39 // pred_check_branch
          %288 = sbr.rel (%p286) target = $region44
        $region43: #{laplace_cost_net_forward.1} parent=39 // pred_region
          %p289 = scmp.lt.s32.totalorder %s19, 3
          %s290 = scalar_select %p289, %s19, 3
          %s291 = smul.addr %s290, 2
          %s292 = smul.addr %s291, 8
          %s293 = scalar_lea.vmem %s0, %s292
        $region44: #{laplace_cost_net_forward.1} parent=39 // pred_fallthru
          _
        // Predicated region
        $region45: #{laplace_cost_net_forward.1} parent=39 // pred_check
          %p294 = pneg %p65
        $region46: #{laplace_cost_net_forward.1} parent=39 // pred_check_branch
          %296 = sbr.rel (%p294) target = $region48
        $region47: #{laplace_cost_net_forward.1} parent=39 // pred_region
          %p297 = scmp.lt.s32.totalorder %s19, 3
          %s298 = scalar_select %p297, %s19, 3
          %s299 = smul.addr %s298, 4
          %s300 = smul.addr %s299, 8
          %s301 = scalar_lea.vmem %s1, %s300
        $region48: #{laplace_cost_net_forward.1} parent=39 // pred_fallthru
          _
      $region40: #{laplace_cost_net_forward.1} parent=5 // pred_fallthru
        _
      %p302 = scmp.le.s32.totalorder 1, %s19
      %p303 = scmp.lt.s32.totalorder %s19, 5
      %p304 = pnand %p302, %p303
      %p305 = pneg %p304
      // Predicated region
      $region49: #{laplace_cost_net_forward.1} parent=5 // pred_check
        _
      $region50: #{laplace_cost_net_forward.1} parent=5 // pred_check_branch
        %307 = sbr.rel (%p304) target = $region52
      $region51: #{laplace_cost_net_forward.1} parent=5 // pred_region
        %s308 = ssub.s32 %s19, 1
        %p309 = scmp.lt.s32.totalorder %s24, 3
        %s310 = scalar_select %p309, %s24, 3
        %s311 = smul.addr %s310, 2
        %s312 = smul.addr %s311, 8
        %s313 = scalar_lea.vmem %s0, %s312
        %p314 = pneg %p45
        %p315 = pneg %p42
        %p316 = scmp.lt.s32.totalorder %s24, 3
        %s317 = scalar_select %p316, %s24, 3
        %s318 = smul.addr %s317, 4
        %s319 = smul.addr %s318, 8
        %s320 = scalar_lea.vmem %s1, %s319
        %p321 = pneg %p71
        %p322 = pneg %p68
        %p323 = pneg %p92
        %p324 = pneg %p89
        %p325 = pneg %p113
        %p326 = pneg %p110
        %p327 = pneg %p134
        %p328 = pneg %p131
        %p329 = pneg %p155
        %p330 = pneg %p152
        %p331 = pneg %p176
        %p332 = pneg %p173
        %p333 = pneg %p197
        %p334 = pneg %p194
        %p335 = pneg %p223
        %p336 = pneg %p220
        %p337 = scmp.lt.s32.totalorder %s24, 3
        %s338 = scalar_select %p337, %s24, 3
        %s339 = smul.addr %s338, 2
        %s340 = scalar_lea.vmem %s8, %s339
        %p341 = pneg %p249
        %p342 = pneg %p246
        %s343 = sand.u32 %s236, 1
        %s344 = scalar_lea.sflag [#allocation3], %s343
        %s345 = sand.u32 %s236, 1
        %s346 = smul.addr %s345, 16
        %s347 = scalar_lea.vmem [#allocation2], %s346
        %p348 = scmp.lt.s32.totalorder %s24, 3
        %s349 = scalar_select %p348, %s24, 3
        %s350 = smul.addr %s349, 2
        %s351 = smul.addr %s350, 8
        %s352 = scalar_lea.vmem %s0, %s351
        %p353 = scmp.lt.s32.totalorder %s24, 3
        %s354 = scalar_select %p353, %s24, 3
        %s355 = smul.addr %s354, 4
        %s356 = smul.addr %s355, 8
        %s357 = scalar_lea.vmem %s1, %s356
        %p358 = scmp.lt.s32.totalorder %s24, 3
        %s359 = scalar_select %p358, %s24, 3
        %s360 = smul.addr %s359, 2
        %s361 = scalar_lea.vmem %s8, %s360
        %v363 = vld [vmem:[%s352] sm:$0xff]
        %v364 = vld [vmem:[%s352 + $0x8] sm:$0xff]
        %v365 = vld [vmem:[%s2] sm:$0xff]
        %v366 = vld [vmem:[%s2 + $0x8] sm:$0xff]
        %v367 = vld [vmem:[%s2 + $0x10] sm:$0xff]
        %v368 = vld [vmem:[%s2 + $0x18] sm:$0xff]
        %v369 = vld [vmem:[%s2 + $0x20] sm:$0xff]
        %v370 = vld [vmem:[%s2 + $0x28] sm:$0xff]
        %v371 = vld [vmem:[%s2 + $0x30] sm:$0xff]
        %v372 = vld [vmem:[%s2 + $0x38] sm:$0xff]
        %v373 = vld [vmem:[%s2 + $0x40] sm:$0xff]
        %v374 = vld [vmem:[%s2 + $0x48] sm:$0xff]
        %v375 = vld [vmem:[%s2 + $0x50] sm:$0xff]
        %v376 = vld [vmem:[%s2 + $0x58] sm:$0xff]
        %v377 = vld [vmem:[%s2 + $0x60] sm:$0xff]
        %v378 = vld [vmem:[%s2 + $0x68] sm:$0xff]
        %v379 = vld [vmem:[%s2 + $0x70] sm:$0xff]
        %v380 = vld [vmem:[%s2 + $0x78] sm:$0xff]
        %vm381 = vcmask 64512
        %v383 = vsel %vm381, %v365, 0
        %v386 = vsel %vm381, %v366, 0
        %v389 = vsel %vm381, %v367, 0
        %v392 = vsel %vm381, %v368, 0
        %v395 = vsel %vm381, %v369, 0
        %v398 = vsel %vm381, %v370, 0
        %v401 = vsel %vm381, %v371, 0
        %v404 = vsel %vm381, %v372, 0
        %v407 = vsel %vm381, %v373, 0
        %v410 = vsel %vm381, %v374, 0
        %v413 = vsel %vm381, %v375, 0
        %v416 = vsel %vm381, %v376, 0
        %v419 = vsel %vm381, %v377, 0
        %v422 = vsel %vm381, %v378, 0
        %v425 = vsel %vm381, %v379, 0
        %v428 = vsel %vm381, %v380, 0
        %430 = vmatprep.subr.mxu0 %v364
        %431 = vmatpush1.msra.mxu0 %v363
        %432 = vmatprep.subr.mxu0 0.0
        %433 = vmatpush1.msra.mxu0 0.0
        %434 = vmatprep.subr.mxu0 0.0
        %435 = vmatpush1.msra.mxu0 0.0
        %436 = vmatprep.subr.mxu0 0.0
        %437 = vmatpush1.msra.mxu0 0.0
        %438 = vmatprep.subr.mxu0 0.0
        %439 = vmatpush1.msra.mxu0 0.0
        %440 = vmatprep.subr.mxu0 0.0
        %441 = vmatpush1.msra.mxu0 0.0
        %442 = vmatprep.subr.mxu0 0.0
        %443 = vmatpush1.msra.mxu0 0.0
        %444 = vmatprep.subr.mxu0 0.0
        %445 = vmatpush1.msra.mxu0 0.0
        %446 = vmatprep.subr.mxu0 0.0
        %447 = vmatpush1.msra.mxu0 0.0
        %448 = vmatprep.subr.mxu0 0.0
        %449 = vmatpush1.msra.mxu0 0.0
        %450 = vmatprep.subr.mxu0 0.0
        %451 = vmatpush1.msra.mxu0 0.0
        %452 = vmatprep.subr.mxu0 0.0
        %453 = vmatpush1.msra.mxu0 0.0
        %454 = vmatprep.subr.mxu0 0.0
        %455 = vmatpush1.msra.mxu0 0.0
        %456 = vmatprep.subr.mxu0 0.0
        %457 = vmatpush1.msra.mxu0 0.0
        %458 = vmatprep.subr.mxu0 0.0
        %459 = vmatpush1.msra.mxu0 0.0
        %460 = vmatprep.subr.mxu0 0.0
        %461 = vmatpush1.msra.mxu0 0.0
        %462 = vmatprep.subr.mxu0 0.0
        %463 = vmatpush1.msra.mxu0 0.0
        %464 = vmatprep.subr.mxu0 0.0
        %465 = vmatpush1.msra.mxu0 0.0
        %466 = vmatprep.subr.mxu0 0.0
        %467 = vmatpush1.msra.mxu0 0.0
        %468 = vmatprep.subr.mxu0 0.0
        %469 = vmatpush1.msra.mxu0 0.0
        %470 = vmatprep.subr.mxu0 0.0
        %471 = vmatpush1.msra.mxu0 0.0
        %472 = vmatprep.subr.mxu0 0.0
        %473 = vmatpush1.msra.mxu0 0.0
        %474 = vmatprep.subr.mxu0 0.0
        %475 = vmatpush1.msra.mxu0 0.0
        %476 = vmatprep.subr.mxu0 0.0
        %477 = vmatpush1.msra.mxu0 0.0
        %478 = vmatprep.subr.mxu0 0.0
        %479 = vmatpush1.msra.mxu0 0.0
        %480 = vmatprep.subr.mxu0 0.0
        %481 = vmatpush1.msra.mxu0 0.0
        %482 = vmatprep.subr.mxu0 0.0
        %483 = vmatpush1.msra.mxu0 0.0
        %484 = vmatprep.subr.mxu0 0.0
        %485 = vmatpush1.msra.mxu0 0.0
        %486 = vmatprep.subr.mxu0 0.0
        %487 = vmatpush1.msra.mxu0 0.0
        %488 = vmatprep.subr.mxu0 0.0
        %489 = vmatpush1.msra.mxu0 0.0
        %490 = vmatprep.subr.mxu0 0.0
        %491 = vmatpush1.msra.mxu0 0.0
        %492 = vmatprep.subr.mxu0 0.0
        %493 = vmatpush1.msra.mxu0 0.0
        %494 = vmatprep.mubr.f32.mxu0 0.0
        %495 = vmatmul.mubr.f32.gmra.mrb[0].mxu0 %v383
        %v496 = vpop.f32.mrb[0].mxu0
        %v497 = vadd.f32 0.0, %v496
        %v498 = vpop.f32.mrb[0].mxu0
        %v499 = vadd.f32 0.0, %v498
        %500 = vmatprep.mubr.f32.mxu0 0.0
        %501 = vmatmul.mubr.f32.gmra.mrb[0].mxu0 %v386
        %v502 = vpop.f32.mrb[0].mxu0
        %v503 = vadd.f32 0.0, %v502
        %v504 = vpop.f32.mrb[0].mxu0
        %v505 = vadd.f32 0.0, %v504
        %506 = vmatprep.mubr.f32.mxu0 0.0
        %507 = vmatmul.mubr.f32.gmra.mrb[0].mxu0 %v389
        %v508 = vpop.f32.mrb[0].mxu0
        %v509 = vadd.f32 0.0, %v508
        %v510 = vpop.f32.mrb[0].mxu0
        %v511 = vadd.f32 0.0, %v510
        %512 = vmatprep.mubr.f32.mxu0 0.0
        %513 = vmatmul.mubr.f32.gmra.mrb[0].mxu0 %v392
        %v514 = vpop.f32.mrb[0].mxu0
        %v515 = vadd.f32 0.0, %v514
        %v516 = vpop.f32.mrb[0].mxu0
        %v517 = vadd.f32 0.0, %v516
        %518 = vmatprep.mubr.f32.mxu0 0.0
        %519 = vmatmul.mubr.f32.gmra.mrb[0].mxu0 %v395
        %v520 = vpop.f32.mrb[0].mxu0
        %v521 = vadd.f32 0.0, %v520
        %v522 = vpop.f32.mrb[0].mxu0
        %v523 = vadd.f32 0.0, %v522
        %524 = vmatprep.mubr.f32.mxu0 0.0
        %525 = vmatmul.mubr.f32.gmra.mrb[0].mxu0 %v398
        %v526 = vpop.f32.mrb[0].mxu0
        %v527 = vadd.f32 0.0, %v526
        %v528 = vpop.f32.mrb[0].mxu0
        %v529 = vadd.f32 0.0, %v528
        %530 = vmatprep.mubr.f32.mxu0 0.0
        %531 = vmatmul.mubr.f32.gmra.mrb[0].mxu0 %v401
        %v532 = vpop.f32.mrb[0].mxu0
        %v533 = vadd.f32 0.0, %v532
        %v534 = vpop.f32.mrb[0].mxu0
        %v535 = vadd.f32 0.0, %v534
        %536 = vmatprep.mubr.f32.mxu0 0.0
        %537 = vmatmul.mubr.f32.gmra.mrb[0].mxu0 %v404
        %v538 = vpop.f32.mrb[0].mxu0
        %v539 = vadd.f32 0.0, %v538
        %v540 = vpop.f32.mrb[0].mxu0
        %v541 = vadd.f32 0.0, %v540
        %542 = vmatprep.mubr.f32.mxu0 0.0
        %543 = vmatmul.mubr.f32.gmra.mrb[0].mxu0 %v407
        %v544 = vpop.f32.mrb[0].mxu0
        %v545 = vadd.f32 0.0, %v544
        %v546 = vpop.f32.mrb[0].mxu0
        %v547 = vadd.f32 0.0, %v546
        %548 = vmatprep.mubr.f32.mxu0 0.0
        %549 = vmatmul.mubr.f32.gmra.mrb[0].mxu0 %v410
        %v550 = vpop.f32.mrb[0].mxu0
        %v551 = vadd.f32 0.0, %v550
        %v552 = vpop.f32.mrb[0].mxu0
        %v553 = vadd.f32 0.0, %v552
        %554 = vmatprep.mubr.f32.mxu0 0.0
        %555 = vmatmul.mubr.f32.gmra.mrb[0].mxu0 %v413
        %v556 = vpop.f32.mrb[0].mxu0
        %v557 = vadd.f32 0.0, %v556
        %v558 = vpop.f32.mrb[0].mxu0
        %v559 = vadd.f32 0.0, %v558
        %560 = vmatprep.mubr.f32.mxu0 0.0
        %561 = vmatmul.mubr.f32.gmra.mrb[0].mxu0 %v416
        %v562 = vpop.f32.mrb[0].mxu0
        %v563 = vadd.f32 0.0, %v562
        %v564 = vpop.f32.mrb[0].mxu0
        %v565 = vadd.f32 0.0, %v564
        %566 = vmatprep.mubr.f32.mxu0 0.0
        %567 = vmatmul.mubr.f32.gmra.mrb[0].mxu0 %v419
        %v568 = vpop.f32.mrb[0].mxu0
        %v569 = vadd.f32 0.0, %v568
        %v570 = vpop.f32.mrb[0].mxu0
        %v571 = vadd.f32 0.0, %v570
        %572 = vmatprep.mubr.f32.mxu0 0.0
        %573 = vmatmul.mubr.f32.gmra.mrb[0].mxu0 %v422
        %v574 = vpop.f32.mrb[0].mxu0
        %v575 = vadd.f32 0.0, %v574
        %v576 = vpop.f32.mrb[0].mxu0
        %v577 = vadd.f32 0.0, %v576
        %578 = vmatprep.mubr.f32.mxu0 0.0
        %579 = vmatmul.mubr.f32.gmra.mrb[0].mxu0 %v425
        %v580 = vpop.f32.mrb[0].mxu0
        %v581 = vadd.f32 0.0, %v580
        %v582 = vpop.f32.mrb[0].mxu0
        %v583 = vadd.f32 0.0, %v582
        %584 = vmatprep.mubr.f32.mxu0 0.0
        %585 = vmatmul.mubr.f32.gmra.mrb[0].mxu0 %v428
        %v586 = vpop.f32.mrb[0].mxu0
        %v587 = vadd.f32 0.0, %v586
        %v588 = vpop.f32.mrb[0].mxu0
        %v589 = vadd.f32 0.0, %v588
        %590 = vdwg.mxu0
        %v591 = vand.u32 2147483647, %v497
        %vm592 = vcmp.le.f32.partialorder %v591, 0.7853982
        %vm593 = vcmp.lt.s32.totalorder %v497, 0
        %v594 = vand.u32 %v497, 2139095040
        %v595 = vshrl.u32 %v594, 23
        %v596 = vsub.s32 %v595, 127
        %v597 = vand.u32 2147483647, %v497
        %v598 = vand.u32 %v597, 8388607
        %v599 = vor.u32 %v598, 8388608
        %v600 = vsub.s32 0, %v599
        %v601 = vadd.s32 %v596, 1
        %vm602 = vcmp.gt.s32.totalorder %v601, 0
        %v603 = vsel %vm602, %v601, 0
        %v604 = vshrl.u32 %v603, 5
        %v605 = vand.u32 %v603, 31
        %v606 = vsub.s32 32, %v605
        %v607 = vshrl.u32 683565275, %v606
        %v608 = vshll.u32 683565275, %v605
        %v609 = vshrl.u32 2475754826, %v606
        %v610 = vor.u32 %v608, %v609
        %v611 = vshll.u32 2475754826, %v605
        %v612 = vshrl.u32 2131351028, %v606
        %v613 = vor.u32 %v611, %v612
        %v614 = vshll.u32 2131351028, %v605
        %v615 = vshrl.u32 2102212464, %v606
        %v616 = vor.u32 %v614, %v615
        %v617 = vshll.u32 2102212464, %v605
        %v618 = vshrl.u32 920167782, %v606
        %v619 = vor.u32 %v617, %v618
        %v620 = vshll.u32 920167782, %v605
        %v621 = vshrl.u32 1326507024, %v606
        %v622 = vor.u32 %v620, %v621
        %vm623 = vcmp.lt.s32.totalorder %v604, 1
        %vm624 = vcmp.lt.s32.totalorder %v604, 2
        %vm625 = vcmp.lt.s32.totalorder %v604, 3
        %vm626 = vcmp.lt.s32.totalorder %v604, 4
        %v627 = vsel %vm623, %v607, %v610
        %v628 = vsel %vm626, %v616, 2102212464
        %v629 = vsel %vm625, %v613, %v628
        %v630 = vsel %vm624, %v627, %v629
        %v631 = vsel %vm623, %v610, %v613
        %v632 = vsel %vm626, %v619, 920167782
        %v633 = vsel %vm625, %v616, %v632
        %v634 = vsel %vm624, %v631, %v633
        %v635 = vsel %vm623, %v613, %v616
        %v636 = vsel %vm626, %v622, 1326507024
        %v637 = vsel %vm625, %v619, %v636
        %v638 = vsel %vm624, %v635, %v637
        %v639 = vshll.u32 %v599, 8
        %v640 = vmul.u32.u64.compose %v639, %v638
        %v641 = vextract.low.u32 %v640
        %v642 = vextract.high.u32 %v640
        %v643 = vmul.u32.u64.compose %v639, %v634
        %v644 = vextract.low.u32 %v643
        %v645 = vextract.high.u32 %v643
        %v646 = vmul.u32 %v639, %v630
        %v647 = vadd.s32 %v642, %v644
        %vm648 = vc.u32 %v642, %v644
        %v649 = vadd.s32 %v645, 1
        %v650 = vsel %vm648, %v649, %v645
        %v651 = vadd.s32 %v646, %v650
        %v652 = vadd.s32 %v651, 536870912
        %v653 = vshrl.u32 %v652, 30
        %v654 = vshll.u32 %v653, 30
        %v655 = vsub.s32 %v651, %v654
        %vm656 = vcmp.lt.s32.totalorder %v655, 0
        %v657 = vsub.s32 0, %v655
        %v658 = vsel %vm656, %v657, %v655
        %v659 = vclz %v658
        %v660 = vsub.s32 %v659, 2
        %vm661 = vcmp.gt.s32.totalorder 0, %v660
        %v662 = vsel %vm661, 0, %v660
        %v663 = vsub.s32 32, %v662
        %v664 = vshll.u32 %v655, %v662
        %v665 = vshrl.u32 %v647, %v663
        %v666 = vor.u32 %v664, %v665
        %v667 = vsub.s32 4294967266, %v662
        %v668 = vadd.s32 %v667, 127
        %v669 = vshll.u32 %v668, 23
        %v670 = vor.u32 4788187, %v669
        %v671 = vand.u32 2147483647, %v670
        %v673 = vcvt.s32.f32 %v666
        %v674 = vmul.f32 %v673, %v671
        %v675 = vxor.u32 %v674, 2147483648
        %v676 = vsel %vm593, %v675, %v674
        %v677 = vsub.s32 4, %v653
        %v678 = vsel %vm593, %v677, %v653
        %v679 = vsel %vm592, %v497, %v676
        %v680 = vsel %vm592, 0, %v678
        %v681 = vcosq.f32.pop %v679
        %v682 = vsinq.f32.pop %v679
        %vm683 = vweird.f32 %v497
        %v684 = vand.u32 %v680, 3
        %vm685 = vcmp.lt.s32.totalorder %v684, 2
        %vm686 = vcmp.eq.s32.totalorder %v684, 0
        %v687 = vxor.u32 %v682, 2147483648
        %v688 = vsel %vm686, %v681, %v687
        %vm689 = vcmp.eq.s32.totalorder %v684, 2
        %v690 = vxor.u32 %v681, 2147483648
        %v691 = vsel %vm689, %v690, %v682
        %v692 = vsel %vm685, %v688, %v691
        %v693 = vsel %vm683, nan, %v692
        %v694 = vand.u32 2147483647, %v499
        %vm695 = vcmp.le.f32.partialorder %v694, 0.7853982
        %vm696 = vcmp.lt.s32.totalorder %v499, 0
        %v697 = vand.u32 %v499, 2139095040
        %v698 = vshrl.u32 %v697, 23
        %v699 = vsub.s32 %v698, 127
        %v700 = vand.u32 2147483647, %v499
        %v701 = vand.u32 %v700, 8388607
        %v702 = vor.u32 %v701, 8388608
        %v703 = vsub.s32 0, %v702
        %v704 = vadd.s32 %v699, 1
        %vm705 = vcmp.gt.s32.totalorder %v704, 0
        %v706 = vsel %vm705, %v704, 0
        %v707 = vshrl.u32 %v706, 5
        %v708 = vand.u32 %v706, 31
        %v709 = vsub.s32 32, %v708
        %v710 = vshrl.u32 683565275, %v709
        %v711 = vshll.u32 683565275, %v708
        %v712 = vshrl.u32 2475754826, %v709
        %v713 = vor.u32 %v711, %v712
        %v714 = vshll.u32 2475754826, %v708
        %v715 = vshrl.u32 2131351028, %v709
        %v716 = vor.u32 %v714, %v715
        %v717 = vshll.u32 2131351028, %v708
        %v718 = vshrl.u32 2102212464, %v709
        %v719 = vor.u32 %v717, %v718
        %v720 = vshll.u32 2102212464, %v708
        %v721 = vshrl.u32 920167782, %v709
        %v722 = vor.u32 %v720, %v721
        %v723 = vshll.u32 920167782, %v708
        %v724 = vshrl.u32 1326507024, %v709
        %v725 = vor.u32 %v723, %v724
        %vm726 = vcmp.lt.s32.totalorder %v707, 1
        %vm727 = vcmp.lt.s32.totalorder %v707, 2
        %vm728 = vcmp.lt.s32.totalorder %v707, 3
        %vm729 = vcmp.lt.s32.totalorder %v707, 4
        %v730 = vsel %vm726, %v710, %v713
        %v731 = vsel %vm729, %v719, 2102212464
        %v732 = vsel %vm728, %v716, %v731
        %v733 = vsel %vm727, %v730, %v732
        %v734 = vsel %vm726, %v713, %v716
        %v735 = vsel %vm729, %v722, 920167782
        %v736 = vsel %vm728, %v719, %v735
        %v737 = vsel %vm727, %v734, %v736
        %v738 = vsel %vm726, %v716, %v719
        %v739 = vsel %vm729, %v725, 1326507024
        %v740 = vsel %vm728, %v722, %v739
        %v741 = vsel %vm727, %v738, %v740
        %v742 = vshll.u32 %v702, 8
        %v743 = vmul.u32.u64.compose %v742, %v741
        %v744 = vextract.low.u32 %v743
        %v745 = vextract.high.u32 %v743
        %v746 = vmul.u32.u64.compose %v742, %v737
        %v747 = vextract.low.u32 %v746
        %v748 = vextract.high.u32 %v746
        %v749 = vmul.u32 %v742, %v733
        %v750 = vadd.s32 %v745, %v747
        %vm751 = vc.u32 %v745, %v747
        %v752 = vadd.s32 %v748, 1
        %v753 = vsel %vm751, %v752, %v748
        %v754 = vadd.s32 %v749, %v753
        %v755 = vadd.s32 %v754, 536870912
        %v756 = vshrl.u32 %v755, 30
        %v757 = vshll.u32 %v756, 30
        %v758 = vsub.s32 %v754, %v757
        %vm759 = vcmp.lt.s32.totalorder %v758, 0
        %v760 = vsub.s32 0, %v758
        %v761 = vsel %vm759, %v760, %v758
        %v762 = vclz %v761
        %v763 = vsub.s32 %v762, 2
        %vm764 = vcmp.gt.s32.totalorder 0, %v763
        %v765 = vsel %vm764, 0, %v763
        %v766 = vsub.s32 32, %v765
        %v767 = vshll.u32 %v758, %v765
        %v768 = vshrl.u32 %v750, %v766
        %v769 = vor.u32 %v767, %v768
        %v770 = vsub.s32 4294967266, %v765
        %v771 = vadd.s32 %v770, 127
        %v772 = vshll.u32 %v771, 23
        %v773 = vor.u32 4788187, %v772
        %v774 = vand.u32 2147483647, %v773
        %v776 = vcvt.s32.f32 %v769
        %v777 = vmul.f32 %v776, %v774
        %v778 = vxor.u32 %v777, 2147483648
        %v779 = vsel %vm696, %v778, %v777
        %v780 = vsub.s32 4, %v756
        %v781 = vsel %vm696, %v780, %v756
        %v782 = vsel %vm695, %v499, %v779
        %v783 = vsel %vm695, 0, %v781
        %v784 = vcosq.f32.pop %v782
        %v785 = vsinq.f32.pop %v782
        %vm786 = vweird.f32 %v499
        %v787 = vand.u32 %v783, 3
        %vm788 = vcmp.lt.s32.totalorder %v787, 2
        %vm789 = vcmp.eq.s32.totalorder %v787, 0
        %v790 = vxor.u32 %v785, 2147483648
        %v791 = vsel %vm789, %v784, %v790
        %vm792 = vcmp.eq.s32.totalorder %v787, 2
        %v793 = vxor.u32 %v784, 2147483648
        %v794 = vsel %vm792, %v793, %v785
        %v795 = vsel %vm788, %v791, %v794
        %v796 = vsel %vm786, nan, %v795
        %v797 = vand.u32 2147483647, %v503
        %vm798 = vcmp.le.f32.partialorder %v797, 0.7853982
        %vm799 = vcmp.lt.s32.totalorder %v503, 0
        %v800 = vand.u32 %v503, 2139095040
        %v801 = vshrl.u32 %v800, 23
        %v802 = vsub.s32 %v801, 127
        %v803 = vand.u32 2147483647, %v503
        %v804 = vand.u32 %v803, 8388607
        %v805 = vor.u32 %v804, 8388608
        %v806 = vsub.s32 0, %v805
        %v807 = vadd.s32 %v802, 1
        %vm808 = vcmp.gt.s32.totalorder %v807, 0
        %v809 = vsel %vm808, %v807, 0
        %v810 = vshrl.u32 %v809, 5
        %v811 = vand.u32 %v809, 31
        %v812 = vsub.s32 32, %v811
        %v813 = vshrl.u32 683565275, %v812
        %v814 = vshll.u32 683565275, %v811
        %v815 = vshrl.u32 2475754826, %v812
        %v816 = vor.u32 %v814, %v815
        %v817 = vshll.u32 2475754826, %v811
        %v818 = vshrl.u32 2131351028, %v812
        %v819 = vor.u32 %v817, %v818
        %v820 = vshll.u32 2131351028, %v811
        %v821 = vshrl.u32 2102212464, %v812
        %v822 = vor.u32 %v820, %v821
        %v823 = vshll.u32 2102212464, %v811
        %v824 = vshrl.u32 920167782, %v812
        %v825 = vor.u32 %v823, %v824
        %v826 = vshll.u32 920167782, %v811
        %v827 = vshrl.u32 1326507024, %v812
        %v828 = vor.u32 %v826, %v827
        %vm829 = vcmp.lt.s32.totalorder %v810, 1
        %vm830 = vcmp.lt.s32.totalorder %v810, 2
        %vm831 = vcmp.lt.s32.totalorder %v810, 3
        %vm832 = vcmp.lt.s32.totalorder %v810, 4
        %v833 = vsel %vm829, %v813, %v816
        %v834 = vsel %vm832, %v822, 2102212464
        %v835 = vsel %vm831, %v819, %v834
        %v836 = vsel %vm830, %v833, %v835
        %v837 = vsel %vm829, %v816, %v819
        %v838 = vsel %vm832, %v825, 920167782
        %v839 = vsel %vm831, %v822, %v838
        %v840 = vsel %vm830, %v837, %v839
        %v841 = vsel %vm829, %v819, %v822
        %v842 = vsel %vm832, %v828, 1326507024
        %v843 = vsel %vm831, %v825, %v842
        %v844 = vsel %vm830, %v841, %v843
        %v845 = vshll.u32 %v805, 8
        %v846 = vmul.u32.u64.compose %v845, %v844
        %v847 = vextract.low.u32 %v846
        %v848 = vextract.high.u32 %v846
        %v849 = vmul.u32.u64.compose %v845, %v840
        %v850 = vextract.low.u32 %v849
        %v851 = vextract.high.u32 %v849
        %v852 = vmul.u32 %v845, %v836
        %v853 = vadd.s32 %v848, %v850
        %vm854 = vc.u32 %v848, %v850
        %v855 = vadd.s32 %v851, 1
        %v856 = vsel %vm854, %v855, %v851
        %v857 = vadd.s32 %v852, %v856
        %v858 = vadd.s32 %v857, 536870912
        %v859 = vshrl.u32 %v858, 30
        %v860 = vshll.u32 %v859, 30
        %v861 = vsub.s32 %v857, %v860
        %vm862 = vcmp.lt.s32.totalorder %v861, 0
        %v863 = vsub.s32 0, %v861
        %v864 = vsel %vm862, %v863, %v861
        %v865 = vclz %v864
        %v866 = vsub.s32 %v865, 2
        %vm867 = vcmp.gt.s32.totalorder 0, %v866
        %v868 = vsel %vm867, 0, %v866
        %v869 = vsub.s32 32, %v868
        %v870 = vshll.u32 %v861, %v868
        %v871 = vshrl.u32 %v853, %v869
        %v872 = vor.u32 %v870, %v871
        %v873 = vsub.s32 4294967266, %v868
        %v874 = vadd.s32 %v873, 127
        %v875 = vshll.u32 %v874, 23
        %v876 = vor.u32 4788187, %v875
        %v877 = vand.u32 2147483647, %v876
        %v879 = vcvt.s32.f32 %v872
        %v880 = vmul.f32 %v879, %v877
        %v881 = vxor.u32 %v880, 2147483648
        %v882 = vsel %vm799, %v881, %v880
        %v883 = vsub.s32 4, %v859
        %v884 = vsel %vm799, %v883, %v859
        %v885 = vsel %vm798, %v503, %v882
        %v886 = vsel %vm798, 0, %v884
        %v887 = vcosq.f32.pop %v885
        %v888 = vsinq.f32.pop %v885
        %vm889 = vweird.f32 %v503
        %v890 = vand.u32 %v886, 3
        %vm891 = vcmp.lt.s32.totalorder %v890, 2
        %vm892 = vcmp.eq.s32.totalorder %v890, 0
        %v893 = vxor.u32 %v888, 2147483648
        %v894 = vsel %vm892, %v887, %v893
        %vm895 = vcmp.eq.s32.totalorder %v890, 2
        %v896 = vxor.u32 %v887, 2147483648
        %v897 = vsel %vm895, %v896, %v888
        %v898 = vsel %vm891, %v894, %v897
        %v899 = vsel %vm889, nan, %v898
        %v900 = vand.u32 2147483647, %v505
        %vm901 = vcmp.le.f32.partialorder %v900, 0.7853982
        %vm902 = vcmp.lt.s32.totalorder %v505, 0
        %v903 = vand.u32 %v505, 2139095040
        %v904 = vshrl.u32 %v903, 23
        %v905 = vsub.s32 %v904, 127
        %v906 = vand.u32 2147483647, %v505
        %v907 = vand.u32 %v906, 8388607
        %v908 = vor.u32 %v907, 8388608
        %v909 = vsub.s32 0, %v908
        %v910 = vadd.s32 %v905, 1
        %vm911 = vcmp.gt.s32.totalorder %v910, 0
        %v912 = vsel %vm911, %v910, 0
        %v913 = vshrl.u32 %v912, 5
        %v914 = vand.u32 %v912, 31
        %v915 = vsub.s32 32, %v914
        %v916 = vshrl.u32 683565275, %v915
        %v917 = vshll.u32 683565275, %v914
        %v918 = vshrl.u32 2475754826, %v915
        %v919 = vor.u32 %v917, %v918
        %v920 = vshll.u32 2475754826, %v914
        %v921 = vshrl.u32 2131351028, %v915
        %v922 = vor.u32 %v920, %v921
        %v923 = vshll.u32 2131351028, %v914
        %v924 = vshrl.u32 2102212464, %v915
        %v925 = vor.u32 %v923, %v924
        %v926 = vshll.u32 2102212464, %v914
        %v927 = vshrl.u32 920167782, %v915
        %v928 = vor.u32 %v926, %v927
        %v929 = vshll.u32 920167782, %v914
        %v930 = vshrl.u32 1326507024, %v915
        %v931 = vor.u32 %v929, %v930
        %vm932 = vcmp.lt.s32.totalorder %v913, 1
        %vm933 = vcmp.lt.s32.totalorder %v913, 2
        %vm934 = vcmp.lt.s32.totalorder %v913, 3
        %vm935 = vcmp.lt.s32.totalorder %v913, 4
        %v936 = vsel %vm932, %v916, %v919
        %v937 = vsel %vm935, %v925, 2102212464
        %v938 = vsel %vm934, %v922, %v937
        %v939 = vsel %vm933, %v936, %v938
        %v940 = vsel %vm932, %v919, %v922
        %v941 = vsel %vm935, %v928, 920167782
        %v942 = vsel %vm934, %v925, %v941
        %v943 = vsel %vm933, %v940, %v942
        %v944 = vsel %vm932, %v922, %v925
        %v945 = vsel %vm935, %v931, 1326507024
        %v946 = vsel %vm934, %v928, %v945
        %v947 = vsel %vm933, %v944, %v946
        %v948 = vshll.u32 %v908, 8
        %v949 = vmul.u32.u64.compose %v948, %v947
        %v950 = vextract.low.u32 %v949
        %v951 = vextract.high.u32 %v949
        %v952 = vmul.u32.u64.compose %v948, %v943
        %v953 = vextract.low.u32 %v952
        %v954 = vextract.high.u32 %v952
        %v955 = vmul.u32 %v948, %v939
        %v956 = vadd.s32 %v951, %v953
        %vm957 = vc.u32 %v951, %v953
        %v958 = vadd.s32 %v954, 1
        %v959 = vsel %vm957, %v958, %v954
        %v960 = vadd.s32 %v955, %v959
        %v961 = vadd.s32 %v960, 536870912
        %v962 = vshrl.u32 %v961, 30
        %v963 = vshll.u32 %v962, 30
        %v964 = vsub.s32 %v960, %v963
        %vm965 = vcmp.lt.s32.totalorder %v964, 0
        %v966 = vsub.s32 0, %v964
        %v967 = vsel %vm965, %v966, %v964
        %v968 = vclz %v967
        %v969 = vsub.s32 %v968, 2
        %vm970 = vcmp.gt.s32.totalorder 0, %v969
        %v971 = vsel %vm970, 0, %v969
        %v972 = vsub.s32 32, %v971
        %v973 = vshll.u32 %v964, %v971
        %v974 = vshrl.u32 %v956, %v972
        %v975 = vor.u32 %v973, %v974
        %v976 = vsub.s32 4294967266, %v971
        %v977 = vadd.s32 %v976, 127
        %v978 = vshll.u32 %v977, 23
        %v979 = vor.u32 4788187, %v978
        %v980 = vand.u32 2147483647, %v979
        %v982 = vcvt.s32.f32 %v975
        %v983 = vmul.f32 %v982, %v980
        %v984 = vxor.u32 %v983, 2147483648
        %v985 = vsel %vm902, %v984, %v983
        %v986 = vsub.s32 4, %v962
        %v987 = vsel %vm902, %v986, %v962
        %v988 = vsel %vm901, %v505, %v985
        %v989 = vsel %vm901, 0, %v987
        %v990 = vcosq.f32.pop %v988
        %v991 = vsinq.f32.pop %v988
        %vm992 = vweird.f32 %v505
        %v993 = vand.u32 %v989, 3
        %vm994 = vcmp.lt.s32.totalorder %v993, 2
        %vm995 = vcmp.eq.s32.totalorder %v993, 0
        %v996 = vxor.u32 %v991, 2147483648
        %v997 = vsel %vm995, %v990, %v996
        %vm998 = vcmp.eq.s32.totalorder %v993, 2
        %v999 = vxor.u32 %v990, 2147483648
        %v1000 = vsel %vm998, %v999, %v991
        %v1001 = vsel %vm994, %v997, %v1000
        %v1002 = vsel %vm992, nan, %v1001
        %v1003 = vand.u32 2147483647, %v509
        %vm1004 = vcmp.le.f32.partialorder %v1003, 0.7853982
        %vm1005 = vcmp.lt.s32.totalorder %v509, 0
        %v1006 = vand.u32 %v509, 2139095040
        %v1007 = vshrl.u32 %v1006, 23
        %v1008 = vsub.s32 %v1007, 127
        %v1009 = vand.u32 2147483647, %v509
        %v1010 = vand.u32 %v1009, 8388607
        %v1011 = vor.u32 %v1010, 8388608
        %v1012 = vsub.s32 0, %v1011
        %v1013 = vadd.s32 %v1008, 1
        %vm1014 = vcmp.gt.s32.totalorder %v1013, 0
        %v1015 = vsel %vm1014, %v1013, 0
        %v1016 = vshrl.u32 %v1015, 5
        %v1017 = vand.u32 %v1015, 31
        %v1018 = vsub.s32 32, %v1017
        %v1019 = vshrl.u32 683565275, %v1018
        %v1020 = vshll.u32 683565275, %v1017
        %v1021 = vshrl.u32 2475754826, %v1018
        %v1022 = vor.u32 %v1020, %v1021
        %v1023 = vshll.u32 2475754826, %v1017
        %v1024 = vshrl.u32 2131351028, %v1018
        %v1025 = vor.u32 %v1023, %v1024
        %v1026 = vshll.u32 2131351028, %v1017
        %v1027 = vshrl.u32 2102212464, %v1018
        %v1028 = vor.u32 %v1026, %v1027
        %v1029 = vshll.u32 2102212464, %v1017
        %v1030 = vshrl.u32 920167782, %v1018
        %v1031 = vor.u32 %v1029, %v1030
        %v1032 = vshll.u32 920167782, %v1017
        %v1033 = vshrl.u32 1326507024, %v1018
        %v1034 = vor.u32 %v1032, %v1033
        %vm1035 = vcmp.lt.s32.totalorder %v1016, 1
        %vm1036 = vcmp.lt.s32.totalorder %v1016, 2
        %vm1037 = vcmp.lt.s32.totalorder %v1016, 3
        %vm1038 = vcmp.lt.s32.totalorder %v1016, 4
        %v1039 = vsel %vm1035, %v1019, %v1022
        %v1040 = vsel %vm1038, %v1028, 2102212464
        %v1041 = vsel %vm1037, %v1025, %v1040
        %v1042 = vsel %vm1036, %v1039, %v1041
        %v1043 = vsel %vm1035, %v1022, %v1025
        %v1044 = vsel %vm1038, %v1031, 920167782
        %v1045 = vsel %vm1037, %v1028, %v1044
        %v1046 = vsel %vm1036, %v1043, %v1045
        %v1047 = vsel %vm1035, %v1025, %v1028
        %v1048 = vsel %vm1038, %v1034, 1326507024
        %v1049 = vsel %vm1037, %v1031, %v1048
        %v1050 = vsel %vm1036, %v1047, %v1049
        %v1051 = vshll.u32 %v1011, 8
        %v1052 = vmul.u32.u64.compose %v1051, %v1050
        %v1053 = vextract.low.u32 %v1052
        %v1054 = vextract.high.u32 %v1052
        %v1055 = vmul.u32.u64.compose %v1051, %v1046
        %v1056 = vextract.low.u32 %v1055
        %v1057 = vextract.high.u32 %v1055
        %v1058 = vmul.u32 %v1051, %v1042
        %v1059 = vadd.s32 %v1054, %v1056
        %vm1060 = vc.u32 %v1054, %v1056
        %v1061 = vadd.s32 %v1057, 1
        %v1062 = vsel %vm1060, %v1061, %v1057
        %v1063 = vadd.s32 %v1058, %v1062
        %v1064 = vadd.s32 %v1063, 536870912
        %v1065 = vshrl.u32 %v1064, 30
        %v1066 = vshll.u32 %v1065, 30
        %v1067 = vsub.s32 %v1063, %v1066
        %vm1068 = vcmp.lt.s32.totalorder %v1067, 0
        %v1069 = vsub.s32 0, %v1067
        %v1070 = vsel %vm1068, %v1069, %v1067
        %v1071 = vclz %v1070
        %v1072 = vsub.s32 %v1071, 2
        %vm1073 = vcmp.gt.s32.totalorder 0, %v1072
        %v1074 = vsel %vm1073, 0, %v1072
        %v1075 = vsub.s32 32, %v1074
        %v1076 = vshll.u32 %v1067, %v1074
        %v1077 = vshrl.u32 %v1059, %v1075
        %v1078 = vor.u32 %v1076, %v1077
        %v1079 = vsub.s32 4294967266, %v1074
        %v1080 = vadd.s32 %v1079, 127
        %v1081 = vshll.u32 %v1080, 23
        %v1082 = vor.u32 4788187, %v1081
        %v1083 = vand.u32 2147483647, %v1082
        %v1085 = vcvt.s32.f32 %v1078
        %v1086 = vmul.f32 %v1085, %v1083
        %v1087 = vxor.u32 %v1086, 2147483648
        %v1088 = vsel %vm1005, %v1087, %v1086
        %v1089 = vsub.s32 4, %v1065
        %v1090 = vsel %vm1005, %v1089, %v1065
        %v1091 = vsel %vm1004, %v509, %v1088
        %v1092 = vsel %vm1004, 0, %v1090
        %v1093 = vcosq.f32.pop %v1091
        %v1094 = vsinq.f32.pop %v1091
        %vm1095 = vweird.f32 %v509
        %v1096 = vand.u32 %v1092, 3
        %vm1097 = vcmp.lt.s32.totalorder %v1096, 2
        %vm1098 = vcmp.eq.s32.totalorder %v1096, 0
        %v1099 = vxor.u32 %v1094, 2147483648
        %v1100 = vsel %vm1098, %v1093, %v1099
        %vm1101 = vcmp.eq.s32.totalorder %v1096, 2
        %v1102 = vxor.u32 %v1093, 2147483648
        %v1103 = vsel %vm1101, %v1102, %v1094
        %v1104 = vsel %vm1097, %v1100, %v1103
        %v1105 = vsel %vm1095, nan, %v1104
        %v1106 = vand.u32 2147483647, %v511
        %vm1107 = vcmp.le.f32.partialorder %v1106, 0.7853982
        %vm1108 = vcmp.lt.s32.totalorder %v511, 0
        %v1109 = vand.u32 %v511, 2139095040
        %v1110 = vshrl.u32 %v1109, 23
        %v1111 = vsub.s32 %v1110, 127
        %v1112 = vand.u32 2147483647, %v511
        %v1113 = vand.u32 %v1112, 8388607
        %v1114 = vor.u32 %v1113, 8388608
        %v1115 = vsub.s32 0, %v1114
        %v1116 = vadd.s32 %v1111, 1
        %vm1117 = vcmp.gt.s32.totalorder %v1116, 0
        %v1118 = vsel %vm1117, %v1116, 0
        %v1119 = vshrl.u32 %v1118, 5
        %v1120 = vand.u32 %v1118, 31
        %v1121 = vsub.s32 32, %v1120
        %v1122 = vshrl.u32 683565275, %v1121
        %v1123 = vshll.u32 683565275, %v1120
        %v1124 = vshrl.u32 2475754826, %v1121
        %v1125 = vor.u32 %v1123, %v1124
        %v1126 = vshll.u32 2475754826, %v1120
        %v1127 = vshrl.u32 2131351028, %v1121
        %v1128 = vor.u32 %v1126, %v1127
        %v1129 = vshll.u32 2131351028, %v1120
        %v1130 = vshrl.u32 2102212464, %v1121
        %v1131 = vor.u32 %v1129, %v1130
        %v1132 = vshll.u32 2102212464, %v1120
        %v1133 = vshrl.u32 920167782, %v1121
        %v1134 = vor.u32 %v1132, %v1133
        %v1135 = vshll.u32 920167782, %v1120
        %v1136 = vshrl.u32 1326507024, %v1121
        %v1137 = vor.u32 %v1135, %v1136
        %vm1138 = vcmp.lt.s32.totalorder %v1119, 1
        %vm1139 = vcmp.lt.s32.totalorder %v1119, 2
        %vm1140 = vcmp.lt.s32.totalorder %v1119, 3
        %vm1141 = vcmp.lt.s32.totalorder %v1119, 4
        %v1142 = vsel %vm1138, %v1122, %v1125
        %v1143 = vsel %vm1141, %v1131, 2102212464
        %v1144 = vsel %vm1140, %v1128, %v1143
        %v1145 = vsel %vm1139, %v1142, %v1144
        %v1146 = vsel %vm1138, %v1125, %v1128
        %v1147 = vsel %vm1141, %v1134, 920167782
        %v1148 = vsel %vm1140, %v1131, %v1147
        %v1149 = vsel %vm1139, %v1146, %v1148
        %v1150 = vsel %vm1138, %v1128, %v1131
        %v1151 = vsel %vm1141, %v1137, 1326507024
        %v1152 = vsel %vm1140, %v1134, %v1151
        %v1153 = vsel %vm1139, %v1150, %v1152
        %v1154 = vshll.u32 %v1114, 8
        %v1155 = vmul.u32.u64.compose %v1154, %v1153
        %v1156 = vextract.low.u32 %v1155
        %v1157 = vextract.high.u32 %v1155
        %v1158 = vmul.u32.u64.compose %v1154, %v1149
        %v1159 = vextract.low.u32 %v1158
        %v1160 = vextract.high.u32 %v1158
        %v1161 = vmul.u32 %v1154, %v1145
        %v1162 = vadd.s32 %v1157, %v1159
        %vm1163 = vc.u32 %v1157, %v1159
        %v1164 = vadd.s32 %v1160, 1
        %v1165 = vsel %vm1163, %v1164, %v1160
        %v1166 = vadd.s32 %v1161, %v1165
        %v1167 = vadd.s32 %v1166, 536870912
        %v1168 = vshrl.u32 %v1167, 30
        %v1169 = vshll.u32 %v1168, 30
        %v1170 = vsub.s32 %v1166, %v1169
        %vm1171 = vcmp.lt.s32.totalorder %v1170, 0
        %v1172 = vsub.s32 0, %v1170
        %v1173 = vsel %vm1171, %v1172, %v1170
        %v1174 = vclz %v1173
        %v1175 = vsub.s32 %v1174, 2
        %vm1176 = vcmp.gt.s32.totalorder 0, %v1175
        %v1177 = vsel %vm1176, 0, %v1175
        %v1178 = vsub.s32 32, %v1177
        %v1179 = vshll.u32 %v1170, %v1177
        %v1180 = vshrl.u32 %v1162, %v1178
        %v1181 = vor.u32 %v1179, %v1180
        %v1182 = vsub.s32 4294967266, %v1177
        %v1183 = vadd.s32 %v1182, 127
        %v1184 = vshll.u32 %v1183, 23
        %v1185 = vor.u32 4788187, %v1184
        %v1186 = vand.u32 2147483647, %v1185
        %v1188 = vcvt.s32.f32 %v1181
        %v1189 = vmul.f32 %v1188, %v1186
        %v1190 = vxor.u32 %v1189, 2147483648
        %v1191 = vsel %vm1108, %v1190, %v1189
        %v1192 = vsub.s32 4, %v1168
        %v1193 = vsel %vm1108, %v1192, %v1168
        %v1194 = vsel %vm1107, %v511, %v1191
        %v1195 = vsel %vm1107, 0, %v1193
        %v1196 = vcosq.f32.pop %v1194
        %v1197 = vsinq.f32.pop %v1194
        %vm1198 = vweird.f32 %v511
        %v1199 = vand.u32 %v1195, 3
        %vm1200 = vcmp.lt.s32.totalorder %v1199, 2
        %vm1201 = vcmp.eq.s32.totalorder %v1199, 0
        %v1202 = vxor.u32 %v1197, 2147483648
        %v1203 = vsel %vm1201, %v1196, %v1202
        %vm1204 = vcmp.eq.s32.totalorder %v1199, 2
        %v1205 = vxor.u32 %v1196, 2147483648
        %v1206 = vsel %vm1204, %v1205, %v1197
        %v1207 = vsel %vm1200, %v1203, %v1206
        %v1208 = vsel %vm1198, nan, %v1207
        %v1209 = vand.u32 2147483647, %v515
        %vm1210 = vcmp.le.f32.partialorder %v1209, 0.7853982
        %vm1211 = vcmp.lt.s32.totalorder %v515, 0
        %v1212 = vand.u32 %v515, 2139095040
        %v1213 = vshrl.u32 %v1212, 23
        %v1214 = vsub.s32 %v1213, 127
        %v1215 = vand.u32 2147483647, %v515
        %v1216 = vand.u32 %v1215, 8388607
        %v1217 = vor.u32 %v1216, 8388608
        %v1218 = vsub.s32 0, %v1217
        %v1219 = vadd.s32 %v1214, 1
        %vm1220 = vcmp.gt.s32.totalorder %v1219, 0
        %v1221 = vsel %vm1220, %v1219, 0
        %v1222 = vshrl.u32 %v1221, 5
        %v1223 = vand.u32 %v1221, 31
        %v1224 = vsub.s32 32, %v1223
        %v1225 = vshrl.u32 683565275, %v1224
        %v1226 = vshll.u32 683565275, %v1223
        %v1227 = vshrl.u32 2475754826, %v1224
        %v1228 = vor.u32 %v1226, %v1227
        %v1229 = vshll.u32 2475754826, %v1223
        %v1230 = vshrl.u32 2131351028, %v1224
        %v1231 = vor.u32 %v1229, %v1230
        %v1232 = vshll.u32 2131351028, %v1223
        %v1233 = vshrl.u32 2102212464, %v1224
        %v1234 = vor.u32 %v1232, %v1233
        %v1235 = vshll.u32 2102212464, %v1223
        %v1236 = vshrl.u32 920167782, %v1224
        %v1237 = vor.u32 %v1235, %v1236
        %v1238 = vshll.u32 920167782, %v1223
        %v1239 = vshrl.u32 1326507024, %v1224
        %v1240 = vor.u32 %v1238, %v1239
        %vm1241 = vcmp.lt.s32.totalorder %v1222, 1
        %vm1242 = vcmp.lt.s32.totalorder %v1222, 2
        %vm1243 = vcmp.lt.s32.totalorder %v1222, 3
        %vm1244 = vcmp.lt.s32.totalorder %v1222, 4
        %v1245 = vsel %vm1241, %v1225, %v1228
        %v1246 = vsel %vm1244, %v1234, 2102212464
        %v1247 = vsel %vm1243, %v1231, %v1246
        %v1248 = vsel %vm1242, %v1245, %v1247
        %v1249 = vsel %vm1241, %v1228, %v1231
        %v1250 = vsel %vm1244, %v1237, 920167782
        %v1251 = vsel %vm1243, %v1234, %v1250
        %v1252 = vsel %vm1242, %v1249, %v1251
        %v1253 = vsel %vm1241, %v1231, %v1234
        %v1254 = vsel %vm1244, %v1240, 1326507024
        %v1255 = vsel %vm1243, %v1237, %v1254
        %v1256 = vsel %vm1242, %v1253, %v1255
        %v1257 = vshll.u32 %v1217, 8
        %v1258 = vmul.u32.u64.compose %v1257, %v1256
        %v1259 = vextract.low.u32 %v1258
        %v1260 = vextract.high.u32 %v1258
        %v1261 = vmul.u32.u64.compose %v1257, %v1252
        %v1262 = vextract.low.u32 %v1261
        %v1263 = vextract.high.u32 %v1261
        %v1264 = vmul.u32 %v1257, %v1248
        %v1265 = vadd.s32 %v1260, %v1262
        %vm1266 = vc.u32 %v1260, %v1262
        %v1267 = vadd.s32 %v1263, 1
        %v1268 = vsel %vm1266, %v1267, %v1263
        %v1269 = vadd.s32 %v1264, %v1268
        %v1270 = vadd.s32 %v1269, 536870912
        %v1271 = vshrl.u32 %v1270, 30
        %v1272 = vshll.u32 %v1271, 30
        %v1273 = vsub.s32 %v1269, %v1272
        %vm1274 = vcmp.lt.s32.totalorder %v1273, 0
        %v1275 = vsub.s32 0, %v1273
        %v1276 = vsel %vm1274, %v1275, %v1273
        %v1277 = vclz %v1276
        %v1278 = vsub.s32 %v1277, 2
        %vm1279 = vcmp.gt.s32.totalorder 0, %v1278
        %v1280 = vsel %vm1279, 0, %v1278
        %v1281 = vsub.s32 32, %v1280
        %v1282 = vshll.u32 %v1273, %v1280
        %v1283 = vshrl.u32 %v1265, %v1281
        %v1284 = vor.u32 %v1282, %v1283
        %v1285 = vsub.s32 4294967266, %v1280
        %v1286 = vadd.s32 %v1285, 127
        %v1287 = vshll.u32 %v1286, 23
        %v1288 = vor.u32 4788187, %v1287
        %v1289 = vand.u32 2147483647, %v1288
        %v1291 = vcvt.s32.f32 %v1284
        %v1292 = vmul.f32 %v1291, %v1289
        %v1293 = vxor.u32 %v1292, 2147483648
        %v1294 = vsel %vm1211, %v1293, %v1292
        %v1295 = vsub.s32 4, %v1271
        %v1296 = vsel %vm1211, %v1295, %v1271
        %v1297 = vsel %vm1210, %v515, %v1294
        %v1298 = vsel %vm1210, 0, %v1296
        %v1299 = vcosq.f32.pop %v1297
        %v1300 = vsinq.f32.pop %v1297
        %vm1301 = vweird.f32 %v515
        %v1302 = vand.u32 %v1298, 3
        %vm1303 = vcmp.lt.s32.totalorder %v1302, 2
        %vm1304 = vcmp.eq.s32.totalorder %v1302, 0
        %v1305 = vxor.u32 %v1300, 2147483648
        %v1306 = vsel %vm1304, %v1299, %v1305
        %vm1307 = vcmp.eq.s32.totalorder %v1302, 2
        %v1308 = vxor.u32 %v1299, 2147483648
        %v1309 = vsel %vm1307, %v1308, %v1300
        %v1310 = vsel %vm1303, %v1306, %v1309
        %v1311 = vsel %vm1301, nan, %v1310
        %v1312 = vand.u32 2147483647, %v517
        %vm1313 = vcmp.le.f32.partialorder %v1312, 0.7853982
        %vm1314 = vcmp.lt.s32.totalorder %v517, 0
        %v1315 = vand.u32 %v517, 2139095040
        %v1316 = vshrl.u32 %v1315, 23
        %v1317 = vsub.s32 %v1316, 127
        %v1318 = vand.u32 2147483647, %v517
        %v1319 = vand.u32 %v1318, 8388607
        %v1320 = vor.u32 %v1319, 8388608
        %v1321 = vsub.s32 0, %v1320
        %v1322 = vadd.s32 %v1317, 1
        %vm1323 = vcmp.gt.s32.totalorder %v1322, 0
        %v1324 = vsel %vm1323, %v1322, 0
        %v1325 = vshrl.u32 %v1324, 5
        %v1326 = vand.u32 %v1324, 31
        %v1327 = vsub.s32 32, %v1326
        %v1328 = vshrl.u32 683565275, %v1327
        %v1329 = vshll.u32 683565275, %v1326
        %v1330 = vshrl.u32 2475754826, %v1327
        %v1331 = vor.u32 %v1329, %v1330
        %v1332 = vshll.u32 2475754826, %v1326
        %v1333 = vshrl.u32 2131351028, %v1327
        %v1334 = vor.u32 %v1332, %v1333
        %v1335 = vshll.u32 2131351028, %v1326
        %v1336 = vshrl.u32 2102212464, %v1327
        %v1337 = vor.u32 %v1335, %v1336
        %v1338 = vshll.u32 2102212464, %v1326
        %v1339 = vshrl.u32 920167782, %v1327
        %v1340 = vor.u32 %v1338, %v1339
        %v1341 = vshll.u32 920167782, %v1326
        %v1342 = vshrl.u32 1326507024, %v1327
        %v1343 = vor.u32 %v1341, %v1342
        %vm1344 = vcmp.lt.s32.totalorder %v1325, 1
        %vm1345 = vcmp.lt.s32.totalorder %v1325, 2
        %vm1346 = vcmp.lt.s32.totalorder %v1325, 3
        %vm1347 = vcmp.lt.s32.totalorder %v1325, 4
        %v1348 = vsel %vm1344, %v1328, %v1331
        %v1349 = vsel %vm1347, %v1337, 2102212464
        %v1350 = vsel %vm1346, %v1334, %v1349
        %v1351 = vsel %vm1345, %v1348, %v1350
        %v1352 = vsel %vm1344, %v1331, %v1334
        %v1353 = vsel %vm1347, %v1340, 920167782
        %v1354 = vsel %vm1346, %v1337, %v1353
        %v1355 = vsel %vm1345, %v1352, %v1354
        %v1356 = vsel %vm1344, %v1334, %v1337
        %v1357 = vsel %vm1347, %v1343, 1326507024
        %v1358 = vsel %vm1346, %v1340, %v1357
        %v1359 = vsel %vm1345, %v1356, %v1358
        %v1360 = vshll.u32 %v1320, 8
        %v1361 = vmul.u32.u64.compose %v1360, %v1359
        %v1362 = vextract.low.u32 %v1361
        %v1363 = vextract.high.u32 %v1361
        %v1364 = vmul.u32.u64.compose %v1360, %v1355
        %v1365 = vextract.low.u32 %v1364
        %v1366 = vextract.high.u32 %v1364
        %v1367 = vmul.u32 %v1360, %v1351
        %v1368 = vadd.s32 %v1363, %v1365
        %vm1369 = vc.u32 %v1363, %v1365
        %v1370 = vadd.s32 %v1366, 1
        %v1371 = vsel %vm1369, %v1370, %v1366
        %v1372 = vadd.s32 %v1367, %v1371
        %v1373 = vadd.s32 %v1372, 536870912
        %v1374 = vshrl.u32 %v1373, 30
        %v1375 = vshll.u32 %v1374, 30
        %v1376 = vsub.s32 %v1372, %v1375
        %vm1377 = vcmp.lt.s32.totalorder %v1376, 0
        %v1378 = vsub.s32 0, %v1376
        %v1379 = vsel %vm1377, %v1378, %v1376
        %v1380 = vclz %v1379
        %v1381 = vsub.s32 %v1380, 2
        %vm1382 = vcmp.gt.s32.totalorder 0, %v1381
        %v1383 = vsel %vm1382, 0, %v1381
        %v1384 = vsub.s32 32, %v1383
        %v1385 = vshll.u32 %v1376, %v1383
        %v1386 = vshrl.u32 %v1368, %v1384
        %v1387 = vor.u32 %v1385, %v1386
        %v1388 = vsub.s32 4294967266, %v1383
        %v1389 = vadd.s32 %v1388, 127
        %v1390 = vshll.u32 %v1389, 23
        %v1391 = vor.u32 4788187, %v1390
        %v1392 = vand.u32 2147483647, %v1391
        %v1394 = vcvt.s32.f32 %v1387
        %v1395 = vmul.f32 %v1394, %v1392
        %v1396 = vxor.u32 %v1395, 2147483648
        %v1397 = vsel %vm1314, %v1396, %v1395
        %v1398 = vsub.s32 4, %v1374
        %v1399 = vsel %vm1314, %v1398, %v1374
        %v1400 = vsel %vm1313, %v517, %v1397
        %v1401 = vsel %vm1313, 0, %v1399
        %v1402 = vcosq.f32.pop %v1400
        %v1403 = vsinq.f32.pop %v1400
        %vm1404 = vweird.f32 %v517
        %v1405 = vand.u32 %v1401, 3
        %vm1406 = vcmp.lt.s32.totalorder %v1405, 2
        %vm1407 = vcmp.eq.s32.totalorder %v1405, 0
        %v1408 = vxor.u32 %v1403, 2147483648
        %v1409 = vsel %vm1407, %v1402, %v1408
        %vm1410 = vcmp.eq.s32.totalorder %v1405, 2
        %v1411 = vxor.u32 %v1402, 2147483648
        %v1412 = vsel %vm1410, %v1411, %v1403
        %v1413 = vsel %vm1406, %v1409, %v1412
        %v1414 = vsel %vm1404, nan, %v1413
        %v1415 = vand.u32 2147483647, %v521
        %vm1416 = vcmp.le.f32.partialorder %v1415, 0.7853982
        %vm1417 = vcmp.lt.s32.totalorder %v521, 0
        %v1418 = vand.u32 %v521, 2139095040
        %v1419 = vshrl.u32 %v1418, 23
        %v1420 = vsub.s32 %v1419, 127
        %v1421 = vand.u32 2147483647, %v521
        %v1422 = vand.u32 %v1421, 8388607
        %v1423 = vor.u32 %v1422, 8388608
        %v1424 = vsub.s32 0, %v1423
        %v1425 = vadd.s32 %v1420, 1
        %vm1426 = vcmp.gt.s32.totalorder %v1425, 0
        %v1427 = vsel %vm1426, %v1425, 0
        %v1428 = vshrl.u32 %v1427, 5
        %v1429 = vand.u32 %v1427, 31
        %v1430 = vsub.s32 32, %v1429
        %v1431 = vshrl.u32 683565275, %v1430
        %v1432 = vshll.u32 683565275, %v1429
        %v1433 = vshrl.u32 2475754826, %v1430
        %v1434 = vor.u32 %v1432, %v1433
        %v1435 = vshll.u32 2475754826, %v1429
        %v1436 = vshrl.u32 2131351028, %v1430
        %v1437 = vor.u32 %v1435, %v1436
        %v1438 = vshll.u32 2131351028, %v1429
        %v1439 = vshrl.u32 2102212464, %v1430
        %v1440 = vor.u32 %v1438, %v1439
        %v1441 = vshll.u32 2102212464, %v1429
        %v1442 = vshrl.u32 920167782, %v1430
        %v1443 = vor.u32 %v1441, %v1442
        %v1444 = vshll.u32 920167782, %v1429
        %v1445 = vshrl.u32 1326507024, %v1430
        %v1446 = vor.u32 %v1444, %v1445
        %vm1447 = vcmp.lt.s32.totalorder %v1428, 1
        %vm1448 = vcmp.lt.s32.totalorder %v1428, 2
        %vm1449 = vcmp.lt.s32.totalorder %v1428, 3
        %vm1450 = vcmp.lt.s32.totalorder %v1428, 4
        %v1451 = vsel %vm1447, %v1431, %v1434
        %v1452 = vsel %vm1450, %v1440, 2102212464
        %v1453 = vsel %vm1449, %v1437, %v1452
        %v1454 = vsel %vm1448, %v1451, %v1453
        %v1455 = vsel %vm1447, %v1434, %v1437
        %v1456 = vsel %vm1450, %v1443, 920167782
        %v1457 = vsel %vm1449, %v1440, %v1456
        %v1458 = vsel %vm1448, %v1455, %v1457
        %v1459 = vsel %vm1447, %v1437, %v1440
        %v1460 = vsel %vm1450, %v1446, 1326507024
        %v1461 = vsel %vm1449, %v1443, %v1460
        %v1462 = vsel %vm1448, %v1459, %v1461
        %v1463 = vshll.u32 %v1423, 8
        %v1464 = vmul.u32.u64.compose %v1463, %v1462
        %v1465 = vextract.low.u32 %v1464
        %v1466 = vextract.high.u32 %v1464
        %v1467 = vmul.u32.u64.compose %v1463, %v1458
        %v1468 = vextract.low.u32 %v1467
        %v1469 = vextract.high.u32 %v1467
        %v1470 = vmul.u32 %v1463, %v1454
        %v1471 = vadd.s32 %v1466, %v1468
        %vm1472 = vc.u32 %v1466, %v1468
        %v1473 = vadd.s32 %v1469, 1
        %v1474 = vsel %vm1472, %v1473, %v1469
        %v1475 = vadd.s32 %v1470, %v1474
        %v1476 = vadd.s32 %v1475, 536870912
        %v1477 = vshrl.u32 %v1476, 30
        %v1478 = vshll.u32 %v1477, 30
        %v1479 = vsub.s32 %v1475, %v1478
        %vm1480 = vcmp.lt.s32.totalorder %v1479, 0
        %v1481 = vsub.s32 0, %v1479
        %v1482 = vsel %vm1480, %v1481, %v1479
        %v1483 = vclz %v1482
        %v1484 = vsub.s32 %v1483, 2
        %vm1485 = vcmp.gt.s32.totalorder 0, %v1484
        %v1486 = vsel %vm1485, 0, %v1484
        %v1487 = vsub.s32 32, %v1486
        %v1488 = vshll.u32 %v1479, %v1486
        %v1489 = vshrl.u32 %v1471, %v1487
        %v1490 = vor.u32 %v1488, %v1489
        %v1491 = vsub.s32 4294967266, %v1486
        %v1492 = vadd.s32 %v1491, 127
        %v1493 = vshll.u32 %v1492, 23
        %v1494 = vor.u32 4788187, %v1493
        %v1495 = vand.u32 2147483647, %v1494
        %v1497 = vcvt.s32.f32 %v1490
        %v1498 = vmul.f32 %v1497, %v1495
        %v1499 = vxor.u32 %v1498, 2147483648
        %v1500 = vsel %vm1417, %v1499, %v1498
        %v1501 = vsub.s32 4, %v1477
        %v1502 = vsel %vm1417, %v1501, %v1477
        %v1503 = vsel %vm1416, %v521, %v1500
        %v1504 = vsel %vm1416, 0, %v1502
        %v1505 = vcosq.f32.pop %v1503
        %v1506 = vsinq.f32.pop %v1503
        %vm1507 = vweird.f32 %v521
        %v1508 = vand.u32 %v1504, 3
        %vm1509 = vcmp.lt.s32.totalorder %v1508, 2
        %vm1510 = vcmp.eq.s32.totalorder %v1508, 0
        %v1511 = vxor.u32 %v1506, 2147483648
        %v1512 = vsel %vm1510, %v1505, %v1511
        %vm1513 = vcmp.eq.s32.totalorder %v1508, 2
        %v1514 = vxor.u32 %v1505, 2147483648
        %v1515 = vsel %vm1513, %v1514, %v1506
        %v1516 = vsel %vm1509, %v1512, %v1515
        %v1517 = vsel %vm1507, nan, %v1516
        %v1518 = vand.u32 2147483647, %v523
        %vm1519 = vcmp.le.f32.partialorder %v1518, 0.7853982
        %vm1520 = vcmp.lt.s32.totalorder %v523, 0
        %v1521 = vand.u32 %v523, 2139095040
        %v1522 = vshrl.u32 %v1521, 23
        %v1523 = vsub.s32 %v1522, 127
        %v1524 = vand.u32 2147483647, %v523
        %v1525 = vand.u32 %v1524, 8388607
        %v1526 = vor.u32 %v1525, 8388608
        %v1527 = vsub.s32 0, %v1526
        %v1528 = vadd.s32 %v1523, 1
        %vm1529 = vcmp.gt.s32.totalorder %v1528, 0
        %v1530 = vsel %vm1529, %v1528, 0
        %v1531 = vshrl.u32 %v1530, 5
        %v1532 = vand.u32 %v1530, 31
        %v1533 = vsub.s32 32, %v1532
        %v1534 = vshrl.u32 683565275, %v1533
        %v1535 = vshll.u32 683565275, %v1532
        %v1536 = vshrl.u32 2475754826, %v1533
        %v1537 = vor.u32 %v1535, %v1536
        %v1538 = vshll.u32 2475754826, %v1532
        %v1539 = vshrl.u32 2131351028, %v1533
        %v1540 = vor.u32 %v1538, %v1539
        %v1541 = vshll.u32 2131351028, %v1532
        %v1542 = vshrl.u32 2102212464, %v1533
        %v1543 = vor.u32 %v1541, %v1542
        %v1544 = vshll.u32 2102212464, %v1532
        %v1545 = vshrl.u32 920167782, %v1533
        %v1546 = vor.u32 %v1544, %v1545
        %v1547 = vshll.u32 920167782, %v1532
        %v1548 = vshrl.u32 1326507024, %v1533
        %v1549 = vor.u32 %v1547, %v1548
        %vm1550 = vcmp.lt.s32.totalorder %v1531, 1
        %vm1551 = vcmp.lt.s32.totalorder %v1531, 2
        %vm1552 = vcmp.lt.s32.totalorder %v1531, 3
        %vm1553 = vcmp.lt.s32.totalorder %v1531, 4
        %v1554 = vsel %vm1550, %v1534, %v1537
        %v1555 = vsel %vm1553, %v1543, 2102212464
        %v1556 = vsel %vm1552, %v1540, %v1555
        %v1557 = vsel %vm1551, %v1554, %v1556
        %v1558 = vsel %vm1550, %v1537, %v1540
        %v1559 = vsel %vm1553, %v1546, 920167782
        %v1560 = vsel %vm1552, %v1543, %v1559
        %v1561 = vsel %vm1551, %v1558, %v1560
        %v1562 = vsel %vm1550, %v1540, %v1543
        %v1563 = vsel %vm1553, %v1549, 1326507024
        %v1564 = vsel %vm1552, %v1546, %v1563
        %v1565 = vsel %vm1551, %v1562, %v1564
        %v1566 = vshll.u32 %v1526, 8
        %v1567 = vmul.u32.u64.compose %v1566, %v1565
        %v1568 = vextract.low.u32 %v1567
        %v1569 = vextract.high.u32 %v1567
        %v1570 = vmul.u32.u64.compose %v1566, %v1561
        %v1571 = vextract.low.u32 %v1570
        %v1572 = vextract.high.u32 %v1570
        %v1573 = vmul.u32 %v1566, %v1557
        %v1574 = vadd.s32 %v1569, %v1571
        %vm1575 = vc.u32 %v1569, %v1571
        %v1576 = vadd.s32 %v1572, 1
        %v1577 = vsel %vm1575, %v1576, %v1572
        %v1578 = vadd.s32 %v1573, %v1577
        %v1579 = vadd.s32 %v1578, 536870912
        %v1580 = vshrl.u32 %v1579, 30
        %v1581 = vshll.u32 %v1580, 30
        %v1582 = vsub.s32 %v1578, %v1581
        %vm1583 = vcmp.lt.s32.totalorder %v1582, 0
        %v1584 = vsub.s32 0, %v1582
        %v1585 = vsel %vm1583, %v1584, %v1582
        %v1586 = vclz %v1585
        %v1587 = vsub.s32 %v1586, 2
        %vm1588 = vcmp.gt.s32.totalorder 0, %v1587
        %v1589 = vsel %vm1588, 0, %v1587
        %v1590 = vsub.s32 32, %v1589
        %v1591 = vshll.u32 %v1582, %v1589
        %v1592 = vshrl.u32 %v1574, %v1590
        %v1593 = vor.u32 %v1591, %v1592
        %v1594 = vsub.s32 4294967266, %v1589
        %v1595 = vadd.s32 %v1594, 127
        %v1596 = vshll.u32 %v1595, 23
        %v1597 = vor.u32 4788187, %v1596
        %v1598 = vand.u32 2147483647, %v1597
        %v1600 = vcvt.s32.f32 %v1593
        %v1601 = vmul.f32 %v1600, %v1598
        %v1602 = vxor.u32 %v1601, 2147483648
        %v1603 = vsel %vm1520, %v1602, %v1601
        %v1604 = vsub.s32 4, %v1580
        %v1605 = vsel %vm1520, %v1604, %v1580
        %v1606 = vsel %vm1519, %v523, %v1603
        %v1607 = vsel %vm1519, 0, %v1605
        %v1608 = vcosq.f32.pop %v1606
        %v1609 = vsinq.f32.pop %v1606
        %vm1610 = vweird.f32 %v523
        %v1611 = vand.u32 %v1607, 3
        %vm1612 = vcmp.lt.s32.totalorder %v1611, 2
        %vm1613 = vcmp.eq.s32.totalorder %v1611, 0
        %v1614 = vxor.u32 %v1609, 2147483648
        %v1615 = vsel %vm1613, %v1608, %v1614
        %vm1616 = vcmp.eq.s32.totalorder %v1611, 2
        %v1617 = vxor.u32 %v1608, 2147483648
        %v1618 = vsel %vm1616, %v1617, %v1609
        %v1619 = vsel %vm1612, %v1615, %v1618
        %v1620 = vsel %vm1610, nan, %v1619
        %v1621 = vand.u32 2147483647, %v527
        %vm1622 = vcmp.le.f32.partialorder %v1621, 0.7853982
        %vm1623 = vcmp.lt.s32.totalorder %v527, 0
        %v1624 = vand.u32 %v527, 2139095040
        %v1625 = vshrl.u32 %v1624, 23
        %v1626 = vsub.s32 %v1625, 127
        %v1627 = vand.u32 2147483647, %v527
        %v1628 = vand.u32 %v1627, 8388607
        %v1629 = vor.u32 %v1628, 8388608
        %v1630 = vsub.s32 0, %v1629
        %v1631 = vadd.s32 %v1626, 1
        %vm1632 = vcmp.gt.s32.totalorder %v1631, 0
        %v1633 = vsel %vm1632, %v1631, 0
        %v1634 = vshrl.u32 %v1633, 5
        %v1635 = vand.u32 %v1633, 31
        %v1636 = vsub.s32 32, %v1635
        %v1637 = vshrl.u32 683565275, %v1636
        %v1638 = vshll.u32 683565275, %v1635
        %v1639 = vshrl.u32 2475754826, %v1636
        %v1640 = vor.u32 %v1638, %v1639
        %v1641 = vshll.u32 2475754826, %v1635
        %v1642 = vshrl.u32 2131351028, %v1636
        %v1643 = vor.u32 %v1641, %v1642
        %v1644 = vshll.u32 2131351028, %v1635
        %v1645 = vshrl.u32 2102212464, %v1636
        %v1646 = vor.u32 %v1644, %v1645
        %v1647 = vshll.u32 2102212464, %v1635
        %v1648 = vshrl.u32 920167782, %v1636
        %v1649 = vor.u32 %v1647, %v1648
        %v1650 = vshll.u32 920167782, %v1635
        %v1651 = vshrl.u32 1326507024, %v1636
        %v1652 = vor.u32 %v1650, %v1651
        %vm1653 = vcmp.lt.s32.totalorder %v1634, 1
        %vm1654 = vcmp.lt.s32.totalorder %v1634, 2
        %vm1655 = vcmp.lt.s32.totalorder %v1634, 3
        %vm1656 = vcmp.lt.s32.totalorder %v1634, 4
        %v1657 = vsel %vm1653, %v1637, %v1640
        %v1658 = vsel %vm1656, %v1646, 2102212464
        %v1659 = vsel %vm1655, %v1643, %v1658
        %v1660 = vsel %vm1654, %v1657, %v1659
        %v1661 = vsel %vm1653, %v1640, %v1643
        %v1662 = vsel %vm1656, %v1649, 920167782
        %v1663 = vsel %vm1655, %v1646, %v1662
        %v1664 = vsel %vm1654, %v1661, %v1663
        %v1665 = vsel %vm1653, %v1643, %v1646
        %v1666 = vsel %vm1656, %v1652, 1326507024
        %v1667 = vsel %vm1655, %v1649, %v1666
        %v1668 = vsel %vm1654, %v1665, %v1667
        %v1669 = vshll.u32 %v1629, 8
        %v1670 = vmul.u32.u64.compose %v1669, %v1668
        %v1671 = vextract.low.u32 %v1670
        %v1672 = vextract.high.u32 %v1670
        %v1673 = vmul.u32.u64.compose %v1669, %v1664
        %v1674 = vextract.low.u32 %v1673
        %v1675 = vextract.high.u32 %v1673
        %v1676 = vmul.u32 %v1669, %v1660
        %v1677 = vadd.s32 %v1672, %v1674
        %vm1678 = vc.u32 %v1672, %v1674
        %v1679 = vadd.s32 %v1675, 1
        %v1680 = vsel %vm1678, %v1679, %v1675
        %v1681 = vadd.s32 %v1676, %v1680
        %v1682 = vadd.s32 %v1681, 536870912
        %v1683 = vshrl.u32 %v1682, 30
        %v1684 = vshll.u32 %v1683, 30
        %v1685 = vsub.s32 %v1681, %v1684
        %vm1686 = vcmp.lt.s32.totalorder %v1685, 0
        %v1687 = vsub.s32 0, %v1685
        %v1688 = vsel %vm1686, %v1687, %v1685
        %v1689 = vclz %v1688
        %v1690 = vsub.s32 %v1689, 2
        %vm1691 = vcmp.gt.s32.totalorder 0, %v1690
        %v1692 = vsel %vm1691, 0, %v1690
        %v1693 = vsub.s32 32, %v1692
        %v1694 = vshll.u32 %v1685, %v1692
        %v1695 = vshrl.u32 %v1677, %v1693
        %v1696 = vor.u32 %v1694, %v1695
        %v1697 = vsub.s32 4294967266, %v1692
        %v1698 = vadd.s32 %v1697, 127
        %v1699 = vshll.u32 %v1698, 23
        %v1700 = vor.u32 4788187, %v1699
        %v1701 = vand.u32 2147483647, %v1700
        %v1703 = vcvt.s32.f32 %v1696
        %v1704 = vmul.f32 %v1703, %v1701
        %v1705 = vxor.u32 %v1704, 2147483648
        %v1706 = vsel %vm1623, %v1705, %v1704
        %v1707 = vsub.s32 4, %v1683
        %v1708 = vsel %vm1623, %v1707, %v1683
        %v1709 = vsel %vm1622, %v527, %v1706
        %v1710 = vsel %vm1622, 0, %v1708
        %v1711 = vcosq.f32.pop %v1709
        %v1712 = vsinq.f32.pop %v1709
        %vm1713 = vweird.f32 %v527
        %v1714 = vand.u32 %v1710, 3
        %vm1715 = vcmp.lt.s32.totalorder %v1714, 2
        %vm1716 = vcmp.eq.s32.totalorder %v1714, 0
        %v1717 = vxor.u32 %v1712, 2147483648
        %v1718 = vsel %vm1716, %v1711, %v1717
        %vm1719 = vcmp.eq.s32.totalorder %v1714, 2
        %v1720 = vxor.u32 %v1711, 2147483648
        %v1721 = vsel %vm1719, %v1720, %v1712
        %v1722 = vsel %vm1715, %v1718, %v1721
        %v1723 = vsel %vm1713, nan, %v1722
        %v1724 = vand.u32 2147483647, %v529
        %vm1725 = vcmp.le.f32.partialorder %v1724, 0.7853982
        %vm1726 = vcmp.lt.s32.totalorder %v529, 0
        %v1727 = vand.u32 %v529, 2139095040
        %v1728 = vshrl.u32 %v1727, 23
        %v1729 = vsub.s32 %v1728, 127
        %v1730 = vand.u32 2147483647, %v529
        %v1731 = vand.u32 %v1730, 8388607
        %v1732 = vor.u32 %v1731, 8388608
        %v1733 = vsub.s32 0, %v1732
        %v1734 = vadd.s32 %v1729, 1
        %vm1735 = vcmp.gt.s32.totalorder %v1734, 0
        %v1736 = vsel %vm1735, %v1734, 0
        %v1737 = vshrl.u32 %v1736, 5
        %v1738 = vand.u32 %v1736, 31
        %v1739 = vsub.s32 32, %v1738
        %v1740 = vshrl.u32 683565275, %v1739
        %v1741 = vshll.u32 683565275, %v1738
        %v1742 = vshrl.u32 2475754826, %v1739
        %v1743 = vor.u32 %v1741, %v1742
        %v1744 = vshll.u32 2475754826, %v1738
        %v1745 = vshrl.u32 2131351028, %v1739
        %v1746 = vor.u32 %v1744, %v1745
        %v1747 = vshll.u32 2131351028, %v1738
        %v1748 = vshrl.u32 2102212464, %v1739
        %v1749 = vor.u32 %v1747, %v1748
        %v1750 = vshll.u32 2102212464, %v1738
        %v1751 = vshrl.u32 920167782, %v1739
        %v1752 = vor.u32 %v1750, %v1751
        %v1753 = vshll.u32 920167782, %v1738
        %v1754 = vshrl.u32 1326507024, %v1739
        %v1755 = vor.u32 %v1753, %v1754
        %vm1756 = vcmp.lt.s32.totalorder %v1737, 1
        %vm1757 = vcmp.lt.s32.totalorder %v1737, 2
        %vm1758 = vcmp.lt.s32.totalorder %v1737, 3
        %vm1759 = vcmp.lt.s32.totalorder %v1737, 4
        %v1760 = vsel %vm1756, %v1740, %v1743
        %v1761 = vsel %vm1759, %v1749, 2102212464
        %v1762 = vsel %vm1758, %v1746, %v1761
        %v1763 = vsel %vm1757, %v1760, %v1762
        %v1764 = vsel %vm1756, %v1743, %v1746
        %v1765 = vsel %vm1759, %v1752, 920167782
        %v1766 = vsel %vm1758, %v1749, %v1765
        %v1767 = vsel %vm1757, %v1764, %v1766
        %v1768 = vsel %vm1756, %v1746, %v1749
        %v1769 = vsel %vm1759, %v1755, 1326507024
        %v1770 = vsel %vm1758, %v1752, %v1769
        %v1771 = vsel %vm1757, %v1768, %v1770
        %v1772 = vshll.u32 %v1732, 8
        %v1773 = vmul.u32.u64.compose %v1772, %v1771
        %v1774 = vextract.low.u32 %v1773
        %v1775 = vextract.high.u32 %v1773
        %v1776 = vmul.u32.u64.compose %v1772, %v1767
        %v1777 = vextract.low.u32 %v1776
        %v1778 = vextract.high.u32 %v1776
        %v1779 = vmul.u32 %v1772, %v1763
        %v1780 = vadd.s32 %v1775, %v1777
        %vm1781 = vc.u32 %v1775, %v1777
        %v1782 = vadd.s32 %v1778, 1
        %v1783 = vsel %vm1781, %v1782, %v1778
        %v1784 = vadd.s32 %v1779, %v1783
        %v1785 = vadd.s32 %v1784, 536870912
        %v1786 = vshrl.u32 %v1785, 30
        %v1787 = vshll.u32 %v1786, 30
        %v1788 = vsub.s32 %v1784, %v1787
        %vm1789 = vcmp.lt.s32.totalorder %v1788, 0
        %v1790 = vsub.s32 0, %v1788
        %v1791 = vsel %vm1789, %v1790, %v1788
        %v1792 = vclz %v1791
        %v1793 = vsub.s32 %v1792, 2
        %vm1794 = vcmp.gt.s32.totalorder 0, %v1793
        %v1795 = vsel %vm1794, 0, %v1793
        %v1796 = vsub.s32 32, %v1795
        %v1797 = vshll.u32 %v1788, %v1795
        %v1798 = vshrl.u32 %v1780, %v1796
        %v1799 = vor.u32 %v1797, %v1798
        %v1800 = vsub.s32 4294967266, %v1795
        %v1801 = vadd.s32 %v1800, 127
        %v1802 = vshll.u32 %v1801, 23
        %v1803 = vor.u32 4788187, %v1802
        %v1804 = vand.u32 2147483647, %v1803
        %v1806 = vcvt.s32.f32 %v1799
        %v1807 = vmul.f32 %v1806, %v1804
        %v1808 = vxor.u32 %v1807, 2147483648
        %v1809 = vsel %vm1726, %v1808, %v1807
        %v1810 = vsub.s32 4, %v1786
        %v1811 = vsel %vm1726, %v1810, %v1786
        %v1812 = vsel %vm1725, %v529, %v1809
        %v1813 = vsel %vm1725, 0, %v1811
        %v1814 = vcosq.f32.pop %v1812
        %v1815 = vsinq.f32.pop %v1812
        %vm1816 = vweird.f32 %v529
        %v1817 = vand.u32 %v1813, 3
        %vm1818 = vcmp.lt.s32.totalorder %v1817, 2
        %vm1819 = vcmp.eq.s32.totalorder %v1817, 0
        %v1820 = vxor.u32 %v1815, 2147483648
        %v1821 = vsel %vm1819, %v1814, %v1820
        %vm1822 = vcmp.eq.s32.totalorder %v1817, 2
        %v1823 = vxor.u32 %v1814, 2147483648
        %v1824 = vsel %vm1822, %v1823, %v1815
        %v1825 = vsel %vm1818, %v1821, %v1824
        %v1826 = vsel %vm1816, nan, %v1825
        %v1827 = vand.u32 2147483647, %v533
        %vm1828 = vcmp.le.f32.partialorder %v1827, 0.7853982
        %vm1829 = vcmp.lt.s32.totalorder %v533, 0
        %v1830 = vand.u32 %v533, 2139095040
        %v1831 = vshrl.u32 %v1830, 23
        %v1832 = vsub.s32 %v1831, 127
        %v1833 = vand.u32 2147483647, %v533
        %v1834 = vand.u32 %v1833, 8388607
        %v1835 = vor.u32 %v1834, 8388608
        %v1836 = vsub.s32 0, %v1835
        %v1837 = vadd.s32 %v1832, 1
        %vm1838 = vcmp.gt.s32.totalorder %v1837, 0
        %v1839 = vsel %vm1838, %v1837, 0
        %v1840 = vshrl.u32 %v1839, 5
        %v1841 = vand.u32 %v1839, 31
        %v1842 = vsub.s32 32, %v1841
        %v1843 = vshrl.u32 683565275, %v1842
        %v1844 = vshll.u32 683565275, %v1841
        %v1845 = vshrl.u32 2475754826, %v1842
        %v1846 = vor.u32 %v1844, %v1845
        %v1847 = vshll.u32 2475754826, %v1841
        %v1848 = vshrl.u32 2131351028, %v1842
        %v1849 = vor.u32 %v1847, %v1848
        %v1850 = vshll.u32 2131351028, %v1841
        %v1851 = vshrl.u32 2102212464, %v1842
        %v1852 = vor.u32 %v1850, %v1851
        %v1853 = vshll.u32 2102212464, %v1841
        %v1854 = vshrl.u32 920167782, %v1842
        %v1855 = vor.u32 %v1853, %v1854
        %v1856 = vshll.u32 920167782, %v1841
        %v1857 = vshrl.u32 1326507024, %v1842
        %v1858 = vor.u32 %v1856, %v1857
        %vm1859 = vcmp.lt.s32.totalorder %v1840, 1
        %vm1860 = vcmp.lt.s32.totalorder %v1840, 2
        %vm1861 = vcmp.lt.s32.totalorder %v1840, 3
        %vm1862 = vcmp.lt.s32.totalorder %v1840, 4
        %v1863 = vsel %vm1859, %v1843, %v1846
        %v1864 = vsel %vm1862, %v1852, 2102212464
        %v1865 = vsel %vm1861, %v1849, %v1864
        %v1866 = vsel %vm1860, %v1863, %v1865
        %v1867 = vsel %vm1859, %v1846, %v1849
        %v1868 = vsel %vm1862, %v1855, 920167782
        %v1869 = vsel %vm1861, %v1852, %v1868
        %v1870 = vsel %vm1860, %v1867, %v1869
        %v1871 = vsel %vm1859, %v1849, %v1852
        %v1872 = vsel %vm1862, %v1858, 1326507024
        %v1873 = vsel %vm1861, %v1855, %v1872
        %v1874 = vsel %vm1860, %v1871, %v1873
        %v1875 = vshll.u32 %v1835, 8
        %v1876 = vmul.u32.u64.compose %v1875, %v1874
        %v1877 = vextract.low.u32 %v1876
        %v1878 = vextract.high.u32 %v1876
        %v1879 = vmul.u32.u64.compose %v1875, %v1870
        %v1880 = vextract.low.u32 %v1879
        %v1881 = vextract.high.u32 %v1879
        %v1882 = vmul.u32 %v1875, %v1866
        %v1883 = vadd.s32 %v1878, %v1880
        %vm1884 = vc.u32 %v1878, %v1880
        %v1885 = vadd.s32 %v1881, 1
        %v1886 = vsel %vm1884, %v1885, %v1881
        %v1887 = vadd.s32 %v1882, %v1886
        %v1888 = vadd.s32 %v1887, 536870912
        %v1889 = vshrl.u32 %v1888, 30
        %v1890 = vshll.u32 %v1889, 30
        %v1891 = vsub.s32 %v1887, %v1890
        %vm1892 = vcmp.lt.s32.totalorder %v1891, 0
        %v1893 = vsub.s32 0, %v1891
        %v1894 = vsel %vm1892, %v1893, %v1891
        %v1895 = vclz %v1894
        %v1896 = vsub.s32 %v1895, 2
        %vm1897 = vcmp.gt.s32.totalorder 0, %v1896
        %v1898 = vsel %vm1897, 0, %v1896
        %v1899 = vsub.s32 32, %v1898
        %v1900 = vshll.u32 %v1891, %v1898
        %v1901 = vshrl.u32 %v1883, %v1899
        %v1902 = vor.u32 %v1900, %v1901
        %v1903 = vsub.s32 4294967266, %v1898
        %v1904 = vadd.s32 %v1903, 127
        %v1905 = vshll.u32 %v1904, 23
        %v1906 = vor.u32 4788187, %v1905
        %v1907 = vand.u32 2147483647, %v1906
        %v1909 = vcvt.s32.f32 %v1902
        %v1910 = vmul.f32 %v1909, %v1907
        %v1911 = vxor.u32 %v1910, 2147483648
        %v1912 = vsel %vm1829, %v1911, %v1910
        %v1913 = vsub.s32 4, %v1889
        %v1914 = vsel %vm1829, %v1913, %v1889
        %v1915 = vsel %vm1828, %v533, %v1912
        %v1916 = vsel %vm1828, 0, %v1914
        %v1917 = vcosq.f32.pop %v1915
        %v1918 = vsinq.f32.pop %v1915
        %vm1919 = vweird.f32 %v533
        %v1920 = vand.u32 %v1916, 3
        %vm1921 = vcmp.lt.s32.totalorder %v1920, 2
        %vm1922 = vcmp.eq.s32.totalorder %v1920, 0
        %v1923 = vxor.u32 %v1918, 2147483648
        %v1924 = vsel %vm1922, %v1917, %v1923
        %vm1925 = vcmp.eq.s32.totalorder %v1920, 2
        %v1926 = vxor.u32 %v1917, 2147483648
        %v1927 = vsel %vm1925, %v1926, %v1918
        %v1928 = vsel %vm1921, %v1924, %v1927
        %v1929 = vsel %vm1919, nan, %v1928
        %v1930 = vand.u32 2147483647, %v535
        %vm1931 = vcmp.le.f32.partialorder %v1930, 0.7853982
        %vm1932 = vcmp.lt.s32.totalorder %v535, 0
        %v1933 = vand.u32 %v535, 2139095040
        %v1934 = vshrl.u32 %v1933, 23
        %v1935 = vsub.s32 %v1934, 127
        %v1936 = vand.u32 2147483647, %v535
        %v1937 = vand.u32 %v1936, 8388607
        %v1938 = vor.u32 %v1937, 8388608
        %v1939 = vsub.s32 0, %v1938
        %v1940 = vadd.s32 %v1935, 1
        %vm1941 = vcmp.gt.s32.totalorder %v1940, 0
        %v1942 = vsel %vm1941, %v1940, 0
        %v1943 = vshrl.u32 %v1942, 5
        %v1944 = vand.u32 %v1942, 31
        %v1945 = vsub.s32 32, %v1944
        %v1946 = vshrl.u32 683565275, %v1945
        %v1947 = vshll.u32 683565275, %v1944
        %v1948 = vshrl.u32 2475754826, %v1945
        %v1949 = vor.u32 %v1947, %v1948
        %v1950 = vshll.u32 2475754826, %v1944
        %v1951 = vshrl.u32 2131351028, %v1945
        %v1952 = vor.u32 %v1950, %v1951
        %v1953 = vshll.u32 2131351028, %v1944
        %v1954 = vshrl.u32 2102212464, %v1945
        %v1955 = vor.u32 %v1953, %v1954
        %v1956 = vshll.u32 2102212464, %v1944
        %v1957 = vshrl.u32 920167782, %v1945
        %v1958 = vor.u32 %v1956, %v1957
        %v1959 = vshll.u32 920167782, %v1944
        %v1960 = vshrl.u32 1326507024, %v1945
        %v1961 = vor.u32 %v1959, %v1960
        %vm1962 = vcmp.lt.s32.totalorder %v1943, 1
        %vm1963 = vcmp.lt.s32.totalorder %v1943, 2
        %vm1964 = vcmp.lt.s32.totalorder %v1943, 3
        %vm1965 = vcmp.lt.s32.totalorder %v1943, 4
        %v1966 = vsel %vm1962, %v1946, %v1949
        %v1967 = vsel %vm1965, %v1955, 2102212464
        %v1968 = vsel %vm1964, %v1952, %v1967
        %v1969 = vsel %vm1963, %v1966, %v1968
        %v1970 = vsel %vm1962, %v1949, %v1952
        %v1971 = vsel %vm1965, %v1958, 920167782
        %v1972 = vsel %vm1964, %v1955, %v1971
        %v1973 = vsel %vm1963, %v1970, %v1972
        %v1974 = vsel %vm1962, %v1952, %v1955
        %v1975 = vsel %vm1965, %v1961, 1326507024
        %v1976 = vsel %vm1964, %v1958, %v1975
        %v1977 = vsel %vm1963, %v1974, %v1976
        %v1978 = vshll.u32 %v1938, 8
        %v1979 = vmul.u32.u64.compose %v1978, %v1977
        %v1980 = vextract.low.u32 %v1979
        %v1981 = vextract.high.u32 %v1979
        %v1982 = vmul.u32.u64.compose %v1978, %v1973
        %v1983 = vextract.low.u32 %v1982
        %v1984 = vextract.high.u32 %v1982
        %v1985 = vmul.u32 %v1978, %v1969
        %v1986 = vadd.s32 %v1981, %v1983
        %vm1987 = vc.u32 %v1981, %v1983
        %v1988 = vadd.s32 %v1984, 1
        %v1989 = vsel %vm1987, %v1988, %v1984
        %v1990 = vadd.s32 %v1985, %v1989
        %v1991 = vadd.s32 %v1990, 536870912
        %v1992 = vshrl.u32 %v1991, 30
        %v1993 = vshll.u32 %v1992, 30
        %v1994 = vsub.s32 %v1990, %v1993
        %vm1995 = vcmp.lt.s32.totalorder %v1994, 0
        %v1996 = vsub.s32 0, %v1994
        %v1997 = vsel %vm1995, %v1996, %v1994
        %v1998 = vclz %v1997
        %v1999 = vsub.s32 %v1998, 2
        %vm2000 = vcmp.gt.s32.totalorder 0, %v1999
        %v2001 = vsel %vm2000, 0, %v1999
        %v2002 = vsub.s32 32, %v2001
        %v2003 = vshll.u32 %v1994, %v2001
        %v2004 = vshrl.u32 %v1986, %v2002
        %v2005 = vor.u32 %v2003, %v2004
        %v2006 = vsub.s32 4294967266, %v2001
        %v2007 = vadd.s32 %v2006, 127
        %v2008 = vshll.u32 %v2007, 23
        %v2009 = vor.u32 4788187, %v2008
        %v2010 = vand.u32 2147483647, %v2009
        %v2012 = vcvt.s32.f32 %v2005
        %v2013 = vmul.f32 %v2012, %v2010
        %v2014 = vxor.u32 %v2013, 2147483648
        %v2015 = vsel %vm1932, %v2014, %v2013
        %v2016 = vsub.s32 4, %v1992
        %v2017 = vsel %vm1932, %v2016, %v1992
        %v2018 = vsel %vm1931, %v535, %v2015
        %v2019 = vsel %vm1931, 0, %v2017
        %v2020 = vcosq.f32.pop %v2018
        %v2021 = vsinq.f32.pop %v2018
        %vm2022 = vweird.f32 %v535
        %v2023 = vand.u32 %v2019, 3
        %vm2024 = vcmp.lt.s32.totalorder %v2023, 2
        %vm2025 = vcmp.eq.s32.totalorder %v2023, 0
        %v2026 = vxor.u32 %v2021, 2147483648
        %v2027 = vsel %vm2025, %v2020, %v2026
        %vm2028 = vcmp.eq.s32.totalorder %v2023, 2
        %v2029 = vxor.u32 %v2020, 2147483648
        %v2030 = vsel %vm2028, %v2029, %v2021
        %v2031 = vsel %vm2024, %v2027, %v2030
        %v2032 = vsel %vm2022, nan, %v2031
        %v2033 = vand.u32 2147483647, %v539
        %vm2034 = vcmp.le.f32.partialorder %v2033, 0.7853982
        %vm2035 = vcmp.lt.s32.totalorder %v539, 0
        %v2036 = vand.u32 %v539, 2139095040
        %v2037 = vshrl.u32 %v2036, 23
        %v2038 = vsub.s32 %v2037, 127
        %v2039 = vand.u32 2147483647, %v539
        %v2040 = vand.u32 %v2039, 8388607
        %v2041 = vor.u32 %v2040, 8388608
        %v2042 = vsub.s32 0, %v2041
        %v2043 = vadd.s32 %v2038, 1
        %vm2044 = vcmp.gt.s32.totalorder %v2043, 0
        %v2045 = vsel %vm2044, %v2043, 0
        %v2046 = vshrl.u32 %v2045, 5
        %v2047 = vand.u32 %v2045, 31
        %v2048 = vsub.s32 32, %v2047
        %v2049 = vshrl.u32 683565275, %v2048
        %v2050 = vshll.u32 683565275, %v2047
        %v2051 = vshrl.u32 2475754826, %v2048
        %v2052 = vor.u32 %v2050, %v2051
        %v2053 = vshll.u32 2475754826, %v2047
        %v2054 = vshrl.u32 2131351028, %v2048
        %v2055 = vor.u32 %v2053, %v2054
        %v2056 = vshll.u32 2131351028, %v2047
        %v2057 = vshrl.u32 2102212464, %v2048
        %v2058 = vor.u32 %v2056, %v2057
        %v2059 = vshll.u32 2102212464, %v2047
        %v2060 = vshrl.u32 920167782, %v2048
        %v2061 = vor.u32 %v2059, %v2060
        %v2062 = vshll.u32 920167782, %v2047
        %v2063 = vshrl.u32 1326507024, %v2048
        %v2064 = vor.u32 %v2062, %v2063
        %vm2065 = vcmp.lt.s32.totalorder %v2046, 1
        %vm2066 = vcmp.lt.s32.totalorder %v2046, 2
        %vm2067 = vcmp.lt.s32.totalorder %v2046, 3
        %vm2068 = vcmp.lt.s32.totalorder %v2046, 4
        %v2069 = vsel %vm2065, %v2049, %v2052
        %v2070 = vsel %vm2068, %v2058, 2102212464
        %v2071 = vsel %vm2067, %v2055, %v2070
        %v2072 = vsel %vm2066, %v2069, %v2071
        %v2073 = vsel %vm2065, %v2052, %v2055
        %v2074 = vsel %vm2068, %v2061, 920167782
        %v2075 = vsel %vm2067, %v2058, %v2074
        %v2076 = vsel %vm2066, %v2073, %v2075
        %v2077 = vsel %vm2065, %v2055, %v2058
        %v2078 = vsel %vm2068, %v2064, 1326507024
        %v2079 = vsel %vm2067, %v2061, %v2078
        %v2080 = vsel %vm2066, %v2077, %v2079
        %v2081 = vshll.u32 %v2041, 8
        %v2082 = vmul.u32.u64.compose %v2081, %v2080
        %v2083 = vextract.low.u32 %v2082
        %v2084 = vextract.high.u32 %v2082
        %v2085 = vmul.u32.u64.compose %v2081, %v2076
        %v2086 = vextract.low.u32 %v2085
        %v2087 = vextract.high.u32 %v2085
        %v2088 = vmul.u32 %v2081, %v2072
        %v2089 = vadd.s32 %v2084, %v2086
        %vm2090 = vc.u32 %v2084, %v2086
        %v2091 = vadd.s32 %v2087, 1
        %v2092 = vsel %vm2090, %v2091, %v2087
        %v2093 = vadd.s32 %v2088, %v2092
        %v2094 = vadd.s32 %v2093, 536870912
        %v2095 = vshrl.u32 %v2094, 30
        %v2096 = vshll.u32 %v2095, 30
        %v2097 = vsub.s32 %v2093, %v2096
        %vm2098 = vcmp.lt.s32.totalorder %v2097, 0
        %v2099 = vsub.s32 0, %v2097
        %v2100 = vsel %vm2098, %v2099, %v2097
        %v2101 = vclz %v2100
        %v2102 = vsub.s32 %v2101, 2
        %vm2103 = vcmp.gt.s32.totalorder 0, %v2102
        %v2104 = vsel %vm2103, 0, %v2102
        %v2105 = vsub.s32 32, %v2104
        %v2106 = vshll.u32 %v2097, %v2104
        %v2107 = vshrl.u32 %v2089, %v2105
        %v2108 = vor.u32 %v2106, %v2107
        %v2109 = vsub.s32 4294967266, %v2104
        %v2110 = vadd.s32 %v2109, 127
        %v2111 = vshll.u32 %v2110, 23
        %v2112 = vor.u32 4788187, %v2111
        %v2113 = vand.u32 2147483647, %v2112
        %v2115 = vcvt.s32.f32 %v2108
        %v2116 = vmul.f32 %v2115, %v2113
        %v2117 = vxor.u32 %v2116, 2147483648
        %v2118 = vsel %vm2035, %v2117, %v2116
        %v2119 = vsub.s32 4, %v2095
        %v2120 = vsel %vm2035, %v2119, %v2095
        %v2121 = vsel %vm2034, %v539, %v2118
        %v2122 = vsel %vm2034, 0, %v2120
        %v2123 = vcosq.f32.pop %v2121
        %v2124 = vsinq.f32.pop %v2121
        %vm2125 = vweird.f32 %v539
        %v2126 = vand.u32 %v2122, 3
        %vm2127 = vcmp.lt.s32.totalorder %v2126, 2
        %vm2128 = vcmp.eq.s32.totalorder %v2126, 0
        %v2129 = vxor.u32 %v2124, 2147483648
        %v2130 = vsel %vm2128, %v2123, %v2129
        %vm2131 = vcmp.eq.s32.totalorder %v2126, 2
        %v2132 = vxor.u32 %v2123, 2147483648
        %v2133 = vsel %vm2131, %v2132, %v2124
        %v2134 = vsel %vm2127, %v2130, %v2133
        %v2135 = vsel %vm2125, nan, %v2134
        %v2136 = vand.u32 2147483647, %v541
        %vm2137 = vcmp.le.f32.partialorder %v2136, 0.7853982
        %vm2138 = vcmp.lt.s32.totalorder %v541, 0
        %v2139 = vand.u32 %v541, 2139095040
        %v2140 = vshrl.u32 %v2139, 23
        %v2141 = vsub.s32 %v2140, 127
        %v2142 = vand.u32 2147483647, %v541
        %v2143 = vand.u32 %v2142, 8388607
        %v2144 = vor.u32 %v2143, 8388608
        %v2145 = vsub.s32 0, %v2144
        %v2146 = vadd.s32 %v2141, 1
        %vm2147 = vcmp.gt.s32.totalorder %v2146, 0
        %v2148 = vsel %vm2147, %v2146, 0
        %v2149 = vshrl.u32 %v2148, 5
        %v2150 = vand.u32 %v2148, 31
        %v2151 = vsub.s32 32, %v2150
        %v2152 = vshrl.u32 683565275, %v2151
        %v2153 = vshll.u32 683565275, %v2150
        %v2154 = vshrl.u32 2475754826, %v2151
        %v2155 = vor.u32 %v2153, %v2154
        %v2156 = vshll.u32 2475754826, %v2150
        %v2157 = vshrl.u32 2131351028, %v2151
        %v2158 = vor.u32 %v2156, %v2157
        %v2159 = vshll.u32 2131351028, %v2150
        %v2160 = vshrl.u32 2102212464, %v2151
        %v2161 = vor.u32 %v2159, %v2160
        %v2162 = vshll.u32 2102212464, %v2150
        %v2163 = vshrl.u32 920167782, %v2151
        %v2164 = vor.u32 %v2162, %v2163
        %v2165 = vshll.u32 920167782, %v2150
        %v2166 = vshrl.u32 1326507024, %v2151
        %v2167 = vor.u32 %v2165, %v2166
        %vm2168 = vcmp.lt.s32.totalorder %v2149, 1
        %vm2169 = vcmp.lt.s32.totalorder %v2149, 2
        %vm2170 = vcmp.lt.s32.totalorder %v2149, 3
        %vm2171 = vcmp.lt.s32.totalorder %v2149, 4
        %v2172 = vsel %vm2168, %v2152, %v2155
        %v2173 = vsel %vm2171, %v2161, 2102212464
        %v2174 = vsel %vm2170, %v2158, %v2173
        %v2175 = vsel %vm2169, %v2172, %v2174
        %v2176 = vsel %vm2168, %v2155, %v2158
        %v2177 = vsel %vm2171, %v2164, 920167782
        %v2178 = vsel %vm2170, %v2161, %v2177
        %v2179 = vsel %vm2169, %v2176, %v2178
        %v2180 = vsel %vm2168, %v2158, %v2161
        %v2181 = vsel %vm2171, %v2167, 1326507024
        %v2182 = vsel %vm2170, %v2164, %v2181
        %v2183 = vsel %vm2169, %v2180, %v2182
        %v2184 = vshll.u32 %v2144, 8
        %v2185 = vmul.u32.u64.compose %v2184, %v2183
        %v2186 = vextract.low.u32 %v2185
        %v2187 = vextract.high.u32 %v2185
        %v2188 = vmul.u32.u64.compose %v2184, %v2179
        %v2189 = vextract.low.u32 %v2188
        %v2190 = vextract.high.u32 %v2188
        %v2191 = vmul.u32 %v2184, %v2175
        %v2192 = vadd.s32 %v2187, %v2189
        %vm2193 = vc.u32 %v2187, %v2189
        %v2194 = vadd.s32 %v2190, 1
        %v2195 = vsel %vm2193, %v2194, %v2190
        %v2196 = vadd.s32 %v2191, %v2195
        %v2197 = vadd.s32 %v2196, 536870912
        %v2198 = vshrl.u32 %v2197, 30
        %v2199 = vshll.u32 %v2198, 30
        %v2200 = vsub.s32 %v2196, %v2199
        %vm2201 = vcmp.lt.s32.totalorder %v2200, 0
        %v2202 = vsub.s32 0, %v2200
        %v2203 = vsel %vm2201, %v2202, %v2200
        %v2204 = vclz %v2203
        %v2205 = vsub.s32 %v2204, 2
        %vm2206 = vcmp.gt.s32.totalorder 0, %v2205
        %v2207 = vsel %vm2206, 0, %v2205
        %v2208 = vsub.s32 32, %v2207
        %v2209 = vshll.u32 %v2200, %v2207
        %v2210 = vshrl.u32 %v2192, %v2208
        %v2211 = vor.u32 %v2209, %v2210
        %v2212 = vsub.s32 4294967266, %v2207
        %v2213 = vadd.s32 %v2212, 127
        %v2214 = vshll.u32 %v2213, 23
        %v2215 = vor.u32 4788187, %v2214
        %v2216 = vand.u32 2147483647, %v2215
        %v2218 = vcvt.s32.f32 %v2211
        %v2219 = vmul.f32 %v2218, %v2216
        %v2220 = vxor.u32 %v2219, 2147483648
        %v2221 = vsel %vm2138, %v2220, %v2219
        %v2222 = vsub.s32 4, %v2198
        %v2223 = vsel %vm2138, %v2222, %v2198
        %v2224 = vsel %vm2137, %v541, %v2221
        %v2225 = vsel %vm2137, 0, %v2223
        %v2226 = vcosq.f32.pop %v2224
        %v2227 = vsinq.f32.pop %v2224
        %vm2228 = vweird.f32 %v541
        %v2229 = vand.u32 %v2225, 3
        %vm2230 = vcmp.lt.s32.totalorder %v2229, 2
        %vm2231 = vcmp.eq.s32.totalorder %v2229, 0
        %v2232 = vxor.u32 %v2227, 2147483648
        %v2233 = vsel %vm2231, %v2226, %v2232
        %vm2234 = vcmp.eq.s32.totalorder %v2229, 2
        %v2235 = vxor.u32 %v2226, 2147483648
        %v2236 = vsel %vm2234, %v2235, %v2227
        %v2237 = vsel %vm2230, %v2233, %v2236
        %v2238 = vsel %vm2228, nan, %v2237
        %v2239 = vand.u32 2147483647, %v545
        %vm2240 = vcmp.le.f32.partialorder %v2239, 0.7853982
        %vm2241 = vcmp.lt.s32.totalorder %v545, 0
        %v2242 = vand.u32 %v545, 2139095040
        %v2243 = vshrl.u32 %v2242, 23
        %v2244 = vsub.s32 %v2243, 127
        %v2245 = vand.u32 2147483647, %v545
        %v2246 = vand.u32 %v2245, 8388607
        %v2247 = vor.u32 %v2246, 8388608
        %v2248 = vsub.s32 0, %v2247
        %v2249 = vadd.s32 %v2244, 1
        %vm2250 = vcmp.gt.s32.totalorder %v2249, 0
        %v2251 = vsel %vm2250, %v2249, 0
        %v2252 = vshrl.u32 %v2251, 5
        %v2253 = vand.u32 %v2251, 31
        %v2254 = vsub.s32 32, %v2253
        %v2255 = vshrl.u32 683565275, %v2254
        %v2256 = vshll.u32 683565275, %v2253
        %v2257 = vshrl.u32 2475754826, %v2254
        %v2258 = vor.u32 %v2256, %v2257
        %v2259 = vshll.u32 2475754826, %v2253
        %v2260 = vshrl.u32 2131351028, %v2254
        %v2261 = vor.u32 %v2259, %v2260
        %v2262 = vshll.u32 2131351028, %v2253
        %v2263 = vshrl.u32 2102212464, %v2254
        %v2264 = vor.u32 %v2262, %v2263
        %v2265 = vshll.u32 2102212464, %v2253
        %v2266 = vshrl.u32 920167782, %v2254
        %v2267 = vor.u32 %v2265, %v2266
        %v2268 = vshll.u32 920167782, %v2253
        %v2269 = vshrl.u32 1326507024, %v2254
        %v2270 = vor.u32 %v2268, %v2269
        %vm2271 = vcmp.lt.s32.totalorder %v2252, 1
        %vm2272 = vcmp.lt.s32.totalorder %v2252, 2
        %vm2273 = vcmp.lt.s32.totalorder %v2252, 3
        %vm2274 = vcmp.lt.s32.totalorder %v2252, 4
        %v2275 = vsel %vm2271, %v2255, %v2258
        %v2276 = vsel %vm2274, %v2264, 2102212464
        %v2277 = vsel %vm2273, %v2261, %v2276
        %v2278 = vsel %vm2272, %v2275, %v2277
        %v2279 = vsel %vm2271, %v2258, %v2261
        %v2280 = vsel %vm2274, %v2267, 920167782
        %v2281 = vsel %vm2273, %v2264, %v2280
        %v2282 = vsel %vm2272, %v2279, %v2281
        %v2283 = vsel %vm2271, %v2261, %v2264
        %v2284 = vsel %vm2274, %v2270, 1326507024
        %v2285 = vsel %vm2273, %v2267, %v2284
        %v2286 = vsel %vm2272, %v2283, %v2285
        %v2287 = vshll.u32 %v2247, 8
        %v2288 = vmul.u32.u64.compose %v2287, %v2286
        %v2289 = vextract.low.u32 %v2288
        %v2290 = vextract.high.u32 %v2288
        %v2291 = vmul.u32.u64.compose %v2287, %v2282
        %v2292 = vextract.low.u32 %v2291
        %v2293 = vextract.high.u32 %v2291
        %v2294 = vmul.u32 %v2287, %v2278
        %v2295 = vadd.s32 %v2290, %v2292
        %vm2296 = vc.u32 %v2290, %v2292
        %v2297 = vadd.s32 %v2293, 1
        %v2298 = vsel %vm2296, %v2297, %v2293
        %v2299 = vadd.s32 %v2294, %v2298
        %v2300 = vadd.s32 %v2299, 536870912
        %v2301 = vshrl.u32 %v2300, 30
        %v2302 = vshll.u32 %v2301, 30
        %v2303 = vsub.s32 %v2299, %v2302
        %vm2304 = vcmp.lt.s32.totalorder %v2303, 0
        %v2305 = vsub.s32 0, %v2303
        %v2306 = vsel %vm2304, %v2305, %v2303
        %v2307 = vclz %v2306
        %v2308 = vsub.s32 %v2307, 2
        %vm2309 = vcmp.gt.s32.totalorder 0, %v2308
        %v2310 = vsel %vm2309, 0, %v2308
        %v2311 = vsub.s32 32, %v2310
        %v2312 = vshll.u32 %v2303, %v2310
        %v2313 = vshrl.u32 %v2295, %v2311
        %v2314 = vor.u32 %v2312, %v2313
        %v2315 = vsub.s32 4294967266, %v2310
        %v2316 = vadd.s32 %v2315, 127
        %v2317 = vshll.u32 %v2316, 23
        %v2318 = vor.u32 4788187, %v2317
        %v2319 = vand.u32 2147483647, %v2318
        %v2321 = vcvt.s32.f32 %v2314
        %v2322 = vmul.f32 %v2321, %v2319
        %v2323 = vxor.u32 %v2322, 2147483648
        %v2324 = vsel %vm2241, %v2323, %v2322
        %v2325 = vsub.s32 4, %v2301
        %v2326 = vsel %vm2241, %v2325, %v2301
        %v2327 = vsel %vm2240, %v545, %v2324
        %v2328 = vsel %vm2240, 0, %v2326
        %v2329 = vcosq.f32.pop %v2327
        %v2330 = vsinq.f32.pop %v2327
        %vm2331 = vweird.f32 %v545
        %v2332 = vand.u32 %v2328, 3
        %vm2333 = vcmp.lt.s32.totalorder %v2332, 2
        %vm2334 = vcmp.eq.s32.totalorder %v2332, 0
        %v2335 = vxor.u32 %v2330, 2147483648
        %v2336 = vsel %vm2334, %v2329, %v2335
        %vm2337 = vcmp.eq.s32.totalorder %v2332, 2
        %v2338 = vxor.u32 %v2329, 2147483648
        %v2339 = vsel %vm2337, %v2338, %v2330
        %v2340 = vsel %vm2333, %v2336, %v2339
        %v2341 = vsel %vm2331, nan, %v2340
        %v2342 = vand.u32 2147483647, %v547
        %vm2343 = vcmp.le.f32.partialorder %v2342, 0.7853982
        %vm2344 = vcmp.lt.s32.totalorder %v547, 0
        %v2345 = vand.u32 %v547, 2139095040
        %v2346 = vshrl.u32 %v2345, 23
        %v2347 = vsub.s32 %v2346, 127
        %v2348 = vand.u32 2147483647, %v547
        %v2349 = vand.u32 %v2348, 8388607
        %v2350 = vor.u32 %v2349, 8388608
        %v2351 = vsub.s32 0, %v2350
        %v2352 = vadd.s32 %v2347, 1
        %vm2353 = vcmp.gt.s32.totalorder %v2352, 0
        %v2354 = vsel %vm2353, %v2352, 0
        %v2355 = vshrl.u32 %v2354, 5
        %v2356 = vand.u32 %v2354, 31
        %v2357 = vsub.s32 32, %v2356
        %v2358 = vshrl.u32 683565275, %v2357
        %v2359 = vshll.u32 683565275, %v2356
        %v2360 = vshrl.u32 2475754826, %v2357
        %v2361 = vor.u32 %v2359, %v2360
        %v2362 = vshll.u32 2475754826, %v2356
        %v2363 = vshrl.u32 2131351028, %v2357
        %v2364 = vor.u32 %v2362, %v2363
        %v2365 = vshll.u32 2131351028, %v2356
        %v2366 = vshrl.u32 2102212464, %v2357
        %v2367 = vor.u32 %v2365, %v2366
        %v2368 = vshll.u32 2102212464, %v2356
        %v2369 = vshrl.u32 920167782, %v2357
        %v2370 = vor.u32 %v2368, %v2369
        %v2371 = vshll.u32 920167782, %v2356
        %v2372 = vshrl.u32 1326507024, %v2357
        %v2373 = vor.u32 %v2371, %v2372
        %vm2374 = vcmp.lt.s32.totalorder %v2355, 1
        %vm2375 = vcmp.lt.s32.totalorder %v2355, 2
        %vm2376 = vcmp.lt.s32.totalorder %v2355, 3
        %vm2377 = vcmp.lt.s32.totalorder %v2355, 4
        %v2378 = vsel %vm2374, %v2358, %v2361
        %v2379 = vsel %vm2377, %v2367, 2102212464
        %v2380 = vsel %vm2376, %v2364, %v2379
        %v2381 = vsel %vm2375, %v2378, %v2380
        %v2382 = vsel %vm2374, %v2361, %v2364
        %v2383 = vsel %vm2377, %v2370, 920167782
        %v2384 = vsel %vm2376, %v2367, %v2383
        %v2385 = vsel %vm2375, %v2382, %v2384
        %v2386 = vsel %vm2374, %v2364, %v2367
        %v2387 = vsel %vm2377, %v2373, 1326507024
        %v2388 = vsel %vm2376, %v2370, %v2387
        %v2389 = vsel %vm2375, %v2386, %v2388
        %v2390 = vshll.u32 %v2350, 8
        %v2391 = vmul.u32.u64.compose %v2390, %v2389
        %v2392 = vextract.low.u32 %v2391
        %v2393 = vextract.high.u32 %v2391
        %v2394 = vmul.u32.u64.compose %v2390, %v2385
        %v2395 = vextract.low.u32 %v2394
        %v2396 = vextract.high.u32 %v2394
        %v2397 = vmul.u32 %v2390, %v2381
        %v2398 = vadd.s32 %v2393, %v2395
        %vm2399 = vc.u32 %v2393, %v2395
        %v2400 = vadd.s32 %v2396, 1
        %v2401 = vsel %vm2399, %v2400, %v2396
        %v2402 = vadd.s32 %v2397, %v2401
        %v2403 = vadd.s32 %v2402, 536870912
        %v2404 = vshrl.u32 %v2403, 30
        %v2405 = vshll.u32 %v2404, 30
        %v2406 = vsub.s32 %v2402, %v2405
        %vm2407 = vcmp.lt.s32.totalorder %v2406, 0
        %v2408 = vsub.s32 0, %v2406
        %v2409 = vsel %vm2407, %v2408, %v2406
        %v2410 = vclz %v2409
        %v2411 = vsub.s32 %v2410, 2
        %vm2412 = vcmp.gt.s32.totalorder 0, %v2411
        %v2413 = vsel %vm2412, 0, %v2411
        %v2414 = vsub.s32 32, %v2413
        %v2415 = vshll.u32 %v2406, %v2413
        %v2416 = vshrl.u32 %v2398, %v2414
        %v2417 = vor.u32 %v2415, %v2416
        %v2418 = vsub.s32 4294967266, %v2413
        %v2419 = vadd.s32 %v2418, 127
        %v2420 = vshll.u32 %v2419, 23
        %v2421 = vor.u32 4788187, %v2420
        %v2422 = vand.u32 2147483647, %v2421
        %v2424 = vcvt.s32.f32 %v2417
        %v2425 = vmul.f32 %v2424, %v2422
        %v2426 = vxor.u32 %v2425, 2147483648
        %v2427 = vsel %vm2344, %v2426, %v2425
        %v2428 = vsub.s32 4, %v2404
        %v2429 = vsel %vm2344, %v2428, %v2404
        %v2430 = vsel %vm2343, %v547, %v2427
        %v2431 = vsel %vm2343, 0, %v2429
        %v2432 = vcosq.f32.pop %v2430
        %v2433 = vsinq.f32.pop %v2430
        %vm2434 = vweird.f32 %v547
        %v2435 = vand.u32 %v2431, 3
        %vm2436 = vcmp.lt.s32.totalorder %v2435, 2
        %vm2437 = vcmp.eq.s32.totalorder %v2435, 0
        %v2438 = vxor.u32 %v2433, 2147483648
        %v2439 = vsel %vm2437, %v2432, %v2438
        %vm2440 = vcmp.eq.s32.totalorder %v2435, 2
        %v2441 = vxor.u32 %v2432, 2147483648
        %v2442 = vsel %vm2440, %v2441, %v2433
        %v2443 = vsel %vm2436, %v2439, %v2442
        %v2444 = vsel %vm2434, nan, %v2443
        %v2445 = vand.u32 2147483647, %v551
        %vm2446 = vcmp.le.f32.partialorder %v2445, 0.7853982
        %vm2447 = vcmp.lt.s32.totalorder %v551, 0
        %v2448 = vand.u32 %v551, 2139095040
        %v2449 = vshrl.u32 %v2448, 23
        %v2450 = vsub.s32 %v2449, 127
        %v2451 = vand.u32 2147483647, %v551
        %v2452 = vand.u32 %v2451, 8388607
        %v2453 = vor.u32 %v2452, 8388608
        %v2454 = vsub.s32 0, %v2453
        %v2455 = vadd.s32 %v2450, 1
        %vm2456 = vcmp.gt.s32.totalorder %v2455, 0
        %v2457 = vsel %vm2456, %v2455, 0
        %v2458 = vshrl.u32 %v2457, 5
        %v2459 = vand.u32 %v2457, 31
        %v2460 = vsub.s32 32, %v2459
        %v2461 = vshrl.u32 683565275, %v2460
        %v2462 = vshll.u32 683565275, %v2459
        %v2463 = vshrl.u32 2475754826, %v2460
        %v2464 = vor.u32 %v2462, %v2463
        %v2465 = vshll.u32 2475754826, %v2459
        %v2466 = vshrl.u32 2131351028, %v2460
        %v2467 = vor.u32 %v2465, %v2466
        %v2468 = vshll.u32 2131351028, %v2459
        %v2469 = vshrl.u32 2102212464, %v2460
        %v2470 = vor.u32 %v2468, %v2469
        %v2471 = vshll.u32 2102212464, %v2459
        %v2472 = vshrl.u32 920167782, %v2460
        %v2473 = vor.u32 %v2471, %v2472
        %v2474 = vshll.u32 920167782, %v2459
        %v2475 = vshrl.u32 1326507024, %v2460
        %v2476 = vor.u32 %v2474, %v2475
        %vm2477 = vcmp.lt.s32.totalorder %v2458, 1
        %vm2478 = vcmp.lt.s32.totalorder %v2458, 2
        %vm2479 = vcmp.lt.s32.totalorder %v2458, 3
        %vm2480 = vcmp.lt.s32.totalorder %v2458, 4
        %v2481 = vsel %vm2477, %v2461, %v2464
        %v2482 = vsel %vm2480, %v2470, 2102212464
        %v2483 = vsel %vm2479, %v2467, %v2482
        %v2484 = vsel %vm2478, %v2481, %v2483
        %v2485 = vsel %vm2477, %v2464, %v2467
        %v2486 = vsel %vm2480, %v2473, 920167782
        %v2487 = vsel %vm2479, %v2470, %v2486
        %v2488 = vsel %vm2478, %v2485, %v2487
        %v2489 = vsel %vm2477, %v2467, %v2470
        %v2490 = vsel %vm2480, %v2476, 1326507024
        %v2491 = vsel %vm2479, %v2473, %v2490
        %v2492 = vsel %vm2478, %v2489, %v2491
        %v2493 = vshll.u32 %v2453, 8
        %v2494 = vmul.u32.u64.compose %v2493, %v2492
        %v2495 = vextract.low.u32 %v2494
        %v2496 = vextract.high.u32 %v2494
        %v2497 = vmul.u32.u64.compose %v2493, %v2488
        %v2498 = vextract.low.u32 %v2497
        %v2499 = vextract.high.u32 %v2497
        %v2500 = vmul.u32 %v2493, %v2484
        %v2501 = vadd.s32 %v2496, %v2498
        %vm2502 = vc.u32 %v2496, %v2498
        %v2503 = vadd.s32 %v2499, 1
        %v2504 = vsel %vm2502, %v2503, %v2499
        %v2505 = vadd.s32 %v2500, %v2504
        %v2506 = vadd.s32 %v2505, 536870912
        %v2507 = vshrl.u32 %v2506, 30
        %v2508 = vshll.u32 %v2507, 30
        %v2509 = vsub.s32 %v2505, %v2508
        %vm2510 = vcmp.lt.s32.totalorder %v2509, 0
        %v2511 = vsub.s32 0, %v2509
        %v2512 = vsel %vm2510, %v2511, %v2509
        %v2513 = vclz %v2512
        %v2514 = vsub.s32 %v2513, 2
        %vm2515 = vcmp.gt.s32.totalorder 0, %v2514
        %v2516 = vsel %vm2515, 0, %v2514
        %v2517 = vsub.s32 32, %v2516
        %v2518 = vshll.u32 %v2509, %v2516
        %v2519 = vshrl.u32 %v2501, %v2517
        %v2520 = vor.u32 %v2518, %v2519
        %v2521 = vsub.s32 4294967266, %v2516
        %v2522 = vadd.s32 %v2521, 127
        %v2523 = vshll.u32 %v2522, 23
        %v2524 = vor.u32 4788187, %v2523
        %v2525 = vand.u32 2147483647, %v2524
        %v2527 = vcvt.s32.f32 %v2520
        %v2528 = vmul.f32 %v2527, %v2525
        %v2529 = vxor.u32 %v2528, 2147483648
        %v2530 = vsel %vm2447, %v2529, %v2528
        %v2531 = vsub.s32 4, %v2507
        %v2532 = vsel %vm2447, %v2531, %v2507
        %v2533 = vsel %vm2446, %v551, %v2530
        %v2534 = vsel %vm2446, 0, %v2532
        %v2535 = vcosq.f32.pop %v2533
        %v2536 = vsinq.f32.pop %v2533
        %vm2537 = vweird.f32 %v551
        %v2538 = vand.u32 %v2534, 3
        %vm2539 = vcmp.lt.s32.totalorder %v2538, 2
        %vm2540 = vcmp.eq.s32.totalorder %v2538, 0
        %v2541 = vxor.u32 %v2536, 2147483648
        %v2542 = vsel %vm2540, %v2535, %v2541
        %vm2543 = vcmp.eq.s32.totalorder %v2538, 2
        %v2544 = vxor.u32 %v2535, 2147483648
        %v2545 = vsel %vm2543, %v2544, %v2536
        %v2546 = vsel %vm2539, %v2542, %v2545
        %v2547 = vsel %vm2537, nan, %v2546
        %v2548 = vand.u32 2147483647, %v553
        %vm2549 = vcmp.le.f32.partialorder %v2548, 0.7853982
        %vm2550 = vcmp.lt.s32.totalorder %v553, 0
        %v2551 = vand.u32 %v553, 2139095040
        %v2552 = vshrl.u32 %v2551, 23
        %v2553 = vsub.s32 %v2552, 127
        %v2554 = vand.u32 2147483647, %v553
        %v2555 = vand.u32 %v2554, 8388607
        %v2556 = vor.u32 %v2555, 8388608
        %v2557 = vsub.s32 0, %v2556
        %v2558 = vadd.s32 %v2553, 1
        %vm2559 = vcmp.gt.s32.totalorder %v2558, 0
        %v2560 = vsel %vm2559, %v2558, 0
        %v2561 = vshrl.u32 %v2560, 5
        %v2562 = vand.u32 %v2560, 31
        %v2563 = vsub.s32 32, %v2562
        %v2564 = vshrl.u32 683565275, %v2563
        %v2565 = vshll.u32 683565275, %v2562
        %v2566 = vshrl.u32 2475754826, %v2563
        %v2567 = vor.u32 %v2565, %v2566
        %v2568 = vshll.u32 2475754826, %v2562
        %v2569 = vshrl.u32 2131351028, %v2563
        %v2570 = vor.u32 %v2568, %v2569
        %v2571 = vshll.u32 2131351028, %v2562
        %v2572 = vshrl.u32 2102212464, %v2563
        %v2573 = vor.u32 %v2571, %v2572
        %v2574 = vshll.u32 2102212464, %v2562
        %v2575 = vshrl.u32 920167782, %v2563
        %v2576 = vor.u32 %v2574, %v2575
        %v2577 = vshll.u32 920167782, %v2562
        %v2578 = vshrl.u32 1326507024, %v2563
        %v2579 = vor.u32 %v2577, %v2578
        %vm2580 = vcmp.lt.s32.totalorder %v2561, 1
        %vm2581 = vcmp.lt.s32.totalorder %v2561, 2
        %vm2582 = vcmp.lt.s32.totalorder %v2561, 3
        %vm2583 = vcmp.lt.s32.totalorder %v2561, 4
        %v2584 = vsel %vm2580, %v2564, %v2567
        %v2585 = vsel %vm2583, %v2573, 2102212464
        %v2586 = vsel %vm2582, %v2570, %v2585
        %v2587 = vsel %vm2581, %v2584, %v2586
        %v2588 = vsel %vm2580, %v2567, %v2570
        %v2589 = vsel %vm2583, %v2576, 920167782
        %v2590 = vsel %vm2582, %v2573, %v2589
        %v2591 = vsel %vm2581, %v2588, %v2590
        %v2592 = vsel %vm2580, %v2570, %v2573
        %v2593 = vsel %vm2583, %v2579, 1326507024
        %v2594 = vsel %vm2582, %v2576, %v2593
        %v2595 = vsel %vm2581, %v2592, %v2594
        %v2596 = vshll.u32 %v2556, 8
        %v2597 = vmul.u32.u64.compose %v2596, %v2595
        %v2598 = vextract.low.u32 %v2597
        %v2599 = vextract.high.u32 %v2597
        %v2600 = vmul.u32.u64.compose %v2596, %v2591
        %v2601 = vextract.low.u32 %v2600
        %v2602 = vextract.high.u32 %v2600
        %v2603 = vmul.u32 %v2596, %v2587
        %v2604 = vadd.s32 %v2599, %v2601
        %vm2605 = vc.u32 %v2599, %v2601
        %v2606 = vadd.s32 %v2602, 1
        %v2607 = vsel %vm2605, %v2606, %v2602
        %v2608 = vadd.s32 %v2603, %v2607
        %v2609 = vadd.s32 %v2608, 536870912
        %v2610 = vshrl.u32 %v2609, 30
        %v2611 = vshll.u32 %v2610, 30
        %v2612 = vsub.s32 %v2608, %v2611
        %vm2613 = vcmp.lt.s32.totalorder %v2612, 0
        %v2614 = vsub.s32 0, %v2612
        %v2615 = vsel %vm2613, %v2614, %v2612
        %v2616 = vclz %v2615
        %v2617 = vsub.s32 %v2616, 2
        %vm2618 = vcmp.gt.s32.totalorder 0, %v2617
        %v2619 = vsel %vm2618, 0, %v2617
        %v2620 = vsub.s32 32, %v2619
        %v2621 = vshll.u32 %v2612, %v2619
        %v2622 = vshrl.u32 %v2604, %v2620
        %v2623 = vor.u32 %v2621, %v2622
        %v2624 = vsub.s32 4294967266, %v2619
        %v2625 = vadd.s32 %v2624, 127
        %v2626 = vshll.u32 %v2625, 23
        %v2627 = vor.u32 4788187, %v2626
        %v2628 = vand.u32 2147483647, %v2627
        %v2630 = vcvt.s32.f32 %v2623
        %v2631 = vmul.f32 %v2630, %v2628
        %v2632 = vxor.u32 %v2631, 2147483648
        %v2633 = vsel %vm2550, %v2632, %v2631
        %v2634 = vsub.s32 4, %v2610
        %v2635 = vsel %vm2550, %v2634, %v2610
        %v2636 = vsel %vm2549, %v553, %v2633
        %v2637 = vsel %vm2549, 0, %v2635
        %v2638 = vcosq.f32.pop %v2636
        %v2639 = vsinq.f32.pop %v2636
        %vm2640 = vweird.f32 %v553
        %v2641 = vand.u32 %v2637, 3
        %vm2642 = vcmp.lt.s32.totalorder %v2641, 2
        %vm2643 = vcmp.eq.s32.totalorder %v2641, 0
        %v2644 = vxor.u32 %v2639, 2147483648
        %v2645 = vsel %vm2643, %v2638, %v2644
        %vm2646 = vcmp.eq.s32.totalorder %v2641, 2
        %v2647 = vxor.u32 %v2638, 2147483648
        %v2648 = vsel %vm2646, %v2647, %v2639
        %v2649 = vsel %vm2642, %v2645, %v2648
        %v2650 = vsel %vm2640, nan, %v2649
        %v2651 = vand.u32 2147483647, %v557
        %vm2652 = vcmp.le.f32.partialorder %v2651, 0.7853982
        %vm2653 = vcmp.lt.s32.totalorder %v557, 0
        %v2654 = vand.u32 %v557, 2139095040
        %v2655 = vshrl.u32 %v2654, 23
        %v2656 = vsub.s32 %v2655, 127
        %v2657 = vand.u32 2147483647, %v557
        %v2658 = vand.u32 %v2657, 8388607
        %v2659 = vor.u32 %v2658, 8388608
        %v2660 = vsub.s32 0, %v2659
        %v2661 = vadd.s32 %v2656, 1
        %vm2662 = vcmp.gt.s32.totalorder %v2661, 0
        %v2663 = vsel %vm2662, %v2661, 0
        %v2664 = vshrl.u32 %v2663, 5
        %v2665 = vand.u32 %v2663, 31
        %v2666 = vsub.s32 32, %v2665
        %v2667 = vshrl.u32 683565275, %v2666
        %v2668 = vshll.u32 683565275, %v2665
        %v2669 = vshrl.u32 2475754826, %v2666
        %v2670 = vor.u32 %v2668, %v2669
        %v2671 = vshll.u32 2475754826, %v2665
        %v2672 = vshrl.u32 2131351028, %v2666
        %v2673 = vor.u32 %v2671, %v2672
        %v2674 = vshll.u32 2131351028, %v2665
        %v2675 = vshrl.u32 2102212464, %v2666
        %v2676 = vor.u32 %v2674, %v2675
        %v2677 = vshll.u32 2102212464, %v2665
        %v2678 = vshrl.u32 920167782, %v2666
        %v2679 = vor.u32 %v2677, %v2678
        %v2680 = vshll.u32 920167782, %v2665
        %v2681 = vshrl.u32 1326507024, %v2666
        %v2682 = vor.u32 %v2680, %v2681
        %vm2683 = vcmp.lt.s32.totalorder %v2664, 1
        %vm2684 = vcmp.lt.s32.totalorder %v2664, 2
        %vm2685 = vcmp.lt.s32.totalorder %v2664, 3
        %vm2686 = vcmp.lt.s32.totalorder %v2664, 4
        %v2687 = vsel %vm2683, %v2667, %v2670
        %v2688 = vsel %vm2686, %v2676, 2102212464
        %v2689 = vsel %vm2685, %v2673, %v2688
        %v2690 = vsel %vm2684, %v2687, %v2689
        %v2691 = vsel %vm2683, %v2670, %v2673
        %v2692 = vsel %vm2686, %v2679, 920167782
        %v2693 = vsel %vm2685, %v2676, %v2692
        %v2694 = vsel %vm2684, %v2691, %v2693
        %v2695 = vsel %vm2683, %v2673, %v2676
        %v2696 = vsel %vm2686, %v2682, 1326507024
        %v2697 = vsel %vm2685, %v2679, %v2696
        %v2698 = vsel %vm2684, %v2695, %v2697
        %v2699 = vshll.u32 %v2659, 8
        %v2700 = vmul.u32.u64.compose %v2699, %v2698
        %v2701 = vextract.low.u32 %v2700
        %v2702 = vextract.high.u32 %v2700
        %v2703 = vmul.u32.u64.compose %v2699, %v2694
        %v2704 = vextract.low.u32 %v2703
        %v2705 = vextract.high.u32 %v2703
        %v2706 = vmul.u32 %v2699, %v2690
        %v2707 = vadd.s32 %v2702, %v2704
        %vm2708 = vc.u32 %v2702, %v2704
        %v2709 = vadd.s32 %v2705, 1
        %v2710 = vsel %vm2708, %v2709, %v2705
        %v2711 = vadd.s32 %v2706, %v2710
        %v2712 = vadd.s32 %v2711, 536870912
        %v2713 = vshrl.u32 %v2712, 30
        %v2714 = vshll.u32 %v2713, 30
        %v2715 = vsub.s32 %v2711, %v2714
        %vm2716 = vcmp.lt.s32.totalorder %v2715, 0
        %v2717 = vsub.s32 0, %v2715
        %v2718 = vsel %vm2716, %v2717, %v2715
        %v2719 = vclz %v2718
        %v2720 = vsub.s32 %v2719, 2
        %vm2721 = vcmp.gt.s32.totalorder 0, %v2720
        %v2722 = vsel %vm2721, 0, %v2720
        %v2723 = vsub.s32 32, %v2722
        %v2724 = vshll.u32 %v2715, %v2722
        %v2725 = vshrl.u32 %v2707, %v2723
        %v2726 = vor.u32 %v2724, %v2725
        %v2727 = vsub.s32 4294967266, %v2722
        %v2728 = vadd.s32 %v2727, 127
        %v2729 = vshll.u32 %v2728, 23
        %v2730 = vor.u32 4788187, %v2729
        %v2731 = vand.u32 2147483647, %v2730
        %v2733 = vcvt.s32.f32 %v2726
        %v2734 = vmul.f32 %v2733, %v2731
        %v2735 = vxor.u32 %v2734, 2147483648
        %v2736 = vsel %vm2653, %v2735, %v2734
        %v2737 = vsub.s32 4, %v2713
        %v2738 = vsel %vm2653, %v2737, %v2713
        %v2739 = vsel %vm2652, %v557, %v2736
        %v2740 = vsel %vm2652, 0, %v2738
        %v2741 = vcosq.f32.pop %v2739
        %v2742 = vsinq.f32.pop %v2739
        %vm2743 = vweird.f32 %v557
        %v2744 = vand.u32 %v2740, 3
        %vm2745 = vcmp.lt.s32.totalorder %v2744, 2
        %vm2746 = vcmp.eq.s32.totalorder %v2744, 0
        %v2747 = vxor.u32 %v2742, 2147483648
        %v2748 = vsel %vm2746, %v2741, %v2747
        %vm2749 = vcmp.eq.s32.totalorder %v2744, 2
        %v2750 = vxor.u32 %v2741, 2147483648
        %v2751 = vsel %vm2749, %v2750, %v2742
        %v2752 = vsel %vm2745, %v2748, %v2751
        %v2753 = vsel %vm2743, nan, %v2752
        %v2754 = vand.u32 2147483647, %v559
        %vm2755 = vcmp.le.f32.partialorder %v2754, 0.7853982
        %vm2756 = vcmp.lt.s32.totalorder %v559, 0
        %v2757 = vand.u32 %v559, 2139095040
        %v2758 = vshrl.u32 %v2757, 23
        %v2759 = vsub.s32 %v2758, 127
        %v2760 = vand.u32 2147483647, %v559
        %v2761 = vand.u32 %v2760, 8388607
        %v2762 = vor.u32 %v2761, 8388608
        %v2763 = vsub.s32 0, %v2762
        %v2764 = vadd.s32 %v2759, 1
        %vm2765 = vcmp.gt.s32.totalorder %v2764, 0
        %v2766 = vsel %vm2765, %v2764, 0
        %v2767 = vshrl.u32 %v2766, 5
        %v2768 = vand.u32 %v2766, 31
        %v2769 = vsub.s32 32, %v2768
        %v2770 = vshrl.u32 683565275, %v2769
        %v2771 = vshll.u32 683565275, %v2768
        %v2772 = vshrl.u32 2475754826, %v2769
        %v2773 = vor.u32 %v2771, %v2772
        %v2774 = vshll.u32 2475754826, %v2768
        %v2775 = vshrl.u32 2131351028, %v2769
        %v2776 = vor.u32 %v2774, %v2775
        %v2777 = vshll.u32 2131351028, %v2768
        %v2778 = vshrl.u32 2102212464, %v2769
        %v2779 = vor.u32 %v2777, %v2778
        %v2780 = vshll.u32 2102212464, %v2768
        %v2781 = vshrl.u32 920167782, %v2769
        %v2782 = vor.u32 %v2780, %v2781
        %v2783 = vshll.u32 920167782, %v2768
        %v2784 = vshrl.u32 1326507024, %v2769
        %v2785 = vor.u32 %v2783, %v2784
        %vm2786 = vcmp.lt.s32.totalorder %v2767, 1
        %vm2787 = vcmp.lt.s32.totalorder %v2767, 2
        %vm2788 = vcmp.lt.s32.totalorder %v2767, 3
        %vm2789 = vcmp.lt.s32.totalorder %v2767, 4
        %v2790 = vsel %vm2786, %v2770, %v2773
        %v2791 = vsel %vm2789, %v2779, 2102212464
        %v2792 = vsel %vm2788, %v2776, %v2791
        %v2793 = vsel %vm2787, %v2790, %v2792
        %v2794 = vsel %vm2786, %v2773, %v2776
        %v2795 = vsel %vm2789, %v2782, 920167782
        %v2796 = vsel %vm2788, %v2779, %v2795
        %v2797 = vsel %vm2787, %v2794, %v2796
        %v2798 = vsel %vm2786, %v2776, %v2779
        %v2799 = vsel %vm2789, %v2785, 1326507024
        %v2800 = vsel %vm2788, %v2782, %v2799
        %v2801 = vsel %vm2787, %v2798, %v2800
        %v2802 = vshll.u32 %v2762, 8
        %v2803 = vmul.u32.u64.compose %v2802, %v2801
        %v2804 = vextract.low.u32 %v2803
        %v2805 = vextract.high.u32 %v2803
        %v2806 = vmul.u32.u64.compose %v2802, %v2797
        %v2807 = vextract.low.u32 %v2806
        %v2808 = vextract.high.u32 %v2806
        %v2809 = vmul.u32 %v2802, %v2793
        %v2810 = vadd.s32 %v2805, %v2807
        %vm2811 = vc.u32 %v2805, %v2807
        %v2812 = vadd.s32 %v2808, 1
        %v2813 = vsel %vm2811, %v2812, %v2808
        %v2814 = vadd.s32 %v2809, %v2813
        %v2815 = vadd.s32 %v2814, 536870912
        %v2816 = vshrl.u32 %v2815, 30
        %v2817 = vshll.u32 %v2816, 30
        %v2818 = vsub.s32 %v2814, %v2817
        %vm2819 = vcmp.lt.s32.totalorder %v2818, 0
        %v2820 = vsub.s32 0, %v2818
        %v2821 = vsel %vm2819, %v2820, %v2818
        %v2822 = vclz %v2821
        %v2823 = vsub.s32 %v2822, 2
        %vm2824 = vcmp.gt.s32.totalorder 0, %v2823
        %v2825 = vsel %vm2824, 0, %v2823
        %v2826 = vsub.s32 32, %v2825
        %v2827 = vshll.u32 %v2818, %v2825
        %v2828 = vshrl.u32 %v2810, %v2826
        %v2829 = vor.u32 %v2827, %v2828
        %v2830 = vsub.s32 4294967266, %v2825
        %v2831 = vadd.s32 %v2830, 127
        %v2832 = vshll.u32 %v2831, 23
        %v2833 = vor.u32 4788187, %v2832
        %v2834 = vand.u32 2147483647, %v2833
        %v2836 = vcvt.s32.f32 %v2829
        %v2837 = vmul.f32 %v2836, %v2834
        %v2838 = vxor.u32 %v2837, 2147483648
        %v2839 = vsel %vm2756, %v2838, %v2837
        %v2840 = vsub.s32 4, %v2816
        %v2841 = vsel %vm2756, %v2840, %v2816
        %v2842 = vsel %vm2755, %v559, %v2839
        %v2843 = vsel %vm2755, 0, %v2841
        %v2844 = vcosq.f32.pop %v2842
        %v2845 = vsinq.f32.pop %v2842
        %vm2846 = vweird.f32 %v559
        %v2847 = vand.u32 %v2843, 3
        %vm2848 = vcmp.lt.s32.totalorder %v2847, 2
        %vm2849 = vcmp.eq.s32.totalorder %v2847, 0
        %v2850 = vxor.u32 %v2845, 2147483648
        %v2851 = vsel %vm2849, %v2844, %v2850
        %vm2852 = vcmp.eq.s32.totalorder %v2847, 2
        %v2853 = vxor.u32 %v2844, 2147483648
        %v2854 = vsel %vm2852, %v2853, %v2845
        %v2855 = vsel %vm2848, %v2851, %v2854
        %v2856 = vsel %vm2846, nan, %v2855
        %v2857 = vand.u32 2147483647, %v563
        %vm2858 = vcmp.le.f32.partialorder %v2857, 0.7853982
        %vm2859 = vcmp.lt.s32.totalorder %v563, 0
        %v2860 = vand.u32 %v563, 2139095040
        %v2861 = vshrl.u32 %v2860, 23
        %v2862 = vsub.s32 %v2861, 127
        %v2863 = vand.u32 2147483647, %v563
        %v2864 = vand.u32 %v2863, 8388607
        %v2865 = vor.u32 %v2864, 8388608
        %v2866 = vsub.s32 0, %v2865
        %v2867 = vadd.s32 %v2862, 1
        %vm2868 = vcmp.gt.s32.totalorder %v2867, 0
        %v2869 = vsel %vm2868, %v2867, 0
        %v2870 = vshrl.u32 %v2869, 5
        %v2871 = vand.u32 %v2869, 31
        %v2872 = vsub.s32 32, %v2871
        %v2873 = vshrl.u32 683565275, %v2872
        %v2874 = vshll.u32 683565275, %v2871
        %v2875 = vshrl.u32 2475754826, %v2872
        %v2876 = vor.u32 %v2874, %v2875
        %v2877 = vshll.u32 2475754826, %v2871
        %v2878 = vshrl.u32 2131351028, %v2872
        %v2879 = vor.u32 %v2877, %v2878
        %v2880 = vshll.u32 2131351028, %v2871
        %v2881 = vshrl.u32 2102212464, %v2872
        %v2882 = vor.u32 %v2880, %v2881
        %v2883 = vshll.u32 2102212464, %v2871
        %v2884 = vshrl.u32 920167782, %v2872
        %v2885 = vor.u32 %v2883, %v2884
        %v2886 = vshll.u32 920167782, %v2871
        %v2887 = vshrl.u32 1326507024, %v2872
        %v2888 = vor.u32 %v2886, %v2887
        %vm2889 = vcmp.lt.s32.totalorder %v2870, 1
        %vm2890 = vcmp.lt.s32.totalorder %v2870, 2
        %vm2891 = vcmp.lt.s32.totalorder %v2870, 3
        %vm2892 = vcmp.lt.s32.totalorder %v2870, 4
        %v2893 = vsel %vm2889, %v2873, %v2876
        %v2894 = vsel %vm2892, %v2882, 2102212464
        %v2895 = vsel %vm2891, %v2879, %v2894
        %v2896 = vsel %vm2890, %v2893, %v2895
        %v2897 = vsel %vm2889, %v2876, %v2879
        %v2898 = vsel %vm2892, %v2885, 920167782
        %v2899 = vsel %vm2891, %v2882, %v2898
        %v2900 = vsel %vm2890, %v2897, %v2899
        %v2901 = vsel %vm2889, %v2879, %v2882
        %v2902 = vsel %vm2892, %v2888, 1326507024
        %v2903 = vsel %vm2891, %v2885, %v2902
        %v2904 = vsel %vm2890, %v2901, %v2903
        %v2905 = vshll.u32 %v2865, 8
        %v2906 = vmul.u32.u64.compose %v2905, %v2904
        %v2907 = vextract.low.u32 %v2906
        %v2908 = vextract.high.u32 %v2906
        %v2909 = vmul.u32.u64.compose %v2905, %v2900
        %v2910 = vextract.low.u32 %v2909
        %v2911 = vextract.high.u32 %v2909
        %v2912 = vmul.u32 %v2905, %v2896
        %v2913 = vadd.s32 %v2908, %v2910
        %vm2914 = vc.u32 %v2908, %v2910
        %v2915 = vadd.s32 %v2911, 1
        %v2916 = vsel %vm2914, %v2915, %v2911
        %v2917 = vadd.s32 %v2912, %v2916
        %v2918 = vadd.s32 %v2917, 536870912
        %v2919 = vshrl.u32 %v2918, 30
        %v2920 = vshll.u32 %v2919, 30
        %v2921 = vsub.s32 %v2917, %v2920
        %vm2922 = vcmp.lt.s32.totalorder %v2921, 0
        %v2923 = vsub.s32 0, %v2921
        %v2924 = vsel %vm2922, %v2923, %v2921
        %v2925 = vclz %v2924
        %v2926 = vsub.s32 %v2925, 2
        %vm2927 = vcmp.gt.s32.totalorder 0, %v2926
        %v2928 = vsel %vm2927, 0, %v2926
        %v2929 = vsub.s32 32, %v2928
        %v2930 = vshll.u32 %v2921, %v2928
        %v2931 = vshrl.u32 %v2913, %v2929
        %v2932 = vor.u32 %v2930, %v2931
        %v2933 = vsub.s32 4294967266, %v2928
        %v2934 = vadd.s32 %v2933, 127
        %v2935 = vshll.u32 %v2934, 23
        %v2936 = vor.u32 4788187, %v2935
        %v2937 = vand.u32 2147483647, %v2936
        %v2939 = vcvt.s32.f32 %v2932
        %v2940 = vmul.f32 %v2939, %v2937
        %v2941 = vxor.u32 %v2940, 2147483648
        %v2942 = vsel %vm2859, %v2941, %v2940
        %v2943 = vsub.s32 4, %v2919
        %v2944 = vsel %vm2859, %v2943, %v2919
        %v2945 = vsel %vm2858, %v563, %v2942
        %v2946 = vsel %vm2858, 0, %v2944
        %v2947 = vcosq.f32.pop %v2945
        %v2948 = vsinq.f32.pop %v2945
        %vm2949 = vweird.f32 %v563
        %v2950 = vand.u32 %v2946, 3
        %vm2951 = vcmp.lt.s32.totalorder %v2950, 2
        %vm2952 = vcmp.eq.s32.totalorder %v2950, 0
        %v2953 = vxor.u32 %v2948, 2147483648
        %v2954 = vsel %vm2952, %v2947, %v2953
        %vm2955 = vcmp.eq.s32.totalorder %v2950, 2
        %v2956 = vxor.u32 %v2947, 2147483648
        %v2957 = vsel %vm2955, %v2956, %v2948
        %v2958 = vsel %vm2951, %v2954, %v2957
        %v2959 = vsel %vm2949, nan, %v2958
        %v2960 = vand.u32 2147483647, %v565
        %vm2961 = vcmp.le.f32.partialorder %v2960, 0.7853982
        %vm2962 = vcmp.lt.s32.totalorder %v565, 0
        %v2963 = vand.u32 %v565, 2139095040
        %v2964 = vshrl.u32 %v2963, 23
        %v2965 = vsub.s32 %v2964, 127
        %v2966 = vand.u32 2147483647, %v565
        %v2967 = vand.u32 %v2966, 8388607
        %v2968 = vor.u32 %v2967, 8388608
        %v2969 = vsub.s32 0, %v2968
        %v2970 = vadd.s32 %v2965, 1
        %vm2971 = vcmp.gt.s32.totalorder %v2970, 0
        %v2972 = vsel %vm2971, %v2970, 0
        %v2973 = vshrl.u32 %v2972, 5
        %v2974 = vand.u32 %v2972, 31
        %v2975 = vsub.s32 32, %v2974
        %v2976 = vshrl.u32 683565275, %v2975
        %v2977 = vshll.u32 683565275, %v2974
        %v2978 = vshrl.u32 2475754826, %v2975
        %v2979 = vor.u32 %v2977, %v2978
        %v2980 = vshll.u32 2475754826, %v2974
        %v2981 = vshrl.u32 2131351028, %v2975
        %v2982 = vor.u32 %v2980, %v2981
        %v2983 = vshll.u32 2131351028, %v2974
        %v2984 = vshrl.u32 2102212464, %v2975
        %v2985 = vor.u32 %v2983, %v2984
        %v2986 = vshll.u32 2102212464, %v2974
        %v2987 = vshrl.u32 920167782, %v2975
        %v2988 = vor.u32 %v2986, %v2987
        %v2989 = vshll.u32 920167782, %v2974
        %v2990 = vshrl.u32 1326507024, %v2975
        %v2991 = vor.u32 %v2989, %v2990
        %vm2992 = vcmp.lt.s32.totalorder %v2973, 1
        %vm2993 = vcmp.lt.s32.totalorder %v2973, 2
        %vm2994 = vcmp.lt.s32.totalorder %v2973, 3
        %vm2995 = vcmp.lt.s32.totalorder %v2973, 4
        %v2996 = vsel %vm2992, %v2976, %v2979
        %v2997 = vsel %vm2995, %v2985, 2102212464
        %v2998 = vsel %vm2994, %v2982, %v2997
        %v2999 = vsel %vm2993, %v2996, %v2998
        %v3000 = vsel %vm2992, %v2979, %v2982
        %v3001 = vsel %vm2995, %v2988, 920167782
        %v3002 = vsel %vm2994, %v2985, %v3001
        %v3003 = vsel %vm2993, %v3000, %v3002
        %v3004 = vsel %vm2992, %v2982, %v2985
        %v3005 = vsel %vm2995, %v2991, 1326507024
        %v3006 = vsel %vm2994, %v2988, %v3005
        %v3007 = vsel %vm2993, %v3004, %v3006
        %v3008 = vshll.u32 %v2968, 8
        %v3009 = vmul.u32.u64.compose %v3008, %v3007
        %v3010 = vextract.low.u32 %v3009
        %v3011 = vextract.high.u32 %v3009
        %v3012 = vmul.u32.u64.compose %v3008, %v3003
        %v3013 = vextract.low.u32 %v3012
        %v3014 = vextract.high.u32 %v3012
        %v3015 = vmul.u32 %v3008, %v2999
        %v3016 = vadd.s32 %v3011, %v3013
        %vm3017 = vc.u32 %v3011, %v3013
        %v3018 = vadd.s32 %v3014, 1
        %v3019 = vsel %vm3017, %v3018, %v3014
        %v3020 = vadd.s32 %v3015, %v3019
        %v3021 = vadd.s32 %v3020, 536870912
        %v3022 = vshrl.u32 %v3021, 30
        %v3023 = vshll.u32 %v3022, 30
        %v3024 = vsub.s32 %v3020, %v3023
        %vm3025 = vcmp.lt.s32.totalorder %v3024, 0
        %v3026 = vsub.s32 0, %v3024
        %v3027 = vsel %vm3025, %v3026, %v3024
        %v3028 = vclz %v3027
        %v3029 = vsub.s32 %v3028, 2
        %vm3030 = vcmp.gt.s32.totalorder 0, %v3029
        %v3031 = vsel %vm3030, 0, %v3029
        %v3032 = vsub.s32 32, %v3031
        %v3033 = vshll.u32 %v3024, %v3031
        %v3034 = vshrl.u32 %v3016, %v3032
        %v3035 = vor.u32 %v3033, %v3034
        %v3036 = vsub.s32 4294967266, %v3031
        %v3037 = vadd.s32 %v3036, 127
        %v3038 = vshll.u32 %v3037, 23
        %v3039 = vor.u32 4788187, %v3038
        %v3040 = vand.u32 2147483647, %v3039
        %v3042 = vcvt.s32.f32 %v3035
        %v3043 = vmul.f32 %v3042, %v3040
        %v3044 = vxor.u32 %v3043, 2147483648
        %v3045 = vsel %vm2962, %v3044, %v3043
        %v3046 = vsub.s32 4, %v3022
        %v3047 = vsel %vm2962, %v3046, %v3022
        %v3048 = vsel %vm2961, %v565, %v3045
        %v3049 = vsel %vm2961, 0, %v3047
        %v3050 = vcosq.f32.pop %v3048
        %v3051 = vsinq.f32.pop %v3048
        %vm3052 = vweird.f32 %v565
        %v3053 = vand.u32 %v3049, 3
        %vm3054 = vcmp.lt.s32.totalorder %v3053, 2
        %vm3055 = vcmp.eq.s32.totalorder %v3053, 0
        %v3056 = vxor.u32 %v3051, 2147483648
        %v3057 = vsel %vm3055, %v3050, %v3056
        %vm3058 = vcmp.eq.s32.totalorder %v3053, 2
        %v3059 = vxor.u32 %v3050, 2147483648
        %v3060 = vsel %vm3058, %v3059, %v3051
        %v3061 = vsel %vm3054, %v3057, %v3060
        %v3062 = vsel %vm3052, nan, %v3061
        %v3063 = vand.u32 2147483647, %v569
        %vm3064 = vcmp.le.f32.partialorder %v3063, 0.7853982
        %vm3065 = vcmp.lt.s32.totalorder %v569, 0
        %v3066 = vand.u32 %v569, 2139095040
        %v3067 = vshrl.u32 %v3066, 23
        %v3068 = vsub.s32 %v3067, 127
        %v3069 = vand.u32 2147483647, %v569
        %v3070 = vand.u32 %v3069, 8388607
        %v3071 = vor.u32 %v3070, 8388608
        %v3072 = vsub.s32 0, %v3071
        %v3073 = vadd.s32 %v3068, 1
        %vm3074 = vcmp.gt.s32.totalorder %v3073, 0
        %v3075 = vsel %vm3074, %v3073, 0
        %v3076 = vshrl.u32 %v3075, 5
        %v3077 = vand.u32 %v3075, 31
        %v3078 = vsub.s32 32, %v3077
        %v3079 = vshrl.u32 683565275, %v3078
        %v3080 = vshll.u32 683565275, %v3077
        %v3081 = vshrl.u32 2475754826, %v3078
        %v3082 = vor.u32 %v3080, %v3081
        %v3083 = vshll.u32 2475754826, %v3077
        %v3084 = vshrl.u32 2131351028, %v3078
        %v3085 = vor.u32 %v3083, %v3084
        %v3086 = vshll.u32 2131351028, %v3077
        %v3087 = vshrl.u32 2102212464, %v3078
        %v3088 = vor.u32 %v3086, %v3087
        %v3089 = vshll.u32 2102212464, %v3077
        %v3090 = vshrl.u32 920167782, %v3078
        %v3091 = vor.u32 %v3089, %v3090
        %v3092 = vshll.u32 920167782, %v3077
        %v3093 = vshrl.u32 1326507024, %v3078
        %v3094 = vor.u32 %v3092, %v3093
        %vm3095 = vcmp.lt.s32.totalorder %v3076, 1
        %vm3096 = vcmp.lt.s32.totalorder %v3076, 2
        %vm3097 = vcmp.lt.s32.totalorder %v3076, 3
        %vm3098 = vcmp.lt.s32.totalorder %v3076, 4
        %v3099 = vsel %vm3095, %v3079, %v3082
        %v3100 = vsel %vm3098, %v3088, 2102212464
        %v3101 = vsel %vm3097, %v3085, %v3100
        %v3102 = vsel %vm3096, %v3099, %v3101
        %v3103 = vsel %vm3095, %v3082, %v3085
        %v3104 = vsel %vm3098, %v3091, 920167782
        %v3105 = vsel %vm3097, %v3088, %v3104
        %v3106 = vsel %vm3096, %v3103, %v3105
        %v3107 = vsel %vm3095, %v3085, %v3088
        %v3108 = vsel %vm3098, %v3094, 1326507024
        %v3109 = vsel %vm3097, %v3091, %v3108
        %v3110 = vsel %vm3096, %v3107, %v3109
        %v3111 = vshll.u32 %v3071, 8
        %v3112 = vmul.u32.u64.compose %v3111, %v3110
        %v3113 = vextract.low.u32 %v3112
        %v3114 = vextract.high.u32 %v3112
        %v3115 = vmul.u32.u64.compose %v3111, %v3106
        %v3116 = vextract.low.u32 %v3115
        %v3117 = vextract.high.u32 %v3115
        %v3118 = vmul.u32 %v3111, %v3102
        %v3119 = vadd.s32 %v3114, %v3116
        %vm3120 = vc.u32 %v3114, %v3116
        %v3121 = vadd.s32 %v3117, 1
        %v3122 = vsel %vm3120, %v3121, %v3117
        %v3123 = vadd.s32 %v3118, %v3122
        %v3124 = vadd.s32 %v3123, 536870912
        %v3125 = vshrl.u32 %v3124, 30
        %v3126 = vshll.u32 %v3125, 30
        %v3127 = vsub.s32 %v3123, %v3126
        %vm3128 = vcmp.lt.s32.totalorder %v3127, 0
        %v3129 = vsub.s32 0, %v3127
        %v3130 = vsel %vm3128, %v3129, %v3127
        %v3131 = vclz %v3130
        %v3132 = vsub.s32 %v3131, 2
        %vm3133 = vcmp.gt.s32.totalorder 0, %v3132
        %v3134 = vsel %vm3133, 0, %v3132
        %v3135 = vsub.s32 32, %v3134
        %v3136 = vshll.u32 %v3127, %v3134
        %v3137 = vshrl.u32 %v3119, %v3135
        %v3138 = vor.u32 %v3136, %v3137
        %v3139 = vsub.s32 4294967266, %v3134
        %v3140 = vadd.s32 %v3139, 127
        %v3141 = vshll.u32 %v3140, 23
        %v3142 = vor.u32 4788187, %v3141
        %v3143 = vand.u32 2147483647, %v3142
        %v3145 = vcvt.s32.f32 %v3138
        %v3146 = vmul.f32 %v3145, %v3143
        %v3147 = vxor.u32 %v3146, 2147483648
        %v3148 = vsel %vm3065, %v3147, %v3146
        %v3149 = vsub.s32 4, %v3125
        %v3150 = vsel %vm3065, %v3149, %v3125
        %v3151 = vsel %vm3064, %v569, %v3148
        %v3152 = vsel %vm3064, 0, %v3150
        %v3153 = vcosq.f32.pop %v3151
        %v3154 = vsinq.f32.pop %v3151
        %vm3155 = vweird.f32 %v569
        %v3156 = vand.u32 %v3152, 3
        %vm3157 = vcmp.lt.s32.totalorder %v3156, 2
        %vm3158 = vcmp.eq.s32.totalorder %v3156, 0
        %v3159 = vxor.u32 %v3154, 2147483648
        %v3160 = vsel %vm3158, %v3153, %v3159
        %vm3161 = vcmp.eq.s32.totalorder %v3156, 2
        %v3162 = vxor.u32 %v3153, 2147483648
        %v3163 = vsel %vm3161, %v3162, %v3154
        %v3164 = vsel %vm3157, %v3160, %v3163
        %v3165 = vsel %vm3155, nan, %v3164
        %v3166 = vand.u32 2147483647, %v571
        %vm3167 = vcmp.le.f32.partialorder %v3166, 0.7853982
        %vm3168 = vcmp.lt.s32.totalorder %v571, 0
        %v3169 = vand.u32 %v571, 2139095040
        %v3170 = vshrl.u32 %v3169, 23
        %v3171 = vsub.s32 %v3170, 127
        %v3172 = vand.u32 2147483647, %v571
        %v3173 = vand.u32 %v3172, 8388607
        %v3174 = vor.u32 %v3173, 8388608
        %v3175 = vsub.s32 0, %v3174
        %v3176 = vadd.s32 %v3171, 1
        %vm3177 = vcmp.gt.s32.totalorder %v3176, 0
        %v3178 = vsel %vm3177, %v3176, 0
        %v3179 = vshrl.u32 %v3178, 5
        %v3180 = vand.u32 %v3178, 31
        %v3181 = vsub.s32 32, %v3180
        %v3182 = vshrl.u32 683565275, %v3181
        %v3183 = vshll.u32 683565275, %v3180
        %v3184 = vshrl.u32 2475754826, %v3181
        %v3185 = vor.u32 %v3183, %v3184
        %v3186 = vshll.u32 2475754826, %v3180
        %v3187 = vshrl.u32 2131351028, %v3181
        %v3188 = vor.u32 %v3186, %v3187
        %v3189 = vshll.u32 2131351028, %v3180
        %v3190 = vshrl.u32 2102212464, %v3181
        %v3191 = vor.u32 %v3189, %v3190
        %v3192 = vshll.u32 2102212464, %v3180
        %v3193 = vshrl.u32 920167782, %v3181
        %v3194 = vor.u32 %v3192, %v3193
        %v3195 = vshll.u32 920167782, %v3180
        %v3196 = vshrl.u32 1326507024, %v3181
        %v3197 = vor.u32 %v3195, %v3196
        %vm3198 = vcmp.lt.s32.totalorder %v3179, 1
        %vm3199 = vcmp.lt.s32.totalorder %v3179, 2
        %vm3200 = vcmp.lt.s32.totalorder %v3179, 3
        %vm3201 = vcmp.lt.s32.totalorder %v3179, 4
        %v3202 = vsel %vm3198, %v3182, %v3185
        %v3203 = vsel %vm3201, %v3191, 2102212464
        %v3204 = vsel %vm3200, %v3188, %v3203
        %v3205 = vsel %vm3199, %v3202, %v3204
        %v3206 = vsel %vm3198, %v3185, %v3188
        %v3207 = vsel %vm3201, %v3194, 920167782
        %v3208 = vsel %vm3200, %v3191, %v3207
        %v3209 = vsel %vm3199, %v3206, %v3208
        %v3210 = vsel %vm3198, %v3188, %v3191
        %v3211 = vsel %vm3201, %v3197, 1326507024
        %v3212 = vsel %vm3200, %v3194, %v3211
        %v3213 = vsel %vm3199, %v3210, %v3212
        %v3214 = vshll.u32 %v3174, 8
        %v3215 = vmul.u32.u64.compose %v3214, %v3213
        %v3216 = vextract.low.u32 %v3215
        %v3217 = vextract.high.u32 %v3215
        %v3218 = vmul.u32.u64.compose %v3214, %v3209
        %v3219 = vextract.low.u32 %v3218
        %v3220 = vextract.high.u32 %v3218
        %v3221 = vmul.u32 %v3214, %v3205
        %v3222 = vadd.s32 %v3217, %v3219
        %vm3223 = vc.u32 %v3217, %v3219
        %v3224 = vadd.s32 %v3220, 1
        %v3225 = vsel %vm3223, %v3224, %v3220
        %v3226 = vadd.s32 %v3221, %v3225
        %v3227 = vadd.s32 %v3226, 536870912
        %v3228 = vshrl.u32 %v3227, 30
        %v3229 = vshll.u32 %v3228, 30
        %v3230 = vsub.s32 %v3226, %v3229
        %vm3231 = vcmp.lt.s32.totalorder %v3230, 0
        %v3232 = vsub.s32 0, %v3230
        %v3233 = vsel %vm3231, %v3232, %v3230
        %v3234 = vclz %v3233
        %v3235 = vsub.s32 %v3234, 2
        %vm3236 = vcmp.gt.s32.totalorder 0, %v3235
        %v3237 = vsel %vm3236, 0, %v3235
        %v3238 = vsub.s32 32, %v3237
        %v3239 = vshll.u32 %v3230, %v3237
        %v3240 = vshrl.u32 %v3222, %v3238
        %v3241 = vor.u32 %v3239, %v3240
        %v3242 = vsub.s32 4294967266, %v3237
        %v3243 = vadd.s32 %v3242, 127
        %v3244 = vshll.u32 %v3243, 23
        %v3245 = vor.u32 4788187, %v3244
        %v3246 = vand.u32 2147483647, %v3245
        %v3248 = vcvt.s32.f32 %v3241
        %v3249 = vmul.f32 %v3248, %v3246
        %v3250 = vxor.u32 %v3249, 2147483648
        %v3251 = vsel %vm3168, %v3250, %v3249
        %v3252 = vsub.s32 4, %v3228
        %v3253 = vsel %vm3168, %v3252, %v3228
        %v3254 = vsel %vm3167, %v571, %v3251
        %v3255 = vsel %vm3167, 0, %v3253
        %v3256 = vcosq.f32.pop %v3254
        %v3257 = vsinq.f32.pop %v3254
        %vm3258 = vweird.f32 %v571
        %v3259 = vand.u32 %v3255, 3
        %vm3260 = vcmp.lt.s32.totalorder %v3259, 2
        %vm3261 = vcmp.eq.s32.totalorder %v3259, 0
        %v3262 = vxor.u32 %v3257, 2147483648
        %v3263 = vsel %vm3261, %v3256, %v3262
        %vm3264 = vcmp.eq.s32.totalorder %v3259, 2
        %v3265 = vxor.u32 %v3256, 2147483648
        %v3266 = vsel %vm3264, %v3265, %v3257
        %v3267 = vsel %vm3260, %v3263, %v3266
        %v3268 = vsel %vm3258, nan, %v3267
        %v3269 = vand.u32 2147483647, %v575
        %vm3270 = vcmp.le.f32.partialorder %v3269, 0.7853982
        %vm3271 = vcmp.lt.s32.totalorder %v575, 0
        %v3272 = vand.u32 %v575, 2139095040
        %v3273 = vshrl.u32 %v3272, 23
        %v3274 = vsub.s32 %v3273, 127
        %v3275 = vand.u32 2147483647, %v575
        %v3276 = vand.u32 %v3275, 8388607
        %v3277 = vor.u32 %v3276, 8388608
        %v3278 = vsub.s32 0, %v3277
        %v3279 = vadd.s32 %v3274, 1
        %vm3280 = vcmp.gt.s32.totalorder %v3279, 0
        %v3281 = vsel %vm3280, %v3279, 0
        %v3282 = vshrl.u32 %v3281, 5
        %v3283 = vand.u32 %v3281, 31
        %v3284 = vsub.s32 32, %v3283
        %v3285 = vshrl.u32 683565275, %v3284
        %v3286 = vshll.u32 683565275, %v3283
        %v3287 = vshrl.u32 2475754826, %v3284
        %v3288 = vor.u32 %v3286, %v3287
        %v3289 = vshll.u32 2475754826, %v3283
        %v3290 = vshrl.u32 2131351028, %v3284
        %v3291 = vor.u32 %v3289, %v3290
        %v3292 = vshll.u32 2131351028, %v3283
        %v3293 = vshrl.u32 2102212464, %v3284
        %v3294 = vor.u32 %v3292, %v3293
        %v3295 = vshll.u32 2102212464, %v3283
        %v3296 = vshrl.u32 920167782, %v3284
        %v3297 = vor.u32 %v3295, %v3296
        %v3298 = vshll.u32 920167782, %v3283
        %v3299 = vshrl.u32 1326507024, %v3284
        %v3300 = vor.u32 %v3298, %v3299
        %vm3301 = vcmp.lt.s32.totalorder %v3282, 1
        %vm3302 = vcmp.lt.s32.totalorder %v3282, 2
        %vm3303 = vcmp.lt.s32.totalorder %v3282, 3
        %vm3304 = vcmp.lt.s32.totalorder %v3282, 4
        %v3305 = vsel %vm3301, %v3285, %v3288
        %v3306 = vsel %vm3304, %v3294, 2102212464
        %v3307 = vsel %vm3303, %v3291, %v3306
        %v3308 = vsel %vm3302, %v3305, %v3307
        %v3309 = vsel %vm3301, %v3288, %v3291
        %v3310 = vsel %vm3304, %v3297, 920167782
        %v3311 = vsel %vm3303, %v3294, %v3310
        %v3312 = vsel %vm3302, %v3309, %v3311
        %v3313 = vsel %vm3301, %v3291, %v3294
        %v3314 = vsel %vm3304, %v3300, 1326507024
        %v3315 = vsel %vm3303, %v3297, %v3314
        %v3316 = vsel %vm3302, %v3313, %v3315
        %v3317 = vshll.u32 %v3277, 8
        %v3318 = vmul.u32.u64.compose %v3317, %v3316
        %v3319 = vextract.low.u32 %v3318
        %v3320 = vextract.high.u32 %v3318
        %v3321 = vmul.u32.u64.compose %v3317, %v3312
        %v3322 = vextract.low.u32 %v3321
        %v3323 = vextract.high.u32 %v3321
        %v3324 = vmul.u32 %v3317, %v3308
        %v3325 = vadd.s32 %v3320, %v3322
        %vm3326 = vc.u32 %v3320, %v3322
        %v3327 = vadd.s32 %v3323, 1
        %v3328 = vsel %vm3326, %v3327, %v3323
        %v3329 = vadd.s32 %v3324, %v3328
        %v3330 = vadd.s32 %v3329, 536870912
        %v3331 = vshrl.u32 %v3330, 30
        %v3332 = vshll.u32 %v3331, 30
        %v3333 = vsub.s32 %v3329, %v3332
        %vm3334 = vcmp.lt.s32.totalorder %v3333, 0
        %v3335 = vsub.s32 0, %v3333
        %v3336 = vsel %vm3334, %v3335, %v3333
        %v3337 = vclz %v3336
        %v3338 = vsub.s32 %v3337, 2
        %vm3339 = vcmp.gt.s32.totalorder 0, %v3338
        %v3340 = vsel %vm3339, 0, %v3338
        %v3341 = vsub.s32 32, %v3340
        %v3342 = vshll.u32 %v3333, %v3340
        %v3343 = vshrl.u32 %v3325, %v3341
        %v3344 = vor.u32 %v3342, %v3343
        %v3345 = vsub.s32 4294967266, %v3340
        %v3346 = vadd.s32 %v3345, 127
        %v3347 = vshll.u32 %v3346, 23
        %v3348 = vor.u32 4788187, %v3347
        %v3349 = vand.u32 2147483647, %v3348
        %v3351 = vcvt.s32.f32 %v3344
        %v3352 = vmul.f32 %v3351, %v3349
        %v3353 = vxor.u32 %v3352, 2147483648
        %v3354 = vsel %vm3271, %v3353, %v3352
        %v3355 = vsub.s32 4, %v3331
        %v3356 = vsel %vm3271, %v3355, %v3331
        %v3357 = vsel %vm3270, %v575, %v3354
        %v3358 = vsel %vm3270, 0, %v3356
        %v3359 = vcosq.f32.pop %v3357
        %v3360 = vsinq.f32.pop %v3357
        %vm3361 = vweird.f32 %v575
        %v3362 = vand.u32 %v3358, 3
        %vm3363 = vcmp.lt.s32.totalorder %v3362, 2
        %vm3364 = vcmp.eq.s32.totalorder %v3362, 0
        %v3365 = vxor.u32 %v3360, 2147483648
        %v3366 = vsel %vm3364, %v3359, %v3365
        %vm3367 = vcmp.eq.s32.totalorder %v3362, 2
        %v3368 = vxor.u32 %v3359, 2147483648
        %v3369 = vsel %vm3367, %v3368, %v3360
        %v3370 = vsel %vm3363, %v3366, %v3369
        %v3371 = vsel %vm3361, nan, %v3370
        %v3372 = vand.u32 2147483647, %v577
        %vm3373 = vcmp.le.f32.partialorder %v3372, 0.7853982
        %vm3374 = vcmp.lt.s32.totalorder %v577, 0
        %v3375 = vand.u32 %v577, 2139095040
        %v3376 = vshrl.u32 %v3375, 23
        %v3377 = vsub.s32 %v3376, 127
        %v3378 = vand.u32 2147483647, %v577
        %v3379 = vand.u32 %v3378, 8388607
        %v3380 = vor.u32 %v3379, 8388608
        %v3381 = vsub.s32 0, %v3380
        %v3382 = vadd.s32 %v3377, 1
        %vm3383 = vcmp.gt.s32.totalorder %v3382, 0
        %v3384 = vsel %vm3383, %v3382, 0
        %v3385 = vshrl.u32 %v3384, 5
        %v3386 = vand.u32 %v3384, 31
        %v3387 = vsub.s32 32, %v3386
        %v3388 = vshrl.u32 683565275, %v3387
        %v3389 = vshll.u32 683565275, %v3386
        %v3390 = vshrl.u32 2475754826, %v3387
        %v3391 = vor.u32 %v3389, %v3390
        %v3392 = vshll.u32 2475754826, %v3386
        %v3393 = vshrl.u32 2131351028, %v3387
        %v3394 = vor.u32 %v3392, %v3393
        %v3395 = vshll.u32 2131351028, %v3386
        %v3396 = vshrl.u32 2102212464, %v3387
        %v3397 = vor.u32 %v3395, %v3396
        %v3398 = vshll.u32 2102212464, %v3386
        %v3399 = vshrl.u32 920167782, %v3387
        %v3400 = vor.u32 %v3398, %v3399
        %v3401 = vshll.u32 920167782, %v3386
        %v3402 = vshrl.u32 1326507024, %v3387
        %v3403 = vor.u32 %v3401, %v3402
        %vm3404 = vcmp.lt.s32.totalorder %v3385, 1
        %vm3405 = vcmp.lt.s32.totalorder %v3385, 2
        %vm3406 = vcmp.lt.s32.totalorder %v3385, 3
        %vm3407 = vcmp.lt.s32.totalorder %v3385, 4
        %v3408 = vsel %vm3404, %v3388, %v3391
        %v3409 = vsel %vm3407, %v3397, 2102212464
        %v3410 = vsel %vm3406, %v3394, %v3409
        %v3411 = vsel %vm3405, %v3408, %v3410
        %v3412 = vsel %vm3404, %v3391, %v3394
        %v3413 = vsel %vm3407, %v3400, 920167782
        %v3414 = vsel %vm3406, %v3397, %v3413
        %v3415 = vsel %vm3405, %v3412, %v3414
        %v3416 = vsel %vm3404, %v3394, %v3397
        %v3417 = vsel %vm3407, %v3403, 1326507024
        %v3418 = vsel %vm3406, %v3400, %v3417
        %v3419 = vsel %vm3405, %v3416, %v3418
        %v3420 = vshll.u32 %v3380, 8
        %v3421 = vmul.u32.u64.compose %v3420, %v3419
        %v3422 = vextract.low.u32 %v3421
        %v3423 = vextract.high.u32 %v3421
        %v3424 = vmul.u32.u64.compose %v3420, %v3415
        %v3425 = vextract.low.u32 %v3424
        %v3426 = vextract.high.u32 %v3424
        %v3427 = vmul.u32 %v3420, %v3411
        %v3428 = vadd.s32 %v3423, %v3425
        %vm3429 = vc.u32 %v3423, %v3425
        %v3430 = vadd.s32 %v3426, 1
        %v3431 = vsel %vm3429, %v3430, %v3426
        %v3432 = vadd.s32 %v3427, %v3431
        %v3433 = vadd.s32 %v3432, 536870912
        %v3434 = vshrl.u32 %v3433, 30
        %v3435 = vshll.u32 %v3434, 30
        %v3436 = vsub.s32 %v3432, %v3435
        %vm3437 = vcmp.lt.s32.totalorder %v3436, 0
        %v3438 = vsub.s32 0, %v3436
        %v3439 = vsel %vm3437, %v3438, %v3436
        %v3440 = vclz %v3439
        %v3441 = vsub.s32 %v3440, 2
        %vm3442 = vcmp.gt.s32.totalorder 0, %v3441
        %v3443 = vsel %vm3442, 0, %v3441
        %v3444 = vsub.s32 32, %v3443
        %v3445 = vshll.u32 %v3436, %v3443
        %v3446 = vshrl.u32 %v3428, %v3444
        %v3447 = vor.u32 %v3445, %v3446
        %v3448 = vsub.s32 4294967266, %v3443
        %v3449 = vadd.s32 %v3448, 127
        %v3450 = vshll.u32 %v3449, 23
        %v3451 = vor.u32 4788187, %v3450
        %v3452 = vand.u32 2147483647, %v3451
        %v3454 = vcvt.s32.f32 %v3447
        %v3455 = vmul.f32 %v3454, %v3452
        %v3456 = vxor.u32 %v3455, 2147483648
        %v3457 = vsel %vm3374, %v3456, %v3455
        %v3458 = vsub.s32 4, %v3434
        %v3459 = vsel %vm3374, %v3458, %v3434
        %v3460 = vsel %vm3373, %v577, %v3457
        %v3461 = vsel %vm3373, 0, %v3459
        %v3462 = vcosq.f32.pop %v3460
        %v3463 = vsinq.f32.pop %v3460
        %vm3464 = vweird.f32 %v577
        %v3465 = vand.u32 %v3461, 3
        %vm3466 = vcmp.lt.s32.totalorder %v3465, 2
        %vm3467 = vcmp.eq.s32.totalorder %v3465, 0
        %v3468 = vxor.u32 %v3463, 2147483648
        %v3469 = vsel %vm3467, %v3462, %v3468
        %vm3470 = vcmp.eq.s32.totalorder %v3465, 2
        %v3471 = vxor.u32 %v3462, 2147483648
        %v3472 = vsel %vm3470, %v3471, %v3463
        %v3473 = vsel %vm3466, %v3469, %v3472
        %v3474 = vsel %vm3464, nan, %v3473
        %v3475 = vand.u32 2147483647, %v581
        %vm3476 = vcmp.le.f32.partialorder %v3475, 0.7853982
        %vm3477 = vcmp.lt.s32.totalorder %v581, 0
        %v3478 = vand.u32 %v581, 2139095040
        %v3479 = vshrl.u32 %v3478, 23
        %v3480 = vsub.s32 %v3479, 127
        %v3481 = vand.u32 2147483647, %v581
        %v3482 = vand.u32 %v3481, 8388607
        %v3483 = vor.u32 %v3482, 8388608
        %v3484 = vsub.s32 0, %v3483
        %v3485 = vadd.s32 %v3480, 1
        %vm3486 = vcmp.gt.s32.totalorder %v3485, 0
        %v3487 = vsel %vm3486, %v3485, 0
        %v3488 = vshrl.u32 %v3487, 5
        %v3489 = vand.u32 %v3487, 31
        %v3490 = vsub.s32 32, %v3489
        %v3491 = vshrl.u32 683565275, %v3490
        %v3492 = vshll.u32 683565275, %v3489
        %v3493 = vshrl.u32 2475754826, %v3490
        %v3494 = vor.u32 %v3492, %v3493
        %v3495 = vshll.u32 2475754826, %v3489
        %v3496 = vshrl.u32 2131351028, %v3490
        %v3497 = vor.u32 %v3495, %v3496
        %v3498 = vshll.u32 2131351028, %v3489
        %v3499 = vshrl.u32 2102212464, %v3490
        %v3500 = vor.u32 %v3498, %v3499
        %v3501 = vshll.u32 2102212464, %v3489
        %v3502 = vshrl.u32 920167782, %v3490
        %v3503 = vor.u32 %v3501, %v3502
        %v3504 = vshll.u32 920167782, %v3489
        %v3505 = vshrl.u32 1326507024, %v3490
        %v3506 = vor.u32 %v3504, %v3505
        %vm3507 = vcmp.lt.s32.totalorder %v3488, 1
        %vm3508 = vcmp.lt.s32.totalorder %v3488, 2
        %vm3509 = vcmp.lt.s32.totalorder %v3488, 3
        %vm3510 = vcmp.lt.s32.totalorder %v3488, 4
        %v3511 = vsel %vm3507, %v3491, %v3494
        %v3512 = vsel %vm3510, %v3500, 2102212464
        %v3513 = vsel %vm3509, %v3497, %v3512
        %v3514 = vsel %vm3508, %v3511, %v3513
        %v3515 = vsel %vm3507, %v3494, %v3497
        %v3516 = vsel %vm3510, %v3503, 920167782
        %v3517 = vsel %vm3509, %v3500, %v3516
        %v3518 = vsel %vm3508, %v3515, %v3517
        %v3519 = vsel %vm3507, %v3497, %v3500
        %v3520 = vsel %vm3510, %v3506, 1326507024
        %v3521 = vsel %vm3509, %v3503, %v3520
        %v3522 = vsel %vm3508, %v3519, %v3521
        %v3523 = vshll.u32 %v3483, 8
        %v3524 = vmul.u32.u64.compose %v3523, %v3522
        %v3525 = vextract.low.u32 %v3524
        %v3526 = vextract.high.u32 %v3524
        %v3527 = vmul.u32.u64.compose %v3523, %v3518
        %v3528 = vextract.low.u32 %v3527
        %v3529 = vextract.high.u32 %v3527
        %v3530 = vmul.u32 %v3523, %v3514
        %v3531 = vadd.s32 %v3526, %v3528
        %vm3532 = vc.u32 %v3526, %v3528
        %v3533 = vadd.s32 %v3529, 1
        %v3534 = vsel %vm3532, %v3533, %v3529
        %v3535 = vadd.s32 %v3530, %v3534
        %v3536 = vadd.s32 %v3535, 536870912
        %v3537 = vshrl.u32 %v3536, 30
        %v3538 = vshll.u32 %v3537, 30
        %v3539 = vsub.s32 %v3535, %v3538
        %vm3540 = vcmp.lt.s32.totalorder %v3539, 0
        %v3541 = vsub.s32 0, %v3539
        %v3542 = vsel %vm3540, %v3541, %v3539
        %v3543 = vclz %v3542
        %v3544 = vsub.s32 %v3543, 2
        %vm3545 = vcmp.gt.s32.totalorder 0, %v3544
        %v3546 = vsel %vm3545, 0, %v3544
        %v3547 = vsub.s32 32, %v3546
        %v3548 = vshll.u32 %v3539, %v3546
        %v3549 = vshrl.u32 %v3531, %v3547
        %v3550 = vor.u32 %v3548, %v3549
        %v3551 = vsub.s32 4294967266, %v3546
        %v3552 = vadd.s32 %v3551, 127
        %v3553 = vshll.u32 %v3552, 23
        %v3554 = vor.u32 4788187, %v3553
        %v3555 = vand.u32 2147483647, %v3554
        %v3557 = vcvt.s32.f32 %v3550
        %v3558 = vmul.f32 %v3557, %v3555
        %v3559 = vxor.u32 %v3558, 2147483648
        %v3560 = vsel %vm3477, %v3559, %v3558
        %v3561 = vsub.s32 4, %v3537
        %v3562 = vsel %vm3477, %v3561, %v3537
        %v3563 = vsel %vm3476, %v581, %v3560
        %v3564 = vsel %vm3476, 0, %v3562
        %v3565 = vcosq.f32.pop %v3563
        %v3566 = vsinq.f32.pop %v3563
        %vm3567 = vweird.f32 %v581
        %v3568 = vand.u32 %v3564, 3
        %vm3569 = vcmp.lt.s32.totalorder %v3568, 2
        %vm3570 = vcmp.eq.s32.totalorder %v3568, 0
        %v3571 = vxor.u32 %v3566, 2147483648
        %v3572 = vsel %vm3570, %v3565, %v3571
        %vm3573 = vcmp.eq.s32.totalorder %v3568, 2
        %v3574 = vxor.u32 %v3565, 2147483648
        %v3575 = vsel %vm3573, %v3574, %v3566
        %v3576 = vsel %vm3569, %v3572, %v3575
        %v3577 = vsel %vm3567, nan, %v3576
        %v3578 = vand.u32 2147483647, %v583
        %vm3579 = vcmp.le.f32.partialorder %v3578, 0.7853982
        %vm3580 = vcmp.lt.s32.totalorder %v583, 0
        %v3581 = vand.u32 %v583, 2139095040
        %v3582 = vshrl.u32 %v3581, 23
        %v3583 = vsub.s32 %v3582, 127
        %v3584 = vand.u32 2147483647, %v583
        %v3585 = vand.u32 %v3584, 8388607
        %v3586 = vor.u32 %v3585, 8388608
        %v3587 = vsub.s32 0, %v3586
        %v3588 = vadd.s32 %v3583, 1
        %vm3589 = vcmp.gt.s32.totalorder %v3588, 0
        %v3590 = vsel %vm3589, %v3588, 0
        %v3591 = vshrl.u32 %v3590, 5
        %v3592 = vand.u32 %v3590, 31
        %v3593 = vsub.s32 32, %v3592
        %v3594 = vshrl.u32 683565275, %v3593
        %v3595 = vshll.u32 683565275, %v3592
        %v3596 = vshrl.u32 2475754826, %v3593
        %v3597 = vor.u32 %v3595, %v3596
        %v3598 = vshll.u32 2475754826, %v3592
        %v3599 = vshrl.u32 2131351028, %v3593
        %v3600 = vor.u32 %v3598, %v3599
        %v3601 = vshll.u32 2131351028, %v3592
        %v3602 = vshrl.u32 2102212464, %v3593
        %v3603 = vor.u32 %v3601, %v3602
        %v3604 = vshll.u32 2102212464, %v3592
        %v3605 = vshrl.u32 920167782, %v3593
        %v3606 = vor.u32 %v3604, %v3605
        %v3607 = vshll.u32 920167782, %v3592
        %v3608 = vshrl.u32 1326507024, %v3593
        %v3609 = vor.u32 %v3607, %v3608
        %vm3610 = vcmp.lt.s32.totalorder %v3591, 1
        %vm3611 = vcmp.lt.s32.totalorder %v3591, 2
        %vm3612 = vcmp.lt.s32.totalorder %v3591, 3
        %vm3613 = vcmp.lt.s32.totalorder %v3591, 4
        %v3614 = vsel %vm3610, %v3594, %v3597
        %v3615 = vsel %vm3613, %v3603, 2102212464
        %v3616 = vsel %vm3612, %v3600, %v3615
        %v3617 = vsel %vm3611, %v3614, %v3616
        %v3618 = vsel %vm3610, %v3597, %v3600
        %v3619 = vsel %vm3613, %v3606, 920167782
        %v3620 = vsel %vm3612, %v3603, %v3619
        %v3621 = vsel %vm3611, %v3618, %v3620
        %v3622 = vsel %vm3610, %v3600, %v3603
        %v3623 = vsel %vm3613, %v3609, 1326507024
        %v3624 = vsel %vm3612, %v3606, %v3623
        %v3625 = vsel %vm3611, %v3622, %v3624
        %v3626 = vshll.u32 %v3586, 8
        %v3627 = vmul.u32.u64.compose %v3626, %v3625
        %v3628 = vextract.low.u32 %v3627
        %v3629 = vextract.high.u32 %v3627
        %v3630 = vmul.u32.u64.compose %v3626, %v3621
        %v3631 = vextract.low.u32 %v3630
        %v3632 = vextract.high.u32 %v3630
        %v3633 = vmul.u32 %v3626, %v3617
        %v3634 = vadd.s32 %v3629, %v3631
        %vm3635 = vc.u32 %v3629, %v3631
        %v3636 = vadd.s32 %v3632, 1
        %v3637 = vsel %vm3635, %v3636, %v3632
        %v3638 = vadd.s32 %v3633, %v3637
        %v3639 = vadd.s32 %v3638, 536870912
        %v3640 = vshrl.u32 %v3639, 30
        %v3641 = vshll.u32 %v3640, 30
        %v3642 = vsub.s32 %v3638, %v3641
        %vm3643 = vcmp.lt.s32.totalorder %v3642, 0
        %v3644 = vsub.s32 0, %v3642
        %v3645 = vsel %vm3643, %v3644, %v3642
        %v3646 = vclz %v3645
        %v3647 = vsub.s32 %v3646, 2
        %vm3648 = vcmp.gt.s32.totalorder 0, %v3647
        %v3649 = vsel %vm3648, 0, %v3647
        %v3650 = vsub.s32 32, %v3649
        %v3651 = vshll.u32 %v3642, %v3649
        %v3652 = vshrl.u32 %v3634, %v3650
        %v3653 = vor.u32 %v3651, %v3652
        %v3654 = vsub.s32 4294967266, %v3649
        %v3655 = vadd.s32 %v3654, 127
        %v3656 = vshll.u32 %v3655, 23
        %v3657 = vor.u32 4788187, %v3656
        %v3658 = vand.u32 2147483647, %v3657
        %v3660 = vcvt.s32.f32 %v3653
        %v3661 = vmul.f32 %v3660, %v3658
        %v3662 = vxor.u32 %v3661, 2147483648
        %v3663 = vsel %vm3580, %v3662, %v3661
        %v3664 = vsub.s32 4, %v3640
        %v3665 = vsel %vm3580, %v3664, %v3640
        %v3666 = vsel %vm3579, %v583, %v3663
        %v3667 = vsel %vm3579, 0, %v3665
        %v3668 = vcosq.f32.pop %v3666
        %v3669 = vsinq.f32.pop %v3666
        %vm3670 = vweird.f32 %v583
        %v3671 = vand.u32 %v3667, 3
        %vm3672 = vcmp.lt.s32.totalorder %v3671, 2
        %vm3673 = vcmp.eq.s32.totalorder %v3671, 0
        %v3674 = vxor.u32 %v3669, 2147483648
        %v3675 = vsel %vm3673, %v3668, %v3674
        %vm3676 = vcmp.eq.s32.totalorder %v3671, 2
        %v3677 = vxor.u32 %v3668, 2147483648
        %v3678 = vsel %vm3676, %v3677, %v3669
        %v3679 = vsel %vm3672, %v3675, %v3678
        %v3680 = vsel %vm3670, nan, %v3679
        %v3681 = vand.u32 2147483647, %v587
        %vm3682 = vcmp.le.f32.partialorder %v3681, 0.7853982
        %vm3683 = vcmp.lt.s32.totalorder %v587, 0
        %v3684 = vand.u32 %v587, 2139095040
        %v3685 = vshrl.u32 %v3684, 23
        %v3686 = vsub.s32 %v3685, 127
        %v3687 = vand.u32 2147483647, %v587
        %v3688 = vand.u32 %v3687, 8388607
        %v3689 = vor.u32 %v3688, 8388608
        %v3690 = vsub.s32 0, %v3689
        %v3691 = vadd.s32 %v3686, 1
        %vm3692 = vcmp.gt.s32.totalorder %v3691, 0
        %v3693 = vsel %vm3692, %v3691, 0
        %v3694 = vshrl.u32 %v3693, 5
        %v3695 = vand.u32 %v3693, 31
        %v3696 = vsub.s32 32, %v3695
        %v3697 = vshrl.u32 683565275, %v3696
        %v3698 = vshll.u32 683565275, %v3695
        %v3699 = vshrl.u32 2475754826, %v3696
        %v3700 = vor.u32 %v3698, %v3699
        %v3701 = vshll.u32 2475754826, %v3695
        %v3702 = vshrl.u32 2131351028, %v3696
        %v3703 = vor.u32 %v3701, %v3702
        %v3704 = vshll.u32 2131351028, %v3695
        %v3705 = vshrl.u32 2102212464, %v3696
        %v3706 = vor.u32 %v3704, %v3705
        %v3707 = vshll.u32 2102212464, %v3695
        %v3708 = vshrl.u32 920167782, %v3696
        %v3709 = vor.u32 %v3707, %v3708
        %v3710 = vshll.u32 920167782, %v3695
        %v3711 = vshrl.u32 1326507024, %v3696
        %v3712 = vor.u32 %v3710, %v3711
        %vm3713 = vcmp.lt.s32.totalorder %v3694, 1
        %vm3714 = vcmp.lt.s32.totalorder %v3694, 2
        %vm3715 = vcmp.lt.s32.totalorder %v3694, 3
        %vm3716 = vcmp.lt.s32.totalorder %v3694, 4
        %v3717 = vsel %vm3713, %v3697, %v3700
        %v3718 = vsel %vm3716, %v3706, 2102212464
        %v3719 = vsel %vm3715, %v3703, %v3718
        %v3720 = vsel %vm3714, %v3717, %v3719
        %v3721 = vsel %vm3713, %v3700, %v3703
        %v3722 = vsel %vm3716, %v3709, 920167782
        %v3723 = vsel %vm3715, %v3706, %v3722
        %v3724 = vsel %vm3714, %v3721, %v3723
        %v3725 = vsel %vm3713, %v3703, %v3706
        %v3726 = vsel %vm3716, %v3712, 1326507024
        %v3727 = vsel %vm3715, %v3709, %v3726
        %v3728 = vsel %vm3714, %v3725, %v3727
        %v3729 = vshll.u32 %v3689, 8
        %v3730 = vmul.u32.u64.compose %v3729, %v3728
        %v3731 = vextract.low.u32 %v3730
        %v3732 = vextract.high.u32 %v3730
        %v3733 = vmul.u32.u64.compose %v3729, %v3724
        %v3734 = vextract.low.u32 %v3733
        %v3735 = vextract.high.u32 %v3733
        %v3736 = vmul.u32 %v3729, %v3720
        %v3737 = vadd.s32 %v3732, %v3734
        %vm3738 = vc.u32 %v3732, %v3734
        %v3739 = vadd.s32 %v3735, 1
        %v3740 = vsel %vm3738, %v3739, %v3735
        %v3741 = vadd.s32 %v3736, %v3740
        %v3742 = vadd.s32 %v3741, 536870912
        %v3743 = vshrl.u32 %v3742, 30
        %v3744 = vshll.u32 %v3743, 30
        %v3745 = vsub.s32 %v3741, %v3744
        %vm3746 = vcmp.lt.s32.totalorder %v3745, 0
        %v3747 = vsub.s32 0, %v3745
        %v3748 = vsel %vm3746, %v3747, %v3745
        %v3749 = vclz %v3748
        %v3750 = vsub.s32 %v3749, 2
        %vm3751 = vcmp.gt.s32.totalorder 0, %v3750
        %v3752 = vsel %vm3751, 0, %v3750
        %v3753 = vsub.s32 32, %v3752
        %v3754 = vshll.u32 %v3745, %v3752
        %v3755 = vshrl.u32 %v3737, %v3753
        %v3756 = vor.u32 %v3754, %v3755
        %v3757 = vsub.s32 4294967266, %v3752
        %v3758 = vadd.s32 %v3757, 127
        %v3759 = vshll.u32 %v3758, 23
        %v3760 = vor.u32 4788187, %v3759
        %v3761 = vand.u32 2147483647, %v3760
        %v3763 = vcvt.s32.f32 %v3756
        %v3764 = vmul.f32 %v3763, %v3761
        %v3765 = vxor.u32 %v3764, 2147483648
        %v3766 = vsel %vm3683, %v3765, %v3764
        %v3767 = vsub.s32 4, %v3743
        %v3768 = vsel %vm3683, %v3767, %v3743
        %v3769 = vsel %vm3682, %v587, %v3766
        %v3770 = vsel %vm3682, 0, %v3768
        %v3771 = vcosq.f32.pop %v3769
        %v3772 = vsinq.f32.pop %v3769
        %vm3773 = vweird.f32 %v587
        %v3774 = vand.u32 %v3770, 3
        %vm3775 = vcmp.lt.s32.totalorder %v3774, 2
        %vm3776 = vcmp.eq.s32.totalorder %v3774, 0
        %v3777 = vxor.u32 %v3772, 2147483648
        %v3778 = vsel %vm3776, %v3771, %v3777
        %vm3779 = vcmp.eq.s32.totalorder %v3774, 2
        %v3780 = vxor.u32 %v3771, 2147483648
        %v3781 = vsel %vm3779, %v3780, %v3772
        %v3782 = vsel %vm3775, %v3778, %v3781
        %v3783 = vsel %vm3773, nan, %v3782
        %v3784 = vand.u32 2147483647, %v589
        %vm3785 = vcmp.le.f32.partialorder %v3784, 0.7853982
        %vm3786 = vcmp.lt.s32.totalorder %v589, 0
        %v3787 = vand.u32 %v589, 2139095040
        %v3788 = vshrl.u32 %v3787, 23
        %v3789 = vsub.s32 %v3788, 127
        %v3790 = vand.u32 2147483647, %v589
        %v3791 = vand.u32 %v3790, 8388607
        %v3792 = vor.u32 %v3791, 8388608
        %v3793 = vsub.s32 0, %v3792
        %v3794 = vadd.s32 %v3789, 1
        %vm3795 = vcmp.gt.s32.totalorder %v3794, 0
        %v3796 = vsel %vm3795, %v3794, 0
        %v3797 = vshrl.u32 %v3796, 5
        %v3798 = vand.u32 %v3796, 31
        %v3799 = vsub.s32 32, %v3798
        %v3800 = vshrl.u32 683565275, %v3799
        %v3801 = vshll.u32 683565275, %v3798
        %v3802 = vshrl.u32 2475754826, %v3799
        %v3803 = vor.u32 %v3801, %v3802
        %v3804 = vshll.u32 2475754826, %v3798
        %v3805 = vshrl.u32 2131351028, %v3799
        %v3806 = vor.u32 %v3804, %v3805
        %v3807 = vshll.u32 2131351028, %v3798
        %v3808 = vshrl.u32 2102212464, %v3799
        %v3809 = vor.u32 %v3807, %v3808
        %v3810 = vshll.u32 2102212464, %v3798
        %v3811 = vshrl.u32 920167782, %v3799
        %v3812 = vor.u32 %v3810, %v3811
        %v3813 = vshll.u32 920167782, %v3798
        %v3814 = vshrl.u32 1326507024, %v3799
        %v3815 = vor.u32 %v3813, %v3814
        %vm3816 = vcmp.lt.s32.totalorder %v3797, 1
        %vm3817 = vcmp.lt.s32.totalorder %v3797, 2
        %vm3818 = vcmp.lt.s32.totalorder %v3797, 3
        %vm3819 = vcmp.lt.s32.totalorder %v3797, 4
        %v3820 = vsel %vm3816, %v3800, %v3803
        %v3821 = vsel %vm3819, %v3809, 2102212464
        %v3822 = vsel %vm3818, %v3806, %v3821
        %v3823 = vsel %vm3817, %v3820, %v3822
        %v3824 = vsel %vm3816, %v3803, %v3806
        %v3825 = vsel %vm3819, %v3812, 920167782
        %v3826 = vsel %vm3818, %v3809, %v3825
        %v3827 = vsel %vm3817, %v3824, %v3826
        %v3828 = vsel %vm3816, %v3806, %v3809
        %v3829 = vsel %vm3819, %v3815, 1326507024
        %v3830 = vsel %vm3818, %v3812, %v3829
        %v3831 = vsel %vm3817, %v3828, %v3830
        %v3832 = vshll.u32 %v3792, 8
        %v3833 = vmul.u32.u64.compose %v3832, %v3831
        %v3834 = vextract.low.u32 %v3833
        %v3835 = vextract.high.u32 %v3833
        %v3836 = vmul.u32.u64.compose %v3832, %v3827
        %v3837 = vextract.low.u32 %v3836
        %v3838 = vextract.high.u32 %v3836
        %v3839 = vmul.u32 %v3832, %v3823
        %v3840 = vadd.s32 %v3835, %v3837
        %vm3841 = vc.u32 %v3835, %v3837
        %v3842 = vadd.s32 %v3838, 1
        %v3843 = vsel %vm3841, %v3842, %v3838
        %v3844 = vadd.s32 %v3839, %v3843
        %v3845 = vadd.s32 %v3844, 536870912
        %v3846 = vshrl.u32 %v3845, 30
        %v3847 = vshll.u32 %v3846, 30
        %v3848 = vsub.s32 %v3844, %v3847
        %vm3849 = vcmp.lt.s32.totalorder %v3848, 0
        %v3850 = vsub.s32 0, %v3848
        %v3851 = vsel %vm3849, %v3850, %v3848
        %v3852 = vclz %v3851
        %v3853 = vsub.s32 %v3852, 2
        %vm3854 = vcmp.gt.s32.totalorder 0, %v3853
        %v3855 = vsel %vm3854, 0, %v3853
        %v3856 = vsub.s32 32, %v3855
        %v3857 = vshll.u32 %v3848, %v3855
        %v3858 = vshrl.u32 %v3840, %v3856
        %v3859 = vor.u32 %v3857, %v3858
        %v3860 = vsub.s32 4294967266, %v3855
        %v3861 = vadd.s32 %v3860, 127
        %v3862 = vshll.u32 %v3861, 23
        %v3863 = vor.u32 4788187, %v3862
        %v3864 = vand.u32 2147483647, %v3863
        %v3866 = vcvt.s32.f32 %v3859
        %v3867 = vmul.f32 %v3866, %v3864
        %v3868 = vxor.u32 %v3867, 2147483648
        %v3869 = vsel %vm3786, %v3868, %v3867
        %v3870 = vsub.s32 4, %v3846
        %v3871 = vsel %vm3786, %v3870, %v3846
        %v3872 = vsel %vm3785, %v589, %v3869
        %v3873 = vsel %vm3785, 0, %v3871
        %v3874 = vcosq.f32.pop %v3872
        %v3875 = vsinq.f32.pop %v3872
        %vm3876 = vweird.f32 %v589
        %v3877 = vand.u32 %v3873, 3
        %vm3878 = vcmp.lt.s32.totalorder %v3877, 2
        %vm3879 = vcmp.eq.s32.totalorder %v3877, 0
        %v3880 = vxor.u32 %v3875, 2147483648
        %v3881 = vsel %vm3879, %v3874, %v3880
        %vm3882 = vcmp.eq.s32.totalorder %v3877, 2
        %v3883 = vxor.u32 %v3874, 2147483648
        %v3884 = vsel %vm3882, %v3883, %v3875
        %v3885 = vsel %vm3878, %v3881, %v3884
        %v3886 = vsel %vm3876, nan, %v3885
        %v3887 = vpack.c.bf16 %v899, %v693
        %v3888 = vpack.c.bf16 %v1002, %v796
        %v3889 = vpack.c.bf16 %v1311, %v1105
        %v3890 = vpack.c.bf16 %v1414, %v1208
        %v3891 = vpack.c.bf16 %v1723, %v1517
        %v3892 = vpack.c.bf16 %v1826, %v1620
        %v3893 = vpack.c.bf16 %v2135, %v1929
        %v3894 = vpack.c.bf16 %v2238, %v2032
        %v3895 = vpack.c.bf16 %v2547, %v2341
        %v3896 = vpack.c.bf16 %v2650, %v2444
        %v3897 = vpack.c.bf16 %v2959, %v2753
        %v3898 = vpack.c.bf16 %v3062, %v2856
        %v3899 = vpack.c.bf16 %v3371, %v3165
        %v3900 = vpack.c.bf16 %v3474, %v3268
        %v3901 = vpack.c.bf16 %v3783, %v3577
        %v3902 = vpack.c.bf16 %v3886, %v3680
        %v3903 = vld [vmem:[%s3] sm:$0xf]
        %v3904 = vld [vmem:[%s3 + $0x4] sm:$0xf]
        %v3905 = vld [vmem:[%s3 + $0x8] sm:$0xf]
        %v3906 = vld [vmem:[%s3 + $0xc] sm:$0xf]
        %v3907 = vld [vmem:[%s3 + $0x10] sm:$0xf]
        %v3908 = vld [vmem:[%s3 + $0x14] sm:$0xf]
        %v3909 = vld [vmem:[%s3 + $0x18] sm:$0xf]
        %v3910 = vld [vmem:[%s3 + $0x1c] sm:$0xf]
        %v3911 = vld [vmem:[%s3 + $0x20] sm:$0xf]
        %v3912 = vld [vmem:[%s3 + $0x24] sm:$0xf]
        %v3913 = vld [vmem:[%s3 + $0x28] sm:$0xf]
        %v3914 = vld [vmem:[%s3 + $0x2c] sm:$0xf]
        %v3915 = vld [vmem:[%s3 + $0x30] sm:$0xf]
        %v3916 = vld [vmem:[%s3 + $0x34] sm:$0xf]
        %v3917 = vld [vmem:[%s3 + $0x38] sm:$0xf]
        %v3918 = vld [vmem:[%s3 + $0x3c] sm:$0xf]
        %v3935 = vunpack.c.l.b16 %v3903
        %v3936 = vunpack.c.l.b16 %v3904
        %v3937 = vunpack.c.l.b16 %v3905
        %v3938 = vunpack.c.l.b16 %v3906
        %v3939 = vunpack.c.l.b16 %v3907
        %v3940 = vunpack.c.l.b16 %v3908
        %v3941 = vunpack.c.l.b16 %v3909
        %v3942 = vunpack.c.l.b16 %v3910
        %v3943 = vunpack.c.l.b16 %v3911
        %v3944 = vunpack.c.l.b16 %v3912
        %v3945 = vunpack.c.l.b16 %v3913
        %v3946 = vunpack.c.l.b16 %v3914
        %v3947 = vunpack.c.l.b16 %v3915
        %v3948 = vunpack.c.l.b16 %v3916
        %v3949 = vunpack.c.l.b16 %v3917
        %v3950 = vunpack.c.l.b16 %v3918
        %v3951 = vpack.c.b16 %v3936, %v3935
        %v3952 = vpack.c.b16 %v3938, %v3937
        %v3953 = vpack.c.b16 %v3940, %v3939
        %v3954 = vpack.c.b16 %v3942, %v3941
        %v3955 = vpack.c.b16 %v3944, %v3943
        %v3956 = vpack.c.b16 %v3946, %v3945
        %v3957 = vpack.c.b16 %v3948, %v3947
        %v3958 = vpack.c.b16 %v3950, %v3949
        %3967 = vmatprep.subr.bf16.mxu0 %v3888
        %3968 = vmatpush1.bf16.msra.mxu0 %v3887
        %3969 = vmatprep.subr.bf16.mxu0 %v3890
        %3970 = vmatpush1.bf16.msra.mxu0 %v3889
        %3971 = vmatprep.subr.bf16.mxu0 %v3892
        %3972 = vmatpush1.bf16.msra.mxu0 %v3891
        %3973 = vmatprep.subr.bf16.mxu0 %v3894
        %3974 = vmatpush1.bf16.msra.mxu0 %v3893
        %3975 = vmatprep.subr.bf16.mxu0 %v3896
        %3976 = vmatpush1.bf16.msra.mxu0 %v3895
        %3977 = vmatprep.subr.bf16.mxu0 %v3898
        %3978 = vmatpush1.bf16.msra.mxu0 %v3897
        %3979 = vmatprep.subr.bf16.mxu0 %v3900
        %3980 = vmatpush1.bf16.msra.mxu0 %v3899
        %3981 = vmatprep.subr.bf16.mxu0 %v3902
        %3982 = vmatpush1.bf16.msra.mxu0 %v3901
        %3983 = vmatprep.subr.bf16.mxu0 0
        %3984 = vmatpush1.bf16.msra.mxu0 0
        %3985 = vmatprep.subr.bf16.mxu0 0
        %3986 = vmatpush1.bf16.msra.mxu0 0
        %3987 = vmatprep.subr.bf16.mxu0 0
        %3988 = vmatpush1.bf16.msra.mxu0 0
        %3989 = vmatprep.subr.bf16.mxu0 0
        %3990 = vmatpush1.bf16.msra.mxu0 0
        %3991 = vmatprep.subr.bf16.mxu0 0
        %3992 = vmatpush1.bf16.msra.mxu0 0
        %3993 = vmatprep.subr.bf16.mxu0 0
        %3994 = vmatpush1.bf16.msra.mxu0 0
        %3995 = vmatprep.subr.bf16.mxu0 0
        %3996 = vmatpush1.bf16.msra.mxu0 0
        %3997 = vmatprep.subr.bf16.mxu0 0
        %3998 = vmatpush1.bf16.msra.mxu0 0
        %3999 = vmatprep.mubr.bf16.mxu0 0
        %4000 = vmatmul.mubr.bf16.gmra.mrb[0].mxu0 %v3951
        %v4001 = vpop.f32.mrb[0].mxu0
        %v4002 = vadd.f32 0.0, %v4001
        %v4003 = vpop.f32.mrb[0].mxu0
        %v4004 = vadd.f32 0.0, %v4003
        %v4005 = vpop.f32.mrb[0].mxu0
        %v4006 = vadd.f32 0.0, %v4005
        %v4007 = vpop.f32.mrb[0].mxu0
        %v4008 = vadd.f32 0.0, %v4007
        %4009 = vmatprep.mubr.bf16.mxu0 0
        %4010 = vmatmul.mubr.bf16.gmra.mrb[0].mxu0 %v3952
        %v4011 = vpop.f32.mrb[0].mxu0
        %v4012 = vadd.f32 0.0, %v4011
        %v4013 = vpop.f32.mrb[0].mxu0
        %v4014 = vadd.f32 0.0, %v4013
        %v4015 = vpop.f32.mrb[0].mxu0
        %v4016 = vadd.f32 0.0, %v4015
        %v4017 = vpop.f32.mrb[0].mxu0
        %v4018 = vadd.f32 0.0, %v4017
        %4019 = vmatprep.mubr.bf16.mxu0 0
        %4020 = vmatmul.mubr.bf16.gmra.mrb[0].mxu0 %v3953
        %v4021 = vpop.f32.mrb[0].mxu0
        %v4022 = vadd.f32 0.0, %v4021
        %v4023 = vpop.f32.mrb[0].mxu0
        %v4024 = vadd.f32 0.0, %v4023
        %v4025 = vpop.f32.mrb[0].mxu0
        %v4026 = vadd.f32 0.0, %v4025
        %v4027 = vpop.f32.mrb[0].mxu0
        %v4028 = vadd.f32 0.0, %v4027
        %4029 = vmatprep.mubr.bf16.mxu0 0
        %4030 = vmatmul.mubr.bf16.gmra.mrb[0].mxu0 %v3954
        %v4031 = vpop.f32.mrb[0].mxu0
        %v4032 = vadd.f32 0.0, %v4031
        %v4033 = vpop.f32.mrb[0].mxu0
        %v4034 = vadd.f32 0.0, %v4033
        %v4035 = vpop.f32.mrb[0].mxu0
        %v4036 = vadd.f32 0.0, %v4035
        %v4037 = vpop.f32.mrb[0].mxu0
        %v4038 = vadd.f32 0.0, %v4037
        %4039 = vmatprep.mubr.bf16.mxu0 0
        %4040 = vmatmul.mubr.bf16.gmra.mrb[0].mxu0 %v3955
        %v4041 = vpop.f32.mrb[0].mxu0
        %v4042 = vadd.f32 0.0, %v4041
        %v4043 = vpop.f32.mrb[0].mxu0
        %v4044 = vadd.f32 0.0, %v4043
        %v4045 = vpop.f32.mrb[0].mxu0
        %v4046 = vadd.f32 0.0, %v4045
        %v4047 = vpop.f32.mrb[0].mxu0
        %v4048 = vadd.f32 0.0, %v4047
        %4049 = vmatprep.mubr.bf16.mxu0 0
        %4050 = vmatmul.mubr.bf16.gmra.mrb[0].mxu0 %v3956
        %v4051 = vpop.f32.mrb[0].mxu0
        %v4052 = vadd.f32 0.0, %v4051
        %v4053 = vpop.f32.mrb[0].mxu0
        %v4054 = vadd.f32 0.0, %v4053
        %v4055 = vpop.f32.mrb[0].mxu0
        %v4056 = vadd.f32 0.0, %v4055
        %v4057 = vpop.f32.mrb[0].mxu0
        %v4058 = vadd.f32 0.0, %v4057
        %4059 = vmatprep.mubr.bf16.mxu0 0
        %4060 = vmatmul.mubr.bf16.gmra.mrb[0].mxu0 %v3957
        %v4061 = vpop.f32.mrb[0].mxu0
        %v4062 = vadd.f32 0.0, %v4061
        %v4063 = vpop.f32.mrb[0].mxu0
        %v4064 = vadd.f32 0.0, %v4063
        %v4065 = vpop.f32.mrb[0].mxu0
        %v4066 = vadd.f32 0.0, %v4065
        %v4067 = vpop.f32.mrb[0].mxu0
        %v4068 = vadd.f32 0.0, %v4067
        %4069 = vmatprep.mubr.bf16.mxu0 0
        %4070 = vmatmul.mubr.bf16.gmra.mrb[0].mxu0 %v3958
        %v4071 = vpop.f32.mrb[0].mxu0
        %v4072 = vadd.f32 0.0, %v4071
        %v4073 = vpop.f32.mrb[0].mxu0
        %v4074 = vadd.f32 0.0, %v4073
        %v4075 = vpop.f32.mrb[0].mxu0
        %v4076 = vadd.f32 0.0, %v4075
        %v4077 = vpop.f32.mrb[0].mxu0
        %v4078 = vadd.f32 0.0, %v4077
        %4079 = vdwg.mxu0
        %v4080 = vmax.f32 %v4002, 0.0
        %v4081 = vmax.f32 %v4004, 0.0
        %v4082 = vmax.f32 %v4006, 0.0
        %v4083 = vmax.f32 %v4008, 0.0
        %v4084 = vmax.f32 %v4012, 0.0
        %v4085 = vmax.f32 %v4014, 0.0
        %v4086 = vmax.f32 %v4016, 0.0
        %v4087 = vmax.f32 %v4018, 0.0
        %v4088 = vmax.f32 %v4022, 0.0
        %v4089 = vmax.f32 %v4024, 0.0
        %v4090 = vmax.f32 %v4026, 0.0
        %v4091 = vmax.f32 %v4028, 0.0
        %v4092 = vmax.f32 %v4032, 0.0
        %v4093 = vmax.f32 %v4034, 0.0
        %v4094 = vmax.f32 %v4036, 0.0
        %v4095 = vmax.f32 %v4038, 0.0
        %v4096 = vmax.f32 %v4042, 0.0
        %v4097 = vmax.f32 %v4044, 0.0
        %v4098 = vmax.f32 %v4046, 0.0
        %v4099 = vmax.f32 %v4048, 0.0
        %v4100 = vmax.f32 %v4052, 0.0
        %v4101 = vmax.f32 %v4054, 0.0
        %v4102 = vmax.f32 %v4056, 0.0
        %v4103 = vmax.f32 %v4058, 0.0
        %v4104 = vmax.f32 %v4062, 0.0
        %v4105 = vmax.f32 %v4064, 0.0
        %v4106 = vmax.f32 %v4066, 0.0
        %v4107 = vmax.f32 %v4068, 0.0
        %v4108 = vmax.f32 %v4072, 0.0
        %v4109 = vmax.f32 %v4074, 0.0
        %v4110 = vmax.f32 %v4076, 0.0
        %v4111 = vmax.f32 %v4078, 0.0
        %v4112 = vpack.c.bf16 %v4082, %v4080
        %v4113 = vpack.c.bf16 %v4083, %v4081
        %v4114 = vpack.c.bf16 %v4086, %v4084
        %v4115 = vpack.c.bf16 %v4087, %v4085
        %v4116 = vpack.c.bf16 %v4090, %v4088
        %v4117 = vpack.c.bf16 %v4091, %v4089
        %v4118 = vpack.c.bf16 %v4094, %v4092
        %v4119 = vpack.c.bf16 %v4095, %v4093
        %v4120 = vpack.c.bf16 %v4098, %v4096
        %v4121 = vpack.c.bf16 %v4099, %v4097
        %v4122 = vpack.c.bf16 %v4102, %v4100
        %v4123 = vpack.c.bf16 %v4103, %v4101
        %v4124 = vpack.c.bf16 %v4106, %v4104
        %v4125 = vpack.c.bf16 %v4107, %v4105
        %v4126 = vpack.c.bf16 %v4110, %v4108
        %v4127 = vpack.c.bf16 %v4111, %v4109
        %s4128 = scalar_lea.vmem %s3, 64
        %v4129 = vld [vmem:[%s4128] sm:$0xf]
        %v4130 = vld [vmem:[%s4128 + $0x4] sm:$0xf]
        %v4131 = vld [vmem:[%s4128 + $0x8] sm:$0xf]
        %v4132 = vld [vmem:[%s4128 + $0xc] sm:$0xf]
        %v4133 = vld [vmem:[%s4128 + $0x10] sm:$0xf]
        %v4134 = vld [vmem:[%s4128 + $0x14] sm:$0xf]
        %v4135 = vld [vmem:[%s4128 + $0x18] sm:$0xf]
        %v4136 = vld [vmem:[%s4128 + $0x1c] sm:$0xf]
        %v4137 = vld [vmem:[%s4128 + $0x20] sm:$0xf]
        %v4138 = vld [vmem:[%s4128 + $0x24] sm:$0xf]
        %v4139 = vld [vmem:[%s4128 + $0x28] sm:$0xf]
        %v4140 = vld [vmem:[%s4128 + $0x2c] sm:$0xf]
        %v4141 = vld [vmem:[%s4128 + $0x30] sm:$0xf]
        %v4142 = vld [vmem:[%s4128 + $0x34] sm:$0xf]
        %v4143 = vld [vmem:[%s4128 + $0x38] sm:$0xf]
        %v4144 = vld [vmem:[%s4128 + $0x3c] sm:$0xf]
        %v4161 = vunpack.c.l.b16 %v4129
        %v4162 = vunpack.c.l.b16 %v4130
        %v4163 = vunpack.c.l.b16 %v4131
        %v4164 = vunpack.c.l.b16 %v4132
        %v4165 = vunpack.c.l.b16 %v4133
        %v4166 = vunpack.c.l.b16 %v4134
        %v4167 = vunpack.c.l.b16 %v4135
        %v4168 = vunpack.c.l.b16 %v4136
        %v4169 = vunpack.c.l.b16 %v4137
        %v4170 = vunpack.c.l.b16 %v4138
        %v4171 = vunpack.c.l.b16 %v4139
        %v4172 = vunpack.c.l.b16 %v4140
        %v4173 = vunpack.c.l.b16 %v4141
        %v4174 = vunpack.c.l.b16 %v4142
        %v4175 = vunpack.c.l.b16 %v4143
        %v4176 = vunpack.c.l.b16 %v4144
        %v4177 = vpack.c.b16 %v4162, %v4161
        %v4178 = vpack.c.b16 %v4164, %v4163
        %v4179 = vpack.c.b16 %v4166, %v4165
        %v4180 = vpack.c.b16 %v4168, %v4167
        %v4181 = vpack.c.b16 %v4170, %v4169
        %v4182 = vpack.c.b16 %v4172, %v4171
        %v4183 = vpack.c.b16 %v4174, %v4173
        %v4184 = vpack.c.b16 %v4176, %v4175
        %4193 = vmatprep.subr.bf16.mxu0 %v4113
        %4194 = vmatpush1.bf16.msra.mxu0 %v4112
        %4195 = vmatprep.subr.bf16.mxu0 %v4115
        %4196 = vmatpush1.bf16.msra.mxu0 %v4114
        %4197 = vmatprep.subr.bf16.mxu0 %v4117
        %4198 = vmatpush1.bf16.msra.mxu0 %v4116
        %4199 = vmatprep.subr.bf16.mxu0 %v4119
        %4200 = vmatpush1.bf16.msra.mxu0 %v4118
        %4201 = vmatprep.subr.bf16.mxu0 %v4121
        %4202 = vmatpush1.bf16.msra.mxu0 %v4120
        %4203 = vmatprep.subr.bf16.mxu0 %v4123
        %4204 = vmatpush1.bf16.msra.mxu0 %v4122
        %4205 = vmatprep.subr.bf16.mxu0 %v4125
        %4206 = vmatpush1.bf16.msra.mxu0 %v4124
        %4207 = vmatprep.subr.bf16.mxu0 %v4127
        %4208 = vmatpush1.bf16.msra.mxu0 %v4126
        %4209 = vmatprep.subr.bf16.mxu0 0
        %4210 = vmatpush1.bf16.msra.mxu0 0
        %4211 = vmatprep.subr.bf16.mxu0 0
        %4212 = vmatpush1.bf16.msra.mxu0 0
        %4213 = vmatprep.subr.bf16.mxu0 0
        %4214 = vmatpush1.bf16.msra.mxu0 0
        %4215 = vmatprep.subr.bf16.mxu0 0
        %4216 = vmatpush1.bf16.msra.mxu0 0
        %4217 = vmatprep.subr.bf16.mxu0 0
        %4218 = vmatpush1.bf16.msra.mxu0 0
        %4219 = vmatprep.subr.bf16.mxu0 0
        %4220 = vmatpush1.bf16.msra.mxu0 0
        %4221 = vmatprep.subr.bf16.mxu0 0
        %4222 = vmatpush1.bf16.msra.mxu0 0
        %4223 = vmatprep.subr.bf16.mxu0 0
        %4224 = vmatpush1.bf16.msra.mxu0 0
        %4225 = vmatprep.mubr.bf16.mxu0 0
        %4226 = vmatmul.mubr.bf16.gmra.mrb[0].mxu0 %v4177
        %v4227 = vpop.f32.mrb[0].mxu0
        %v4228 = vadd.f32 0.0, %v4227
        %v4229 = vpop.f32.mrb[0].mxu0
        %v4230 = vadd.f32 0.0, %v4229
        %v4231 = vpop.f32.mrb[0].mxu0
        %v4232 = vadd.f32 0.0, %v4231
        %v4233 = vpop.f32.mrb[0].mxu0
        %v4234 = vadd.f32 0.0, %v4233
        %4235 = vmatprep.mubr.bf16.mxu0 0
        %4236 = vmatmul.mubr.bf16.gmra.mrb[0].mxu0 %v4178
        %v4237 = vpop.f32.mrb[0].mxu0
        %v4238 = vadd.f32 0.0, %v4237
        %v4239 = vpop.f32.mrb[0].mxu0
        %v4240 = vadd.f32 0.0, %v4239
        %v4241 = vpop.f32.mrb[0].mxu0
        %v4242 = vadd.f32 0.0, %v4241
        %v4243 = vpop.f32.mrb[0].mxu0
        %v4244 = vadd.f32 0.0, %v4243
        %4245 = vmatprep.mubr.bf16.mxu0 0
        %4246 = vmatmul.mubr.bf16.gmra.mrb[0].mxu0 %v4179
        %v4247 = vpop.f32.mrb[0].mxu0
        %v4248 = vadd.f32 0.0, %v4247
        %v4249 = vpop.f32.mrb[0].mxu0
        %v4250 = vadd.f32 0.0, %v4249
        %v4251 = vpop.f32.mrb[0].mxu0
        %v4252 = vadd.f32 0.0, %v4251
        %v4253 = vpop.f32.mrb[0].mxu0
        %v4254 = vadd.f32 0.0, %v4253
        %4255 = vmatprep.mubr.bf16.mxu0 0
        %4256 = vmatmul.mubr.bf16.gmra.mrb[0].mxu0 %v4180
        %v4257 = vpop.f32.mrb[0].mxu0
        %v4258 = vadd.f32 0.0, %v4257
        %v4259 = vpop.f32.mrb[0].mxu0
        %v4260 = vadd.f32 0.0, %v4259
        %v4261 = vpop.f32.mrb[0].mxu0
        %v4262 = vadd.f32 0.0, %v4261
        %v4263 = vpop.f32.mrb[0].mxu0
        %v4264 = vadd.f32 0.0, %v4263
        %4265 = vmatprep.mubr.bf16.mxu0 0
        %4266 = vmatmul.mubr.bf16.gmra.mrb[0].mxu0 %v4181
        %v4267 = vpop.f32.mrb[0].mxu0
        %v4268 = vadd.f32 0.0, %v4267
        %v4269 = vpop.f32.mrb[0].mxu0
        %v4270 = vadd.f32 0.0, %v4269
        %v4271 = vpop.f32.mrb[0].mxu0
        %v4272 = vadd.f32 0.0, %v4271
        %v4273 = vpop.f32.mrb[0].mxu0
        %v4274 = vadd.f32 0.0, %v4273
        %4275 = vmatprep.mubr.bf16.mxu0 0
        %4276 = vmatmul.mubr.bf16.gmra.mrb[0].mxu0 %v4182
        %v4277 = vpop.f32.mrb[0].mxu0
        %v4278 = vadd.f32 0.0, %v4277
        %v4279 = vpop.f32.mrb[0].mxu0
        %v4280 = vadd.f32 0.0, %v4279
        %v4281 = vpop.f32.mrb[0].mxu0
        %v4282 = vadd.f32 0.0, %v4281
        %v4283 = vpop.f32.mrb[0].mxu0
        %v4284 = vadd.f32 0.0, %v4283
        %4285 = vmatprep.mubr.bf16.mxu0 0
        %4286 = vmatmul.mubr.bf16.gmra.mrb[0].mxu0 %v4183
        %v4287 = vpop.f32.mrb[0].mxu0
        %v4288 = vadd.f32 0.0, %v4287
        %v4289 = vpop.f32.mrb[0].mxu0
        %v4290 = vadd.f32 0.0, %v4289
        %v4291 = vpop.f32.mrb[0].mxu0
        %v4292 = vadd.f32 0.0, %v4291
        %v4293 = vpop.f32.mrb[0].mxu0
        %v4294 = vadd.f32 0.0, %v4293
        %4295 = vmatprep.mubr.bf16.mxu0 0
        %4296 = vmatmul.mubr.bf16.gmra.mrb[0].mxu0 %v4184
        %v4297 = vpop.f32.mrb[0].mxu0
        %v4298 = vadd.f32 0.0, %v4297
        %v4299 = vpop.f32.mrb[0].mxu0
        %v4300 = vadd.f32 0.0, %v4299
        %v4301 = vpop.f32.mrb[0].mxu0
        %v4302 = vadd.f32 0.0, %v4301
        %v4303 = vpop.f32.mrb[0].mxu0
        %v4304 = vadd.f32 0.0, %v4303
        %4305 = vdwg.mxu0
        %v4306 = vmax.f32 %v4228, 0.0
        %v4307 = vmax.f32 %v4230, 0.0
        %v4308 = vmax.f32 %v4232, 0.0
        %v4309 = vmax.f32 %v4234, 0.0
        %v4310 = vmax.f32 %v4238, 0.0
        %v4311 = vmax.f32 %v4240, 0.0
        %v4312 = vmax.f32 %v4242, 0.0
        %v4313 = vmax.f32 %v4244, 0.0
        %v4314 = vmax.f32 %v4248, 0.0
        %v4315 = vmax.f32 %v4250, 0.0
        %v4316 = vmax.f32 %v4252, 0.0
        %v4317 = vmax.f32 %v4254, 0.0
        %v4318 = vmax.f32 %v4258, 0.0
        %v4319 = vmax.f32 %v4260, 0.0
        %v4320 = vmax.f32 %v4262, 0.0
        %v4321 = vmax.f32 %v4264, 0.0
        %v4322 = vmax.f32 %v4268, 0.0
        %v4323 = vmax.f32 %v4270, 0.0
        %v4324 = vmax.f32 %v4272, 0.0
        %v4325 = vmax.f32 %v4274, 0.0
        %v4326 = vmax.f32 %v4278, 0.0
        %v4327 = vmax.f32 %v4280, 0.0
        %v4328 = vmax.f32 %v4282, 0.0
        %v4329 = vmax.f32 %v4284, 0.0
        %v4330 = vmax.f32 %v4288, 0.0
        %v4331 = vmax.f32 %v4290, 0.0
        %v4332 = vmax.f32 %v4292, 0.0
        %v4333 = vmax.f32 %v4294, 0.0
        %v4334 = vmax.f32 %v4298, 0.0
        %v4335 = vmax.f32 %v4300, 0.0
        %v4336 = vmax.f32 %v4302, 0.0
        %v4337 = vmax.f32 %v4304, 0.0
        %v4338 = vpack.c.bf16 %v4308, %v4306
        %v4339 = vpack.c.bf16 %v4309, %v4307
        %v4340 = vpack.c.bf16 %v4312, %v4310
        %v4341 = vpack.c.bf16 %v4313, %v4311
        %v4342 = vpack.c.bf16 %v4316, %v4314
        %v4343 = vpack.c.bf16 %v4317, %v4315
        %v4344 = vpack.c.bf16 %v4320, %v4318
        %v4345 = vpack.c.bf16 %v4321, %v4319
        %v4346 = vpack.c.bf16 %v4324, %v4322
        %v4347 = vpack.c.bf16 %v4325, %v4323
        %v4348 = vpack.c.bf16 %v4328, %v4326
        %v4349 = vpack.c.bf16 %v4329, %v4327
        %v4350 = vpack.c.bf16 %v4332, %v4330
        %v4351 = vpack.c.bf16 %v4333, %v4331
        %v4352 = vpack.c.bf16 %v4336, %v4334
        %v4353 = vpack.c.bf16 %v4337, %v4335
        %s4354 = scalar_lea.vmem %s3, 128
        %v4355 = vld [vmem:[%s4354] sm:$0xf]
        %v4356 = vld [vmem:[%s4354 + $0x4] sm:$0xf]
        %v4357 = vld [vmem:[%s4354 + $0x8] sm:$0xf]
        %v4358 = vld [vmem:[%s4354 + $0xc] sm:$0xf]
        %v4359 = vld [vmem:[%s4354 + $0x10] sm:$0xf]
        %v4360 = vld [vmem:[%s4354 + $0x14] sm:$0xf]
        %v4361 = vld [vmem:[%s4354 + $0x18] sm:$0xf]
        %v4362 = vld [vmem:[%s4354 + $0x1c] sm:$0xf]
        %v4363 = vld [vmem:[%s4354 + $0x20] sm:$0xf]
        %v4364 = vld [vmem:[%s4354 + $0x24] sm:$0xf]
        %v4365 = vld [vmem:[%s4354 + $0x28] sm:$0xf]
        %v4366 = vld [vmem:[%s4354 + $0x2c] sm:$0xf]
        %v4367 = vld [vmem:[%s4354 + $0x30] sm:$0xf]
        %v4368 = vld [vmem:[%s4354 + $0x34] sm:$0xf]
        %v4369 = vld [vmem:[%s4354 + $0x38] sm:$0xf]
        %v4370 = vld [vmem:[%s4354 + $0x3c] sm:$0xf]
        %v4387 = vunpack.c.l.b16 %v4355
        %v4388 = vunpack.c.l.b16 %v4356
        %v4389 = vunpack.c.l.b16 %v4357
        %v4390 = vunpack.c.l.b16 %v4358
        %v4391 = vunpack.c.l.b16 %v4359
        %v4392 = vunpack.c.l.b16 %v4360
        %v4393 = vunpack.c.l.b16 %v4361
        %v4394 = vunpack.c.l.b16 %v4362
        %v4395 = vunpack.c.l.b16 %v4363
        %v4396 = vunpack.c.l.b16 %v4364
        %v4397 = vunpack.c.l.b16 %v4365
        %v4398 = vunpack.c.l.b16 %v4366
        %v4399 = vunpack.c.l.b16 %v4367
        %v4400 = vunpack.c.l.b16 %v4368
        %v4401 = vunpack.c.l.b16 %v4369
        %v4402 = vunpack.c.l.b16 %v4370
        %v4403 = vpack.c.b16 %v4388, %v4387
        %v4404 = vpack.c.b16 %v4390, %v4389
        %v4405 = vpack.c.b16 %v4392, %v4391
        %v4406 = vpack.c.b16 %v4394, %v4393
        %v4407 = vpack.c.b16 %v4396, %v4395
        %v4408 = vpack.c.b16 %v4398, %v4397
        %v4409 = vpack.c.b16 %v4400, %v4399
        %v4410 = vpack.c.b16 %v4402, %v4401
        %4419 = vmatprep.subr.bf16.mxu0 %v4339
        %4420 = vmatpush1.bf16.msra.mxu0 %v4338
        %4421 = vmatprep.subr.bf16.mxu0 %v4341
        %4422 = vmatpush1.bf16.msra.mxu0 %v4340
        %4423 = vmatprep.subr.bf16.mxu0 %v4343
        %4424 = vmatpush1.bf16.msra.mxu0 %v4342
        %4425 = vmatprep.subr.bf16.mxu0 %v4345
        %4426 = vmatpush1.bf16.msra.mxu0 %v4344
        %4427 = vmatprep.subr.bf16.mxu0 %v4347
        %4428 = vmatpush1.bf16.msra.mxu0 %v4346
        %4429 = vmatprep.subr.bf16.mxu0 %v4349
        %4430 = vmatpush1.bf16.msra.mxu0 %v4348
        %4431 = vmatprep.subr.bf16.mxu0 %v4351
        %4432 = vmatpush1.bf16.msra.mxu0 %v4350
        %4433 = vmatprep.subr.bf16.mxu0 %v4353
        %4434 = vmatpush1.bf16.msra.mxu0 %v4352
        %4435 = vmatprep.subr.bf16.mxu0 0
        %4436 = vmatpush1.bf16.msra.mxu0 0
        %4437 = vmatprep.subr.bf16.mxu0 0
        %4438 = vmatpush1.bf16.msra.mxu0 0
        %4439 = vmatprep.subr.bf16.mxu0 0
        %4440 = vmatpush1.bf16.msra.mxu0 0
        %4441 = vmatprep.subr.bf16.mxu0 0
        %4442 = vmatpush1.bf16.msra.mxu0 0
        %4443 = vmatprep.subr.bf16.mxu0 0
        %4444 = vmatpush1.bf16.msra.mxu0 0
        %4445 = vmatprep.subr.bf16.mxu0 0
        %4446 = vmatpush1.bf16.msra.mxu0 0
        %4447 = vmatprep.subr.bf16.mxu0 0
        %4448 = vmatpush1.bf16.msra.mxu0 0
        %4449 = vmatprep.subr.bf16.mxu0 0
        %4450 = vmatpush1.bf16.msra.mxu0 0
        %4451 = vmatprep.mubr.bf16.mxu0 0
        %4452 = vmatmul.mubr.bf16.gmra.mrb[0].mxu0 %v4403
        %v4453 = vpop.f32.mrb[0].mxu0
        %v4454 = vadd.f32 0.0, %v4453
        %v4455 = vpop.f32.mrb[0].mxu0
        %v4456 = vadd.f32 0.0, %v4455
        %v4457 = vpop.f32.mrb[0].mxu0
        %v4458 = vadd.f32 0.0, %v4457
        %v4459 = vpop.f32.mrb[0].mxu0
        %v4460 = vadd.f32 0.0, %v4459
        %4461 = vmatprep.mubr.bf16.mxu0 0
        %4462 = vmatmul.mubr.bf16.gmra.mrb[0].mxu0 %v4404
        %v4463 = vpop.f32.mrb[0].mxu0
        %v4464 = vadd.f32 0.0, %v4463
        %v4465 = vpop.f32.mrb[0].mxu0
        %v4466 = vadd.f32 0.0, %v4465
        %v4467 = vpop.f32.mrb[0].mxu0
        %v4468 = vadd.f32 0.0, %v4467
        %v4469 = vpop.f32.mrb[0].mxu0
        %v4470 = vadd.f32 0.0, %v4469
        %4471 = vmatprep.mubr.bf16.mxu0 0
        %4472 = vmatmul.mubr.bf16.gmra.mrb[0].mxu0 %v4405
        %v4473 = vpop.f32.mrb[0].mxu0
        %v4474 = vadd.f32 0.0, %v4473
        %v4475 = vpop.f32.mrb[0].mxu0
        %v4476 = vadd.f32 0.0, %v4475
        %v4477 = vpop.f32.mrb[0].mxu0
        %v4478 = vadd.f32 0.0, %v4477
        %v4479 = vpop.f32.mrb[0].mxu0
        %v4480 = vadd.f32 0.0, %v4479
        %4481 = vmatprep.mubr.bf16.mxu0 0
        %4482 = vmatmul.mubr.bf16.gmra.mrb[0].mxu0 %v4406
        %v4483 = vpop.f32.mrb[0].mxu0
        %v4484 = vadd.f32 0.0, %v4483
        %v4485 = vpop.f32.mrb[0].mxu0
        %v4486 = vadd.f32 0.0, %v4485
        %v4487 = vpop.f32.mrb[0].mxu0
        %v4488 = vadd.f32 0.0, %v4487
        %v4489 = vpop.f32.mrb[0].mxu0
        %v4490 = vadd.f32 0.0, %v4489
        %4491 = vmatprep.mubr.bf16.mxu0 0
        %4492 = vmatmul.mubr.bf16.gmra.mrb[0].mxu0 %v4407
        %v4493 = vpop.f32.mrb[0].mxu0
        %v4494 = vadd.f32 0.0, %v4493
        %v4495 = vpop.f32.mrb[0].mxu0
        %v4496 = vadd.f32 0.0, %v4495
        %v4497 = vpop.f32.mrb[0].mxu0
        %v4498 = vadd.f32 0.0, %v4497
        %v4499 = vpop.f32.mrb[0].mxu0
        %v4500 = vadd.f32 0.0, %v4499
        %4501 = vmatprep.mubr.bf16.mxu0 0
        %4502 = vmatmul.mubr.bf16.gmra.mrb[0].mxu0 %v4408
        %v4503 = vpop.f32.mrb[0].mxu0
        %v4504 = vadd.f32 0.0, %v4503
        %v4505 = vpop.f32.mrb[0].mxu0
        %v4506 = vadd.f32 0.0, %v4505
        %v4507 = vpop.f32.mrb[0].mxu0
        %v4508 = vadd.f32 0.0, %v4507
        %v4509 = vpop.f32.mrb[0].mxu0
        %v4510 = vadd.f32 0.0, %v4509
        %4511 = vmatprep.mubr.bf16.mxu0 0
        %4512 = vmatmul.mubr.bf16.gmra.mrb[0].mxu0 %v4409
        %v4513 = vpop.f32.mrb[0].mxu0
        %v4514 = vadd.f32 0.0, %v4513
        %v4515 = vpop.f32.mrb[0].mxu0
        %v4516 = vadd.f32 0.0, %v4515
        %v4517 = vpop.f32.mrb[0].mxu0
        %v4518 = vadd.f32 0.0, %v4517
        %v4519 = vpop.f32.mrb[0].mxu0
        %v4520 = vadd.f32 0.0, %v4519
        %4521 = vmatprep.mubr.bf16.mxu0 0
        %4522 = vmatmul.mubr.bf16.gmra.mrb[0].mxu0 %v4410
        %v4523 = vpop.f32.mrb[0].mxu0
        %v4524 = vadd.f32 0.0, %v4523
        %v4525 = vpop.f32.mrb[0].mxu0
        %v4526 = vadd.f32 0.0, %v4525
        %v4527 = vpop.f32.mrb[0].mxu0
        %v4528 = vadd.f32 0.0, %v4527
        %v4529 = vpop.f32.mrb[0].mxu0
        %v4530 = vadd.f32 0.0, %v4529
        %4531 = vdwg.mxu0
        %v4532 = vmax.f32 %v4454, 0.0
        %v4533 = vmax.f32 %v4456, 0.0
        %v4534 = vmax.f32 %v4458, 0.0
        %v4535 = vmax.f32 %v4460, 0.0
        %v4536 = vmax.f32 %v4464, 0.0
        %v4537 = vmax.f32 %v4466, 0.0
        %v4538 = vmax.f32 %v4468, 0.0
        %v4539 = vmax.f32 %v4470, 0.0
        %v4540 = vmax.f32 %v4474, 0.0
        %v4541 = vmax.f32 %v4476, 0.0
        %v4542 = vmax.f32 %v4478, 0.0
        %v4543 = vmax.f32 %v4480, 0.0
        %v4544 = vmax.f32 %v4484, 0.0
        %v4545 = vmax.f32 %v4486, 0.0
        %v4546 = vmax.f32 %v4488, 0.0
        %v4547 = vmax.f32 %v4490, 0.0
        %v4548 = vmax.f32 %v4494, 0.0
        %v4549 = vmax.f32 %v4496, 0.0
        %v4550 = vmax.f32 %v4498, 0.0
        %v4551 = vmax.f32 %v4500, 0.0
        %v4552 = vmax.f32 %v4504, 0.0
        %v4553 = vmax.f32 %v4506, 0.0
        %v4554 = vmax.f32 %v4508, 0.0
        %v4555 = vmax.f32 %v4510, 0.0
        %v4556 = vmax.f32 %v4514, 0.0
        %v4557 = vmax.f32 %v4516, 0.0
        %v4558 = vmax.f32 %v4518, 0.0
        %v4559 = vmax.f32 %v4520, 0.0
        %v4560 = vmax.f32 %v4524, 0.0
        %v4561 = vmax.f32 %v4526, 0.0
        %v4562 = vmax.f32 %v4528, 0.0
        %v4563 = vmax.f32 %v4530, 0.0
        %v4564 = vpack.c.bf16 %v4534, %v4532
        %v4565 = vpack.c.bf16 %v4535, %v4533
        %v4566 = vpack.c.bf16 %v4538, %v4536
        %v4567 = vpack.c.bf16 %v4539, %v4537
        %v4568 = vpack.c.bf16 %v4542, %v4540
        %v4569 = vpack.c.bf16 %v4543, %v4541
        %v4570 = vpack.c.bf16 %v4546, %v4544
        %v4571 = vpack.c.bf16 %v4547, %v4545
        %v4572 = vpack.c.bf16 %v4550, %v4548
        %v4573 = vpack.c.bf16 %v4551, %v4549
        %v4574 = vpack.c.bf16 %v4554, %v4552
        %v4575 = vpack.c.bf16 %v4555, %v4553
        %v4576 = vpack.c.bf16 %v4558, %v4556
        %v4577 = vpack.c.bf16 %v4559, %v4557
        %v4578 = vpack.c.bf16 %v4562, %v4560
        %v4579 = vpack.c.bf16 %v4563, %v4561
        %s4580 = scalar_lea.vmem %s3, 192
        %v4581 = vld [vmem:[%s4580] sm:$0xf]
        %v4582 = vld [vmem:[%s4580 + $0x4] sm:$0xf]
        %v4583 = vld [vmem:[%s4580 + $0x8] sm:$0xf]
        %v4584 = vld [vmem:[%s4580 + $0xc] sm:$0xf]
        %v4585 = vld [vmem:[%s4580 + $0x10] sm:$0xf]
        %v4586 = vld [vmem:[%s4580 + $0x14] sm:$0xf]
        %v4587 = vld [vmem:[%s4580 + $0x18] sm:$0xf]
        %v4588 = vld [vmem:[%s4580 + $0x1c] sm:$0xf]
        %v4589 = vld [vmem:[%s4580 + $0x20] sm:$0xf]
        %v4590 = vld [vmem:[%s4580 + $0x24] sm:$0xf]
        %v4591 = vld [vmem:[%s4580 + $0x28] sm:$0xf]
        %v4592 = vld [vmem:[%s4580 + $0x2c] sm:$0xf]
        %v4593 = vld [vmem:[%s4580 + $0x30] sm:$0xf]
        %v4594 = vld [vmem:[%s4580 + $0x34] sm:$0xf]
        %v4595 = vld [vmem:[%s4580 + $0x38] sm:$0xf]
        %v4596 = vld [vmem:[%s4580 + $0x3c] sm:$0xf]
        %v4613 = vunpack.c.l.b16 %v4581
        %v4614 = vunpack.c.l.b16 %v4582
        %v4615 = vunpack.c.l.b16 %v4583
        %v4616 = vunpack.c.l.b16 %v4584
        %v4617 = vunpack.c.l.b16 %v4585
        %v4618 = vunpack.c.l.b16 %v4586
        %v4619 = vunpack.c.l.b16 %v4587
        %v4620 = vunpack.c.l.b16 %v4588
        %v4621 = vunpack.c.l.b16 %v4589
        %v4622 = vunpack.c.l.b16 %v4590
        %v4623 = vunpack.c.l.b16 %v4591
        %v4624 = vunpack.c.l.b16 %v4592
        %v4625 = vunpack.c.l.b16 %v4593
        %v4626 = vunpack.c.l.b16 %v4594
        %v4627 = vunpack.c.l.b16 %v4595
        %v4628 = vunpack.c.l.b16 %v4596
        %v4629 = vpack.c.b16 %v4614, %v4613
        %v4630 = vpack.c.b16 %v4616, %v4615
        %v4631 = vpack.c.b16 %v4618, %v4617
        %v4632 = vpack.c.b16 %v4620, %v4619
        %v4633 = vpack.c.b16 %v4622, %v4621
        %v4634 = vpack.c.b16 %v4624, %v4623
        %v4635 = vpack.c.b16 %v4626, %v4625
        %v4636 = vpack.c.b16 %v4628, %v4627
        %4645 = vmatprep.subr.bf16.mxu0 %v4565
        %4646 = vmatpush1.bf16.msra.mxu0 %v4564
        %4647 = vmatprep.subr.bf16.mxu0 %v4567
        %4648 = vmatpush1.bf16.msra.mxu0 %v4566
        %4649 = vmatprep.subr.bf16.mxu0 %v4569
        %4650 = vmatpush1.bf16.msra.mxu0 %v4568
        %4651 = vmatprep.subr.bf16.mxu0 %v4571
        %4652 = vmatpush1.bf16.msra.mxu0 %v4570
        %4653 = vmatprep.subr.bf16.mxu0 %v4573
        %4654 = vmatpush1.bf16.msra.mxu0 %v4572
        %4655 = vmatprep.subr.bf16.mxu0 %v4575
        %4656 = vmatpush1.bf16.msra.mxu0 %v4574
        %4657 = vmatprep.subr.bf16.mxu0 %v4577
        %4658 = vmatpush1.bf16.msra.mxu0 %v4576
        %4659 = vmatprep.subr.bf16.mxu0 %v4579
        %4660 = vmatpush1.bf16.msra.mxu0 %v4578
        %4661 = vmatprep.subr.bf16.mxu0 0
        %4662 = vmatpush1.bf16.msra.mxu0 0
        %4663 = vmatprep.subr.bf16.mxu0 0
        %4664 = vmatpush1.bf16.msra.mxu0 0
        %4665 = vmatprep.subr.bf16.mxu0 0
        %4666 = vmatpush1.bf16.msra.mxu0 0
        %4667 = vmatprep.subr.bf16.mxu0 0
        %4668 = vmatpush1.bf16.msra.mxu0 0
        %4669 = vmatprep.subr.bf16.mxu0 0
        %4670 = vmatpush1.bf16.msra.mxu0 0
        %4671 = vmatprep.subr.bf16.mxu0 0
        %4672 = vmatpush1.bf16.msra.mxu0 0
        %4673 = vmatprep.subr.bf16.mxu0 0
        %4674 = vmatpush1.bf16.msra.mxu0 0
        %4675 = vmatprep.subr.bf16.mxu0 0
        %4676 = vmatpush1.bf16.msra.mxu0 0
        %4677 = vmatprep.mubr.bf16.mxu0 0
        %4678 = vmatmul.mubr.bf16.gmra.mrb[0].mxu0 %v4629
        %v4679 = vpop.f32.mrb[0].mxu0
        %v4680 = vadd.f32 0.0, %v4679
        %v4681 = vpop.f32.mrb[0].mxu0
        %v4682 = vadd.f32 0.0, %v4681
        %v4683 = vpop.f32.mrb[0].mxu0
        %v4684 = vadd.f32 0.0, %v4683
        %v4685 = vpop.f32.mrb[0].mxu0
        %v4686 = vadd.f32 0.0, %v4685
        %4687 = vmatprep.mubr.bf16.mxu0 0
        %4688 = vmatmul.mubr.bf16.gmra.mrb[0].mxu0 %v4630
        %v4689 = vpop.f32.mrb[0].mxu0
        %v4690 = vadd.f32 0.0, %v4689
        %v4691 = vpop.f32.mrb[0].mxu0
        %v4692 = vadd.f32 0.0, %v4691
        %v4693 = vpop.f32.mrb[0].mxu0
        %v4694 = vadd.f32 0.0, %v4693
        %v4695 = vpop.f32.mrb[0].mxu0
        %v4696 = vadd.f32 0.0, %v4695
        %4697 = vmatprep.mubr.bf16.mxu0 0
        %4698 = vmatmul.mubr.bf16.gmra.mrb[0].mxu0 %v4631
        %v4699 = vpop.f32.mrb[0].mxu0
        %v4700 = vadd.f32 0.0, %v4699
        %v4701 = vpop.f32.mrb[0].mxu0
        %v4702 = vadd.f32 0.0, %v4701
        %v4703 = vpop.f32.mrb[0].mxu0
        %v4704 = vadd.f32 0.0, %v4703
        %v4705 = vpop.f32.mrb[0].mxu0
        %v4706 = vadd.f32 0.0, %v4705
        %4707 = vmatprep.mubr.bf16.mxu0 0
        %4708 = vmatmul.mubr.bf16.gmra.mrb[0].mxu0 %v4632
        %v4709 = vpop.f32.mrb[0].mxu0
        %v4710 = vadd.f32 0.0, %v4709
        %v4711 = vpop.f32.mrb[0].mxu0
        %v4712 = vadd.f32 0.0, %v4711
        %v4713 = vpop.f32.mrb[0].mxu0
        %v4714 = vadd.f32 0.0, %v4713
        %v4715 = vpop.f32.mrb[0].mxu0
        %v4716 = vadd.f32 0.0, %v4715
        %4717 = vmatprep.mubr.bf16.mxu0 0
        %4718 = vmatmul.mubr.bf16.gmra.mrb[0].mxu0 %v4633
        %v4719 = vpop.f32.mrb[0].mxu0
        %v4720 = vadd.f32 0.0, %v4719
        %v4721 = vpop.f32.mrb[0].mxu0
        %v4722 = vadd.f32 0.0, %v4721
        %v4723 = vpop.f32.mrb[0].mxu0
        %v4724 = vadd.f32 0.0, %v4723
        %v4725 = vpop.f32.mrb[0].mxu0
        %v4726 = vadd.f32 0.0, %v4725
        %4727 = vmatprep.mubr.bf16.mxu0 0
        %4728 = vmatmul.mubr.bf16.gmra.mrb[0].mxu0 %v4634
        %v4729 = vpop.f32.mrb[0].mxu0
        %v4730 = vadd.f32 0.0, %v4729
        %v4731 = vpop.f32.mrb[0].mxu0
        %v4732 = vadd.f32 0.0, %v4731
        %v4733 = vpop.f32.mrb[0].mxu0
        %v4734 = vadd.f32 0.0, %v4733
        %v4735 = vpop.f32.mrb[0].mxu0
        %v4736 = vadd.f32 0.0, %v4735
        %4737 = vmatprep.mubr.bf16.mxu0 0
        %4738 = vmatmul.mubr.bf16.gmra.mrb[0].mxu0 %v4635
        %v4739 = vpop.f32.mrb[0].mxu0
        %v4740 = vadd.f32 0.0, %v4739
        %v4741 = vpop.f32.mrb[0].mxu0
        %v4742 = vadd.f32 0.0, %v4741
        %v4743 = vpop.f32.mrb[0].mxu0
        %v4744 = vadd.f32 0.0, %v4743
        %v4745 = vpop.f32.mrb[0].mxu0
        %v4746 = vadd.f32 0.0, %v4745
        %4747 = vmatprep.mubr.bf16.mxu0 0
        %4748 = vmatmul.mubr.bf16.gmra.mrb[0].mxu0 %v4636
        %v4749 = vpop.f32.mrb[0].mxu0
        %v4750 = vadd.f32 0.0, %v4749
        %v4751 = vpop.f32.mrb[0].mxu0
        %v4752 = vadd.f32 0.0, %v4751
        %v4753 = vpop.f32.mrb[0].mxu0
        %v4754 = vadd.f32 0.0, %v4753
        %v4755 = vpop.f32.mrb[0].mxu0
        %v4756 = vadd.f32 0.0, %v4755
        %4757 = vdwg.mxu0
        %v4758 = vmax.f32 %v4680, 0.0
        %v4759 = vmax.f32 %v4682, 0.0
        %v4760 = vmax.f32 %v4684, 0.0
        %v4761 = vmax.f32 %v4686, 0.0
        %v4762 = vmax.f32 %v4690, 0.0
        %v4763 = vmax.f32 %v4692, 0.0
        %v4764 = vmax.f32 %v4694, 0.0
        %v4765 = vmax.f32 %v4696, 0.0
        %v4766 = vmax.f32 %v4700, 0.0
        %v4767 = vmax.f32 %v4702, 0.0
        %v4768 = vmax.f32 %v4704, 0.0
        %v4769 = vmax.f32 %v4706, 0.0
        %v4770 = vmax.f32 %v4710, 0.0
        %v4771 = vmax.f32 %v4712, 0.0
        %v4772 = vmax.f32 %v4714, 0.0
        %v4773 = vmax.f32 %v4716, 0.0
        %v4774 = vmax.f32 %v4720, 0.0
        %v4775 = vmax.f32 %v4722, 0.0
        %v4776 = vmax.f32 %v4724, 0.0
        %v4777 = vmax.f32 %v4726, 0.0
        %v4778 = vmax.f32 %v4730, 0.0
        %v4779 = vmax.f32 %v4732, 0.0
        %v4780 = vmax.f32 %v4734, 0.0
        %v4781 = vmax.f32 %v4736, 0.0
        %v4782 = vmax.f32 %v4740, 0.0
        %v4783 = vmax.f32 %v4742, 0.0
        %v4784 = vmax.f32 %v4744, 0.0
        %v4785 = vmax.f32 %v4746, 0.0
        %v4786 = vmax.f32 %v4750, 0.0
        %v4787 = vmax.f32 %v4752, 0.0
        %v4788 = vmax.f32 %v4754, 0.0
        %v4789 = vmax.f32 %v4756, 0.0
        %v4790 = vpack.c.bf16 %v4760, %v4758
        %v4791 = vpack.c.bf16 %v4761, %v4759
        %v4792 = vpack.c.bf16 %v4764, %v4762
        %v4793 = vpack.c.bf16 %v4765, %v4763
        %v4794 = vpack.c.bf16 %v4768, %v4766
        %v4795 = vpack.c.bf16 %v4769, %v4767
        %v4796 = vpack.c.bf16 %v4772, %v4770
        %v4797 = vpack.c.bf16 %v4773, %v4771
        %v4798 = vpack.c.bf16 %v4776, %v4774
        %v4799 = vpack.c.bf16 %v4777, %v4775
        %v4800 = vpack.c.bf16 %v4780, %v4778
        %v4801 = vpack.c.bf16 %v4781, %v4779
        %v4802 = vpack.c.bf16 %v4784, %v4782
        %v4803 = vpack.c.bf16 %v4785, %v4783
        %v4804 = vpack.c.bf16 %v4788, %v4786
        %v4805 = vpack.c.bf16 %v4789, %v4787
        %v4806 = vld [vmem:[%s4] sm:$0xf]
        %4807 = vmatprep.subr.bf16.mxu0 %v4791
        %4808 = vmatpush1.bf16.msra.mxu0 %v4790
        %4809 = vmatprep.subr.bf16.mxu0 %v4793
        %4810 = vmatpush1.bf16.msra.mxu0 %v4792
        %4811 = vmatprep.subr.bf16.mxu0 %v4795
        %4812 = vmatpush1.bf16.msra.mxu0 %v4794
        %4813 = vmatprep.subr.bf16.mxu0 %v4797
        %4814 = vmatpush1.bf16.msra.mxu0 %v4796
        %4815 = vmatprep.subr.bf16.mxu0 %v4799
        %4816 = vmatpush1.bf16.msra.mxu0 %v4798
        %4817 = vmatprep.subr.bf16.mxu0 %v4801
        %4818 = vmatpush1.bf16.msra.mxu0 %v4800
        %4819 = vmatprep.subr.bf16.mxu0 %v4803
        %4820 = vmatpush1.bf16.msra.mxu0 %v4802
        %4821 = vmatprep.subr.bf16.mxu0 %v4805
        %4822 = vmatpush1.bf16.msra.mxu0 %v4804
        %4823 = vmatprep.subr.bf16.mxu0 0
        %4824 = vmatpush1.bf16.msra.mxu0 0
        %4825 = vmatprep.subr.bf16.mxu0 0
        %4826 = vmatpush1.bf16.msra.mxu0 0
        %4827 = vmatprep.subr.bf16.mxu0 0
        %4828 = vmatpush1.bf16.msra.mxu0 0
        %4829 = vmatprep.subr.bf16.mxu0 0
        %4830 = vmatpush1.bf16.msra.mxu0 0
        %4831 = vmatprep.subr.bf16.mxu0 0
        %4832 = vmatpush1.bf16.msra.mxu0 0
        %4833 = vmatprep.subr.bf16.mxu0 0
        %4834 = vmatpush1.bf16.msra.mxu0 0
        %4835 = vmatprep.subr.bf16.mxu0 0
        %4836 = vmatpush1.bf16.msra.mxu0 0
        %4837 = vmatprep.subr.bf16.mxu0 0
        %4838 = vmatpush1.bf16.msra.mxu0 0
        %4839 = vmatprep.mubr.bf16.mxu0 0
        %4840 = vmatmul.mubr.bf16.gmra.mrb[0].mxu0 %v4806
        %v4841 = vpop.f32.mrb[0].mxu0
        %v4842 = vadd.f32 0.0, %v4841
        %v4843 = vpop.f32.mrb[0].mxu0
        %v4844 = vadd.f32 0.0, %v4843
        %v4845 = vpop.f32.mrb[0].mxu0
        %v4846 = vpop.f32.mrb[0].mxu0
        %4847 = vdwg.mxu0
        %v4848 = vld [vmem:[%s6] sm:$0xff]
        %v4849 = vld [vmem:[%s6 + $0x8] sm:$0xff]
        %v4850 = vld [vmem:[%s6 + $0x10] sm:$0xff]
        %v4851 = vld [vmem:[%s6 + $0x18] sm:$0xff]
        %v4852 = vlaneseq
        %v4853 = vshrl.u32 %v4852, 7
        %v4854 = vsub.s32 0, %v4853
        %v4855 = vrot.slane %v4842, %v4854
        %v4856 = vlaneseq
        %v4857 = vshrl.u32 %v4856, 7
        %v4858 = vsub.s32 0, %v4857
        %v4859 = vrot.slane %v4844, %v4858
        %v4860 = vmul.f32 %v4848, %v4855
        %v4861 = vmul.f32 %v4849, %v4859
        %v4862 = vmul.f32 %v4850, %v4855
        %v4863 = vmul.f32 %v4851, %v4859
        %v4864 = vld [vmem:[%s7] sm:$0xff]
        %v4865 = vld [vmem:[%s7 + $0x8] sm:$0xff]
        %v4866 = vld [vmem:[%s7 + $0x10] sm:$0xff]
        %v4867 = vld [vmem:[%s7 + $0x18] sm:$0xff]
        %v4868 = vld [vmem:[%s7 + $0x20] sm:$0xff]
        %v4869 = vld [vmem:[%s7 + $0x28] sm:$0xff]
        %v4870 = vld [vmem:[%s7 + $0x30] sm:$0xff]
        %v4871 = vld [vmem:[%s7 + $0x38] sm:$0xff]
        %v4872 = vld [vmem:[%s7 + $0x40] sm:$0xff]
        %v4873 = vld [vmem:[%s7 + $0x48] sm:$0xff]
        %v4874 = vld [vmem:[%s7 + $0x50] sm:$0xff]
        %v4875 = vld [vmem:[%s7 + $0x58] sm:$0xff]
        %v4876 = vld [vmem:[%s7 + $0x60] sm:$0xff]
        %v4877 = vld [vmem:[%s7 + $0x68] sm:$0xff]
        %v4878 = vld [vmem:[%s7 + $0x70] sm:$0xff]
        %v4879 = vld [vmem:[%s7 + $0x78] sm:$0xff]
        %v4880 = vld [vmem:[%s7 + $0x80] sm:$0xff]
        %v4881 = vld [vmem:[%s7 + $0x88] sm:$0xff]
        %v4882 = vld [vmem:[%s7 + $0x90] sm:$0xff]
        %v4883 = vld [vmem:[%s7 + $0x98] sm:$0xff]
        %v4884 = vld [vmem:[%s7 + $0xa0] sm:$0xff]
        %v4885 = vld [vmem:[%s7 + $0xa8] sm:$0xff]
        %v4886 = vld [vmem:[%s7 + $0xb0] sm:$0xff]
        %v4887 = vld [vmem:[%s7 + $0xb8] sm:$0xff]
        %v4888 = vld [vmem:[%s7 + $0xc0] sm:$0xff]
        %v4889 = vld [vmem:[%s7 + $0xc8] sm:$0xff]
        %v4890 = vld [vmem:[%s7 + $0xd0] sm:$0xff]
        %v4891 = vld [vmem:[%s7 + $0xd8] sm:$0xff]
        %v4892 = vld [vmem:[%s7 + $0xe0] sm:$0xff]
        %v4893 = vld [vmem:[%s7 + $0xe8] sm:$0xff]
        %v4894 = vld [vmem:[%s7 + $0xf0] sm:$0xff]
        %v4895 = vld [vmem:[%s7 + $0xf8] sm:$0xff]
        %4896 = vmatprep.subr.mxu0 0.0
        %4897 = vmatpush1.msra.mxu0 %v4864
        %4898 = vmatprep.subr.mxu0 0.0
        %4899 = vmatpush1.msra.mxu0 %v4865
        %4900 = vmatprep.subr.mxu0 0.0
        %4901 = vmatpush1.msra.mxu0 %v4866
        %4902 = vmatprep.subr.mxu0 0.0
        %4903 = vmatpush1.msra.mxu0 %v4867
        %4904 = vmatprep.subr.mxu0 0.0
        %4905 = vmatpush1.msra.mxu0 %v4868
        %4906 = vmatprep.subr.mxu0 0.0
        %4907 = vmatpush1.msra.mxu0 %v4869
        %4908 = vmatprep.subr.mxu0 0.0
        %4909 = vmatpush1.msra.mxu0 %v4870
        %4910 = vmatprep.subr.mxu0 0.0
        %4911 = vmatpush1.msra.mxu0 %v4871
        %4912 = vmatprep.subr.mxu0 0.0
        %4913 = vmatpush1.msra.mxu0 %v4872
        %4914 = vmatprep.subr.mxu0 0.0
        %4915 = vmatpush1.msra.mxu0 %v4873
        %4916 = vmatprep.subr.mxu0 0.0
        %4917 = vmatpush1.msra.mxu0 %v4874
        %4918 = vmatprep.subr.mxu0 0.0
        %4919 = vmatpush1.msra.mxu0 %v4875
        %4920 = vmatprep.subr.mxu0 0.0
        %4921 = vmatpush1.msra.mxu0 %v4876
        %4922 = vmatprep.subr.mxu0 0.0
        %4923 = vmatpush1.msra.mxu0 %v4877
        %4924 = vmatprep.subr.mxu0 0.0
        %4925 = vmatpush1.msra.mxu0 %v4878
        %4926 = vmatprep.subr.mxu0 0.0
        %4927 = vmatpush1.msra.mxu0 %v4879
        %4928 = vmatprep.subr.mxu0 0.0
        %4929 = vmatpush1.msra.mxu0 %v4880
        %4930 = vmatprep.subr.mxu0 0.0
        %4931 = vmatpush1.msra.mxu0 %v4881
        %4932 = vmatprep.subr.mxu0 0.0
        %4933 = vmatpush1.msra.mxu0 %v4882
        %4934 = vmatprep.subr.mxu0 0.0
        %4935 = vmatpush1.msra.mxu0 %v4883
        %4936 = vmatprep.subr.mxu0 0.0
        %4937 = vmatpush1.msra.mxu0 %v4884
        %4938 = vmatprep.subr.mxu0 0.0
        %4939 = vmatpush1.msra.mxu0 %v4885
        %4940 = vmatprep.subr.mxu0 0.0
        %4941 = vmatpush1.msra.mxu0 %v4886
        %4942 = vmatprep.subr.mxu0 0.0
        %4943 = vmatpush1.msra.mxu0 %v4887
        %4944 = vmatprep.subr.mxu0 0.0
        %4945 = vmatpush1.msra.mxu0 %v4888
        %4946 = vmatprep.subr.mxu0 0.0
        %4947 = vmatpush1.msra.mxu0 %v4889
        %4948 = vmatprep.subr.mxu0 0.0
        %4949 = vmatpush1.msra.mxu0 %v4890
        %4950 = vmatprep.subr.mxu0 0.0
        %4951 = vmatpush1.msra.mxu0 %v4891
        %4952 = vmatprep.subr.mxu0 0.0
        %4953 = vmatpush1.msra.mxu0 %v4892
        %4954 = vmatprep.subr.mxu0 0.0
        %4955 = vmatpush1.msra.mxu0 %v4893
        %4956 = vmatprep.subr.mxu0 0.0
        %4957 = vmatpush1.msra.mxu0 %v4894
        %4958 = vmatprep.subr.mxu0 0.0
        %4959 = vmatpush1.msra.mxu0 %v4895
        %4960 = vmatprep.mubr.f32.mxu0 %v4861
        %4961 = vmatmul.mubr.f32.gmra.mrb[0].mxu0 %v4860
        %v4962 = vpop.f32.mrb[0].mxu0
        %v4963 = vadd.f32 0.0, %v4962
        %v4964 = vpop.f32.mrb[0].mxu0
        %4965 = vmatprep.mubr.f32.mxu0 %v4863
        %4966 = vmatmul.mubr.f32.gmra.mrb[0].mxu0 %v4862
        %v4967 = vpop.f32.mrb[0].mxu0
        %v4968 = vadd.f32 0.0, %v4967
        %v4969 = vpop.f32.mrb[0].mxu0
        %4970 = vdwg.mxu0
        %vm4971 = vcmask 130048
        %4972 = vst.msk [vmem:[%s347] sm:$0xff] %vm4971, %v4963
        %4973 = vst.msk [vmem:[%s347 + $0x8] sm:$0xff] %vm4971, %v4968
        %v4974 = vld [vmem:[%s357] sm:$0xff]
        %v4975 = vld [vmem:[%s357 + $0x8] sm:$0xff]
        %v4976 = vld [vmem:[%s357 + $0x10] sm:$0xff]
        %v4977 = vld [vmem:[%s357 + $0x18] sm:$0xff]
        %v4978 = vld [vmem:[%s5] sm:$0xff]
        %v4979 = vld [vmem:[%s5 + $0x8] sm:$0xff]
        %v4980 = vld [vmem:[%s5 + $0x10] sm:$0xff]
        %v4981 = vld [vmem:[%s5 + $0x18] sm:$0xff]
        %v4982 = vld [vmem:[%s5 + $0x20] sm:$0xff]
        %v4983 = vld [vmem:[%s5 + $0x28] sm:$0xff]
        %v4984 = vld [vmem:[%s5 + $0x30] sm:$0xff]
        %v4985 = vld [vmem:[%s5 + $0x38] sm:$0xff]
        %v4986 = vld [vmem:[%s5 + $0x40] sm:$0xff]
        %v4987 = vld [vmem:[%s5 + $0x48] sm:$0xff]
        %v4988 = vmax.f32 %v4963, 0.0
        %v4989 = vmax.f32 %v4968, 0.0
        %vm4990 = vcmp.eq.f32.partialorder %v4974, 1.0
        %vm4991 = vcmp.eq.f32.partialorder %v4975, 1.0
        %v4992 = vsel %vm4990, 1, 0
        %v4993 = vsel %vm4991, 1, 0
        %v4994 = vcvt.s32.f32 %v4992
        %v4995 = vcvt.s32.f32 %v4993
        %v4996 = vmul.f32 %v4976, %v4994
        %v4997 = vmul.f32 %v4977, %v4995
        %vm4998 = vcmp.gt.f32.partialorder %v4976, 0.0
        %vm4999 = vcmp.gt.f32.partialorder %v4977, 0.0
        %v5000 = vsel %vm4998, 1, 0
        %v5001 = vsel %vm4999, 1, 0
        %v5002 = vcvt.s32.f32 %v5000
        %v5003 = vcvt.s32.f32 %v5001
        %v5004 = vmul.f32 %v4996, %v5002
        %v5005 = vmul.f32 %v4997, %v5003
        %v5007 = vsel %vm4971, %v5004, 0
        %v5010 = vsel %vm4971, %v5005, 0
        %5012 = vmatprep.subr.mxu0 0.0
        %5013 = vmatpush1.msra.mxu0 %v4984
        %5014 = vmatprep.subr.mxu0 0.0
        %5015 = vmatpush1.msra.mxu0 %v4985
        %5016 = vmatprep.subr.mxu0 0.0
        %5017 = vmatpush1.msra.mxu0 0.0
        %5018 = vmatprep.subr.mxu0 0.0
        %5019 = vmatpush1.msra.mxu0 0.0
        %5020 = vmatprep.subr.mxu0 0.0
        %5021 = vmatpush1.msra.mxu0 0.0
        %5022 = vmatprep.subr.mxu0 0.0
        %5023 = vmatpush1.msra.mxu0 0.0
        %5024 = vmatprep.subr.mxu0 0.0
        %5025 = vmatpush1.msra.mxu0 0.0
        %5026 = vmatprep.subr.mxu0 0.0
        %5027 = vmatpush1.msra.mxu0 0.0
        %5028 = vmatprep.subr.mxu0 0.0
        %5029 = vmatpush1.msra.mxu0 0.0
        %5030 = vmatprep.subr.mxu0 0.0
        %5031 = vmatpush1.msra.mxu0 0.0
        %5032 = vmatprep.subr.mxu0 0.0
        %5033 = vmatpush1.msra.mxu0 0.0
        %5034 = vmatprep.subr.mxu0 0.0
        %5035 = vmatpush1.msra.mxu0 0.0
        %5036 = vmatprep.subr.mxu0 0.0
        %5037 = vmatpush1.msra.mxu0 0.0
        %5038 = vmatprep.subr.mxu0 0.0
        %5039 = vmatpush1.msra.mxu0 0.0
        %5040 = vmatprep.subr.mxu0 0.0
        %5041 = vmatpush1.msra.mxu0 0.0
        %5042 = vmatprep.subr.mxu0 0.0
        %5043 = vmatpush1.msra.mxu0 0.0
        %5044 = vmatprep.subr.mxu0 0.0
        %5045 = vmatpush1.msra.mxu0 0.0
        %5046 = vmatprep.subr.mxu0 0.0
        %5047 = vmatpush1.msra.mxu0 0.0
        %5048 = vmatprep.subr.mxu0 0.0
        %5049 = vmatpush1.msra.mxu0 0.0
        %5050 = vmatprep.subr.mxu0 0.0
        %5051 = vmatpush1.msra.mxu0 0.0
        %5052 = vmatprep.subr.mxu0 0.0
        %5053 = vmatpush1.msra.mxu0 0.0
        %5054 = vmatprep.subr.mxu0 0.0
        %5055 = vmatpush1.msra.mxu0 0.0
        %5056 = vmatprep.subr.mxu0 0.0
        %5057 = vmatpush1.msra.mxu0 0.0
        %5058 = vmatprep.subr.mxu0 0.0
        %5059 = vmatpush1.msra.mxu0 0.0
        %5060 = vmatprep.subr.mxu0 0.0
        %5061 = vmatpush1.msra.mxu0 0.0
        %5062 = vmatprep.subr.mxu0 0.0
        %5063 = vmatpush1.msra.mxu0 0.0
        %5064 = vmatprep.subr.mxu0 0.0
        %5065 = vmatpush1.msra.mxu0 0.0
        %5066 = vmatprep.subr.mxu0 0.0
        %5067 = vmatpush1.msra.mxu0 0.0
        %5068 = vmatprep.subr.mxu0 0.0
        %5069 = vmatpush1.msra.mxu0 0.0
        %5070 = vmatprep.subr.mxu0 0.0
        %5071 = vmatpush1.msra.mxu0 0.0
        %5072 = vmatprep.subr.mxu0 0.0
        %5073 = vmatpush1.msra.mxu0 0.0
        %5074 = vmatprep.subr.mxu0 0.0
        %5075 = vmatpush1.msra.mxu0 0.0
        %5076 = vmatprep.mubr.f32.mxu0 0.0
        %5077 = vmatmul.mubr.f32.gmra.mrb[0].mxu0 %v5007
        %v5078 = vpop.f32.mrb[0].mxu0
        %v5079 = vadd.f32 0.0, %v5078
        %v5080 = vpop.f32.mrb[0].mxu0
        %5081 = vmatprep.mubr.f32.mxu0 0.0
        %5082 = vmatmul.mubr.f32.gmra.mrb[0].mxu0 %v5010
        %v5083 = vpop.f32.mrb[0].mxu0
        %v5084 = vadd.f32 0.0, %v5083
        %v5085 = vpop.f32.mrb[0].mxu0
        %5086 = vdwg.mxu0
        %v5088 = vsel %vm4971, %v4982, 0
        %v5091 = vsel %vm4971, %v4983, 0
        %5093 = vmatprep.subr.mxu0 0.0
        %5094 = vmatpush1.msra.mxu0 %v5079
        %5095 = vmatprep.subr.mxu0 0.0
        %5096 = vmatpush1.msra.mxu0 %v5084
        %5097 = vmatprep.subr.mxu0 0.0
        %5098 = vmatpush1.msra.mxu0 0.0
        %5099 = vmatprep.subr.mxu0 0.0
        %5100 = vmatpush1.msra.mxu0 0.0
        %5101 = vmatprep.subr.mxu0 0.0
        %5102 = vmatpush1.msra.mxu0 0.0
        %5103 = vmatprep.subr.mxu0 0.0
        %5104 = vmatpush1.msra.mxu0 0.0
        %5105 = vmatprep.subr.mxu0 0.0
        %5106 = vmatpush1.msra.mxu0 0.0
        %5107 = vmatprep.subr.mxu0 0.0
        %5108 = vmatpush1.msra.mxu0 0.0
        %5109 = vmatprep.subr.mxu0 0.0
        %5110 = vmatpush1.msra.mxu0 0.0
        %5111 = vmatprep.subr.mxu0 0.0
        %5112 = vmatpush1.msra.mxu0 0.0
        %5113 = vmatprep.subr.mxu0 0.0
        %5114 = vmatpush1.msra.mxu0 0.0
        %5115 = vmatprep.subr.mxu0 0.0
        %5116 = vmatpush1.msra.mxu0 0.0
        %5117 = vmatprep.subr.mxu0 0.0
        %5118 = vmatpush1.msra.mxu0 0.0
        %5119 = vmatprep.subr.mxu0 0.0
        %5120 = vmatpush1.msra.mxu0 0.0
        %5121 = vmatprep.subr.mxu0 0.0
        %5122 = vmatpush1.msra.mxu0 0.0
        %5123 = vmatprep.subr.mxu0 0.0
        %5124 = vmatpush1.msra.mxu0 0.0
        %5125 = vmatprep.subr.mxu0 0.0
        %5126 = vmatpush1.msra.mxu0 0.0
        %5127 = vmatprep.subr.mxu0 0.0
        %5128 = vmatpush1.msra.mxu0 0.0
        %5129 = vmatprep.subr.mxu0 0.0
        %5130 = vmatpush1.msra.mxu0 0.0
        %5131 = vmatprep.subr.mxu0 0.0
        %5132 = vmatpush1.msra.mxu0 0.0
        %5133 = vmatprep.subr.mxu0 0.0
        %5134 = vmatpush1.msra.mxu0 0.0
        %5135 = vmatprep.subr.mxu0 0.0
        %5136 = vmatpush1.msra.mxu0 0.0
        %5137 = vmatprep.subr.mxu0 0.0
        %5138 = vmatpush1.msra.mxu0 0.0
        %5139 = vmatprep.subr.mxu0 0.0
        %5140 = vmatpush1.msra.mxu0 0.0
        %5141 = vmatprep.subr.mxu0 0.0
        %5142 = vmatpush1.msra.mxu0 0.0
        %5143 = vmatprep.subr.mxu0 0.0
        %5144 = vmatpush1.msra.mxu0 0.0
        %5145 = vmatprep.subr.mxu0 0.0
        %5146 = vmatpush1.msra.mxu0 0.0
        %5147 = vmatprep.subr.mxu0 0.0
        %5148 = vmatpush1.msra.mxu0 0.0
        %5149 = vmatprep.subr.mxu0 0.0
        %5150 = vmatpush1.msra.mxu0 0.0
        %5151 = vmatprep.subr.mxu0 0.0
        %5152 = vmatpush1.msra.mxu0 0.0
        %5153 = vmatprep.subr.mxu0 0.0
        %5154 = vmatpush1.msra.mxu0 0.0
        %5155 = vmatprep.subr.mxu0 0.0
        %5156 = vmatpush1.msra.mxu0 0.0
        %5157 = vmatprep.mubr.f32.mxu0 0.0
        %5158 = vmatmul.mubr.f32.gmra.mrb[0].mxu0 %v5088
        %v5159 = vpop.f32.mrb[0].mxu0
        %v5160 = vadd.f32 0.0, %v5159
        %v5161 = vpop.f32.mrb[0].mxu0
        %5162 = vmatprep.mubr.f32.mxu0 0.0
        %5163 = vmatmul.mubr.f32.gmra.mrb[0].mxu0 %v5091
        %v5164 = vpop.f32.mrb[0].mxu0
        %v5165 = vadd.f32 0.0, %v5164
        %v5166 = vpop.f32.mrb[0].mxu0
        %5167 = vdwg.mxu0
        %vm5168 = vcmp.eq.f32.partialorder %v4974, 0.0
        %vm5169 = vcmp.eq.f32.partialorder %v4975, 0.0
        %v5170 = vsel %vm5168, 1, 0
        %v5171 = vsel %vm5169, 1, 0
        %v5172 = vcvt.s32.f32 %v5170
        %v5173 = vcvt.s32.f32 %v5171
        %v5174 = vmul.f32 %v5160, %v5172
        %v5175 = vmul.f32 %v5165, %v5173
        %v5176 = vadd.f32 %v4988, %v5174
        %v5177 = vadd.f32 %v4989, %v5175
        %vm5178 = vcmp.gt.f32.partialorder %v4974, 0.0
        %vm5179 = vcmp.gt.f32.partialorder %v4975, 0.0
        %v5180 = vsel %vm5178, %v4976, 10.0
        %v5181 = vsel %vm5179, %v4977, 10.0
        %v5183 = vsel %vm4971, %v5180, 0
        %v5186 = vsel %vm4971, %v5181, 0
        %5188 = vmatprep.subr.mxu0 0.0
        %5189 = vmatpush1.msra.mxu0 %v4980
        %5190 = vmatprep.subr.mxu0 0.0
        %5191 = vmatpush1.msra.mxu0 %v4981
        %5192 = vmatprep.subr.mxu0 0.0
        %5193 = vmatpush1.msra.mxu0 0.0
        %5194 = vmatprep.subr.mxu0 0.0
        %5195 = vmatpush1.msra.mxu0 0.0
        %5196 = vmatprep.subr.mxu0 0.0
        %5197 = vmatpush1.msra.mxu0 0.0
        %5198 = vmatprep.subr.mxu0 0.0
        %5199 = vmatpush1.msra.mxu0 0.0
        %5200 = vmatprep.subr.mxu0 0.0
        %5201 = vmatpush1.msra.mxu0 0.0
        %5202 = vmatprep.subr.mxu0 0.0
        %5203 = vmatpush1.msra.mxu0 0.0
        %5204 = vmatprep.subr.mxu0 0.0
        %5205 = vmatpush1.msra.mxu0 0.0
        %5206 = vmatprep.subr.mxu0 0.0
        %5207 = vmatpush1.msra.mxu0 0.0
        %5208 = vmatprep.subr.mxu0 0.0
        %5209 = vmatpush1.msra.mxu0 0.0
        %5210 = vmatprep.subr.mxu0 0.0
        %5211 = vmatpush1.msra.mxu0 0.0
        %5212 = vmatprep.subr.mxu0 0.0
        %5213 = vmatpush1.msra.mxu0 0.0
        %5214 = vmatprep.subr.mxu0 0.0
        %5215 = vmatpush1.msra.mxu0 0.0
        %5216 = vmatprep.subr.mxu0 0.0
        %5217 = vmatpush1.msra.mxu0 0.0
        %5218 = vmatprep.subr.mxu0 0.0
        %5219 = vmatpush1.msra.mxu0 0.0
        %5220 = vmatprep.subr.mxu0 0.0
        %5221 = vmatpush1.msra.mxu0 0.0
        %5222 = vmatprep.subr.mxu0 0.0
        %5223 = vmatpush1.msra.mxu0 0.0
        %5224 = vmatprep.subr.mxu0 0.0
        %5225 = vmatpush1.msra.mxu0 0.0
        %5226 = vmatprep.subr.mxu0 0.0
        %5227 = vmatpush1.msra.mxu0 0.0
        %5228 = vmatprep.subr.mxu0 0.0
        %5229 = vmatpush1.msra.mxu0 0.0
        %5230 = vmatprep.subr.mxu0 0.0
        %5231 = vmatpush1.msra.mxu0 0.0
        %5232 = vmatprep.subr.mxu0 0.0
        %5233 = vmatpush1.msra.mxu0 0.0
        %5234 = vmatprep.subr.mxu0 0.0
        %5235 = vmatpush1.msra.mxu0 0.0
        %5236 = vmatprep.subr.mxu0 0.0
        %5237 = vmatpush1.msra.mxu0 0.0
        %5238 = vmatprep.subr.mxu0 0.0
        %5239 = vmatpush1.msra.mxu0 0.0
        %5240 = vmatprep.subr.mxu0 0.0
        %5241 = vmatpush1.msra.mxu0 0.0
        %5242 = vmatprep.subr.mxu0 0.0
        %5243 = vmatpush1.msra.mxu0 0.0
        %5244 = vmatprep.subr.mxu0 0.0
        %5245 = vmatpush1.msra.mxu0 0.0
        %5246 = vmatprep.subr.mxu0 0.0
        %5247 = vmatpush1.msra.mxu0 0.0
        %5248 = vmatprep.subr.mxu0 0.0
        %5249 = vmatpush1.msra.mxu0 0.0
        %5250 = vmatprep.subr.mxu0 0.0
        %5251 = vmatpush1.msra.mxu0 0.0
        %5252 = vmatprep.mubr.f32.mxu0 0.0
        %5253 = vmatmul.mubr.f32.gmra.mrb[0].mxu0 %v5183
        %v5254 = vpop.f32.mrb[0].mxu0
        %v5255 = vadd.f32 0.0, %v5254
        %v5256 = vpop.f32.mrb[0].mxu0
        %5257 = vmatprep.mubr.f32.mxu0 0.0
        %5258 = vmatmul.mubr.f32.gmra.mrb[0].mxu0 %v5186
        %v5259 = vpop.f32.mrb[0].mxu0
        %v5260 = vadd.f32 0.0, %v5259
        %v5261 = vpop.f32.mrb[0].mxu0
        %5262 = vdwg.mxu0
        %v5264 = vsel %vm4971, %v4978, 0
        %v5267 = vsel %vm4971, %v4979, 0
        %5269 = vmatprep.subr.mxu0 0.0
        %5270 = vmatpush1.msra.mxu0 %v5255
        %5271 = vmatprep.subr.mxu0 0.0
        %5272 = vmatpush1.msra.mxu0 %v5260
        %5273 = vmatprep.subr.mxu0 0.0
        %5274 = vmatpush1.msra.mxu0 0.0
        %5275 = vmatprep.subr.mxu0 0.0
        %5276 = vmatpush1.msra.mxu0 0.0
        %5277 = vmatprep.subr.mxu0 0.0
        %5278 = vmatpush1.msra.mxu0 0.0
        %5279 = vmatprep.subr.mxu0 0.0
        %5280 = vmatpush1.msra.mxu0 0.0
        %5281 = vmatprep.subr.mxu0 0.0
        %5282 = vmatpush1.msra.mxu0 0.0
        %5283 = vmatprep.subr.mxu0 0.0
        %5284 = vmatpush1.msra.mxu0 0.0
        %5285 = vmatprep.subr.mxu0 0.0
        %5286 = vmatpush1.msra.mxu0 0.0
        %5287 = vmatprep.subr.mxu0 0.0
        %5288 = vmatpush1.msra.mxu0 0.0
        %5289 = vmatprep.subr.mxu0 0.0
        %5290 = vmatpush1.msra.mxu0 0.0
        %5291 = vmatprep.subr.mxu0 0.0
        %5292 = vmatpush1.msra.mxu0 0.0
        %5293 = vmatprep.subr.mxu0 0.0
        %5294 = vmatpush1.msra.mxu0 0.0
        %5295 = vmatprep.subr.mxu0 0.0
        %5296 = vmatpush1.msra.mxu0 0.0
        %5297 = vmatprep.subr.mxu0 0.0
        %5298 = vmatpush1.msra.mxu0 0.0
        %5299 = vmatprep.subr.mxu0 0.0
        %5300 = vmatpush1.msra.mxu0 0.0
        %5301 = vmatprep.subr.mxu0 0.0
        %5302 = vmatpush1.msra.mxu0 0.0
        %5303 = vmatprep.subr.mxu0 0.0
        %5304 = vmatpush1.msra.mxu0 0.0
        %5305 = vmatprep.subr.mxu0 0.0
        %5306 = vmatpush1.msra.mxu0 0.0
        %5307 = vmatprep.subr.mxu0 0.0
        %5308 = vmatpush1.msra.mxu0 0.0
        %5309 = vmatprep.subr.mxu0 0.0
        %5310 = vmatpush1.msra.mxu0 0.0
        %5311 = vmatprep.subr.mxu0 0.0
        %5312 = vmatpush1.msra.mxu0 0.0
        %5313 = vmatprep.subr.mxu0 0.0
        %5314 = vmatpush1.msra.mxu0 0.0
        %5315 = vmatprep.subr.mxu0 0.0
        %5316 = vmatpush1.msra.mxu0 0.0
        %5317 = vmatprep.subr.mxu0 0.0
        %5318 = vmatpush1.msra.mxu0 0.0
        %5319 = vmatprep.subr.mxu0 0.0
        %5320 = vmatpush1.msra.mxu0 0.0
        %5321 = vmatprep.subr.mxu0 0.0
        %5322 = vmatpush1.msra.mxu0 0.0
        %5323 = vmatprep.subr.mxu0 0.0
        %5324 = vmatpush1.msra.mxu0 0.0
        %5325 = vmatprep.subr.mxu0 0.0
        %5326 = vmatpush1.msra.mxu0 0.0
        %5327 = vmatprep.subr.mxu0 0.0
        %5328 = vmatpush1.msra.mxu0 0.0
        %5329 = vmatprep.subr.mxu0 0.0
        %5330 = vmatpush1.msra.mxu0 0.0
        %5331 = vmatprep.subr.mxu0 0.0
        %5332 = vmatpush1.msra.mxu0 0.0
        %5333 = vmatprep.mubr.f32.mxu0 0.0
        %5334 = vmatmul.mubr.f32.gmra.mrb[0].mxu0 %v5264
        %v5335 = vpop.f32.mrb[0].mxu0
        %v5336 = vadd.f32 0.0, %v5335
        %v5337 = vpop.f32.mrb[0].mxu0
        %5338 = vmatprep.mubr.f32.mxu0 0.0
        %5339 = vmatmul.mubr.f32.gmra.mrb[0].mxu0 %v5267
        %v5340 = vpop.f32.mrb[0].mxu0
        %v5341 = vadd.f32 0.0, %v5340
        %v5342 = vpop.f32.mrb[0].mxu0
        %5343 = vdwg.mxu0
        %v5344 = vsub.f32 %v5336, %v5180
        %v5345 = vsub.f32 %v5341, %v5181
        %v5346 = vmul.f32 %v5344, %v4986
        %v5347 = vmul.f32 %v5345, %v4987
        %v5348 = vadd.f32 %v5346, %v5176
        %v5349 = vadd.f32 %v5347, %v5177
        %v5350 = vsel %vm5178, %v4976, %v5348
        %v5351 = vsel %vm5179, %v4977, %v5349
        %v5353 = vsel %vm4971, %v5350, 0
        %v5356 = vsel %vm4971, %v5351, 0
        %5358 = vmatprep.subr.mxu0 0.0
        %5359 = vmatpush1.msra.mxu0 %v4980
        %5360 = vmatprep.subr.mxu0 0.0
        %5361 = vmatpush1.msra.mxu0 %v4981
        %5362 = vmatprep.subr.mxu0 0.0
        %5363 = vmatpush1.msra.mxu0 0.0
        %5364 = vmatprep.subr.mxu0 0.0
        %5365 = vmatpush1.msra.mxu0 0.0
        %5366 = vmatprep.subr.mxu0 0.0
        %5367 = vmatpush1.msra.mxu0 0.0
        %5368 = vmatprep.subr.mxu0 0.0
        %5369 = vmatpush1.msra.mxu0 0.0
        %5370 = vmatprep.subr.mxu0 0.0
        %5371 = vmatpush1.msra.mxu0 0.0
        %5372 = vmatprep.subr.mxu0 0.0
        %5373 = vmatpush1.msra.mxu0 0.0
        %5374 = vmatprep.subr.mxu0 0.0
        %5375 = vmatpush1.msra.mxu0 0.0
        %5376 = vmatprep.subr.mxu0 0.0
        %5377 = vmatpush1.msra.mxu0 0.0
        %5378 = vmatprep.subr.mxu0 0.0
        %5379 = vmatpush1.msra.mxu0 0.0
        %5380 = vmatprep.subr.mxu0 0.0
        %5381 = vmatpush1.msra.mxu0 0.0
        %5382 = vmatprep.subr.mxu0 0.0
        %5383 = vmatpush1.msra.mxu0 0.0
        %5384 = vmatprep.subr.mxu0 0.0
        %5385 = vmatpush1.msra.mxu0 0.0
        %5386 = vmatprep.subr.mxu0 0.0
        %5387 = vmatpush1.msra.mxu0 0.0
        %5388 = vmatprep.subr.mxu0 0.0
        %5389 = vmatpush1.msra.mxu0 0.0
        %5390 = vmatprep.subr.mxu0 0.0
        %5391 = vmatpush1.msra.mxu0 0.0
        %5392 = vmatprep.subr.mxu0 0.0
        %5393 = vmatpush1.msra.mxu0 0.0
        %5394 = vmatprep.subr.mxu0 0.0
        %5395 = vmatpush1.msra.mxu0 0.0
        %5396 = vmatprep.subr.mxu0 0.0
        %5397 = vmatpush1.msra.mxu0 0.0
        %5398 = vmatprep.subr.mxu0 0.0
        %5399 = vmatpush1.msra.mxu0 0.0
        %5400 = vmatprep.subr.mxu0 0.0
        %5401 = vmatpush1.msra.mxu0 0.0
        %5402 = vmatprep.subr.mxu0 0.0
        %5403 = vmatpush1.msra.mxu0 0.0
        %5404 = vmatprep.subr.mxu0 0.0
        %5405 = vmatpush1.msra.mxu0 0.0
        %5406 = vmatprep.subr.mxu0 0.0
        %5407 = vmatpush1.msra.mxu0 0.0
        %5408 = vmatprep.subr.mxu0 0.0
        %5409 = vmatpush1.msra.mxu0 0.0
        %5410 = vmatprep.subr.mxu0 0.0
        %5411 = vmatpush1.msra.mxu0 0.0
        %5412 = vmatprep.subr.mxu0 0.0
        %5413 = vmatpush1.msra.mxu0 0.0
        %5414 = vmatprep.subr.mxu0 0.0
        %5415 = vmatpush1.msra.mxu0 0.0
        %5416 = vmatprep.subr.mxu0 0.0
        %5417 = vmatpush1.msra.mxu0 0.0
        %5418 = vmatprep.subr.mxu0 0.0
        %5419 = vmatpush1.msra.mxu0 0.0
        %5420 = vmatprep.subr.mxu0 0.0
        %5421 = vmatpush1.msra.mxu0 0.0
        %5422 = vmatprep.mubr.f32.mxu0 0.0
        %5423 = vmatmul.mubr.f32.gmra.mrb[0].mxu0 %v5353
        %v5424 = vpop.f32.mrb[0].mxu0
        %v5425 = vadd.f32 0.0, %v5424
        %v5426 = vpop.f32.mrb[0].mxu0
        %5427 = vmatprep.mubr.f32.mxu0 0.0
        %5428 = vmatmul.mubr.f32.gmra.mrb[0].mxu0 %v5356
        %v5429 = vpop.f32.mrb[0].mxu0
        %v5430 = vadd.f32 0.0, %v5429
        %v5431 = vpop.f32.mrb[0].mxu0
        %5432 = vdwg.mxu0
        %5433 = vmatprep.subr.mxu0 0.0
        %5434 = vmatpush1.msra.mxu0 %v5425
        %5435 = vmatprep.subr.mxu0 0.0
        %5436 = vmatpush1.msra.mxu0 %v5430
        %5437 = vmatprep.subr.mxu0 0.0
        %5438 = vmatpush1.msra.mxu0 0.0
        %5439 = vmatprep.subr.mxu0 0.0
        %5440 = vmatpush1.msra.mxu0 0.0
        %5441 = vmatprep.subr.mxu0 0.0
        %5442 = vmatpush1.msra.mxu0 0.0
        %5443 = vmatprep.subr.mxu0 0.0
        %5444 = vmatpush1.msra.mxu0 0.0
        %5445 = vmatprep.subr.mxu0 0.0
        %5446 = vmatpush1.msra.mxu0 0.0
        %5447 = vmatprep.subr.mxu0 0.0
        %5448 = vmatpush1.msra.mxu0 0.0
        %5449 = vmatprep.subr.mxu0 0.0
        %5450 = vmatpush1.msra.mxu0 0.0
        %5451 = vmatprep.subr.mxu0 0.0
        %5452 = vmatpush1.msra.mxu0 0.0
        %5453 = vmatprep.subr.mxu0 0.0
        %5454 = vmatpush1.msra.mxu0 0.0
        %5455 = vmatprep.subr.mxu0 0.0
        %5456 = vmatpush1.msra.mxu0 0.0
        %5457 = vmatprep.subr.mxu0 0.0
        %5458 = vmatpush1.msra.mxu0 0.0
        %5459 = vmatprep.subr.mxu0 0.0
        %5460 = vmatpush1.msra.mxu0 0.0
        %5461 = vmatprep.subr.mxu0 0.0
        %5462 = vmatpush1.msra.mxu0 0.0
        %5463 = vmatprep.subr.mxu0 0.0
        %5464 = vmatpush1.msra.mxu0 0.0
        %5465 = vmatprep.subr.mxu0 0.0
        %5466 = vmatpush1.msra.mxu0 0.0
        %5467 = vmatprep.subr.mxu0 0.0
        %5468 = vmatpush1.msra.mxu0 0.0
        %5469 = vmatprep.subr.mxu0 0.0
        %5470 = vmatpush1.msra.mxu0 0.0
        %5471 = vmatprep.subr.mxu0 0.0
        %5472 = vmatpush1.msra.mxu0 0.0
        %5473 = vmatprep.subr.mxu0 0.0
        %5474 = vmatpush1.msra.mxu0 0.0
        %5475 = vmatprep.subr.mxu0 0.0
        %5476 = vmatpush1.msra.mxu0 0.0
        %5477 = vmatprep.subr.mxu0 0.0
        %5478 = vmatpush1.msra.mxu0 0.0
        %5479 = vmatprep.subr.mxu0 0.0
        %5480 = vmatpush1.msra.mxu0 0.0
        %5481 = vmatprep.subr.mxu0 0.0
        %5482 = vmatpush1.msra.mxu0 0.0
        %5483 = vmatprep.subr.mxu0 0.0
        %5484 = vmatpush1.msra.mxu0 0.0
        %5485 = vmatprep.subr.mxu0 0.0
        %5486 = vmatpush1.msra.mxu0 0.0
        %5487 = vmatprep.subr.mxu0 0.0
        %5488 = vmatpush1.msra.mxu0 0.0
        %5489 = vmatprep.subr.mxu0 0.0
        %5490 = vmatpush1.msra.mxu0 0.0
        %5491 = vmatprep.subr.mxu0 0.0
        %5492 = vmatpush1.msra.mxu0 0.0
        %5493 = vmatprep.subr.mxu0 0.0
        %5494 = vmatpush1.msra.mxu0 0.0
        %5495 = vmatprep.subr.mxu0 0.0
        %5496 = vmatpush1.msra.mxu0 0.0
        %5497 = vmatprep.mubr.f32.mxu0 0.0
        %5498 = vmatmul.mubr.f32.gmra.mrb[0].mxu0 %v5264
        %v5499 = vpop.f32.mrb[0].mxu0
        %v5500 = vadd.f32 0.0, %v5499
        %v5501 = vpop.f32.mrb[0].mxu0
        %5502 = vmatprep.mubr.f32.mxu0 0.0
        %5503 = vmatmul.mubr.f32.gmra.mrb[0].mxu0 %v5267
        %v5504 = vpop.f32.mrb[0].mxu0
        %v5505 = vadd.f32 0.0, %v5504
        %v5506 = vpop.f32.mrb[0].mxu0
        %5507 = vdwg.mxu0
        %v5508 = vsub.f32 %v5500, %v5350
        %v5509 = vsub.f32 %v5505, %v5351
        %v5510 = vmul.f32 %v5508, %v4986
        %v5511 = vmul.f32 %v5509, %v4987
        %v5512 = vadd.f32 %v5510, %v5176
        %v5513 = vadd.f32 %v5511, %v5177
        %v5514 = vsel %vm5178, %v4976, %v5512
        %v5515 = vsel %vm5179, %v4977, %v5513
        %v5517 = vsel %vm4971, %v5514, 0
        %v5520 = vsel %vm4971, %v5515, 0
        %5522 = vmatprep.subr.mxu0 0.0
        %5523 = vmatpush1.msra.mxu0 %v4980
        %5524 = vmatprep.subr.mxu0 0.0
        %5525 = vmatpush1.msra.mxu0 %v4981
        %5526 = vmatprep.subr.mxu0 0.0
        %5527 = vmatpush1.msra.mxu0 0.0
        %5528 = vmatprep.subr.mxu0 0.0
        %5529 = vmatpush1.msra.mxu0 0.0
        %5530 = vmatprep.subr.mxu0 0.0
        %5531 = vmatpush1.msra.mxu0 0.0
        %5532 = vmatprep.subr.mxu0 0.0
        %5533 = vmatpush1.msra.mxu0 0.0
        %5534 = vmatprep.subr.mxu0 0.0
        %5535 = vmatpush1.msra.mxu0 0.0
        %5536 = vmatprep.subr.mxu0 0.0
        %5537 = vmatpush1.msra.mxu0 0.0
        %5538 = vmatprep.subr.mxu0 0.0
        %5539 = vmatpush1.msra.mxu0 0.0
        %5540 = vmatprep.subr.mxu0 0.0
        %5541 = vmatpush1.msra.mxu0 0.0
        %5542 = vmatprep.subr.mxu0 0.0
        %5543 = vmatpush1.msra.mxu0 0.0
        %5544 = vmatprep.subr.mxu0 0.0
        %5545 = vmatpush1.msra.mxu0 0.0
        %5546 = vmatprep.subr.mxu0 0.0
        %5547 = vmatpush1.msra.mxu0 0.0
        %5548 = vmatprep.subr.mxu0 0.0
        %5549 = vmatpush1.msra.mxu0 0.0
        %5550 = vmatprep.subr.mxu0 0.0
        %5551 = vmatpush1.msra.mxu0 0.0
        %5552 = vmatprep.subr.mxu0 0.0
        %5553 = vmatpush1.msra.mxu0 0.0
        %5554 = vmatprep.subr.mxu0 0.0
        %5555 = vmatpush1.msra.mxu0 0.0
        %5556 = vmatprep.subr.mxu0 0.0
        %5557 = vmatpush1.msra.mxu0 0.0
        %5558 = vmatprep.subr.mxu0 0.0
        %5559 = vmatpush1.msra.mxu0 0.0
        %5560 = vmatprep.subr.mxu0 0.0
        %5561 = vmatpush1.msra.mxu0 0.0
        %5562 = vmatprep.subr.mxu0 0.0
        %5563 = vmatpush1.msra.mxu0 0.0
        %5564 = vmatprep.subr.mxu0 0.0
        %5565 = vmatpush1.msra.mxu0 0.0
        %5566 = vmatprep.subr.mxu0 0.0
        %5567 = vmatpush1.msra.mxu0 0.0
        %5568 = vmatprep.subr.mxu0 0.0
        %5569 = vmatpush1.msra.mxu0 0.0
        %5570 = vmatprep.subr.mxu0 0.0
        %5571 = vmatpush1.msra.mxu0 0.0
        %5572 = vmatprep.subr.mxu0 0.0
        %5573 = vmatpush1.msra.mxu0 0.0
        %5574 = vmatprep.subr.mxu0 0.0
        %5575 = vmatpush1.msra.mxu0 0.0
        %5576 = vmatprep.subr.mxu0 0.0
        %5577 = vmatpush1.msra.mxu0 0.0
        %5578 = vmatprep.subr.mxu0 0.0
        %5579 = vmatpush1.msra.mxu0 0.0
        %5580 = vmatprep.subr.mxu0 0.0
        %5581 = vmatpush1.msra.mxu0 0.0
        %5582 = vmatprep.subr.mxu0 0.0
        %5583 = vmatpush1.msra.mxu0 0.0
        %5584 = vmatprep.subr.mxu0 0.0
        %5585 = vmatpush1.msra.mxu0 0.0
        %5586 = vmatprep.mubr.f32.mxu0 0.0
        %5587 = vmatmul.mubr.f32.gmra.mrb[0].mxu0 %v5517
        %v5588 = vpop.f32.mrb[0].mxu0
        %v5589 = vadd.f32 0.0, %v5588
        %v5590 = vpop.f32.mrb[0].mxu0
        %5591 = vmatprep.mubr.f32.mxu0 0.0
        %5592 = vmatmul.mubr.f32.gmra.mrb[0].mxu0 %v5520
        %v5593 = vpop.f32.mrb[0].mxu0
        %v5594 = vadd.f32 0.0, %v5593
        %v5595 = vpop.f32.mrb[0].mxu0
        %5596 = vdwg.mxu0
        %5597 = vmatprep.subr.mxu0 0.0
        %5598 = vmatpush1.msra.mxu0 %v5589
        %5599 = vmatprep.subr.mxu0 0.0
        %5600 = vmatpush1.msra.mxu0 %v5594
        %5601 = vmatprep.subr.mxu0 0.0
        %5602 = vmatpush1.msra.mxu0 0.0
        %5603 = vmatprep.subr.mxu0 0.0
        %5604 = vmatpush1.msra.mxu0 0.0
        %5605 = vmatprep.subr.mxu0 0.0
        %5606 = vmatpush1.msra.mxu0 0.0
        %5607 = vmatprep.subr.mxu0 0.0
        %5608 = vmatpush1.msra.mxu0 0.0
        %5609 = vmatprep.subr.mxu0 0.0
        %5610 = vmatpush1.msra.mxu0 0.0
        %5611 = vmatprep.subr.mxu0 0.0
        %5612 = vmatpush1.msra.mxu0 0.0
        %5613 = vmatprep.subr.mxu0 0.0
        %5614 = vmatpush1.msra.mxu0 0.0
        %5615 = vmatprep.subr.mxu0 0.0
        %5616 = vmatpush1.msra.mxu0 0.0
        %5617 = vmatprep.subr.mxu0 0.0
        %5618 = vmatpush1.msra.mxu0 0.0
        %5619 = vmatprep.subr.mxu0 0.0
        %5620 = vmatpush1.msra.mxu0 0.0
        %5621 = vmatprep.subr.mxu0 0.0
        %5622 = vmatpush1.msra.mxu0 0.0
        %5623 = vmatprep.subr.mxu0 0.0
        %5624 = vmatpush1.msra.mxu0 0.0
        %5625 = vmatprep.subr.mxu0 0.0
        %5626 = vmatpush1.msra.mxu0 0.0
        %5627 = vmatprep.subr.mxu0 0.0
        %5628 = vmatpush1.msra.mxu0 0.0
        %5629 = vmatprep.subr.mxu0 0.0
        %5630 = vmatpush1.msra.mxu0 0.0
        %5631 = vmatprep.subr.mxu0 0.0
        %5632 = vmatpush1.msra.mxu0 0.0
        %5633 = vmatprep.subr.mxu0 0.0
        %5634 = vmatpush1.msra.mxu0 0.0
        %5635 = vmatprep.subr.mxu0 0.0
        %5636 = vmatpush1.msra.mxu0 0.0
        %5637 = vmatprep.subr.mxu0 0.0
        %5638 = vmatpush1.msra.mxu0 0.0
        %5639 = vmatprep.subr.mxu0 0.0
        %5640 = vmatpush1.msra.mxu0 0.0
        %5641 = vmatprep.subr.mxu0 0.0
        %5642 = vmatpush1.msra.mxu0 0.0
        %5643 = vmatprep.subr.mxu0 0.0
        %5644 = vmatpush1.msra.mxu0 0.0
        %5645 = vmatprep.subr.mxu0 0.0
        %5646 = vmatpush1.msra.mxu0 0.0
        %5647 = vmatprep.subr.mxu0 0.0
        %5648 = vmatpush1.msra.mxu0 0.0
        %5649 = vmatprep.subr.mxu0 0.0
        %5650 = vmatpush1.msra.mxu0 0.0
        %5651 = vmatprep.subr.mxu0 0.0
        %5652 = vmatpush1.msra.mxu0 0.0
        %5653 = vmatprep.subr.mxu0 0.0
        %5654 = vmatpush1.msra.mxu0 0.0
        %5655 = vmatprep.subr.mxu0 0.0
        %5656 = vmatpush1.msra.mxu0 0.0
        %5657 = vmatprep.subr.mxu0 0.0
        %5658 = vmatpush1.msra.mxu0 0.0
        %5659 = vmatprep.subr.mxu0 0.0
        %5660 = vmatpush1.msra.mxu0 0.0
        %5661 = vmatprep.mubr.f32.mxu0 0.0
        %5662 = vmatmul.mubr.f32.gmra.mrb[0].mxu0 %v5264
        %v5663 = vpop.f32.mrb[0].mxu0
        %v5664 = vadd.f32 0.0, %v5663
        %v5665 = vpop.f32.mrb[0].mxu0
        %5666 = vmatprep.mubr.f32.mxu0 0.0
        %5667 = vmatmul.mubr.f32.gmra.mrb[0].mxu0 %v5267
        %v5668 = vpop.f32.mrb[0].mxu0
        %v5669 = vadd.f32 0.0, %v5668
        %v5670 = vpop.f32.mrb[0].mxu0
        %5671 = vdwg.mxu0
        %v5672 = vsub.f32 %v5664, %v5514
        %v5673 = vsub.f32 %v5669, %v5515
        %v5674 = vmul.f32 %v5672, %v4986
        %v5675 = vmul.f32 %v5673, %v4987
        %v5676 = vadd.f32 %v5674, %v5176
        %v5677 = vadd.f32 %v5675, %v5177
        %v5678 = vsel %vm5178, %v4976, %v5676
        %v5679 = vsel %vm5179, %v4977, %v5677
        %v5681 = vsel %vm4971, %v5678, 0
        %v5684 = vsel %vm4971, %v5679, 0
        %5686 = vmatprep.subr.mxu0 0.0
        %5687 = vmatpush1.msra.mxu0 %v4980
        %5688 = vmatprep.subr.mxu0 0.0
        %5689 = vmatpush1.msra.mxu0 %v4981
        %5690 = vmatprep.subr.mxu0 0.0
        %5691 = vmatpush1.msra.mxu0 0.0
        %5692 = vmatprep.subr.mxu0 0.0
        %5693 = vmatpush1.msra.mxu0 0.0
        %5694 = vmatprep.subr.mxu0 0.0
        %5695 = vmatpush1.msra.mxu0 0.0
        %5696 = vmatprep.subr.mxu0 0.0
        %5697 = vmatpush1.msra.mxu0 0.0
        %5698 = vmatprep.subr.mxu0 0.0
        %5699 = vmatpush1.msra.mxu0 0.0
        %5700 = vmatprep.subr.mxu0 0.0
        %5701 = vmatpush1.msra.mxu0 0.0
        %5702 = vmatprep.subr.mxu0 0.0
        %5703 = vmatpush1.msra.mxu0 0.0
        %5704 = vmatprep.subr.mxu0 0.0
        %5705 = vmatpush1.msra.mxu0 0.0
        %5706 = vmatprep.subr.mxu0 0.0
        %5707 = vmatpush1.msra.mxu0 0.0
        %5708 = vmatprep.subr.mxu0 0.0
        %5709 = vmatpush1.msra.mxu0 0.0
        %5710 = vmatprep.subr.mxu0 0.0
        %5711 = vmatpush1.msra.mxu0 0.0
        %5712 = vmatprep.subr.mxu0 0.0
        %5713 = vmatpush1.msra.mxu0 0.0
        %5714 = vmatprep.subr.mxu0 0.0
        %5715 = vmatpush1.msra.mxu0 0.0
        %5716 = vmatprep.subr.mxu0 0.0
        %5717 = vmatpush1.msra.mxu0 0.0
        %5718 = vmatprep.subr.mxu0 0.0
        %5719 = vmatpush1.msra.mxu0 0.0
        %5720 = vmatprep.subr.mxu0 0.0
        %5721 = vmatpush1.msra.mxu0 0.0
        %5722 = vmatprep.subr.mxu0 0.0
        %5723 = vmatpush1.msra.mxu0 0.0
        %5724 = vmatprep.subr.mxu0 0.0
        %5725 = vmatpush1.msra.mxu0 0.0
        %5726 = vmatprep.subr.mxu0 0.0
        %5727 = vmatpush1.msra.mxu0 0.0
        %5728 = vmatprep.subr.mxu0 0.0
        %5729 = vmatpush1.msra.mxu0 0.0
        %5730 = vmatprep.subr.mxu0 0.0
        %5731 = vmatpush1.msra.mxu0 0.0
        %5732 = vmatprep.subr.mxu0 0.0
        %5733 = vmatpush1.msra.mxu0 0.0
        %5734 = vmatprep.subr.mxu0 0.0
        %5735 = vmatpush1.msra.mxu0 0.0
        %5736 = vmatprep.subr.mxu0 0.0
        %5737 = vmatpush1.msra.mxu0 0.0
        %5738 = vmatprep.subr.mxu0 0.0
        %5739 = vmatpush1.msra.mxu0 0.0
        %5740 = vmatprep.subr.mxu0 0.0
        %5741 = vmatpush1.msra.mxu0 0.0
        %5742 = vmatprep.subr.mxu0 0.0
        %5743 = vmatpush1.msra.mxu0 0.0
        %5744 = vmatprep.subr.mxu0 0.0
        %5745 = vmatpush1.msra.mxu0 0.0
        %5746 = vmatprep.subr.mxu0 0.0
        %5747 = vmatpush1.msra.mxu0 0.0
        %5748 = vmatprep.subr.mxu0 0.0
        %5749 = vmatpush1.msra.mxu0 0.0
        %5750 = vmatprep.mubr.f32.mxu0 0.0
        %5751 = vmatmul.mubr.f32.gmra.mrb[0].mxu0 %v5681
        %v5752 = vpop.f32.mrb[0].mxu0
        %v5753 = vadd.f32 0.0, %v5752
        %v5754 = vpop.f32.mrb[0].mxu0
        %5755 = vmatprep.mubr.f32.mxu0 0.0
        %5756 = vmatmul.mubr.f32.gmra.mrb[0].mxu0 %v5684
        %v5757 = vpop.f32.mrb[0].mxu0
        %v5758 = vadd.f32 0.0, %v5757
        %v5759 = vpop.f32.mrb[0].mxu0
        %5760 = vdwg.mxu0
        %5761 = vmatprep.subr.mxu0 0.0
        %5762 = vmatpush1.msra.mxu0 %v5753
        %5763 = vmatprep.subr.mxu0 0.0
        %5764 = vmatpush1.msra.mxu0 %v5758
        %5765 = vmatprep.subr.mxu0 0.0
        %5766 = vmatpush1.msra.mxu0 0.0
        %5767 = vmatprep.subr.mxu0 0.0
        %5768 = vmatpush1.msra.mxu0 0.0
        %5769 = vmatprep.subr.mxu0 0.0
        %5770 = vmatpush1.msra.mxu0 0.0
        %5771 = vmatprep.subr.mxu0 0.0
        %5772 = vmatpush1.msra.mxu0 0.0
        %5773 = vmatprep.subr.mxu0 0.0
        %5774 = vmatpush1.msra.mxu0 0.0
        %5775 = vmatprep.subr.mxu0 0.0
        %5776 = vmatpush1.msra.mxu0 0.0
        %5777 = vmatprep.subr.mxu0 0.0
        %5778 = vmatpush1.msra.mxu0 0.0
        %5779 = vmatprep.subr.mxu0 0.0
        %5780 = vmatpush1.msra.mxu0 0.0
        %5781 = vmatprep.subr.mxu0 0.0
        %5782 = vmatpush1.msra.mxu0 0.0
        %5783 = vmatprep.subr.mxu0 0.0
        %5784 = vmatpush1.msra.mxu0 0.0
        %5785 = vmatprep.subr.mxu0 0.0
        %5786 = vmatpush1.msra.mxu0 0.0
        %5787 = vmatprep.subr.mxu0 0.0
        %5788 = vmatpush1.msra.mxu0 0.0
        %5789 = vmatprep.subr.mxu0 0.0
        %5790 = vmatpush1.msra.mxu0 0.0
        %5791 = vmatprep.subr.mxu0 0.0
        %5792 = vmatpush1.msra.mxu0 0.0
        %5793 = vmatprep.subr.mxu0 0.0
        %5794 = vmatpush1.msra.mxu0 0.0
        %5795 = vmatprep.subr.mxu0 0.0
        %5796 = vmatpush1.msra.mxu0 0.0
        %5797 = vmatprep.subr.mxu0 0.0
        %5798 = vmatpush1.msra.mxu0 0.0
        %5799 = vmatprep.subr.mxu0 0.0
        %5800 = vmatpush1.msra.mxu0 0.0
        %5801 = vmatprep.subr.mxu0 0.0
        %5802 = vmatpush1.msra.mxu0 0.0
        %5803 = vmatprep.subr.mxu0 0.0
        %5804 = vmatpush1.msra.mxu0 0.0
        %5805 = vmatprep.subr.mxu0 0.0
        %5806 = vmatpush1.msra.mxu0 0.0
        %5807 = vmatprep.subr.mxu0 0.0
        %5808 = vmatpush1.msra.mxu0 0.0
        %5809 = vmatprep.subr.mxu0 0.0
        %5810 = vmatpush1.msra.mxu0 0.0
        %5811 = vmatprep.subr.mxu0 0.0
        %5812 = vmatpush1.msra.mxu0 0.0
        %5813 = vmatprep.subr.mxu0 0.0
        %5814 = vmatpush1.msra.mxu0 0.0
        %5815 = vmatprep.subr.mxu0 0.0
        %5816 = vmatpush1.msra.mxu0 0.0
        %5817 = vmatprep.subr.mxu0 0.0
        %5818 = vmatpush1.msra.mxu0 0.0
        %5819 = vmatprep.subr.mxu0 0.0
        %5820 = vmatpush1.msra.mxu0 0.0
        %5821 = vmatprep.subr.mxu0 0.0
        %5822 = vmatpush1.msra.mxu0 0.0
        %5823 = vmatprep.subr.mxu0 0.0
        %5824 = vmatpush1.msra.mxu0 0.0
        %5825 = vmatprep.mubr.f32.mxu0 0.0
        %5826 = vmatmul.mubr.f32.gmra.mrb[0].mxu0 %v5264
        %v5827 = vpop.f32.mrb[0].mxu0
        %v5828 = vadd.f32 0.0, %v5827
        %v5829 = vpop.f32.mrb[0].mxu0
        %5830 = vmatprep.mubr.f32.mxu0 0.0
        %5831 = vmatmul.mubr.f32.gmra.mrb[0].mxu0 %v5267
        %v5832 = vpop.f32.mrb[0].mxu0
        %v5833 = vadd.f32 0.0, %v5832
        %v5834 = vpop.f32.mrb[0].mxu0
        %5835 = vdwg.mxu0
        %v5836 = vsub.f32 %v5828, %v5678
        %v5837 = vsub.f32 %v5833, %v5679
        %v5838 = vmul.f32 %v5836, %v4986
        %v5839 = vmul.f32 %v5837, %v4987
        %v5840 = vadd.f32 %v5838, %v5176
        %v5841 = vadd.f32 %v5839, %v5177
        %v5842 = vsel %vm5178, %v4976, %v5840
        %v5843 = vsel %vm5179, %v4977, %v5841
        %v5845 = vsel %vm4971, %v5842, 0
        %v5848 = vsel %vm4971, %v5843, 0
        %5850 = vmatprep.subr.mxu0 0.0
        %5851 = vmatpush1.msra.mxu0 %v4980
        %5852 = vmatprep.subr.mxu0 0.0
        %5853 = vmatpush1.msra.mxu0 %v4981
        %5854 = vmatprep.subr.mxu0 0.0
        %5855 = vmatpush1.msra.mxu0 0.0
        %5856 = vmatprep.subr.mxu0 0.0
        %5857 = vmatpush1.msra.mxu0 0.0
        %5858 = vmatprep.subr.mxu0 0.0
        %5859 = vmatpush1.msra.mxu0 0.0
        %5860 = vmatprep.subr.mxu0 0.0
        %5861 = vmatpush1.msra.mxu0 0.0
        %5862 = vmatprep.subr.mxu0 0.0
        %5863 = vmatpush1.msra.mxu0 0.0
        %5864 = vmatprep.subr.mxu0 0.0
        %5865 = vmatpush1.msra.mxu0 0.0
        %5866 = vmatprep.subr.mxu0 0.0
        %5867 = vmatpush1.msra.mxu0 0.0
        %5868 = vmatprep.subr.mxu0 0.0
        %5869 = vmatpush1.msra.mxu0 0.0
        %5870 = vmatprep.subr.mxu0 0.0
        %5871 = vmatpush1.msra.mxu0 0.0
        %5872 = vmatprep.subr.mxu0 0.0
        %5873 = vmatpush1.msra.mxu0 0.0
        %5874 = vmatprep.subr.mxu0 0.0
        %5875 = vmatpush1.msra.mxu0 0.0
        %5876 = vmatprep.subr.mxu0 0.0
        %5877 = vmatpush1.msra.mxu0 0.0
        %5878 = vmatprep.subr.mxu0 0.0
        %5879 = vmatpush1.msra.mxu0 0.0
        %5880 = vmatprep.subr.mxu0 0.0
        %5881 = vmatpush1.msra.mxu0 0.0
        %5882 = vmatprep.subr.mxu0 0.0
        %5883 = vmatpush1.msra.mxu0 0.0
        %5884 = vmatprep.subr.mxu0 0.0
        %5885 = vmatpush1.msra.mxu0 0.0
        %5886 = vmatprep.subr.mxu0 0.0
        %5887 = vmatpush1.msra.mxu0 0.0
        %5888 = vmatprep.subr.mxu0 0.0
        %5889 = vmatpush1.msra.mxu0 0.0
        %5890 = vmatprep.subr.mxu0 0.0
        %5891 = vmatpush1.msra.mxu0 0.0
        %5892 = vmatprep.subr.mxu0 0.0
        %5893 = vmatpush1.msra.mxu0 0.0
        %5894 = vmatprep.subr.mxu0 0.0
        %5895 = vmatpush1.msra.mxu0 0.0
        %5896 = vmatprep.subr.mxu0 0.0
        %5897 = vmatpush1.msra.mxu0 0.0
        %5898 = vmatprep.subr.mxu0 0.0
        %5899 = vmatpush1.msra.mxu0 0.0
        %5900 = vmatprep.subr.mxu0 0.0
        %5901 = vmatpush1.msra.mxu0 0.0
        %5902 = vmatprep.subr.mxu0 0.0
        %5903 = vmatpush1.msra.mxu0 0.0
        %5904 = vmatprep.subr.mxu0 0.0
        %5905 = vmatpush1.msra.mxu0 0.0
        %5906 = vmatprep.subr.mxu0 0.0
        %5907 = vmatpush1.msra.mxu0 0.0
        %5908 = vmatprep.subr.mxu0 0.0
        %5909 = vmatpush1.msra.mxu0 0.0
        %5910 = vmatprep.subr.mxu0 0.0
        %5911 = vmatpush1.msra.mxu0 0.0
        %5912 = vmatprep.subr.mxu0 0.0
        %5913 = vmatpush1.msra.mxu0 0.0
        %5914 = vmatprep.mubr.f32.mxu0 0.0
        %5915 = vmatmul.mubr.f32.gmra.mrb[0].mxu0 %v5845
        %v5916 = vpop.f32.mrb[0].mxu0
        %v5917 = vadd.f32 0.0, %v5916
        %v5918 = vpop.f32.mrb[0].mxu0
        %5919 = vmatprep.mubr.f32.mxu0 0.0
        %5920 = vmatmul.mubr.f32.gmra.mrb[0].mxu0 %v5848
        %v5921 = vpop.f32.mrb[0].mxu0
        %v5922 = vadd.f32 0.0, %v5921
        %v5923 = vpop.f32.mrb[0].mxu0
        %5924 = vdwg.mxu0
        %5925 = vmatprep.subr.mxu0 0.0
        %5926 = vmatpush1.msra.mxu0 %v5917
        %5927 = vmatprep.subr.mxu0 0.0
        %5928 = vmatpush1.msra.mxu0 %v5922
        %5929 = vmatprep.subr.mxu0 0.0
        %5930 = vmatpush1.msra.mxu0 0.0
        %5931 = vmatprep.subr.mxu0 0.0
        %5932 = vmatpush1.msra.mxu0 0.0
        %5933 = vmatprep.subr.mxu0 0.0
        %5934 = vmatpush1.msra.mxu0 0.0
        %5935 = vmatprep.subr.mxu0 0.0
        %5936 = vmatpush1.msra.mxu0 0.0
        %5937 = vmatprep.subr.mxu0 0.0
        %5938 = vmatpush1.msra.mxu0 0.0
        %5939 = vmatprep.subr.mxu0 0.0
        %5940 = vmatpush1.msra.mxu0 0.0
        %5941 = vmatprep.subr.mxu0 0.0
        %5942 = vmatpush1.msra.mxu0 0.0
        %5943 = vmatprep.subr.mxu0 0.0
        %5944 = vmatpush1.msra.mxu0 0.0
        %5945 = vmatprep.subr.mxu0 0.0
        %5946 = vmatpush1.msra.mxu0 0.0
        %5947 = vmatprep.subr.mxu0 0.0
        %5948 = vmatpush1.msra.mxu0 0.0
        %5949 = vmatprep.subr.mxu0 0.0
        %5950 = vmatpush1.msra.mxu0 0.0
        %5951 = vmatprep.subr.mxu0 0.0
        %5952 = vmatpush1.msra.mxu0 0.0
        %5953 = vmatprep.subr.mxu0 0.0
        %5954 = vmatpush1.msra.mxu0 0.0
        %5955 = vmatprep.subr.mxu0 0.0
        %5956 = vmatpush1.msra.mxu0 0.0
        %5957 = vmatprep.subr.mxu0 0.0
        %5958 = vmatpush1.msra.mxu0 0.0
        %5959 = vmatprep.subr.mxu0 0.0
        %5960 = vmatpush1.msra.mxu0 0.0
        %5961 = vmatprep.subr.mxu0 0.0
        %5962 = vmatpush1.msra.mxu0 0.0
        %5963 = vmatprep.subr.mxu0 0.0
        %5964 = vmatpush1.msra.mxu0 0.0
        %5965 = vmatprep.subr.mxu0 0.0
        %5966 = vmatpush1.msra.mxu0 0.0
        %5967 = vmatprep.subr.mxu0 0.0
        %5968 = vmatpush1.msra.mxu0 0.0
        %5969 = vmatprep.subr.mxu0 0.0
        %5970 = vmatpush1.msra.mxu0 0.0
        %5971 = vmatprep.subr.mxu0 0.0
        %5972 = vmatpush1.msra.mxu0 0.0
        %5973 = vmatprep.subr.mxu0 0.0
        %5974 = vmatpush1.msra.mxu0 0.0
        %5975 = vmatprep.subr.mxu0 0.0
        %5976 = vmatpush1.msra.mxu0 0.0
        %5977 = vmatprep.subr.mxu0 0.0
        %5978 = vmatpush1.msra.mxu0 0.0
        %5979 = vmatprep.subr.mxu0 0.0
        %5980 = vmatpush1.msra.mxu0 0.0
        %5981 = vmatprep.subr.mxu0 0.0
        %5982 = vmatpush1.msra.mxu0 0.0
        %5983 = vmatprep.subr.mxu0 0.0
        %5984 = vmatpush1.msra.mxu0 0.0
        %5985 = vmatprep.subr.mxu0 0.0
        %5986 = vmatpush1.msra.mxu0 0.0
        %5987 = vmatprep.subr.mxu0 0.0
        %5988 = vmatpush1.msra.mxu0 0.0
        %5989 = vmatprep.mubr.f32.mxu0 0.0
        %5990 = vmatmul.mubr.f32.gmra.mrb[0].mxu0 %v5264
        %v5991 = vpop.f32.mrb[0].mxu0
        %v5992 = vadd.f32 0.0, %v5991
        %v5993 = vpop.f32.mrb[0].mxu0
        %5994 = vmatprep.mubr.f32.mxu0 0.0
        %5995 = vmatmul.mubr.f32.gmra.mrb[0].mxu0 %v5267
        %v5996 = vpop.f32.mrb[0].mxu0
        %v5997 = vadd.f32 0.0, %v5996
        %v5998 = vpop.f32.mrb[0].mxu0
        %5999 = vdwg.mxu0
        %v6000 = vsub.f32 %v5992, %v5842
        %v6001 = vsub.f32 %v5997, %v5843
        %v6002 = vmul.f32 %v6000, %v4986
        %v6003 = vmul.f32 %v6001, %v4987
        %v6004 = vadd.f32 %v6002, %v5176
        %v6005 = vadd.f32 %v6003, %v5177
        %v6006 = vsel %vm5178, %v4976, %v6004
        %v6007 = vsel %vm5179, %v4977, %v6005
        %v6008 = vadd.f32 %v363, 1.0
        %v6009 = vadd.f32 %v364, 1.0
        %v6010 = vmul.f32 %v6008, 7.5
        %v6011 = vmul.f32 %v6009, 7.5
        %v6012 = vmax.f32 %v6010, 0.0
        %v6013 = vmax.f32 %v6011, 0.0
        %v6014 = vmin.f32 %v6012, 15.0
        %v6015 = vmin.f32 %v6013, 15.0
        %v6016 = vfloor.f32 %v6014
        %v6017 = vfloor.f32 %v6015
        %v6018 = vsub.f32 %v6014, %v6016
        %v6019 = vsub.f32 %v6015, %v6017
        %v6020 = vcvt.f32.s32.to.zero.pseudo %v6016
        %v6021 = vcvt.f32.s32.to.zero.pseudo %v6017
        %v6022 = vadd.s32 %v6020, 1
        %v6023 = vadd.s32 %v6021, 1
        %vm6024 = vcmp.lt.s32.totalorder %v6022, 15
        %v6025 = vsel %vm6024, %v6022, 15
        %vm6026 = vcmp.lt.s32.totalorder %v6023, 15
        %v6027 = vsel %vm6026, %v6023, 15
        %v6028 = vlaneseq
        %v6029 = vshrl.u32 %v6028, 7
        %v6030 = vadd.s32 %v6029, 8
        %v6031 = vlaneseq
        %v6032 = vshrl.u32 %v6031, 7
        %v6033 = vsub.s32 0, %v6032
        %v6034 = vrot.slane %v6020, %v6033
        %v6035 = vlaneseq
        %v6036 = vshrl.u32 %v6035, 7
        %v6037 = vsub.s32 0, %v6036
        %v6038 = vrot.slane %v6021, %v6037
        %vm6039 = vcmp.eq.s32.totalorder %v6029, %v6034
        %vm6040 = vcmp.eq.s32.totalorder %v6029, %v6038
        %vm6041 = vcmp.eq.s32.totalorder %v6030, %v6034
        %vm6042 = vcmp.eq.s32.totalorder %v6030, %v6038
        %v6043 = vsub.f32 1.0, %v6018
        %v6044 = vsub.f32 1.0, %v6019
        %v6045 = vlaneseq
        %v6046 = vshrl.u32 %v6045, 7
        %v6047 = vsub.s32 0, %v6046
        %v6048 = vrot.slane %v6043, %v6047
        %v6049 = vlaneseq
        %v6050 = vshrl.u32 %v6049, 7
        %v6051 = vsub.s32 0, %v6050
        %v6052 = vrot.slane %v6044, %v6051
        %v6053 = vsel %vm6039, %v6048, 0.0
        %v6054 = vsel %vm6040, %v6052, 0.0
        %v6055 = vsel %vm6041, %v6048, 0.0
        %v6056 = vsel %vm6042, %v6052, 0.0
        %v6057 = vlaneseq
        %v6058 = vshrl.u32 %v6057, 7
        %v6059 = vsub.s32 0, %v6058
        %v6060 = vrot.slane %v6025, %v6059
        %v6061 = vlaneseq
        %v6062 = vshrl.u32 %v6061, 7
        %v6063 = vsub.s32 0, %v6062
        %v6064 = vrot.slane %v6027, %v6063
        %vm6065 = vcmp.eq.s32.totalorder %v6029, %v6060
        %vm6066 = vcmp.eq.s32.totalorder %v6029, %v6064
        %vm6067 = vcmp.eq.s32.totalorder %v6030, %v6060
        %vm6068 = vcmp.eq.s32.totalorder %v6030, %v6064
        %v6069 = vlaneseq
        %v6070 = vshrl.u32 %v6069, 7
        %v6071 = vsub.s32 0, %v6070
        %v6072 = vrot.slane %v6018, %v6071
        %v6073 = vlaneseq
        %v6074 = vshrl.u32 %v6073, 7
        %v6075 = vsub.s32 0, %v6074
        %v6076 = vrot.slane %v6019, %v6075
        %v6077 = vsel %vm6065, %v6072, 0.0
        %v6078 = vsel %vm6066, %v6076, 0.0
        %v6079 = vsel %vm6067, %v6072, 0.0
        %v6080 = vsel %vm6068, %v6076, 0.0
        %v6081 = vadd.f32 %v6053, %v6077
        %v6082 = vadd.f32 %v6054, %v6078
        %v6083 = vadd.f32 %v6055, %v6079
        %v6084 = vadd.f32 %v6056, %v6080
        %v6085 = vlaneseq
        %v6086 = vshrl.u32 %v6085, 7
        %v6087 = vsub.s32 1, %v6086
        %v6088 = vrot.slane %v6020, %v6087
        %v6089 = vlaneseq
        %v6090 = vshrl.u32 %v6089, 7
        %v6091 = vsub.s32 1, %v6090
        %v6092 = vrot.slane %v6021, %v6091
        %vm6093 = vcmp.eq.s32.totalorder %v6029, %v6088
        %vm6094 = vcmp.eq.s32.totalorder %v6029, %v6092
        %vm6095 = vcmp.eq.s32.totalorder %v6030, %v6088
        %vm6096 = vcmp.eq.s32.totalorder %v6030, %v6092
        %v6097 = vlaneseq
        %v6098 = vshrl.u32 %v6097, 7
        %v6099 = vsub.s32 1, %v6098
        %v6100 = vrot.slane %v6043, %v6099
        %v6101 = vlaneseq
        %v6102 = vshrl.u32 %v6101, 7
        %v6103 = vsub.s32 1, %v6102
        %v6104 = vrot.slane %v6044, %v6103
        %v6105 = vsel %vm6093, %v6100, 0.0
        %v6106 = vsel %vm6094, %v6104, 0.0
        %v6107 = vsel %vm6095, %v6100, 0.0
        %v6108 = vsel %vm6096, %v6104, 0.0
        %v6109 = vlaneseq
        %v6110 = vshrl.u32 %v6109, 7
        %v6111 = vsub.s32 1, %v6110
        %v6112 = vrot.slane %v6025, %v6111
        %v6113 = vlaneseq
        %v6114 = vshrl.u32 %v6113, 7
        %v6115 = vsub.s32 1, %v6114
        %v6116 = vrot.slane %v6027, %v6115
        %vm6117 = vcmp.eq.s32.totalorder %v6029, %v6112
        %vm6118 = vcmp.eq.s32.totalorder %v6029, %v6116
        %vm6119 = vcmp.eq.s32.totalorder %v6030, %v6112
        %vm6120 = vcmp.eq.s32.totalorder %v6030, %v6116
        %v6121 = vlaneseq
        %v6122 = vshrl.u32 %v6121, 7
        %v6123 = vsub.s32 1, %v6122
        %v6124 = vrot.slane %v6018, %v6123
        %v6125 = vlaneseq
        %v6126 = vshrl.u32 %v6125, 7
        %v6127 = vsub.s32 1, %v6126
        %v6128 = vrot.slane %v6019, %v6127
        %v6129 = vsel %vm6117, %v6124, 0.0
        %v6130 = vsel %vm6118, %v6128, 0.0
        %v6131 = vsel %vm6119, %v6124, 0.0
        %v6132 = vsel %vm6120, %v6128, 0.0
        %v6133 = vadd.f32 %v6105, %v6129
        %v6134 = vadd.f32 %v6106, %v6130
        %v6135 = vadd.f32 %v6107, %v6131
        %v6136 = vadd.f32 %v6108, %v6132
        %v6138 = vsel %vm4971, %v6006, 0
        %v6141 = vsel %vm4971, %v6007, 0
        %6143 = vmatprep.subr.mxu0 %v6082
        %6144 = vmatpush1.msra.mxu0 %v6081
        %6145 = vmatprep.subr.mxu0 %v6084
        %6146 = vmatpush1.msra.mxu0 %v6083
        %6147 = vmatprep.subr.mxu0 0.0
        %6148 = vmatpush1.msra.mxu0 0.0
        %6149 = vmatprep.subr.mxu0 0.0
        %6150 = vmatpush1.msra.mxu0 0.0
        %6151 = vmatprep.subr.mxu0 0.0
        %6152 = vmatpush1.msra.mxu0 0.0
        %6153 = vmatprep.subr.mxu0 0.0
        %6154 = vmatpush1.msra.mxu0 0.0
        %6155 = vmatprep.subr.mxu0 0.0
        %6156 = vmatpush1.msra.mxu0 0.0
        %6157 = vmatprep.subr.mxu0 0.0
        %6158 = vmatpush1.msra.mxu0 0.0
        %6159 = vmatprep.subr.mxu0 0.0
        %6160 = vmatpush1.msra.mxu0 0.0
        %6161 = vmatprep.subr.mxu0 0.0
        %6162 = vmatpush1.msra.mxu0 0.0
        %6163 = vmatprep.subr.mxu0 0.0
        %6164 = vmatpush1.msra.mxu0 0.0
        %6165 = vmatprep.subr.mxu0 0.0
        %6166 = vmatpush1.msra.mxu0 0.0
        %6167 = vmatprep.subr.mxu0 0.0
        %6168 = vmatpush1.msra.mxu0 0.0
        %6169 = vmatprep.subr.mxu0 0.0
        %6170 = vmatpush1.msra.mxu0 0.0
        %6171 = vmatprep.subr.mxu0 0.0
        %6172 = vmatpush1.msra.mxu0 0.0
        %6173 = vmatprep.subr.mxu0 0.0
        %6174 = vmatpush1.msra.mxu0 0.0
        %6175 = vmatprep.subr.mxu0 0.0
        %6176 = vmatpush1.msra.mxu0 0.0
        %6177 = vmatprep.subr.mxu0 0.0
        %6178 = vmatpush1.msra.mxu0 0.0
        %6179 = vmatprep.subr.mxu0 0.0
        %6180 = vmatpush1.msra.mxu0 0.0
        %6181 = vmatprep.subr.mxu0 0.0
        %6182 = vmatpush1.msra.mxu0 0.0
        %6183 = vmatprep.subr.mxu0 0.0
        %6184 = vmatpush1.msra.mxu0 0.0
        %6185 = vmatprep.subr.mxu0 0.0
        %6186 = vmatpush1.msra.mxu0 0.0
        %6187 = vmatprep.subr.mxu0 0.0
        %6188 = vmatpush1.msra.mxu0 0.0
        %6189 = vmatprep.subr.mxu0 0.0
        %6190 = vmatpush1.msra.mxu0 0.0
        %6191 = vmatprep.subr.mxu0 0.0
        %6192 = vmatpush1.msra.mxu0 0.0
        %6193 = vmatprep.subr.mxu0 0.0
        %6194 = vmatpush1.msra.mxu0 0.0
        %6195 = vmatprep.subr.mxu0 0.0
        %6196 = vmatpush1.msra.mxu0 0.0
        %6197 = vmatprep.subr.mxu0 0.0
        %6198 = vmatpush1.msra.mxu0 0.0
        %6199 = vmatprep.subr.mxu0 0.0
        %6200 = vmatpush1.msra.mxu0 0.0
        %6201 = vmatprep.subr.mxu0 0.0
        %6202 = vmatpush1.msra.mxu0 0.0
        %6203 = vmatprep.subr.mxu0 0.0
        %6204 = vmatpush1.msra.mxu0 0.0
        %6205 = vmatprep.subr.mxu0 0.0
        %6206 = vmatpush1.msra.mxu0 0.0
        %6207 = vmatprep.mubr.f32.mxu0 0.0
        %6208 = vmatmul.mubr.f32.gmra.mrb[0].mxu0 %v6138
        %v6209 = vpop.f32.mrb[0].mxu0
        %v6210 = vadd.f32 0.0, %v6209
        %v6211 = vpop.f32.mrb[0].mxu0
        %v6212 = vadd.f32 0.0, %v6211
        %6213 = vmatprep.mubr.f32.mxu0 0.0
        %6214 = vmatmul.mubr.f32.gmra.mrb[0].mxu0 %v6141
        %v6215 = vpop.f32.mrb[0].mxu0
        %v6216 = vadd.f32 0.0, %v6215
        %v6217 = vpop.f32.mrb[0].mxu0
        %v6218 = vadd.f32 0.0, %v6217
        %6219 = vdwg.mxu0
        %v6220 = vmul.f32 %v6133, %v6210
        %v6221 = vmul.f32 %v6134, %v6212
        %v6222 = vmul.f32 %v6135, %v6216
        %v6223 = vmul.f32 %v6136, %v6218
        %v6224 = vadd.f32 %v6220, %v6222
        %v6225 = vrot.slane %v6224, 4
        %v6226 = vadd.f32 %v6224, %v6225
        %v6227 = vrot.slane %v6226, 2
        %v6228 = vadd.f32 %v6226, %v6227
        %v6229 = vrot.slane %v6228, 1
        %v6230 = vadd.f32 %v6228, %v6229
        %v6231 = vadd.f32 %v6221, %v6223
        %v6232 = vrot.slane %v6231, 4
        %v6233 = vadd.f32 %v6231, %v6232
        %v6234 = vrot.slane %v6233, 2
        %v6235 = vadd.f32 %v6233, %v6234
        %v6236 = vrot.slane %v6235, 1
        %v6237 = vadd.f32 %v6235, %v6236
        %v6240 = vcombine.low %v6230, %v6237
        %v6242 = vunpack.c.l.s4 1966171168
        %v6243 = vunpack.c.0.s8 %v6242
        %v6244 = vlaneseq
        %v6245 = vshrl.u32 %v6244, 7
        %v6246 = vsub.s32 %v6243, %v6245
        %v6247 = vrot.slane %v6240, %v6246
        %v6249 = vunpack.c.l.s4 1966171168
        %v6250 = vunpack.c.0.s8 %v6249
        %v6251 = vlaneseq
        %v6252 = vshrl.u32 %v6251, 7
        %v6253 = vsub.s32 %v6250, %v6252
        %v6254 = vrot.slane %v6247, %v6253
        %v6256 = vlaneseq
        %vm6257 = vcmp.ge.s32.totalorder %v6256, 0
        %vm6258 = vcmp.lt.s32.totalorder %v6256, 256
        %vm6259 = vmand %vm6257, %vm6258
        %6260 = vst.msk [vmem:[%s361] sm:$0x3] %vm6259, %v6254
        %p6261 = scmp.lt.s32.totalorder %s24, 3
        %s6262 = scalar_select %p6261, %s24, 3
        %s6263 = smul.addr %s6262, 2
        %s6264 = scalar_lea.vmem %s8, %s6263
        %s6265 = sand.u32 %s236, 1
        %s6266 = scalar_lea.sflag [#allocation3], %s6265
        %s6267 = sand.u32 %s236, 1
        %s6268 = smul.addr %s6267, 16
        %s6269 = scalar_lea.vmem [#allocation2], %s6268
        // Predicated region
        $region53: #{laplace_cost_net_forward.1} parent=51 // pred_check
          %p6270 = pneg %p220
        $region54: #{laplace_cost_net_forward.1} parent=51 // pred_check_branch
          %6272 = sbr.rel (%p6270) target = $region56
        $region55: #{laplace_cost_net_forward.1} parent=51 // pred_region
          _
        $region56: #{laplace_cost_net_forward.1} parent=51 // pred_fallthru
          _
        // Predicated region
        $region57: #{laplace_cost_net_forward.1} parent=51 // pred_check
          %p6273 = pneg %p246
        $region58: #{laplace_cost_net_forward.1} parent=51 // pred_check_branch
          %6275 = sbr.rel (%p6273) target = $region60
        $region59: #{laplace_cost_net_forward.1} parent=51 // pred_region
          %s6277 = ssub.s32 256, 256
          %6278 = vsyncadd %s6266, %s6277
          %s6279 = smul.addr %s24, 2
          %s6280 = smul.addr %s6279, 128
          %s6281 = scalar_lea.hbm %s9, %s6280
          %s6282 = sshll.u32 %s6269, 4
          %s6283 = int_to_ptr.vmem [resolvable:$true] %s6282
          %6288 = dma.vmem_to_hbm [thread:$0]  %s6283, 256, %s6281, %s6266, 128, 128, 8
        $region60: #{laplace_cost_net_forward.1} parent=51 // pred_fallthru
          _
      $region52: #{laplace_cost_net_forward.1} parent=5 // pred_fallthru
        _
      %p6289 = scmp.le.s32.totalorder 2, %s19
      // Predicated region
      $region61: #{laplace_cost_net_forward.1} parent=5 // pred_check
        %p6290 = pneg %p6289
      $region62: #{laplace_cost_net_forward.1} parent=5 // pred_check_branch
        %6292 = sbr.rel (%p6290) target = $region64
      $region63: #{laplace_cost_net_forward.1} parent=5 // pred_region
        %s6293 = ssub.s32 %s19, 2
        // Predicated region
        $region65: #{laplace_cost_net_forward.1} parent=63 // pred_check
          %p6294 = pneg %p226
        $region66: #{laplace_cost_net_forward.1} parent=63 // pred_check_branch
          %6296 = sbr.rel (%p6294) target = $region68
        $region67: #{laplace_cost_net_forward.1} parent=63 // pred_region
          %p6297 = scmp.lt.s32.totalorder %s25, 3
          %s6298 = scalar_select %p6297, %s25, 3
          %s6299 = smul.addr %s6298, 2
          %s6300 = scalar_lea.vmem %s8, %s6299
        $region68: #{laplace_cost_net_forward.1} parent=63 // pred_fallthru
          _
        // Predicated region
        $region69: #{laplace_cost_net_forward.1} parent=63 // pred_check
          %p6301 = pneg %p252
        $region70: #{laplace_cost_net_forward.1} parent=63 // pred_check_branch
          %6303 = sbr.rel (%p6301) target = $region72
        $region71: #{laplace_cost_net_forward.1} parent=63 // pred_region
          %s6304 = sand.u32 %s237, 1
          %s6305 = scalar_lea.sflag [#allocation3], %s6304
          %s6306 = sand.u32 %s237, 1
          %s6307 = smul.addr %s6306, 16
          %s6308 = scalar_lea.vmem [#allocation2], %s6307
          %6309 = dma.done %s6305, 256
        $region72: #{laplace_cost_net_forward.1} parent=63 // pred_fallthru
          _
      $region64: #{laplace_cost_net_forward.1} parent=5 // pred_fallthru
        _
    $region6: #{laplace_cost_net_forward.1} parent=1 // loop_footer
      %s23 = sadd.s32 1, %s19
    $region7: #{laplace_cost_net_forward.1} parent=1 // loop_footer_branch
      %18 = sbr.rel target = $region3
    $region8: #{laplace_cost_net_forward.1} parent=1 // loop_exit
      _
    %6310 = vsyncpa [#allocation3], 1
    %s6311 = scalar_lea.sflag [#allocation3], 1
    %6312 = vsyncpa %s6311, 1

</llo_original>
